<compile_context>
chip_gen: v7x
topology: tpu7x:2x2x1
jax: 0.10.0
libtpu: 0.0.40
codegen_flags: <defaults>
</compile_context>

<pallas_src>
import math

import jax
import jax.numpy as jnp
from jax.experimental import pallas as pl
from jax.experimental.pallas import tpu as pltpu  # noqa: F401  (TPU backend assumed)

# ----- model hyper-parameters (small but consistent with the module) ---------
BATCH = 2
SEQ = 8
INPUT_DIM = 16
EMBED_DIM = 32
NUM_HEADS = 4
NUM_LAYERS = 2
FFN_DIM = 2048            # nn.TransformerEncoderLayer default dim_feedforward
LN_EPS = 1e-5             # nn.LayerNorm default eps
HEAD_DIM = EMBED_DIM // NUM_HEADS
ROWS = BATCH * SEQ


# =============================== kernel ======================================
def _layernorm(x, w, b):
    mu = jnp.mean(x, axis=-1, keepdims=True)
    var = jnp.mean((x - mu) ** 2, axis=-1, keepdims=True)
    return (x - mu) * jax.lax.rsqrt(var + LN_EPS) * w + b


def _fused_forward_kernel(x_ref, w_proj_ref, b_proj_ref, pe_ref,
                          w_q_ref, b_q_ref, w_k_ref, b_k_ref,
                          w_v_ref, b_v_ref, w_o_ref, b_o_ref,
                          ln1_w_ref, ln1_b_ref,
                          w_ff1_ref, b_ff1_ref, w_ff2_ref, b_ff2_ref,
                          ln2_w_ref, ln2_b_ref,
                          o_ref):
    scale = 1.0 / math.sqrt(HEAD_DIM)

    # ---- input projection + positional encoding over flattened rows ---------
    h = (jnp.dot(x_ref[...], w_proj_ref[...],
                 preferred_element_type=jnp.float32)
         + b_proj_ref[...] + pe_ref[...])                      # (ROWS, E) f32

    # ---- transformer encoder layers (post-norm, eval mode) -------------------
    for l in range(NUM_LAYERS):                                # static unroll
        # ----- multi-head self-attention with head-major weights -------------
        attn = b_o_ref[l]                                      # (1, E) -> bcast
        for hd in range(NUM_HEADS):                            # static unroll
            q = (jnp.dot(h, w_q_ref[l, hd, :, :],
                         preferred_element_type=jnp.float32) + b_q_ref[l, hd])
            k = (jnp.dot(h, w_k_ref[l, hd, :, :],
                         preferred_element_type=jnp.float32) + b_k_ref[l, hd])
            v = (jnp.dot(h, w_v_ref[l, hd, :, :],
                         preferred_element_type=jnp.float32) + b_v_ref[l, hd])

            ctx_parts = []
            for b in range(BATCH):                  # sublane-aligned batch split
                r0, r1 = b * SEQ, (b + 1) * SEQ
                qb, kb, vb = q[r0:r1], k[r0:r1], v[r0:r1]      # (S, D) each
                s = jax.lax.dot_general(
                    qb, kb, (((1,), (1,)), ((), ())),
                    preferred_element_type=jnp.float32) * scale  # q @ k^T
                s = s - jnp.max(s, axis=-1, keepdims=True)
                p = jnp.exp(s)
                p = p / jnp.sum(p, axis=-1, keepdims=True)
                ctx_parts.append(jnp.dot(p, vb,
                                         preferred_element_type=jnp.float32))
            ctx = jnp.concatenate(ctx_parts, axis=0)           # (ROWS, D)

            # per-head output projection, summed over heads (no lane concat)
            attn = attn + jnp.dot(ctx, w_o_ref[l, hd, :, :],
                                  preferred_element_type=jnp.float32)

        x1 = _layernorm(h + attn, ln1_w_ref[l], ln1_b_ref[l])

        # ----- feed-forward (relu), bf16 MXU operands, f32 accumulation ------
        f = (jnp.dot(x1.astype(jnp.bfloat16), w_ff1_ref[l],
                     preferred_element_type=jnp.float32) + b_ff1_ref[l])
        f = jnp.maximum(f, 0.0)
        f = (jnp.dot(f.astype(jnp.bfloat16), w_ff2_ref[l],
                     preferred_element_type=jnp.float32) + b_ff2_ref[l])

        h = _layernorm(x1 + f, ln2_w_ref[l], ln2_b_ref[l])

    # ---- mean over the sequence axis, per batch element ----------------------
    means = [jnp.mean(h[b * SEQ:(b + 1) * SEQ], axis=0, keepdims=True)
             for b in range(BATCH)]
    o_ref[...] = jnp.concatenate(means, axis=0)                # (B, E)


# ============================== wrapper ======================================
def forward(x, params):
    B, S, Din = x.shape
    x_flat = x.reshape(B * S, Din)
    args = (x_flat,
            params['w_proj'], params['b_proj'], params['pe_flat'],
            params['w_q'], params['b_q'], params['w_k'], params['b_k'],
            params['w_v'], params['b_v'], params['w_o'], params['b_o'],
            params['ln1_w'], params['ln1_b'],
            params['w_ff1'], params['b_ff1'], params['w_ff2'], params['b_ff2'],
            params['ln2_w'], params['ln2_b'])
    # Single fused call, no grid: every operand is mapped whole into VMEM.
    return pl.pallas_call(
        _fused_forward_kernel,
        out_shape=jax.ShapeDtypeStruct((B, EMBED_DIM), jnp.float32),
    )(*args)


# ====================== deterministic parameter init =========================
def make_positional_encoding(seq, dim):
    pos = jnp.arange(seq, dtype=jnp.float32)[:, None]
    div = jnp.exp(jnp.arange(0, dim, 2, dtype=jnp.float32)
                  * (-math.log(10000.0) / dim))
    pe = jnp.zeros((seq, dim), jnp.float32)
    pe = pe.at[:, 0::2].set(jnp.sin(pos * div))
    pe = pe.at[:, 1::2].set(jnp.cos(pos * div))
    return pe


def init_params(key):
    keys = iter(jax.random.split(key, 64))

    def nrm(shape, scale=0.02, dtype=jnp.float32):
        return (scale * jax.random.normal(next(keys), shape,
                                          jnp.float32)).astype(dtype)

    bf16 = jnp.bfloat16
    pe = make_positional_encoding(SEQ, EMBED_DIM)
    L, H, E, D, F = NUM_LAYERS, NUM_HEADS, EMBED_DIM, HEAD_DIM, FFN_DIM
    params = {
        'w_proj': nrm((INPUT_DIM, E)),                 # pre-transposed Linear
        'b_proj': nrm((1, E)),
        'pe_flat': jnp.tile(pe, (BATCH, 1)),           # (B*S, E)
        # head-major attention weights (equivalent to PyTorch in_proj/out_proj)
        'w_q': nrm((L, H, E, D)), 'b_q': nrm((L, H, 1, D)),
        'w_k': nrm((L, H, E, D)), 'b_k': nrm((L, H, 1, D)),
        'w_v': nrm((L, H, E, D)), 'b_v': nrm((L, H, 1, D)),
        'w_o': nrm((L, H, D, E)), 'b_o': nrm((L, 1, E)),
        'ln1_w': jnp.ones((L, 1, E), jnp.float32),
        'ln1_b': jnp.zeros((L, 1, E), jnp.float32),
        # FFN weights stored bf16 (dominant HBM traffic); biases f32
        'w_ff1': nrm((L, E, F), dtype=bf16), 'b_ff1': nrm((L, 1, F)),
        'w_ff2': nrm((L, F, E), dtype=bf16), 'b_ff2': nrm((L, 1, E)),
        'ln2_w': jnp.ones((L, 1, E), jnp.float32),
        'ln2_b': jnp.zeros((L, 1, E), jnp.float32),
    }
    return params


# ========================= pure-JAX reference =================================
def reference_forward(x, params):
    hp = jax.lax.Precision.HIGHEST
    f32 = jnp.float32

    def ln(v, w, b):
        mu = v.mean(-1, keepdims=True)
        var = ((v - mu) ** 2).mean(-1, keepdims=True)
        return (v - mu) * jax.lax.rsqrt(var + LN_EPS) * w + b

    B, S, _ = x.shape
    pe = params['pe_flat'].reshape(B, S, EMBED_DIM)
    h = (jnp.einsum('bsd,de->bse', x, params['w_proj'].astype(f32),
                    precision=hp) + params['b_proj'][0] + pe)
    for l in range(NUM_LAYERS):
        q = (jnp.einsum('bse,hed->bhsd', h, params['w_q'][l].astype(f32),
                        precision=hp) + params['b_q'][l][None])
        k = (jnp.einsum('bse,hed->bhsd', h, params['w_k'][l].astype(f32),
                        precision=hp) + params['b_k'][l][None])
        v = (jnp.einsum('bse,hed->bhsd', h, params['w_v'][l].astype(f32),
                        precision=hp) + params['b_v'][l][None])
        s = jnp.einsum('bhqd,bhkd->bhqk', q, k,
                       precision=hp) / math.sqrt(HEAD_DIM)
        p = jax.nn.softmax(s, axis=-1)
        ctx = jnp.einsum('bhqk,bhkd->bhqd', p, v, precision=hp)
        attn = (jnp.einsum('bhsd,hde->bse', ctx, params['w_o'][l].astype(f32),
                           precision=hp) + params['b_o'][l])
        x1 = ln(h + attn, params['ln1_w'][l], params['ln1_b'][l])
        f = jnp.maximum(
            jnp.einsum('bse,ef->bsf', x1, params['w_ff1'][l].astype(f32),
                       precision=hp) + params['b_ff1'][l], 0.0)
        f = (jnp.einsum('bsf,fe->bse', f, params['w_ff2'][l].astype(f32),
                        precision=hp) + params['b_ff2'][l])
        h = ln(x1 + f, params['ln2_w'][l], params['ln2_b'][l])
    return h.mean(axis=1)


# ================================= main =======================================
if __name__ == "__main__":
    key = jax.random.PRNGKey(0)
    kx, kp = jax.random.split(key)
    x = jax.random.normal(kx, (BATCH, SEQ, INPUT_DIM), jnp.float32)
    params = init_params(kp)

    out = forward(x, params)
    out = jax.block_until_ready(out)

    ref = reference_forward(x, params)
    assert out.shape == (BATCH, EMBED_DIM)
    assert bool(jnp.all(jnp.isfinite(out)))
    assert bool(jnp.allclose(out, ref, atol=1e-2, rtol=1e-2))
    print("KERNEL_OK")
</pallas_src>

<mosaic_0001>
module attributes {stable_mosaic.version = 11 : i64} {
  func.func @_fused_forward_kernel(%arg0: memref<16x16xf32, #tpu.memory_space<vmem>>, %arg1: memref<16x32xf32, #tpu.memory_space<vmem>>, %arg2: memref<1x32xf32, #tpu.memory_space<vmem>>, %arg3: memref<16x32xf32, #tpu.memory_space<vmem>>, %arg4: memref<2x4x32x8xf32, #tpu.memory_space<vmem>>, %arg5: memref<2x4x1x8xf32, #tpu.memory_space<vmem>>, %arg6: memref<2x4x32x8xf32, #tpu.memory_space<vmem>>, %arg7: memref<2x4x1x8xf32, #tpu.memory_space<vmem>>, %arg8: memref<2x4x32x8xf32, #tpu.memory_space<vmem>>, %arg9: memref<2x4x1x8xf32, #tpu.memory_space<vmem>>, %arg10: memref<2x4x8x32xf32, #tpu.memory_space<vmem>>, %arg11: memref<2x1x32xf32, #tpu.memory_space<vmem>>, %arg12: memref<2x1x32xf32, #tpu.memory_space<vmem>>, %arg13: memref<2x1x32xf32, #tpu.memory_space<vmem>>, %arg14: memref<2x32x2048xbf16, #tpu.memory_space<vmem>>, %arg15: memref<2x1x2048xf32, #tpu.memory_space<vmem>>, %arg16: memref<2x2048x32xbf16, #tpu.memory_space<vmem>>, %arg17: memref<2x1x32xf32, #tpu.memory_space<vmem>>, %arg18: memref<2x1x32xf32, #tpu.memory_space<vmem>>, %arg19: memref<2x1x32xf32, #tpu.memory_space<vmem>>, %arg20: memref<2x32xf32, #tpu.memory_space<vmem>>) attributes {dimension_semantics = [], scalar_prefetch = 0 : i64, scratch_operands = 0 : i64, tpu.core_type = #tpu.core_type<tc>} {
    %c0 = arith.constant 0 : index
    %c0_0 = arith.constant 0 : index
    %0 = vector.load %arg0[%c0, %c0_0] : memref<16x16xf32, #tpu.memory_space<vmem>>, vector<16x16xf32>
    %c0_1 = arith.constant 0 : index
    %c0_2 = arith.constant 0 : index
    %1 = vector.load %arg1[%c0_1, %c0_2] : memref<16x32xf32, #tpu.memory_space<vmem>>, vector<16x32xf32>
    %cst = arith.constant dense<0.000000e+00> : vector<16x32xf32>
    %2 = tpu.matmul %0, %1, %cst {dimension_numbers = #tpu.dot_dimension_numbers<[1], [0], [0], [1], [0, 0, 1, 1], [], []>} : vector<16x16xf32>, vector<16x32xf32>, vector<16x32xf32> -> vector<16x32xf32>
    %c0_3 = arith.constant 0 : index
    %c0_4 = arith.constant 0 : index
    %3 = vector.load %arg2[%c0_3, %c0_4] : memref<1x32xf32, #tpu.memory_space<vmem>>, vector<1x32xf32>
    %4 = vector.broadcast %3 : vector<1x32xf32> to vector<16x32xf32>
    %5 = arith.addf %2, %4 : vector<16x32xf32>
    %c0_5 = arith.constant 0 : index
    %c0_6 = arith.constant 0 : index
    %6 = vector.load %arg3[%c0_5, %c0_6] : memref<16x32xf32, #tpu.memory_space<vmem>>, vector<16x32xf32>
    %7 = arith.addf %5, %6 : vector<16x32xf32>
    %c0_7 = arith.constant 0 : index
    %c0_8 = arith.constant 0 : index
    %c0_9 = arith.constant 0 : index
    %8 = vector.load %arg11[%c0_7, %c0_8, %c0_9] : memref<2x1x32xf32, #tpu.memory_space<vmem>>, vector<1x1x32xf32>
    %9 = vector.shape_cast %8 : vector<1x1x32xf32> to vector<1x32xf32>
    %c0_10 = arith.constant 0 : index
    %c0_11 = arith.constant 0 : index
    %c0_12 = arith.constant 0 : index
    %c0_13 = arith.constant 0 : index
    %10 = vector.load %arg4[%c0_10, %c0_11, %c0_12, %c0_13] : memref<2x4x32x8xf32, #tpu.memory_space<vmem>>, vector<1x1x32x8xf32>
    %11 = vector.shape_cast %10 : vector<1x1x32x8xf32> to vector<32x8xf32>
    %cst_14 = arith.constant dense<0.000000e+00> : vector<16x8xf32>
    %12 = tpu.matmul %7, %11, %cst_14 {dimension_numbers = #tpu.dot_dimension_numbers<[1], [0], [0], [1], [0, 0, 1, 1], [], []>} : vector<16x32xf32>, vector<32x8xf32>, vector<16x8xf32> -> vector<16x8xf32>
    %c0_15 = arith.constant 0 : index
    %c0_16 = arith.constant 0 : index
    %c0_17 = arith.constant 0 : index
    %c0_18 = arith.constant 0 : index
    %13 = vector.load %arg5[%c0_15, %c0_16, %c0_17, %c0_18] : memref<2x4x1x8xf32, #tpu.memory_space<vmem>>, vector<1x1x1x8xf32>
    %14 = vector.shape_cast %13 : vector<1x1x1x8xf32> to vector<1x8xf32>
    %15 = vector.broadcast %14 : vector<1x8xf32> to vector<16x8xf32>
    %16 = arith.addf %12, %15 : vector<16x8xf32>
    %c0_19 = arith.constant 0 : index
    %c0_20 = arith.constant 0 : index
    %c0_21 = arith.constant 0 : index
    %c0_22 = arith.constant 0 : index
    %17 = vector.load %arg6[%c0_19, %c0_20, %c0_21, %c0_22] : memref<2x4x32x8xf32, #tpu.memory_space<vmem>>, vector<1x1x32x8xf32>
    %18 = vector.shape_cast %17 : vector<1x1x32x8xf32> to vector<32x8xf32>
    %cst_23 = arith.constant dense<0.000000e+00> : vector<16x8xf32>
    %19 = tpu.matmul %7, %18, %cst_23 {dimension_numbers = #tpu.dot_dimension_numbers<[1], [0], [0], [1], [0, 0, 1, 1], [], []>} : vector<16x32xf32>, vector<32x8xf32>, vector<16x8xf32> -> vector<16x8xf32>
    %c0_24 = arith.constant 0 : index
    %c0_25 = arith.constant 0 : index
    %c0_26 = arith.constant 0 : index
    %c0_27 = arith.constant 0 : index
    %20 = vector.load %arg7[%c0_24, %c0_25, %c0_26, %c0_27] : memref<2x4x1x8xf32, #tpu.memory_space<vmem>>, vector<1x1x1x8xf32>
    %21 = vector.shape_cast %20 : vector<1x1x1x8xf32> to vector<1x8xf32>
    %22 = vector.broadcast %21 : vector<1x8xf32> to vector<16x8xf32>
    %23 = arith.addf %19, %22 : vector<16x8xf32>
    %c0_28 = arith.constant 0 : index
    %c0_29 = arith.constant 0 : index
    %c0_30 = arith.constant 0 : index
    %c0_31 = arith.constant 0 : index
    %24 = vector.load %arg8[%c0_28, %c0_29, %c0_30, %c0_31] : memref<2x4x32x8xf32, #tpu.memory_space<vmem>>, vector<1x1x32x8xf32>
    %25 = vector.shape_cast %24 : vector<1x1x32x8xf32> to vector<32x8xf32>
    %cst_32 = arith.constant dense<0.000000e+00> : vector<16x8xf32>
    %26 = tpu.matmul %7, %25, %cst_32 {dimension_numbers = #tpu.dot_dimension_numbers<[1], [0], [0], [1], [0, 0, 1, 1], [], []>} : vector<16x32xf32>, vector<32x8xf32>, vector<16x8xf32> -> vector<16x8xf32>
    %c0_33 = arith.constant 0 : index
    %c0_34 = arith.constant 0 : index
    %c0_35 = arith.constant 0 : index
    %c0_36 = arith.constant 0 : index
    %27 = vector.load %arg9[%c0_33, %c0_34, %c0_35, %c0_36] : memref<2x4x1x8xf32, #tpu.memory_space<vmem>>, vector<1x1x1x8xf32>
    %28 = vector.shape_cast %27 : vector<1x1x1x8xf32> to vector<1x8xf32>
    %29 = vector.broadcast %28 : vector<1x8xf32> to vector<16x8xf32>
    %30 = arith.addf %26, %29 : vector<16x8xf32>
    %31 = vector.extract_strided_slice %16 {offsets = [0, 0], sizes = [8, 8], strides = [1, 1]} : vector<16x8xf32> to vector<8x8xf32>
    %32 = vector.extract_strided_slice %23 {offsets = [0, 0], sizes = [8, 8], strides = [1, 1]} : vector<16x8xf32> to vector<8x8xf32>
    %33 = vector.extract_strided_slice %30 {offsets = [0, 0], sizes = [8, 8], strides = [1, 1]} : vector<16x8xf32> to vector<8x8xf32>
    %cst_37 = arith.constant dense<0.000000e+00> : vector<8x8xf32>
    %34 = tpu.matmul %31, %32, %cst_37 {dimension_numbers = #tpu.dot_dimension_numbers<[1], [1], [0], [0], [0, 0, 1, 0], [], []>} : vector<8x8xf32>, vector<8x8xf32>, vector<8x8xf32> -> vector<8x8xf32>
    %cst_38 = arith.constant 0.353553385 : f32
    %35 = vector.broadcast %cst_38 : f32 to vector<8x8xf32>
    %36 = arith.mulf %34, %35 : vector<8x8xf32>
    %cst_39 = arith.constant dense<0xFF800000> : vector<8xf32>
    %37 = vector.multi_reduction <maximumf>, %36, %cst_39 [1] : vector<8x8xf32> to vector<8xf32>
    %38 = vector.shape_cast %37 : vector<8xf32> to vector<8x1xf32>
    %39 = vector.broadcast %38 : vector<8x1xf32> to vector<8x8xf32>
    %40 = arith.subf %36, %39 : vector<8x8xf32>
    %41 = math.exp %40 : vector<8x8xf32>
    %cst_40 = arith.constant dense<0.000000e+00> : vector<8xf32>
    %42 = vector.multi_reduction <add>, %41, %cst_40 [1] : vector<8x8xf32> to vector<8xf32>
    %43 = vector.shape_cast %42 : vector<8xf32> to vector<8x1xf32>
    %44 = vector.broadcast %43 : vector<8x1xf32> to vector<8x8xf32>
    %45 = arith.divf %41, %44 : vector<8x8xf32>
    %cst_41 = arith.constant dense<0.000000e+00> : vector<8x8xf32>
    %46 = tpu.matmul %45, %33, %cst_41 {dimension_numbers = #tpu.dot_dimension_numbers<[1], [0], [0], [1], [0, 0, 1, 1], [], []>} : vector<8x8xf32>, vector<8x8xf32>, vector<8x8xf32> -> vector<8x8xf32>
    %47 = vector.extract_strided_slice %16 {offsets = [8, 0], sizes = [8, 8], strides = [1, 1]} : vector<16x8xf32> to vector<8x8xf32>
    %48 = vector.extract_strided_slice %23 {offsets = [8, 0], sizes = [8, 8], strides = [1, 1]} : vector<16x8xf32> to vector<8x8xf32>
    %49 = vector.extract_strided_slice %30 {offsets = [8, 0], sizes = [8, 8], strides = [1, 1]} : vector<16x8xf32> to vector<8x8xf32>
    %cst_42 = arith.constant dense<0.000000e+00> : vector<8x8xf32>
    %50 = tpu.matmul %47, %48, %cst_42 {dimension_numbers = #tpu.dot_dimension_numbers<[1], [1], [0], [0], [0, 0, 1, 0], [], []>} : vector<8x8xf32>, vector<8x8xf32>, vector<8x8xf32> -> vector<8x8xf32>
    %cst_43 = arith.constant 0.353553385 : f32
    %51 = vector.broadcast %cst_43 : f32 to vector<8x8xf32>
    %52 = arith.mulf %50, %51 : vector<8x8xf32>
    %cst_44 = arith.constant dense<0xFF800000> : vector<8xf32>
    %53 = vector.multi_reduction <maximumf>, %52, %cst_44 [1] : vector<8x8xf32> to vector<8xf32>
    %54 = vector.shape_cast %53 : vector<8xf32> to vector<8x1xf32>
    %55 = vector.broadcast %54 : vector<8x1xf32> to vector<8x8xf32>
    %56 = arith.subf %52, %55 : vector<8x8xf32>
    %57 = math.exp %56 : vector<8x8xf32>
    %cst_45 = arith.constant dense<0.000000e+00> : vector<8xf32>
    %58 = vector.multi_reduction <add>, %57, %cst_45 [1] : vector<8x8xf32> to vector<8xf32>
    %59 = vector.shape_cast %58 : vector<8xf32> to vector<8x1xf32>
    %60 = vector.broadcast %59 : vector<8x1xf32> to vector<8x8xf32>
    %61 = arith.divf %57, %60 : vector<8x8xf32>
    %cst_46 = arith.constant dense<0.000000e+00> : vector<8x8xf32>
    %62 = tpu.matmul %61, %49, %cst_46 {dimension_numbers = #tpu.dot_dimension_numbers<[1], [0], [0], [1], [0, 0, 1, 1], [], []>} : vector<8x8xf32>, vector<8x8xf32>, vector<8x8xf32> -> vector<8x8xf32>
    %63 = tpu.concatenate %46, %62 in 0 : vector<8x8xf32>, vector<8x8xf32> -> vector<16x8xf32>
    %c0_47 = arith.constant 0 : index
    %c0_48 = arith.constant 0 : index
    %c0_49 = arith.constant 0 : index
    %c0_50 = arith.constant 0 : index
    %64 = vector.load %arg10[%c0_47, %c0_48, %c0_49, %c0_50] : memref<2x4x8x32xf32, #tpu.memory_space<vmem>>, vector<1x1x8x32xf32>
    %65 = vector.shape_cast %64 : vector<1x1x8x32xf32> to vector<8x32xf32>
    %cst_51 = arith.constant dense<0.000000e+00> : vector<16x32xf32>
    %66 = tpu.matmul %63, %65, %cst_51 {dimension_numbers = #tpu.dot_dimension_numbers<[1], [0], [0], [1], [0, 0, 1, 1], [], []>} : vector<16x8xf32>, vector<8x32xf32>, vector<16x32xf32> -> vector<16x32xf32>
    %67 = vector.broadcast %9 : vector<1x32xf32> to vector<16x32xf32>
    %68 = arith.addf %67, %66 : vector<16x32xf32>
    %c0_52 = arith.constant 0 : index
    %c1 = arith.constant 1 : index
    %c0_53 = arith.constant 0 : index
    %c0_54 = arith.constant 0 : index
    %69 = vector.load %arg4[%c0_52, %c1, %c0_53, %c0_54] : memref<2x4x32x8xf32, #tpu.memory_space<vmem>>, vector<1x1x32x8xf32>
    %70 = vector.shape_cast %69 : vector<1x1x32x8xf32> to vector<32x8xf32>
    %cst_55 = arith.constant dense<0.000000e+00> : vector<16x8xf32>
    %71 = tpu.matmul %7, %70, %cst_55 {dimension_numbers = #tpu.dot_dimension_numbers<[1], [0], [0], [1], [0, 0, 1, 1], [], []>} : vector<16x32xf32>, vector<32x8xf32>, vector<16x8xf32> -> vector<16x8xf32>
    %c0_56 = arith.constant 0 : index
    %c1_57 = arith.constant 1 : index
    %c0_58 = arith.constant 0 : index
    %c0_59 = arith.constant 0 : index
    %72 = vector.load %arg5[%c0_56, %c1_57, %c0_58, %c0_59] : memref<2x4x1x8xf32, #tpu.memory_space<vmem>>, vector<1x1x1x8xf32>
    %73 = vector.shape_cast %72 : vector<1x1x1x8xf32> to vector<1x8xf32>
    %74 = vector.broadcast %73 : vector<1x8xf32> to vector<16x8xf32>
    %75 = arith.addf %71, %74 : vector<16x8xf32>
    %c0_60 = arith.constant 0 : index
    %c1_61 = arith.constant 1 : index
    %c0_62 = arith.constant 0 : index
    %c0_63 = arith.constant 0 : index
    %76 = vector.load %arg6[%c0_60, %c1_61, %c0_62, %c0_63] : memref<2x4x32x8xf32, #tpu.memory_space<vmem>>, vector<1x1x32x8xf32>
    %77 = vector.shape_cast %76 : vector<1x1x32x8xf32> to vector<32x8xf32>
    %cst_64 = arith.constant dense<0.000000e+00> : vector<16x8xf32>
    %78 = tpu.matmul %7, %77, %cst_64 {dimension_numbers = #tpu.dot_dimension_numbers<[1], [0], [0], [1], [0, 0, 1, 1], [], []>} : vector<16x32xf32>, vector<32x8xf32>, vector<16x8xf32> -> vector<16x8xf32>
    %c0_65 = arith.constant 0 : index
    %c1_66 = arith.constant 1 : index
    %c0_67 = arith.constant 0 : index
    %c0_68 = arith.constant 0 : index
    %79 = vector.load %arg7[%c0_65, %c1_66, %c0_67, %c0_68] : memref<2x4x1x8xf32, #tpu.memory_space<vmem>>, vector<1x1x1x8xf32>
    %80 = vector.shape_cast %79 : vector<1x1x1x8xf32> to vector<1x8xf32>
    %81 = vector.broadcast %80 : vector<1x8xf32> to vector<16x8xf32>
    %82 = arith.addf %78, %81 : vector<16x8xf32>
    %c0_69 = arith.constant 0 : index
    %c1_70 = arith.constant 1 : index
    %c0_71 = arith.constant 0 : index
    %c0_72 = arith.constant 0 : index
    %83 = vector.load %arg8[%c0_69, %c1_70, %c0_71, %c0_72] : memref<2x4x32x8xf32, #tpu.memory_space<vmem>>, vector<1x1x32x8xf32>
    %84 = vector.shape_cast %83 : vector<1x1x32x8xf32> to vector<32x8xf32>
    %cst_73 = arith.constant dense<0.000000e+00> : vector<16x8xf32>
    %85 = tpu.matmul %7, %84, %cst_73 {dimension_numbers = #tpu.dot_dimension_numbers<[1], [0], [0], [1], [0, 0, 1, 1], [], []>} : vector<16x32xf32>, vector<32x8xf32>, vector<16x8xf32> -> vector<16x8xf32>
    %c0_74 = arith.constant 0 : index
    %c1_75 = arith.constant 1 : index
    %c0_76 = arith.constant 0 : index
    %c0_77 = arith.constant 0 : index
    %86 = vector.load %arg9[%c0_74, %c1_75, %c0_76, %c0_77] : memref<2x4x1x8xf32, #tpu.memory_space<vmem>>, vector<1x1x1x8xf32>
    %87 = vector.shape_cast %86 : vector<1x1x1x8xf32> to vector<1x8xf32>
    %88 = vector.broadcast %87 : vector<1x8xf32> to vector<16x8xf32>
    %89 = arith.addf %85, %88 : vector<16x8xf32>
    %90 = vector.extract_strided_slice %75 {offsets = [0, 0], sizes = [8, 8], strides = [1, 1]} : vector<16x8xf32> to vector<8x8xf32>
    %91 = vector.extract_strided_slice %82 {offsets = [0, 0], sizes = [8, 8], strides = [1, 1]} : vector<16x8xf32> to vector<8x8xf32>
    %92 = vector.extract_strided_slice %89 {offsets = [0, 0], sizes = [8, 8], strides = [1, 1]} : vector<16x8xf32> to vector<8x8xf32>
    %cst_78 = arith.constant dense<0.000000e+00> : vector<8x8xf32>
    %93 = tpu.matmul %90, %91, %cst_78 {dimension_numbers = #tpu.dot_dimension_numbers<[1], [1], [0], [0], [0, 0, 1, 0], [], []>} : vector<8x8xf32>, vector<8x8xf32>, vector<8x8xf32> -> vector<8x8xf32>
    %cst_79 = arith.constant 0.353553385 : f32
    %94 = vector.broadcast %cst_79 : f32 to vector<8x8xf32>
    %95 = arith.mulf %93, %94 : vector<8x8xf32>
    %cst_80 = arith.constant dense<0xFF800000> : vector<8xf32>
    %96 = vector.multi_reduction <maximumf>, %95, %cst_80 [1] : vector<8x8xf32> to vector<8xf32>
    %97 = vector.shape_cast %96 : vector<8xf32> to vector<8x1xf32>
    %98 = vector.broadcast %97 : vector<8x1xf32> to vector<8x8xf32>
    %99 = arith.subf %95, %98 : vector<8x8xf32>
    %100 = math.exp %99 : vector<8x8xf32>
    %cst_81 = arith.constant dense<0.000000e+00> : vector<8xf32>
    %101 = vector.multi_reduction <add>, %100, %cst_81 [1] : vector<8x8xf32> to vector<8xf32>
    %102 = vector.shape_cast %101 : vector<8xf32> to vector<8x1xf32>
    %103 = vector.broadcast %102 : vector<8x1xf32> to vector<8x8xf32>
    %104 = arith.divf %100, %103 : vector<8x8xf32>
    %cst_82 = arith.constant dense<0.000000e+00> : vector<8x8xf32>
    %105 = tpu.matmul %104, %92, %cst_82 {dimension_numbers = #tpu.dot_dimension_numbers<[1], [0], [0], [1], [0, 0, 1, 1], [], []>} : vector<8x8xf32>, vector<8x8xf32>, vector<8x8xf32> -> vector<8x8xf32>
    %106 = vector.extract_strided_slice %75 {offsets = [8, 0], sizes = [8, 8], strides = [1, 1]} : vector<16x8xf32> to vector<8x8xf32>
    %107 = vector.extract_strided_slice %82 {offsets = [8, 0], sizes = [8, 8], strides = [1, 1]} : vector<16x8xf32> to vector<8x8xf32>
    %108 = vector.extract_strided_slice %89 {offsets = [8, 0], sizes = [8, 8], strides = [1, 1]} : vector<16x8xf32> to vector<8x8xf32>
    %cst_83 = arith.constant dense<0.000000e+00> : vector<8x8xf32>
    %109 = tpu.matmul %106, %107, %cst_83 {dimension_numbers = #tpu.dot_dimension_numbers<[1], [1], [0], [0], [0, 0, 1, 0], [], []>} : vector<8x8xf32>, vector<8x8xf32>, vector<8x8xf32> -> vector<8x8xf32>
    %cst_84 = arith.constant 0.353553385 : f32
    %110 = vector.broadcast %cst_84 : f32 to vector<8x8xf32>
    %111 = arith.mulf %109, %110 : vector<8x8xf32>
    %cst_85 = arith.constant dense<0xFF800000> : vector<8xf32>
    %112 = vector.multi_reduction <maximumf>, %111, %cst_85 [1] : vector<8x8xf32> to vector<8xf32>
    %113 = vector.shape_cast %112 : vector<8xf32> to vector<8x1xf32>
    %114 = vector.broadcast %113 : vector<8x1xf32> to vector<8x8xf32>
    %115 = arith.subf %111, %114 : vector<8x8xf32>
    %116 = math.exp %115 : vector<8x8xf32>
    %cst_86 = arith.constant dense<0.000000e+00> : vector<8xf32>
    %117 = vector.multi_reduction <add>, %116, %cst_86 [1] : vector<8x8xf32> to vector<8xf32>
    %118 = vector.shape_cast %117 : vector<8xf32> to vector<8x1xf32>
    %119 = vector.broadcast %118 : vector<8x1xf32> to vector<8x8xf32>
    %120 = arith.divf %116, %119 : vector<8x8xf32>
    %cst_87 = arith.constant dense<0.000000e+00> : vector<8x8xf32>
    %121 = tpu.matmul %120, %108, %cst_87 {dimension_numbers = #tpu.dot_dimension_numbers<[1], [0], [0], [1], [0, 0, 1, 1], [], []>} : vector<8x8xf32>, vector<8x8xf32>, vector<8x8xf32> -> vector<8x8xf32>
    %122 = tpu.concatenate %105, %121 in 0 : vector<8x8xf32>, vector<8x8xf32> -> vector<16x8xf32>
    %c0_88 = arith.constant 0 : index
    %c1_89 = arith.constant 1 : index
    %c0_90 = arith.constant 0 : index
    %c0_91 = arith.constant 0 : index
    %123 = vector.load %arg10[%c0_88, %c1_89, %c0_90, %c0_91] : memref<2x4x8x32xf32, #tpu.memory_space<vmem>>, vector<1x1x8x32xf32>
    %124 = vector.shape_cast %123 : vector<1x1x8x32xf32> to vector<8x32xf32>
    %cst_92 = arith.constant dense<0.000000e+00> : vector<16x32xf32>
    %125 = tpu.matmul %122, %124, %cst_92 {dimension_numbers = #tpu.dot_dimension_numbers<[1], [0], [0], [1], [0, 0, 1, 1], [], []>} : vector<16x8xf32>, vector<8x32xf32>, vector<16x32xf32> -> vector<16x32xf32>
    %126 = arith.addf %68, %125 : vector<16x32xf32>
    %c0_93 = arith.constant 0 : index
    %c2 = arith.constant 2 : index
    %c0_94 = arith.constant 0 : index
    %c0_95 = arith.constant 0 : index
    %127 = vector.load %arg4[%c0_93, %c2, %c0_94, %c0_95] : memref<2x4x32x8xf32, #tpu.memory_space<vmem>>, vector<1x1x32x8xf32>
    %128 = vector.shape_cast %127 : vector<1x1x32x8xf32> to vector<32x8xf32>
    %cst_96 = arith.constant dense<0.000000e+00> : vector<16x8xf32>
    %129 = tpu.matmul %7, %128, %cst_96 {dimension_numbers = #tpu.dot_dimension_numbers<[1], [0], [0], [1], [0, 0, 1, 1], [], []>} : vector<16x32xf32>, vector<32x8xf32>, vector<16x8xf32> -> vector<16x8xf32>
    %c0_97 = arith.constant 0 : index
    %c2_98 = arith.constant 2 : index
    %c0_99 = arith.constant 0 : index
    %c0_100 = arith.constant 0 : index
    %130 = vector.load %arg5[%c0_97, %c2_98, %c0_99, %c0_100] : memref<2x4x1x8xf32, #tpu.memory_space<vmem>>, vector<1x1x1x8xf32>
    %131 = vector.shape_cast %130 : vector<1x1x1x8xf32> to vector<1x8xf32>
    %132 = vector.broadcast %131 : vector<1x8xf32> to vector<16x8xf32>
    %133 = arith.addf %129, %132 : vector<16x8xf32>
    %c0_101 = arith.constant 0 : index
    %c2_102 = arith.constant 2 : index
    %c0_103 = arith.constant 0 : index
    %c0_104 = arith.constant 0 : index
    %134 = vector.load %arg6[%c0_101, %c2_102, %c0_103, %c0_104] : memref<2x4x32x8xf32, #tpu.memory_space<vmem>>, vector<1x1x32x8xf32>
    %135 = vector.shape_cast %134 : vector<1x1x32x8xf32> to vector<32x8xf32>
    %cst_105 = arith.constant dense<0.000000e+00> : vector<16x8xf32>
    %136 = tpu.matmul %7, %135, %cst_105 {dimension_numbers = #tpu.dot_dimension_numbers<[1], [0], [0], [1], [0, 0, 1, 1], [], []>} : vector<16x32xf32>, vector<32x8xf32>, vector<16x8xf32> -> vector<16x8xf32>
    %c0_106 = arith.constant 0 : index
    %c2_107 = arith.constant 2 : index
    %c0_108 = arith.constant 0 : index
    %c0_109 = arith.constant 0 : index
    %137 = vector.load %arg7[%c0_106, %c2_107, %c0_108, %c0_109] : memref<2x4x1x8xf32, #tpu.memory_space<vmem>>, vector<1x1x1x8xf32>
    %138 = vector.shape_cast %137 : vector<1x1x1x8xf32> to vector<1x8xf32>
    %139 = vector.broadcast %138 : vector<1x8xf32> to vector<16x8xf32>
    %140 = arith.addf %136, %139 : vector<16x8xf32>
    %c0_110 = arith.constant 0 : index
    %c2_111 = arith.constant 2 : index
    %c0_112 = arith.constant 0 : index
    %c0_113 = arith.constant 0 : index
    %141 = vector.load %arg8[%c0_110, %c2_111, %c0_112, %c0_113] : memref<2x4x32x8xf32, #tpu.memory_space<vmem>>, vector<1x1x32x8xf32>
    %142 = vector.shape_cast %141 : vector<1x1x32x8xf32> to vector<32x8xf32>
    %cst_114 = arith.constant dense<0.000000e+00> : vector<16x8xf32>
    %143 = tpu.matmul %7, %142, %cst_114 {dimension_numbers = #tpu.dot_dimension_numbers<[1], [0], [0], [1], [0, 0, 1, 1], [], []>} : vector<16x32xf32>, vector<32x8xf32>, vector<16x8xf32> -> vector<16x8xf32>
    %c0_115 = arith.constant 0 : index
    %c2_116 = arith.constant 2 : index
    %c0_117 = arith.constant 0 : index
    %c0_118 = arith.constant 0 : index
    %144 = vector.load %arg9[%c0_115, %c2_116, %c0_117, %c0_118] : memref<2x4x1x8xf32, #tpu.memory_space<vmem>>, vector<1x1x1x8xf32>
    %145 = vector.shape_cast %144 : vector<1x1x1x8xf32> to vector<1x8xf32>
    %146 = vector.broadcast %145 : vector<1x8xf32> to vector<16x8xf32>
    %147 = arith.addf %143, %146 : vector<16x8xf32>
    %148 = vector.extract_strided_slice %133 {offsets = [0, 0], sizes = [8, 8], strides = [1, 1]} : vector<16x8xf32> to vector<8x8xf32>
    %149 = vector.extract_strided_slice %140 {offsets = [0, 0], sizes = [8, 8], strides = [1, 1]} : vector<16x8xf32> to vector<8x8xf32>
    %150 = vector.extract_strided_slice %147 {offsets = [0, 0], sizes = [8, 8], strides = [1, 1]} : vector<16x8xf32> to vector<8x8xf32>
    %cst_119 = arith.constant dense<0.000000e+00> : vector<8x8xf32>
    %151 = tpu.matmul %148, %149, %cst_119 {dimension_numbers = #tpu.dot_dimension_numbers<[1], [1], [0], [0], [0, 0, 1, 0], [], []>} : vector<8x8xf32>, vector<8x8xf32>, vector<8x8xf32> -> vector<8x8xf32>
    %cst_120 = arith.constant 0.353553385 : f32
    %152 = vector.broadcast %cst_120 : f32 to vector<8x8xf32>
    %153 = arith.mulf %151, %152 : vector<8x8xf32>
    %cst_121 = arith.constant dense<0xFF800000> : vector<8xf32>
    %154 = vector.multi_reduction <maximumf>, %153, %cst_121 [1] : vector<8x8xf32> to vector<8xf32>
    %155 = vector.shape_cast %154 : vector<8xf32> to vector<8x1xf32>
    %156 = vector.broadcast %155 : vector<8x1xf32> to vector<8x8xf32>
    %157 = arith.subf %153, %156 : vector<8x8xf32>
    %158 = math.exp %157 : vector<8x8xf32>
    %cst_122 = arith.constant dense<0.000000e+00> : vector<8xf32>
    %159 = vector.multi_reduction <add>, %158, %cst_122 [1] : vector<8x8xf32> to vector<8xf32>
    %160 = vector.shape_cast %159 : vector<8xf32> to vector<8x1xf32>
    %161 = vector.broadcast %160 : vector<8x1xf32> to vector<8x8xf32>
    %162 = arith.divf %158, %161 : vector<8x8xf32>
    %cst_123 = arith.constant dense<0.000000e+00> : vector<8x8xf32>
    %163 = tpu.matmul %162, %150, %cst_123 {dimension_numbers = #tpu.dot_dimension_numbers<[1], [0], [0], [1], [0, 0, 1, 1], [], []>} : vector<8x8xf32>, vector<8x8xf32>, vector<8x8xf32> -> vector<8x8xf32>
    %164 = vector.extract_strided_slice %133 {offsets = [8, 0], sizes = [8, 8], strides = [1, 1]} : vector<16x8xf32> to vector<8x8xf32>
    %165 = vector.extract_strided_slice %140 {offsets = [8, 0], sizes = [8, 8], strides = [1, 1]} : vector<16x8xf32> to vector<8x8xf32>
    %166 = vector.extract_strided_slice %147 {offsets = [8, 0], sizes = [8, 8], strides = [1, 1]} : vector<16x8xf32> to vector<8x8xf32>
    %cst_124 = arith.constant dense<0.000000e+00> : vector<8x8xf32>
    %167 = tpu.matmul %164, %165, %cst_124 {dimension_numbers = #tpu.dot_dimension_numbers<[1], [1], [0], [0], [0, 0, 1, 0], [], []>} : vector<8x8xf32>, vector<8x8xf32>, vector<8x8xf32> -> vector<8x8xf32>
    %cst_125 = arith.constant 0.353553385 : f32
    %168 = vector.broadcast %cst_125 : f32 to vector<8x8xf32>
    %169 = arith.mulf %167, %168 : vector<8x8xf32>
    %cst_126 = arith.constant dense<0xFF800000> : vector<8xf32>
    %170 = vector.multi_reduction <maximumf>, %169, %cst_126 [1] : vector<8x8xf32> to vector<8xf32>
    %171 = vector.shape_cast %170 : vector<8xf32> to vector<8x1xf32>
    %172 = vector.broadcast %171 : vector<8x1xf32> to vector<8x8xf32>
    %173 = arith.subf %169, %172 : vector<8x8xf32>
    %174 = math.exp %173 : vector<8x8xf32>
    %cst_127 = arith.constant dense<0.000000e+00> : vector<8xf32>
    %175 = vector.multi_reduction <add>, %174, %cst_127 [1] : vector<8x8xf32> to vector<8xf32>
    %176 = vector.shape_cast %175 : vector<8xf32> to vector<8x1xf32>
    %177 = vector.broadcast %176 : vector<8x1xf32> to vector<8x8xf32>
    %178 = arith.divf %174, %177 : vector<8x8xf32>
    %cst_128 = arith.constant dense<0.000000e+00> : vector<8x8xf32>
    %179 = tpu.matmul %178, %166, %cst_128 {dimension_numbers = #tpu.dot_dimension_numbers<[1], [0], [0], [1], [0, 0, 1, 1], [], []>} : vector<8x8xf32>, vector<8x8xf32>, vector<8x8xf32> -> vector<8x8xf32>
    %180 = tpu.concatenate %163, %179 in 0 : vector<8x8xf32>, vector<8x8xf32> -> vector<16x8xf32>
    %c0_129 = arith.constant 0 : index
    %c2_130 = arith.constant 2 : index
    %c0_131 = arith.constant 0 : index
    %c0_132 = arith.constant 0 : index
    %181 = vector.load %arg10[%c0_129, %c2_130, %c0_131, %c0_132] : memref<2x4x8x32xf32, #tpu.memory_space<vmem>>, vector<1x1x8x32xf32>
    %182 = vector.shape_cast %181 : vector<1x1x8x32xf32> to vector<8x32xf32>
    %cst_133 = arith.constant dense<0.000000e+00> : vector<16x32xf32>
    %183 = tpu.matmul %180, %182, %cst_133 {dimension_numbers = #tpu.dot_dimension_numbers<[1], [0], [0], [1], [0, 0, 1, 1], [], []>} : vector<16x8xf32>, vector<8x32xf32>, vector<16x32xf32> -> vector<16x32xf32>
    %184 = arith.addf %126, %183 : vector<16x32xf32>
    %c0_134 = arith.constant 0 : index
    %c3 = arith.constant 3 : index
    %c0_135 = arith.constant 0 : index
    %c0_136 = arith.constant 0 : index
    %185 = vector.load %arg4[%c0_134, %c3, %c0_135, %c0_136] : memref<2x4x32x8xf32, #tpu.memory_space<vmem>>, vector<1x1x32x8xf32>
    %186 = vector.shape_cast %185 : vector<1x1x32x8xf32> to vector<32x8xf32>
    %cst_137 = arith.constant dense<0.000000e+00> : vector<16x8xf32>
    %187 = tpu.matmul %7, %186, %cst_137 {dimension_numbers = #tpu.dot_dimension_numbers<[1], [0], [0], [1], [0, 0, 1, 1], [], []>} : vector<16x32xf32>, vector<32x8xf32>, vector<16x8xf32> -> vector<16x8xf32>
    %c0_138 = arith.constant 0 : index
    %c3_139 = arith.constant 3 : index
    %c0_140 = arith.constant 0 : index
    %c0_141 = arith.constant 0 : index
    %188 = vector.load %arg5[%c0_138, %c3_139, %c0_140, %c0_141] : memref<2x4x1x8xf32, #tpu.memory_space<vmem>>, vector<1x1x1x8xf32>
    %189 = vector.shape_cast %188 : vector<1x1x1x8xf32> to vector<1x8xf32>
    %190 = vector.broadcast %189 : vector<1x8xf32> to vector<16x8xf32>
    %191 = arith.addf %187, %190 : vector<16x8xf32>
    %c0_142 = arith.constant 0 : index
    %c3_143 = arith.constant 3 : index
    %c0_144 = arith.constant 0 : index
    %c0_145 = arith.constant 0 : index
    %192 = vector.load %arg6[%c0_142, %c3_143, %c0_144, %c0_145] : memref<2x4x32x8xf32, #tpu.memory_space<vmem>>, vector<1x1x32x8xf32>
    %193 = vector.shape_cast %192 : vector<1x1x32x8xf32> to vector<32x8xf32>
    %cst_146 = arith.constant dense<0.000000e+00> : vector<16x8xf32>
    %194 = tpu.matmul %7, %193, %cst_146 {dimension_numbers = #tpu.dot_dimension_numbers<[1], [0], [0], [1], [0, 0, 1, 1], [], []>} : vector<16x32xf32>, vector<32x8xf32>, vector<16x8xf32> -> vector<16x8xf32>
    %c0_147 = arith.constant 0 : index
    %c3_148 = arith.constant 3 : index
    %c0_149 = arith.constant 0 : index
    %c0_150 = arith.constant 0 : index
    %195 = vector.load %arg7[%c0_147, %c3_148, %c0_149, %c0_150] : memref<2x4x1x8xf32, #tpu.memory_space<vmem>>, vector<1x1x1x8xf32>
    %196 = vector.shape_cast %195 : vector<1x1x1x8xf32> to vector<1x8xf32>
    %197 = vector.broadcast %196 : vector<1x8xf32> to vector<16x8xf32>
    %198 = arith.addf %194, %197 : vector<16x8xf32>
    %c0_151 = arith.constant 0 : index
    %c3_152 = arith.constant 3 : index
    %c0_153 = arith.constant 0 : index
    %c0_154 = arith.constant 0 : index
    %199 = vector.load %arg8[%c0_151, %c3_152, %c0_153, %c0_154] : memref<2x4x32x8xf32, #tpu.memory_space<vmem>>, vector<1x1x32x8xf32>
    %200 = vector.shape_cast %199 : vector<1x1x32x8xf32> to vector<32x8xf32>
    %cst_155 = arith.constant dense<0.000000e+00> : vector<16x8xf32>
    %201 = tpu.matmul %7, %200, %cst_155 {dimension_numbers = #tpu.dot_dimension_numbers<[1], [0], [0], [1], [0, 0, 1, 1], [], []>} : vector<16x32xf32>, vector<32x8xf32>, vector<16x8xf32> -> vector<16x8xf32>
    %c0_156 = arith.constant 0 : index
    %c3_157 = arith.constant 3 : index
    %c0_158 = arith.constant 0 : index
    %c0_159 = arith.constant 0 : index
    %202 = vector.load %arg9[%c0_156, %c3_157, %c0_158, %c0_159] : memref<2x4x1x8xf32, #tpu.memory_space<vmem>>, vector<1x1x1x8xf32>
    %203 = vector.shape_cast %202 : vector<1x1x1x8xf32> to vector<1x8xf32>
    %204 = vector.broadcast %203 : vector<1x8xf32> to vector<16x8xf32>
    %205 = arith.addf %201, %204 : vector<16x8xf32>
    %206 = vector.extract_strided_slice %191 {offsets = [0, 0], sizes = [8, 8], strides = [1, 1]} : vector<16x8xf32> to vector<8x8xf32>
    %207 = vector.extract_strided_slice %198 {offsets = [0, 0], sizes = [8, 8], strides = [1, 1]} : vector<16x8xf32> to vector<8x8xf32>
    %208 = vector.extract_strided_slice %205 {offsets = [0, 0], sizes = [8, 8], strides = [1, 1]} : vector<16x8xf32> to vector<8x8xf32>
    %cst_160 = arith.constant dense<0.000000e+00> : vector<8x8xf32>
    %209 = tpu.matmul %206, %207, %cst_160 {dimension_numbers = #tpu.dot_dimension_numbers<[1], [1], [0], [0], [0, 0, 1, 0], [], []>} : vector<8x8xf32>, vector<8x8xf32>, vector<8x8xf32> -> vector<8x8xf32>
    %cst_161 = arith.constant 0.353553385 : f32
    %210 = vector.broadcast %cst_161 : f32 to vector<8x8xf32>
    %211 = arith.mulf %209, %210 : vector<8x8xf32>
    %cst_162 = arith.constant dense<0xFF800000> : vector<8xf32>
    %212 = vector.multi_reduction <maximumf>, %211, %cst_162 [1] : vector<8x8xf32> to vector<8xf32>
    %213 = vector.shape_cast %212 : vector<8xf32> to vector<8x1xf32>
    %214 = vector.broadcast %213 : vector<8x1xf32> to vector<8x8xf32>
    %215 = arith.subf %211, %214 : vector<8x8xf32>
    %216 = math.exp %215 : vector<8x8xf32>
    %cst_163 = arith.constant dense<0.000000e+00> : vector<8xf32>
    %217 = vector.multi_reduction <add>, %216, %cst_163 [1] : vector<8x8xf32> to vector<8xf32>
    %218 = vector.shape_cast %217 : vector<8xf32> to vector<8x1xf32>
    %219 = vector.broadcast %218 : vector<8x1xf32> to vector<8x8xf32>
    %220 = arith.divf %216, %219 : vector<8x8xf32>
    %cst_164 = arith.constant dense<0.000000e+00> : vector<8x8xf32>
    %221 = tpu.matmul %220, %208, %cst_164 {dimension_numbers = #tpu.dot_dimension_numbers<[1], [0], [0], [1], [0, 0, 1, 1], [], []>} : vector<8x8xf32>, vector<8x8xf32>, vector<8x8xf32> -> vector<8x8xf32>
    %222 = vector.extract_strided_slice %191 {offsets = [8, 0], sizes = [8, 8], strides = [1, 1]} : vector<16x8xf32> to vector<8x8xf32>
    %223 = vector.extract_strided_slice %198 {offsets = [8, 0], sizes = [8, 8], strides = [1, 1]} : vector<16x8xf32> to vector<8x8xf32>
    %224 = vector.extract_strided_slice %205 {offsets = [8, 0], sizes = [8, 8], strides = [1, 1]} : vector<16x8xf32> to vector<8x8xf32>
    %cst_165 = arith.constant dense<0.000000e+00> : vector<8x8xf32>
    %225 = tpu.matmul %222, %223, %cst_165 {dimension_numbers = #tpu.dot_dimension_numbers<[1], [1], [0], [0], [0, 0, 1, 0], [], []>} : vector<8x8xf32>, vector<8x8xf32>, vector<8x8xf32> -> vector<8x8xf32>
    %cst_166 = arith.constant 0.353553385 : f32
    %226 = vector.broadcast %cst_166 : f32 to vector<8x8xf32>
    %227 = arith.mulf %225, %226 : vector<8x8xf32>
    %cst_167 = arith.constant dense<0xFF800000> : vector<8xf32>
    %228 = vector.multi_reduction <maximumf>, %227, %cst_167 [1] : vector<8x8xf32> to vector<8xf32>
    %229 = vector.shape_cast %228 : vector<8xf32> to vector<8x1xf32>
    %230 = vector.broadcast %229 : vector<8x1xf32> to vector<8x8xf32>
    %231 = arith.subf %227, %230 : vector<8x8xf32>
    %232 = math.exp %231 : vector<8x8xf32>
    %cst_168 = arith.constant dense<0.000000e+00> : vector<8xf32>
    %233 = vector.multi_reduction <add>, %232, %cst_168 [1] : vector<8x8xf32> to vector<8xf32>
    %234 = vector.shape_cast %233 : vector<8xf32> to vector<8x1xf32>
    %235 = vector.broadcast %234 : vector<8x1xf32> to vector<8x8xf32>
    %236 = arith.divf %232, %235 : vector<8x8xf32>
    %cst_169 = arith.constant dense<0.000000e+00> : vector<8x8xf32>
    %237 = tpu.matmul %236, %224, %cst_169 {dimension_numbers = #tpu.dot_dimension_numbers<[1], [0], [0], [1], [0, 0, 1, 1], [], []>} : vector<8x8xf32>, vector<8x8xf32>, vector<8x8xf32> -> vector<8x8xf32>
    %238 = tpu.concatenate %221, %237 in 0 : vector<8x8xf32>, vector<8x8xf32> -> vector<16x8xf32>
    %c0_170 = arith.constant 0 : index
    %c3_171 = arith.constant 3 : index
    %c0_172 = arith.constant 0 : index
    %c0_173 = arith.constant 0 : index
    %239 = vector.load %arg10[%c0_170, %c3_171, %c0_172, %c0_173] : memref<2x4x8x32xf32, #tpu.memory_space<vmem>>, vector<1x1x8x32xf32>
    %240 = vector.shape_cast %239 : vector<1x1x8x32xf32> to vector<8x32xf32>
    %cst_174 = arith.constant dense<0.000000e+00> : vector<16x32xf32>
    %241 = tpu.matmul %238, %240, %cst_174 {dimension_numbers = #tpu.dot_dimension_numbers<[1], [0], [0], [1], [0, 0, 1, 1], [], []>} : vector<16x8xf32>, vector<8x32xf32>, vector<16x32xf32> -> vector<16x32xf32>
    %242 = arith.addf %184, %241 : vector<16x32xf32>
    %243 = arith.addf %7, %242 : vector<16x32xf32>
    %c0_175 = arith.constant 0 : index
    %c0_176 = arith.constant 0 : index
    %c0_177 = arith.constant 0 : index
    %244 = vector.load %arg12[%c0_175, %c0_176, %c0_177] : memref<2x1x32xf32, #tpu.memory_space<vmem>>, vector<1x1x32xf32>
    %245 = vector.shape_cast %244 : vector<1x1x32xf32> to vector<1x32xf32>
    %c0_178 = arith.constant 0 : index
    %c0_179 = arith.constant 0 : index
    %c0_180 = arith.constant 0 : index
    %246 = vector.load %arg13[%c0_178, %c0_179, %c0_180] : memref<2x1x32xf32, #tpu.memory_space<vmem>>, vector<1x1x32xf32>
    %247 = vector.shape_cast %246 : vector<1x1x32xf32> to vector<1x32xf32>
    %cst_181 = arith.constant dense<0.000000e+00> : vector<16xf32>
    %248 = vector.multi_reduction <add>, %243, %cst_181 [1] : vector<16x32xf32> to vector<16xf32>
    %249 = vector.shape_cast %248 : vector<16xf32> to vector<16x1xf32>
    %cst_182 = arith.constant 3.200000e+01 : f32
    %250 = vector.broadcast %cst_182 : f32 to vector<16x1xf32>
    %251 = arith.divf %249, %250 : vector<16x1xf32>
    %252 = vector.broadcast %251 : vector<16x1xf32> to vector<16x32xf32>
    %253 = arith.subf %243, %252 : vector<16x32xf32>
    %254 = arith.mulf %253, %253 : vector<16x32xf32>
    %cst_183 = arith.constant dense<0.000000e+00> : vector<16xf32>
    %255 = vector.multi_reduction <add>, %254, %cst_183 [1] : vector<16x32xf32> to vector<16xf32>
    %256 = vector.shape_cast %255 : vector<16xf32> to vector<16x1xf32>
    %cst_184 = arith.constant 3.200000e+01 : f32
    %257 = vector.broadcast %cst_184 : f32 to vector<16x1xf32>
    %258 = arith.divf %256, %257 : vector<16x1xf32>
    %259 = vector.broadcast %251 : vector<16x1xf32> to vector<16x32xf32>
    %260 = arith.subf %243, %259 : vector<16x32xf32>
    %cst_185 = arith.constant 9.99999974E-6 : f32
    %261 = vector.broadcast %cst_185 : f32 to vector<16x1xf32>
    %262 = arith.addf %258, %261 : vector<16x1xf32>
    %263 = math.rsqrt %262 : vector<16x1xf32>
    %264 = vector.broadcast %263 : vector<16x1xf32> to vector<16x32xf32>
    %265 = arith.mulf %260, %264 : vector<16x32xf32>
    %266 = vector.broadcast %245 : vector<1x32xf32> to vector<16x32xf32>
    %267 = arith.mulf %265, %266 : vector<16x32xf32>
    %268 = vector.broadcast %247 : vector<1x32xf32> to vector<16x32xf32>
    %269 = arith.addf %267, %268 : vector<16x32xf32>
    %270 = arith.truncf %269 : vector<16x32xf32> to vector<16x32xbf16>
    %c0_186 = arith.constant 0 : index
    %c0_187 = arith.constant 0 : index
    %c0_188 = arith.constant 0 : index
    %271 = vector.load %arg14[%c0_186, %c0_187, %c0_188] : memref<2x32x2048xbf16, #tpu.memory_space<vmem>>, vector<1x32x2048xbf16>
    %272 = vector.shape_cast %271 : vector<1x32x2048xbf16> to vector<32x2048xbf16>
    %cst_189 = arith.constant dense<0.000000e+00> : vector<16x2048xf32>
    %273 = tpu.matmul %270, %272, %cst_189 {dimension_numbers = #tpu.dot_dimension_numbers<[1], [0], [0], [1], [0, 0, 1, 1], [], []>} : vector<16x32xbf16>, vector<32x2048xbf16>, vector<16x2048xf32> -> vector<16x2048xf32>
    %c0_190 = arith.constant 0 : index
    %c0_191 = arith.constant 0 : index
    %c0_192 = arith.constant 0 : index
    %274 = vector.load %arg15[%c0_190, %c0_191, %c0_192] : memref<2x1x2048xf32, #tpu.memory_space<vmem>>, vector<1x1x2048xf32>
    %275 = vector.shape_cast %274 : vector<1x1x2048xf32> to vector<1x2048xf32>
    %276 = vector.broadcast %275 : vector<1x2048xf32> to vector<16x2048xf32>
    %277 = arith.addf %273, %276 : vector<16x2048xf32>
    %cst_193 = arith.constant 0.000000e+00 : f32
    %278 = vector.broadcast %cst_193 : f32 to vector<16x2048xf32>
    %279 = arith.maximumf %277, %278 : vector<16x2048xf32>
    %280 = arith.truncf %279 : vector<16x2048xf32> to vector<16x2048xbf16>
    %c0_194 = arith.constant 0 : index
    %c0_195 = arith.constant 0 : index
    %c0_196 = arith.constant 0 : index
    %281 = vector.load %arg16[%c0_194, %c0_195, %c0_196] : memref<2x2048x32xbf16, #tpu.memory_space<vmem>>, vector<1x2048x32xbf16>
    %282 = vector.shape_cast %281 : vector<1x2048x32xbf16> to vector<2048x32xbf16>
    %cst_197 = arith.constant dense<0.000000e+00> : vector<16x32xf32>
    %283 = tpu.matmul %280, %282, %cst_197 {dimension_numbers = #tpu.dot_dimension_numbers<[1], [0], [0], [1], [0, 0, 1, 1], [], []>} : vector<16x2048xbf16>, vector<2048x32xbf16>, vector<16x32xf32> -> vector<16x32xf32>
    %c0_198 = arith.constant 0 : index
    %c0_199 = arith.constant 0 : index
    %c0_200 = arith.constant 0 : index
    %284 = vector.load %arg17[%c0_198, %c0_199, %c0_200] : memref<2x1x32xf32, #tpu.memory_space<vmem>>, vector<1x1x32xf32>
    %285 = vector.shape_cast %284 : vector<1x1x32xf32> to vector<1x32xf32>
    %286 = vector.broadcast %285 : vector<1x32xf32> to vector<16x32xf32>
    %287 = arith.addf %283, %286 : vector<16x32xf32>
    %288 = arith.addf %269, %287 : vector<16x32xf32>
    %c0_201 = arith.constant 0 : index
    %c0_202 = arith.constant 0 : index
    %c0_203 = arith.constant 0 : index
    %289 = vector.load %arg18[%c0_201, %c0_202, %c0_203] : memref<2x1x32xf32, #tpu.memory_space<vmem>>, vector<1x1x32xf32>
    %290 = vector.shape_cast %289 : vector<1x1x32xf32> to vector<1x32xf32>
    %c0_204 = arith.constant 0 : index
    %c0_205 = arith.constant 0 : index
    %c0_206 = arith.constant 0 : index
    %291 = vector.load %arg19[%c0_204, %c0_205, %c0_206] : memref<2x1x32xf32, #tpu.memory_space<vmem>>, vector<1x1x32xf32>
    %292 = vector.shape_cast %291 : vector<1x1x32xf32> to vector<1x32xf32>
    %cst_207 = arith.constant dense<0.000000e+00> : vector<16xf32>
    %293 = vector.multi_reduction <add>, %288, %cst_207 [1] : vector<16x32xf32> to vector<16xf32>
    %294 = vector.shape_cast %293 : vector<16xf32> to vector<16x1xf32>
    %cst_208 = arith.constant 3.200000e+01 : f32
    %295 = vector.broadcast %cst_208 : f32 to vector<16x1xf32>
    %296 = arith.divf %294, %295 : vector<16x1xf32>
    %297 = vector.broadcast %296 : vector<16x1xf32> to vector<16x32xf32>
    %298 = arith.subf %288, %297 : vector<16x32xf32>
    %299 = arith.mulf %298, %298 : vector<16x32xf32>
    %cst_209 = arith.constant dense<0.000000e+00> : vector<16xf32>
    %300 = vector.multi_reduction <add>, %299, %cst_209 [1] : vector<16x32xf32> to vector<16xf32>
    %301 = vector.shape_cast %300 : vector<16xf32> to vector<16x1xf32>
    %cst_210 = arith.constant 3.200000e+01 : f32
    %302 = vector.broadcast %cst_210 : f32 to vector<16x1xf32>
    %303 = arith.divf %301, %302 : vector<16x1xf32>
    %304 = vector.broadcast %296 : vector<16x1xf32> to vector<16x32xf32>
    %305 = arith.subf %288, %304 : vector<16x32xf32>
    %cst_211 = arith.constant 9.99999974E-6 : f32
    %306 = vector.broadcast %cst_211 : f32 to vector<16x1xf32>
    %307 = arith.addf %303, %306 : vector<16x1xf32>
    %308 = math.rsqrt %307 : vector<16x1xf32>
    %309 = vector.broadcast %308 : vector<16x1xf32> to vector<16x32xf32>
    %310 = arith.mulf %305, %309 : vector<16x32xf32>
    %311 = vector.broadcast %290 : vector<1x32xf32> to vector<16x32xf32>
    %312 = arith.mulf %310, %311 : vector<16x32xf32>
    %313 = vector.broadcast %292 : vector<1x32xf32> to vector<16x32xf32>
    %314 = arith.addf %312, %313 : vector<16x32xf32>
    %c1_212 = arith.constant 1 : index
    %c0_213 = arith.constant 0 : index
    %c0_214 = arith.constant 0 : index
    %315 = vector.load %arg11[%c1_212, %c0_213, %c0_214] : memref<2x1x32xf32, #tpu.memory_space<vmem>>, vector<1x1x32xf32>
    %316 = vector.shape_cast %315 : vector<1x1x32xf32> to vector<1x32xf32>
    %c1_215 = arith.constant 1 : index
    %c0_216 = arith.constant 0 : index
    %c0_217 = arith.constant 0 : index
    %c0_218 = arith.constant 0 : index
    %317 = vector.load %arg4[%c1_215, %c0_216, %c0_217, %c0_218] : memref<2x4x32x8xf32, #tpu.memory_space<vmem>>, vector<1x1x32x8xf32>
    %318 = vector.shape_cast %317 : vector<1x1x32x8xf32> to vector<32x8xf32>
    %cst_219 = arith.constant dense<0.000000e+00> : vector<16x8xf32>
    %319 = tpu.matmul %314, %318, %cst_219 {dimension_numbers = #tpu.dot_dimension_numbers<[1], [0], [0], [1], [0, 0, 1, 1], [], []>} : vector<16x32xf32>, vector<32x8xf32>, vector<16x8xf32> -> vector<16x8xf32>
    %c1_220 = arith.constant 1 : index
    %c0_221 = arith.constant 0 : index
    %c0_222 = arith.constant 0 : index
    %c0_223 = arith.constant 0 : index
    %320 = vector.load %arg5[%c1_220, %c0_221, %c0_222, %c0_223] : memref<2x4x1x8xf32, #tpu.memory_space<vmem>>, vector<1x1x1x8xf32>
    %321 = vector.shape_cast %320 : vector<1x1x1x8xf32> to vector<1x8xf32>
    %322 = vector.broadcast %321 : vector<1x8xf32> to vector<16x8xf32>
    %323 = arith.addf %319, %322 : vector<16x8xf32>
    %c1_224 = arith.constant 1 : index
    %c0_225 = arith.constant 0 : index
    %c0_226 = arith.constant 0 : index
    %c0_227 = arith.constant 0 : index
    %324 = vector.load %arg6[%c1_224, %c0_225, %c0_226, %c0_227] : memref<2x4x32x8xf32, #tpu.memory_space<vmem>>, vector<1x1x32x8xf32>
    %325 = vector.shape_cast %324 : vector<1x1x32x8xf32> to vector<32x8xf32>
    %cst_228 = arith.constant dense<0.000000e+00> : vector<16x8xf32>
    %326 = tpu.matmul %314, %325, %cst_228 {dimension_numbers = #tpu.dot_dimension_numbers<[1], [0], [0], [1], [0, 0, 1, 1], [], []>} : vector<16x32xf32>, vector<32x8xf32>, vector<16x8xf32> -> vector<16x8xf32>
    %c1_229 = arith.constant 1 : index
    %c0_230 = arith.constant 0 : index
    %c0_231 = arith.constant 0 : index
    %c0_232 = arith.constant 0 : index
    %327 = vector.load %arg7[%c1_229, %c0_230, %c0_231, %c0_232] : memref<2x4x1x8xf32, #tpu.memory_space<vmem>>, vector<1x1x1x8xf32>
    %328 = vector.shape_cast %327 : vector<1x1x1x8xf32> to vector<1x8xf32>
    %329 = vector.broadcast %328 : vector<1x8xf32> to vector<16x8xf32>
    %330 = arith.addf %326, %329 : vector<16x8xf32>
    %c1_233 = arith.constant 1 : index
    %c0_234 = arith.constant 0 : index
    %c0_235 = arith.constant 0 : index
    %c0_236 = arith.constant 0 : index
    %331 = vector.load %arg8[%c1_233, %c0_234, %c0_235, %c0_236] : memref<2x4x32x8xf32, #tpu.memory_space<vmem>>, vector<1x1x32x8xf32>
    %332 = vector.shape_cast %331 : vector<1x1x32x8xf32> to vector<32x8xf32>
    %cst_237 = arith.constant dense<0.000000e+00> : vector<16x8xf32>
    %333 = tpu.matmul %314, %332, %cst_237 {dimension_numbers = #tpu.dot_dimension_numbers<[1], [0], [0], [1], [0, 0, 1, 1], [], []>} : vector<16x32xf32>, vector<32x8xf32>, vector<16x8xf32> -> vector<16x8xf32>
    %c1_238 = arith.constant 1 : index
    %c0_239 = arith.constant 0 : index
    %c0_240 = arith.constant 0 : index
    %c0_241 = arith.constant 0 : index
    %334 = vector.load %arg9[%c1_238, %c0_239, %c0_240, %c0_241] : memref<2x4x1x8xf32, #tpu.memory_space<vmem>>, vector<1x1x1x8xf32>
    %335 = vector.shape_cast %334 : vector<1x1x1x8xf32> to vector<1x8xf32>
    %336 = vector.broadcast %335 : vector<1x8xf32> to vector<16x8xf32>
    %337 = arith.addf %333, %336 : vector<16x8xf32>
    %338 = vector.extract_strided_slice %323 {offsets = [0, 0], sizes = [8, 8], strides = [1, 1]} : vector<16x8xf32> to vector<8x8xf32>
    %339 = vector.extract_strided_slice %330 {offsets = [0, 0], sizes = [8, 8], strides = [1, 1]} : vector<16x8xf32> to vector<8x8xf32>
    %340 = vector.extract_strided_slice %337 {offsets = [0, 0], sizes = [8, 8], strides = [1, 1]} : vector<16x8xf32> to vector<8x8xf32>
    %cst_242 = arith.constant dense<0.000000e+00> : vector<8x8xf32>
    %341 = tpu.matmul %338, %339, %cst_242 {dimension_numbers = #tpu.dot_dimension_numbers<[1], [1], [0], [0], [0, 0, 1, 0], [], []>} : vector<8x8xf32>, vector<8x8xf32>, vector<8x8xf32> -> vector<8x8xf32>
    %cst_243 = arith.constant 0.353553385 : f32
    %342 = vector.broadcast %cst_243 : f32 to vector<8x8xf32>
    %343 = arith.mulf %341, %342 : vector<8x8xf32>
    %cst_244 = arith.constant dense<0xFF800000> : vector<8xf32>
    %344 = vector.multi_reduction <maximumf>, %343, %cst_244 [1] : vector<8x8xf32> to vector<8xf32>
    %345 = vector.shape_cast %344 : vector<8xf32> to vector<8x1xf32>
    %346 = vector.broadcast %345 : vector<8x1xf32> to vector<8x8xf32>
    %347 = arith.subf %343, %346 : vector<8x8xf32>
    %348 = math.exp %347 : vector<8x8xf32>
    %cst_245 = arith.constant dense<0.000000e+00> : vector<8xf32>
    %349 = vector.multi_reduction <add>, %348, %cst_245 [1] : vector<8x8xf32> to vector<8xf32>
    %350 = vector.shape_cast %349 : vector<8xf32> to vector<8x1xf32>
    %351 = vector.broadcast %350 : vector<8x1xf32> to vector<8x8xf32>
    %352 = arith.divf %348, %351 : vector<8x8xf32>
    %cst_246 = arith.constant dense<0.000000e+00> : vector<8x8xf32>
    %353 = tpu.matmul %352, %340, %cst_246 {dimension_numbers = #tpu.dot_dimension_numbers<[1], [0], [0], [1], [0, 0, 1, 1], [], []>} : vector<8x8xf32>, vector<8x8xf32>, vector<8x8xf32> -> vector<8x8xf32>
    %354 = vector.extract_strided_slice %323 {offsets = [8, 0], sizes = [8, 8], strides = [1, 1]} : vector<16x8xf32> to vector<8x8xf32>
    %355 = vector.extract_strided_slice %330 {offsets = [8, 0], sizes = [8, 8], strides = [1, 1]} : vector<16x8xf32> to vector<8x8xf32>
    %356 = vector.extract_strided_slice %337 {offsets = [8, 0], sizes = [8, 8], strides = [1, 1]} : vector<16x8xf32> to vector<8x8xf32>
    %cst_247 = arith.constant dense<0.000000e+00> : vector<8x8xf32>
    %357 = tpu.matmul %354, %355, %cst_247 {dimension_numbers = #tpu.dot_dimension_numbers<[1], [1], [0], [0], [0, 0, 1, 0], [], []>} : vector<8x8xf32>, vector<8x8xf32>, vector<8x8xf32> -> vector<8x8xf32>
    %cst_248 = arith.constant 0.353553385 : f32
    %358 = vector.broadcast %cst_248 : f32 to vector<8x8xf32>
    %359 = arith.mulf %357, %358 : vector<8x8xf32>
    %cst_249 = arith.constant dense<0xFF800000> : vector<8xf32>
    %360 = vector.multi_reduction <maximumf>, %359, %cst_249 [1] : vector<8x8xf32> to vector<8xf32>
    %361 = vector.shape_cast %360 : vector<8xf32> to vector<8x1xf32>
    %362 = vector.broadcast %361 : vector<8x1xf32> to vector<8x8xf32>
    %363 = arith.subf %359, %362 : vector<8x8xf32>
    %364 = math.exp %363 : vector<8x8xf32>
    %cst_250 = arith.constant dense<0.000000e+00> : vector<8xf32>
    %365 = vector.multi_reduction <add>, %364, %cst_250 [1] : vector<8x8xf32> to vector<8xf32>
    %366 = vector.shape_cast %365 : vector<8xf32> to vector<8x1xf32>
    %367 = vector.broadcast %366 : vector<8x1xf32> to vector<8x8xf32>
    %368 = arith.divf %364, %367 : vector<8x8xf32>
    %cst_251 = arith.constant dense<0.000000e+00> : vector<8x8xf32>
    %369 = tpu.matmul %368, %356, %cst_251 {dimension_numbers = #tpu.dot_dimension_numbers<[1], [0], [0], [1], [0, 0, 1, 1], [], []>} : vector<8x8xf32>, vector<8x8xf32>, vector<8x8xf32> -> vector<8x8xf32>
    %370 = tpu.concatenate %353, %369 in 0 : vector<8x8xf32>, vector<8x8xf32> -> vector<16x8xf32>
    %c1_252 = arith.constant 1 : index
    %c0_253 = arith.constant 0 : index
    %c0_254 = arith.constant 0 : index
    %c0_255 = arith.constant 0 : index
    %371 = vector.load %arg10[%c1_252, %c0_253, %c0_254, %c0_255] : memref<2x4x8x32xf32, #tpu.memory_space<vmem>>, vector<1x1x8x32xf32>
    %372 = vector.shape_cast %371 : vector<1x1x8x32xf32> to vector<8x32xf32>
    %cst_256 = arith.constant dense<0.000000e+00> : vector<16x32xf32>
    %373 = tpu.matmul %370, %372, %cst_256 {dimension_numbers = #tpu.dot_dimension_numbers<[1], [0], [0], [1], [0, 0, 1, 1], [], []>} : vector<16x8xf32>, vector<8x32xf32>, vector<16x32xf32> -> vector<16x32xf32>
    %374 = vector.broadcast %316 : vector<1x32xf32> to vector<16x32xf32>
    %375 = arith.addf %374, %373 : vector<16x32xf32>
    %c1_257 = arith.constant 1 : index
    %c1_258 = arith.constant 1 : index
    %c0_259 = arith.constant 0 : index
    %c0_260 = arith.constant 0 : index
    %376 = vector.load %arg4[%c1_257, %c1_258, %c0_259, %c0_260] : memref<2x4x32x8xf32, #tpu.memory_space<vmem>>, vector<1x1x32x8xf32>
    %377 = vector.shape_cast %376 : vector<1x1x32x8xf32> to vector<32x8xf32>
    %cst_261 = arith.constant dense<0.000000e+00> : vector<16x8xf32>
    %378 = tpu.matmul %314, %377, %cst_261 {dimension_numbers = #tpu.dot_dimension_numbers<[1], [0], [0], [1], [0, 0, 1, 1], [], []>} : vector<16x32xf32>, vector<32x8xf32>, vector<16x8xf32> -> vector<16x8xf32>
    %c1_262 = arith.constant 1 : index
    %c1_263 = arith.constant 1 : index
    %c0_264 = arith.constant 0 : index
    %c0_265 = arith.constant 0 : index
    %379 = vector.load %arg5[%c1_262, %c1_263, %c0_264, %c0_265] : memref<2x4x1x8xf32, #tpu.memory_space<vmem>>, vector<1x1x1x8xf32>
    %380 = vector.shape_cast %379 : vector<1x1x1x8xf32> to vector<1x8xf32>
    %381 = vector.broadcast %380 : vector<1x8xf32> to vector<16x8xf32>
    %382 = arith.addf %378, %381 : vector<16x8xf32>
    %c1_266 = arith.constant 1 : index
    %c1_267 = arith.constant 1 : index
    %c0_268 = arith.constant 0 : index
    %c0_269 = arith.constant 0 : index
    %383 = vector.load %arg6[%c1_266, %c1_267, %c0_268, %c0_269] : memref<2x4x32x8xf32, #tpu.memory_space<vmem>>, vector<1x1x32x8xf32>
    %384 = vector.shape_cast %383 : vector<1x1x32x8xf32> to vector<32x8xf32>
    %cst_270 = arith.constant dense<0.000000e+00> : vector<16x8xf32>
    %385 = tpu.matmul %314, %384, %cst_270 {dimension_numbers = #tpu.dot_dimension_numbers<[1], [0], [0], [1], [0, 0, 1, 1], [], []>} : vector<16x32xf32>, vector<32x8xf32>, vector<16x8xf32> -> vector<16x8xf32>
    %c1_271 = arith.constant 1 : index
    %c1_272 = arith.constant 1 : index
    %c0_273 = arith.constant 0 : index
    %c0_274 = arith.constant 0 : index
    %386 = vector.load %arg7[%c1_271, %c1_272, %c0_273, %c0_274] : memref<2x4x1x8xf32, #tpu.memory_space<vmem>>, vector<1x1x1x8xf32>
    %387 = vector.shape_cast %386 : vector<1x1x1x8xf32> to vector<1x8xf32>
    %388 = vector.broadcast %387 : vector<1x8xf32> to vector<16x8xf32>
    %389 = arith.addf %385, %388 : vector<16x8xf32>
    %c1_275 = arith.constant 1 : index
    %c1_276 = arith.constant 1 : index
    %c0_277 = arith.constant 0 : index
    %c0_278 = arith.constant 0 : index
    %390 = vector.load %arg8[%c1_275, %c1_276, %c0_277, %c0_278] : memref<2x4x32x8xf32, #tpu.memory_space<vmem>>, vector<1x1x32x8xf32>
    %391 = vector.shape_cast %390 : vector<1x1x32x8xf32> to vector<32x8xf32>
    %cst_279 = arith.constant dense<0.000000e+00> : vector<16x8xf32>
    %392 = tpu.matmul %314, %391, %cst_279 {dimension_numbers = #tpu.dot_dimension_numbers<[1], [0], [0], [1], [0, 0, 1, 1], [], []>} : vector<16x32xf32>, vector<32x8xf32>, vector<16x8xf32> -> vector<16x8xf32>
    %c1_280 = arith.constant 1 : index
    %c1_281 = arith.constant 1 : index
    %c0_282 = arith.constant 0 : index
    %c0_283 = arith.constant 0 : index
    %393 = vector.load %arg9[%c1_280, %c1_281, %c0_282, %c0_283] : memref<2x4x1x8xf32, #tpu.memory_space<vmem>>, vector<1x1x1x8xf32>
    %394 = vector.shape_cast %393 : vector<1x1x1x8xf32> to vector<1x8xf32>
    %395 = vector.broadcast %394 : vector<1x8xf32> to vector<16x8xf32>
    %396 = arith.addf %392, %395 : vector<16x8xf32>
    %397 = vector.extract_strided_slice %382 {offsets = [0, 0], sizes = [8, 8], strides = [1, 1]} : vector<16x8xf32> to vector<8x8xf32>
    %398 = vector.extract_strided_slice %389 {offsets = [0, 0], sizes = [8, 8], strides = [1, 1]} : vector<16x8xf32> to vector<8x8xf32>
    %399 = vector.extract_strided_slice %396 {offsets = [0, 0], sizes = [8, 8], strides = [1, 1]} : vector<16x8xf32> to vector<8x8xf32>
    %cst_284 = arith.constant dense<0.000000e+00> : vector<8x8xf32>
    %400 = tpu.matmul %397, %398, %cst_284 {dimension_numbers = #tpu.dot_dimension_numbers<[1], [1], [0], [0], [0, 0, 1, 0], [], []>} : vector<8x8xf32>, vector<8x8xf32>, vector<8x8xf32> -> vector<8x8xf32>
    %cst_285 = arith.constant 0.353553385 : f32
    %401 = vector.broadcast %cst_285 : f32 to vector<8x8xf32>
    %402 = arith.mulf %400, %401 : vector<8x8xf32>
    %cst_286 = arith.constant dense<0xFF800000> : vector<8xf32>
    %403 = vector.multi_reduction <maximumf>, %402, %cst_286 [1] : vector<8x8xf32> to vector<8xf32>
    %404 = vector.shape_cast %403 : vector<8xf32> to vector<8x1xf32>
    %405 = vector.broadcast %404 : vector<8x1xf32> to vector<8x8xf32>
    %406 = arith.subf %402, %405 : vector<8x8xf32>
    %407 = math.exp %406 : vector<8x8xf32>
    %cst_287 = arith.constant dense<0.000000e+00> : vector<8xf32>
    %408 = vector.multi_reduction <add>, %407, %cst_287 [1] : vector<8x8xf32> to vector<8xf32>
    %409 = vector.shape_cast %408 : vector<8xf32> to vector<8x1xf32>
    %410 = vector.broadcast %409 : vector<8x1xf32> to vector<8x8xf32>
    %411 = arith.divf %407, %410 : vector<8x8xf32>
    %cst_288 = arith.constant dense<0.000000e+00> : vector<8x8xf32>
    %412 = tpu.matmul %411, %399, %cst_288 {dimension_numbers = #tpu.dot_dimension_numbers<[1], [0], [0], [1], [0, 0, 1, 1], [], []>} : vector<8x8xf32>, vector<8x8xf32>, vector<8x8xf32> -> vector<8x8xf32>
    %413 = vector.extract_strided_slice %382 {offsets = [8, 0], sizes = [8, 8], strides = [1, 1]} : vector<16x8xf32> to vector<8x8xf32>
    %414 = vector.extract_strided_slice %389 {offsets = [8, 0], sizes = [8, 8], strides = [1, 1]} : vector<16x8xf32> to vector<8x8xf32>
    %415 = vector.extract_strided_slice %396 {offsets = [8, 0], sizes = [8, 8], strides = [1, 1]} : vector<16x8xf32> to vector<8x8xf32>
    %cst_289 = arith.constant dense<0.000000e+00> : vector<8x8xf32>
    %416 = tpu.matmul %413, %414, %cst_289 {dimension_numbers = #tpu.dot_dimension_numbers<[1], [1], [0], [0], [0, 0, 1, 0], [], []>} : vector<8x8xf32>, vector<8x8xf32>, vector<8x8xf32> -> vector<8x8xf32>
    %cst_290 = arith.constant 0.353553385 : f32
    %417 = vector.broadcast %cst_290 : f32 to vector<8x8xf32>
    %418 = arith.mulf %416, %417 : vector<8x8xf32>
    %cst_291 = arith.constant dense<0xFF800000> : vector<8xf32>
    %419 = vector.multi_reduction <maximumf>, %418, %cst_291 [1] : vector<8x8xf32> to vector<8xf32>
    %420 = vector.shape_cast %419 : vector<8xf32> to vector<8x1xf32>
    %421 = vector.broadcast %420 : vector<8x1xf32> to vector<8x8xf32>
    %422 = arith.subf %418, %421 : vector<8x8xf32>
    %423 = math.exp %422 : vector<8x8xf32>
    %cst_292 = arith.constant dense<0.000000e+00> : vector<8xf32>
    %424 = vector.multi_reduction <add>, %423, %cst_292 [1] : vector<8x8xf32> to vector<8xf32>
    %425 = vector.shape_cast %424 : vector<8xf32> to vector<8x1xf32>
    %426 = vector.broadcast %425 : vector<8x1xf32> to vector<8x8xf32>
    %427 = arith.divf %423, %426 : vector<8x8xf32>
    %cst_293 = arith.constant dense<0.000000e+00> : vector<8x8xf32>
    %428 = tpu.matmul %427, %415, %cst_293 {dimension_numbers = #tpu.dot_dimension_numbers<[1], [0], [0], [1], [0, 0, 1, 1], [], []>} : vector<8x8xf32>, vector<8x8xf32>, vector<8x8xf32> -> vector<8x8xf32>
    %429 = tpu.concatenate %412, %428 in 0 : vector<8x8xf32>, vector<8x8xf32> -> vector<16x8xf32>
    %c1_294 = arith.constant 1 : index
    %c1_295 = arith.constant 1 : index
    %c0_296 = arith.constant 0 : index
    %c0_297 = arith.constant 0 : index
    %430 = vector.load %arg10[%c1_294, %c1_295, %c0_296, %c0_297] : memref<2x4x8x32xf32, #tpu.memory_space<vmem>>, vector<1x1x8x32xf32>
    %431 = vector.shape_cast %430 : vector<1x1x8x32xf32> to vector<8x32xf32>
    %cst_298 = arith.constant dense<0.000000e+00> : vector<16x32xf32>
    %432 = tpu.matmul %429, %431, %cst_298 {dimension_numbers = #tpu.dot_dimension_numbers<[1], [0], [0], [1], [0, 0, 1, 1], [], []>} : vector<16x8xf32>, vector<8x32xf32>, vector<16x32xf32> -> vector<16x32xf32>
    %433 = arith.addf %375, %432 : vector<16x32xf32>
    %c1_299 = arith.constant 1 : index
    %c2_300 = arith.constant 2 : index
    %c0_301 = arith.constant 0 : index
    %c0_302 = arith.constant 0 : index
    %434 = vector.load %arg4[%c1_299, %c2_300, %c0_301, %c0_302] : memref<2x4x32x8xf32, #tpu.memory_space<vmem>>, vector<1x1x32x8xf32>
    %435 = vector.shape_cast %434 : vector<1x1x32x8xf32> to vector<32x8xf32>
    %cst_303 = arith.constant dense<0.000000e+00> : vector<16x8xf32>
    %436 = tpu.matmul %314, %435, %cst_303 {dimension_numbers = #tpu.dot_dimension_numbers<[1], [0], [0], [1], [0, 0, 1, 1], [], []>} : vector<16x32xf32>, vector<32x8xf32>, vector<16x8xf32> -> vector<16x8xf32>
    %c1_304 = arith.constant 1 : index
    %c2_305 = arith.constant 2 : index
    %c0_306 = arith.constant 0 : index
    %c0_307 = arith.constant 0 : index
    %437 = vector.load %arg5[%c1_304, %c2_305, %c0_306, %c0_307] : memref<2x4x1x8xf32, #tpu.memory_space<vmem>>, vector<1x1x1x8xf32>
    %438 = vector.shape_cast %437 : vector<1x1x1x8xf32> to vector<1x8xf32>
    %439 = vector.broadcast %438 : vector<1x8xf32> to vector<16x8xf32>
    %440 = arith.addf %436, %439 : vector<16x8xf32>
    %c1_308 = arith.constant 1 : index
    %c2_309 = arith.constant 2 : index
    %c0_310 = arith.constant 0 : index
    %c0_311 = arith.constant 0 : index
    %441 = vector.load %arg6[%c1_308, %c2_309, %c0_310, %c0_311] : memref<2x4x32x8xf32, #tpu.memory_space<vmem>>, vector<1x1x32x8xf32>
    %442 = vector.shape_cast %441 : vector<1x1x32x8xf32> to vector<32x8xf32>
    %cst_312 = arith.constant dense<0.000000e+00> : vector<16x8xf32>
    %443 = tpu.matmul %314, %442, %cst_312 {dimension_numbers = #tpu.dot_dimension_numbers<[1], [0], [0], [1], [0, 0, 1, 1], [], []>} : vector<16x32xf32>, vector<32x8xf32>, vector<16x8xf32> -> vector<16x8xf32>
    %c1_313 = arith.constant 1 : index
    %c2_314 = arith.constant 2 : index
    %c0_315 = arith.constant 0 : index
    %c0_316 = arith.constant 0 : index
    %444 = vector.load %arg7[%c1_313, %c2_314, %c0_315, %c0_316] : memref<2x4x1x8xf32, #tpu.memory_space<vmem>>, vector<1x1x1x8xf32>
    %445 = vector.shape_cast %444 : vector<1x1x1x8xf32> to vector<1x8xf32>
    %446 = vector.broadcast %445 : vector<1x8xf32> to vector<16x8xf32>
    %447 = arith.addf %443, %446 : vector<16x8xf32>
    %c1_317 = arith.constant 1 : index
    %c2_318 = arith.constant 2 : index
    %c0_319 = arith.constant 0 : index
    %c0_320 = arith.constant 0 : index
    %448 = vector.load %arg8[%c1_317, %c2_318, %c0_319, %c0_320] : memref<2x4x32x8xf32, #tpu.memory_space<vmem>>, vector<1x1x32x8xf32>
    %449 = vector.shape_cast %448 : vector<1x1x32x8xf32> to vector<32x8xf32>
    %cst_321 = arith.constant dense<0.000000e+00> : vector<16x8xf32>
    %450 = tpu.matmul %314, %449, %cst_321 {dimension_numbers = #tpu.dot_dimension_numbers<[1], [0], [0], [1], [0, 0, 1, 1], [], []>} : vector<16x32xf32>, vector<32x8xf32>, vector<16x8xf32> -> vector<16x8xf32>
    %c1_322 = arith.constant 1 : index
    %c2_323 = arith.constant 2 : index
    %c0_324 = arith.constant 0 : index
    %c0_325 = arith.constant 0 : index
    %451 = vector.load %arg9[%c1_322, %c2_323, %c0_324, %c0_325] : memref<2x4x1x8xf32, #tpu.memory_space<vmem>>, vector<1x1x1x8xf32>
    %452 = vector.shape_cast %451 : vector<1x1x1x8xf32> to vector<1x8xf32>
    %453 = vector.broadcast %452 : vector<1x8xf32> to vector<16x8xf32>
    %454 = arith.addf %450, %453 : vector<16x8xf32>
    %455 = vector.extract_strided_slice %440 {offsets = [0, 0], sizes = [8, 8], strides = [1, 1]} : vector<16x8xf32> to vector<8x8xf32>
    %456 = vector.extract_strided_slice %447 {offsets = [0, 0], sizes = [8, 8], strides = [1, 1]} : vector<16x8xf32> to vector<8x8xf32>
    %457 = vector.extract_strided_slice %454 {offsets = [0, 0], sizes = [8, 8], strides = [1, 1]} : vector<16x8xf32> to vector<8x8xf32>
    %cst_326 = arith.constant dense<0.000000e+00> : vector<8x8xf32>
    %458 = tpu.matmul %455, %456, %cst_326 {dimension_numbers = #tpu.dot_dimension_numbers<[1], [1], [0], [0], [0, 0, 1, 0], [], []>} : vector<8x8xf32>, vector<8x8xf32>, vector<8x8xf32> -> vector<8x8xf32>
    %cst_327 = arith.constant 0.353553385 : f32
    %459 = vector.broadcast %cst_327 : f32 to vector<8x8xf32>
    %460 = arith.mulf %458, %459 : vector<8x8xf32>
    %cst_328 = arith.constant dense<0xFF800000> : vector<8xf32>
    %461 = vector.multi_reduction <maximumf>, %460, %cst_328 [1] : vector<8x8xf32> to vector<8xf32>
    %462 = vector.shape_cast %461 : vector<8xf32> to vector<8x1xf32>
    %463 = vector.broadcast %462 : vector<8x1xf32> to vector<8x8xf32>
    %464 = arith.subf %460, %463 : vector<8x8xf32>
    %465 = math.exp %464 : vector<8x8xf32>
    %cst_329 = arith.constant dense<0.000000e+00> : vector<8xf32>
    %466 = vector.multi_reduction <add>, %465, %cst_329 [1] : vector<8x8xf32> to vector<8xf32>
    %467 = vector.shape_cast %466 : vector<8xf32> to vector<8x1xf32>
    %468 = vector.broadcast %467 : vector<8x1xf32> to vector<8x8xf32>
    %469 = arith.divf %465, %468 : vector<8x8xf32>
    %cst_330 = arith.constant dense<0.000000e+00> : vector<8x8xf32>
    %470 = tpu.matmul %469, %457, %cst_330 {dimension_numbers = #tpu.dot_dimension_numbers<[1], [0], [0], [1], [0, 0, 1, 1], [], []>} : vector<8x8xf32>, vector<8x8xf32>, vector<8x8xf32> -> vector<8x8xf32>
    %471 = vector.extract_strided_slice %440 {offsets = [8, 0], sizes = [8, 8], strides = [1, 1]} : vector<16x8xf32> to vector<8x8xf32>
    %472 = vector.extract_strided_slice %447 {offsets = [8, 0], sizes = [8, 8], strides = [1, 1]} : vector<16x8xf32> to vector<8x8xf32>
    %473 = vector.extract_strided_slice %454 {offsets = [8, 0], sizes = [8, 8], strides = [1, 1]} : vector<16x8xf32> to vector<8x8xf32>
    %cst_331 = arith.constant dense<0.000000e+00> : vector<8x8xf32>
    %474 = tpu.matmul %471, %472, %cst_331 {dimension_numbers = #tpu.dot_dimension_numbers<[1], [1], [0], [0], [0, 0, 1, 0], [], []>} : vector<8x8xf32>, vector<8x8xf32>, vector<8x8xf32> -> vector<8x8xf32>
    %cst_332 = arith.constant 0.353553385 : f32
    %475 = vector.broadcast %cst_332 : f32 to vector<8x8xf32>
    %476 = arith.mulf %474, %475 : vector<8x8xf32>
    %cst_333 = arith.constant dense<0xFF800000> : vector<8xf32>
    %477 = vector.multi_reduction <maximumf>, %476, %cst_333 [1] : vector<8x8xf32> to vector<8xf32>
    %478 = vector.shape_cast %477 : vector<8xf32> to vector<8x1xf32>
    %479 = vector.broadcast %478 : vector<8x1xf32> to vector<8x8xf32>
    %480 = arith.subf %476, %479 : vector<8x8xf32>
    %481 = math.exp %480 : vector<8x8xf32>
    %cst_334 = arith.constant dense<0.000000e+00> : vector<8xf32>
    %482 = vector.multi_reduction <add>, %481, %cst_334 [1] : vector<8x8xf32> to vector<8xf32>
    %483 = vector.shape_cast %482 : vector<8xf32> to vector<8x1xf32>
    %484 = vector.broadcast %483 : vector<8x1xf32> to vector<8x8xf32>
    %485 = arith.divf %481, %484 : vector<8x8xf32>
    %cst_335 = arith.constant dense<0.000000e+00> : vector<8x8xf32>
    %486 = tpu.matmul %485, %473, %cst_335 {dimension_numbers = #tpu.dot_dimension_numbers<[1], [0], [0], [1], [0, 0, 1, 1], [], []>} : vector<8x8xf32>, vector<8x8xf32>, vector<8x8xf32> -> vector<8x8xf32>
    %487 = tpu.concatenate %470, %486 in 0 : vector<8x8xf32>, vector<8x8xf32> -> vector<16x8xf32>
    %c1_336 = arith.constant 1 : index
    %c2_337 = arith.constant 2 : index
    %c0_338 = arith.constant 0 : index
    %c0_339 = arith.constant 0 : index
    %488 = vector.load %arg10[%c1_336, %c2_337, %c0_338, %c0_339] : memref<2x4x8x32xf32, #tpu.memory_space<vmem>>, vector<1x1x8x32xf32>
    %489 = vector.shape_cast %488 : vector<1x1x8x32xf32> to vector<8x32xf32>
    %cst_340 = arith.constant dense<0.000000e+00> : vector<16x32xf32>
    %490 = tpu.matmul %487, %489, %cst_340 {dimension_numbers = #tpu.dot_dimension_numbers<[1], [0], [0], [1], [0, 0, 1, 1], [], []>} : vector<16x8xf32>, vector<8x32xf32>, vector<16x32xf32> -> vector<16x32xf32>
    %491 = arith.addf %433, %490 : vector<16x32xf32>
    %c1_341 = arith.constant 1 : index
    %c3_342 = arith.constant 3 : index
    %c0_343 = arith.constant 0 : index
    %c0_344 = arith.constant 0 : index
    %492 = vector.load %arg4[%c1_341, %c3_342, %c0_343, %c0_344] : memref<2x4x32x8xf32, #tpu.memory_space<vmem>>, vector<1x1x32x8xf32>
    %493 = vector.shape_cast %492 : vector<1x1x32x8xf32> to vector<32x8xf32>
    %cst_345 = arith.constant dense<0.000000e+00> : vector<16x8xf32>
    %494 = tpu.matmul %314, %493, %cst_345 {dimension_numbers = #tpu.dot_dimension_numbers<[1], [0], [0], [1], [0, 0, 1, 1], [], []>} : vector<16x32xf32>, vector<32x8xf32>, vector<16x8xf32> -> vector<16x8xf32>
    %c1_346 = arith.constant 1 : index
    %c3_347 = arith.constant 3 : index
    %c0_348 = arith.constant 0 : index
    %c0_349 = arith.constant 0 : index
    %495 = vector.load %arg5[%c1_346, %c3_347, %c0_348, %c0_349] : memref<2x4x1x8xf32, #tpu.memory_space<vmem>>, vector<1x1x1x8xf32>
    %496 = vector.shape_cast %495 : vector<1x1x1x8xf32> to vector<1x8xf32>
    %497 = vector.broadcast %496 : vector<1x8xf32> to vector<16x8xf32>
    %498 = arith.addf %494, %497 : vector<16x8xf32>
    %c1_350 = arith.constant 1 : index
    %c3_351 = arith.constant 3 : index
    %c0_352 = arith.constant 0 : index
    %c0_353 = arith.constant 0 : index
    %499 = vector.load %arg6[%c1_350, %c3_351, %c0_352, %c0_353] : memref<2x4x32x8xf32, #tpu.memory_space<vmem>>, vector<1x1x32x8xf32>
    %500 = vector.shape_cast %499 : vector<1x1x32x8xf32> to vector<32x8xf32>
    %cst_354 = arith.constant dense<0.000000e+00> : vector<16x8xf32>
    %501 = tpu.matmul %314, %500, %cst_354 {dimension_numbers = #tpu.dot_dimension_numbers<[1], [0], [0], [1], [0, 0, 1, 1], [], []>} : vector<16x32xf32>, vector<32x8xf32>, vector<16x8xf32> -> vector<16x8xf32>
    %c1_355 = arith.constant 1 : index
    %c3_356 = arith.constant 3 : index
    %c0_357 = arith.constant 0 : index
    %c0_358 = arith.constant 0 : index
    %502 = vector.load %arg7[%c1_355, %c3_356, %c0_357, %c0_358] : memref<2x4x1x8xf32, #tpu.memory_space<vmem>>, vector<1x1x1x8xf32>
    %503 = vector.shape_cast %502 : vector<1x1x1x8xf32> to vector<1x8xf32>
    %504 = vector.broadcast %503 : vector<1x8xf32> to vector<16x8xf32>
    %505 = arith.addf %501, %504 : vector<16x8xf32>
    %c1_359 = arith.constant 1 : index
    %c3_360 = arith.constant 3 : index
    %c0_361 = arith.constant 0 : index
    %c0_362 = arith.constant 0 : index
    %506 = vector.load %arg8[%c1_359, %c3_360, %c0_361, %c0_362] : memref<2x4x32x8xf32, #tpu.memory_space<vmem>>, vector<1x1x32x8xf32>
    %507 = vector.shape_cast %506 : vector<1x1x32x8xf32> to vector<32x8xf32>
    %cst_363 = arith.constant dense<0.000000e+00> : vector<16x8xf32>
    %508 = tpu.matmul %314, %507, %cst_363 {dimension_numbers = #tpu.dot_dimension_numbers<[1], [0], [0], [1], [0, 0, 1, 1], [], []>} : vector<16x32xf32>, vector<32x8xf32>, vector<16x8xf32> -> vector<16x8xf32>
    %c1_364 = arith.constant 1 : index
    %c3_365 = arith.constant 3 : index
    %c0_366 = arith.constant 0 : index
    %c0_367 = arith.constant 0 : index
    %509 = vector.load %arg9[%c1_364, %c3_365, %c0_366, %c0_367] : memref<2x4x1x8xf32, #tpu.memory_space<vmem>>, vector<1x1x1x8xf32>
    %510 = vector.shape_cast %509 : vector<1x1x1x8xf32> to vector<1x8xf32>
    %511 = vector.broadcast %510 : vector<1x8xf32> to vector<16x8xf32>
    %512 = arith.addf %508, %511 : vector<16x8xf32>
    %513 = vector.extract_strided_slice %498 {offsets = [0, 0], sizes = [8, 8], strides = [1, 1]} : vector<16x8xf32> to vector<8x8xf32>
    %514 = vector.extract_strided_slice %505 {offsets = [0, 0], sizes = [8, 8], strides = [1, 1]} : vector<16x8xf32> to vector<8x8xf32>
    %515 = vector.extract_strided_slice %512 {offsets = [0, 0], sizes = [8, 8], strides = [1, 1]} : vector<16x8xf32> to vector<8x8xf32>
    %cst_368 = arith.constant dense<0.000000e+00> : vector<8x8xf32>
    %516 = tpu.matmul %513, %514, %cst_368 {dimension_numbers = #tpu.dot_dimension_numbers<[1], [1], [0], [0], [0, 0, 1, 0], [], []>} : vector<8x8xf32>, vector<8x8xf32>, vector<8x8xf32> -> vector<8x8xf32>
    %cst_369 = arith.constant 0.353553385 : f32
    %517 = vector.broadcast %cst_369 : f32 to vector<8x8xf32>
    %518 = arith.mulf %516, %517 : vector<8x8xf32>
    %cst_370 = arith.constant dense<0xFF800000> : vector<8xf32>
    %519 = vector.multi_reduction <maximumf>, %518, %cst_370 [1] : vector<8x8xf32> to vector<8xf32>
    %520 = vector.shape_cast %519 : vector<8xf32> to vector<8x1xf32>
    %521 = vector.broadcast %520 : vector<8x1xf32> to vector<8x8xf32>
    %522 = arith.subf %518, %521 : vector<8x8xf32>
    %523 = math.exp %522 : vector<8x8xf32>
    %cst_371 = arith.constant dense<0.000000e+00> : vector<8xf32>
    %524 = vector.multi_reduction <add>, %523, %cst_371 [1] : vector<8x8xf32> to vector<8xf32>
    %525 = vector.shape_cast %524 : vector<8xf32> to vector<8x1xf32>
    %526 = vector.broadcast %525 : vector<8x1xf32> to vector<8x8xf32>
    %527 = arith.divf %523, %526 : vector<8x8xf32>
    %cst_372 = arith.constant dense<0.000000e+00> : vector<8x8xf32>
    %528 = tpu.matmul %527, %515, %cst_372 {dimension_numbers = #tpu.dot_dimension_numbers<[1], [0], [0], [1], [0, 0, 1, 1], [], []>} : vector<8x8xf32>, vector<8x8xf32>, vector<8x8xf32> -> vector<8x8xf32>
    %529 = vector.extract_strided_slice %498 {offsets = [8, 0], sizes = [8, 8], strides = [1, 1]} : vector<16x8xf32> to vector<8x8xf32>
    %530 = vector.extract_strided_slice %505 {offsets = [8, 0], sizes = [8, 8], strides = [1, 1]} : vector<16x8xf32> to vector<8x8xf32>
    %531 = vector.extract_strided_slice %512 {offsets = [8, 0], sizes = [8, 8], strides = [1, 1]} : vector<16x8xf32> to vector<8x8xf32>
    %cst_373 = arith.constant dense<0.000000e+00> : vector<8x8xf32>
    %532 = tpu.matmul %529, %530, %cst_373 {dimension_numbers = #tpu.dot_dimension_numbers<[1], [1], [0], [0], [0, 0, 1, 0], [], []>} : vector<8x8xf32>, vector<8x8xf32>, vector<8x8xf32> -> vector<8x8xf32>
    %cst_374 = arith.constant 0.353553385 : f32
    %533 = vector.broadcast %cst_374 : f32 to vector<8x8xf32>
    %534 = arith.mulf %532, %533 : vector<8x8xf32>
    %cst_375 = arith.constant dense<0xFF800000> : vector<8xf32>
    %535 = vector.multi_reduction <maximumf>, %534, %cst_375 [1] : vector<8x8xf32> to vector<8xf32>
    %536 = vector.shape_cast %535 : vector<8xf32> to vector<8x1xf32>
    %537 = vector.broadcast %536 : vector<8x1xf32> to vector<8x8xf32>
    %538 = arith.subf %534, %537 : vector<8x8xf32>
    %539 = math.exp %538 : vector<8x8xf32>
    %cst_376 = arith.constant dense<0.000000e+00> : vector<8xf32>
    %540 = vector.multi_reduction <add>, %539, %cst_376 [1] : vector<8x8xf32> to vector<8xf32>
    %541 = vector.shape_cast %540 : vector<8xf32> to vector<8x1xf32>
    %542 = vector.broadcast %541 : vector<8x1xf32> to vector<8x8xf32>
    %543 = arith.divf %539, %542 : vector<8x8xf32>
    %cst_377 = arith.constant dense<0.000000e+00> : vector<8x8xf32>
    %544 = tpu.matmul %543, %531, %cst_377 {dimension_numbers = #tpu.dot_dimension_numbers<[1], [0], [0], [1], [0, 0, 1, 1], [], []>} : vector<8x8xf32>, vector<8x8xf32>, vector<8x8xf32> -> vector<8x8xf32>
    %545 = tpu.concatenate %528, %544 in 0 : vector<8x8xf32>, vector<8x8xf32> -> vector<16x8xf32>
    %c1_378 = arith.constant 1 : index
    %c3_379 = arith.constant 3 : index
    %c0_380 = arith.constant 0 : index
    %c0_381 = arith.constant 0 : index
    %546 = vector.load %arg10[%c1_378, %c3_379, %c0_380, %c0_381] : memref<2x4x8x32xf32, #tpu.memory_space<vmem>>, vector<1x1x8x32xf32>
    %547 = vector.shape_cast %546 : vector<1x1x8x32xf32> to vector<8x32xf32>
    %cst_382 = arith.constant dense<0.000000e+00> : vector<16x32xf32>
    %548 = tpu.matmul %545, %547, %cst_382 {dimension_numbers = #tpu.dot_dimension_numbers<[1], [0], [0], [1], [0, 0, 1, 1], [], []>} : vector<16x8xf32>, vector<8x32xf32>, vector<16x32xf32> -> vector<16x32xf32>
    %549 = arith.addf %491, %548 : vector<16x32xf32>
    %550 = arith.addf %314, %549 : vector<16x32xf32>
    %c1_383 = arith.constant 1 : index
    %c0_384 = arith.constant 0 : index
    %c0_385 = arith.constant 0 : index
    %551 = vector.load %arg12[%c1_383, %c0_384, %c0_385] : memref<2x1x32xf32, #tpu.memory_space<vmem>>, vector<1x1x32xf32>
    %552 = vector.shape_cast %551 : vector<1x1x32xf32> to vector<1x32xf32>
    %c1_386 = arith.constant 1 : index
    %c0_387 = arith.constant 0 : index
    %c0_388 = arith.constant 0 : index
    %553 = vector.load %arg13[%c1_386, %c0_387, %c0_388] : memref<2x1x32xf32, #tpu.memory_space<vmem>>, vector<1x1x32xf32>
    %554 = vector.shape_cast %553 : vector<1x1x32xf32> to vector<1x32xf32>
    %cst_389 = arith.constant dense<0.000000e+00> : vector<16xf32>
    %555 = vector.multi_reduction <add>, %550, %cst_389 [1] : vector<16x32xf32> to vector<16xf32>
    %556 = vector.shape_cast %555 : vector<16xf32> to vector<16x1xf32>
    %cst_390 = arith.constant 3.200000e+01 : f32
    %557 = vector.broadcast %cst_390 : f32 to vector<16x1xf32>
    %558 = arith.divf %556, %557 : vector<16x1xf32>
    %559 = vector.broadcast %558 : vector<16x1xf32> to vector<16x32xf32>
    %560 = arith.subf %550, %559 : vector<16x32xf32>
    %561 = arith.mulf %560, %560 : vector<16x32xf32>
    %cst_391 = arith.constant dense<0.000000e+00> : vector<16xf32>
    %562 = vector.multi_reduction <add>, %561, %cst_391 [1] : vector<16x32xf32> to vector<16xf32>
    %563 = vector.shape_cast %562 : vector<16xf32> to vector<16x1xf32>
    %cst_392 = arith.constant 3.200000e+01 : f32
    %564 = vector.broadcast %cst_392 : f32 to vector<16x1xf32>
    %565 = arith.divf %563, %564 : vector<16x1xf32>
    %566 = vector.broadcast %558 : vector<16x1xf32> to vector<16x32xf32>
    %567 = arith.subf %550, %566 : vector<16x32xf32>
    %cst_393 = arith.constant 9.99999974E-6 : f32
    %568 = vector.broadcast %cst_393 : f32 to vector<16x1xf32>
    %569 = arith.addf %565, %568 : vector<16x1xf32>
    %570 = math.rsqrt %569 : vector<16x1xf32>
    %571 = vector.broadcast %570 : vector<16x1xf32> to vector<16x32xf32>
    %572 = arith.mulf %567, %571 : vector<16x32xf32>
    %573 = vector.broadcast %552 : vector<1x32xf32> to vector<16x32xf32>
    %574 = arith.mulf %572, %573 : vector<16x32xf32>
    %575 = vector.broadcast %554 : vector<1x32xf32> to vector<16x32xf32>
    %576 = arith.addf %574, %575 : vector<16x32xf32>
    %577 = arith.truncf %576 : vector<16x32xf32> to vector<16x32xbf16>
    %c1_394 = arith.constant 1 : index
    %c0_395 = arith.constant 0 : index
    %c0_396 = arith.constant 0 : index
    %578 = vector.load %arg14[%c1_394, %c0_395, %c0_396] : memref<2x32x2048xbf16, #tpu.memory_space<vmem>>, vector<1x32x2048xbf16>
    %579 = vector.shape_cast %578 : vector<1x32x2048xbf16> to vector<32x2048xbf16>
    %cst_397 = arith.constant dense<0.000000e+00> : vector<16x2048xf32>
    %580 = tpu.matmul %577, %579, %cst_397 {dimension_numbers = #tpu.dot_dimension_numbers<[1], [0], [0], [1], [0, 0, 1, 1], [], []>} : vector<16x32xbf16>, vector<32x2048xbf16>, vector<16x2048xf32> -> vector<16x2048xf32>
    %c1_398 = arith.constant 1 : index
    %c0_399 = arith.constant 0 : index
    %c0_400 = arith.constant 0 : index
    %581 = vector.load %arg15[%c1_398, %c0_399, %c0_400] : memref<2x1x2048xf32, #tpu.memory_space<vmem>>, vector<1x1x2048xf32>
    %582 = vector.shape_cast %581 : vector<1x1x2048xf32> to vector<1x2048xf32>
    %583 = vector.broadcast %582 : vector<1x2048xf32> to vector<16x2048xf32>
    %584 = arith.addf %580, %583 : vector<16x2048xf32>
    %cst_401 = arith.constant 0.000000e+00 : f32
    %585 = vector.broadcast %cst_401 : f32 to vector<16x2048xf32>
    %586 = arith.maximumf %584, %585 : vector<16x2048xf32>
    %587 = arith.truncf %586 : vector<16x2048xf32> to vector<16x2048xbf16>
    %c1_402 = arith.constant 1 : index
    %c0_403 = arith.constant 0 : index
    %c0_404 = arith.constant 0 : index
    %588 = vector.load %arg16[%c1_402, %c0_403, %c0_404] : memref<2x2048x32xbf16, #tpu.memory_space<vmem>>, vector<1x2048x32xbf16>
    %589 = vector.shape_cast %588 : vector<1x2048x32xbf16> to vector<2048x32xbf16>
    %cst_405 = arith.constant dense<0.000000e+00> : vector<16x32xf32>
    %590 = tpu.matmul %587, %589, %cst_405 {dimension_numbers = #tpu.dot_dimension_numbers<[1], [0], [0], [1], [0, 0, 1, 1], [], []>} : vector<16x2048xbf16>, vector<2048x32xbf16>, vector<16x32xf32> -> vector<16x32xf32>
    %c1_406 = arith.constant 1 : index
    %c0_407 = arith.constant 0 : index
    %c0_408 = arith.constant 0 : index
    %591 = vector.load %arg17[%c1_406, %c0_407, %c0_408] : memref<2x1x32xf32, #tpu.memory_space<vmem>>, vector<1x1x32xf32>
    %592 = vector.shape_cast %591 : vector<1x1x32xf32> to vector<1x32xf32>
    %593 = vector.broadcast %592 : vector<1x32xf32> to vector<16x32xf32>
    %594 = arith.addf %590, %593 : vector<16x32xf32>
    %595 = arith.addf %576, %594 : vector<16x32xf32>
    %c1_409 = arith.constant 1 : index
    %c0_410 = arith.constant 0 : index
    %c0_411 = arith.constant 0 : index
    %596 = vector.load %arg18[%c1_409, %c0_410, %c0_411] : memref<2x1x32xf32, #tpu.memory_space<vmem>>, vector<1x1x32xf32>
    %597 = vector.shape_cast %596 : vector<1x1x32xf32> to vector<1x32xf32>
    %c1_412 = arith.constant 1 : index
    %c0_413 = arith.constant 0 : index
    %c0_414 = arith.constant 0 : index
    %598 = vector.load %arg19[%c1_412, %c0_413, %c0_414] : memref<2x1x32xf32, #tpu.memory_space<vmem>>, vector<1x1x32xf32>
    %599 = vector.shape_cast %598 : vector<1x1x32xf32> to vector<1x32xf32>
    %cst_415 = arith.constant dense<0.000000e+00> : vector<16xf32>
    %600 = vector.multi_reduction <add>, %595, %cst_415 [1] : vector<16x32xf32> to vector<16xf32>
    %601 = vector.shape_cast %600 : vector<16xf32> to vector<16x1xf32>
    %cst_416 = arith.constant 3.200000e+01 : f32
    %602 = vector.broadcast %cst_416 : f32 to vector<16x1xf32>
    %603 = arith.divf %601, %602 : vector<16x1xf32>
    %604 = vector.broadcast %603 : vector<16x1xf32> to vector<16x32xf32>
    %605 = arith.subf %595, %604 : vector<16x32xf32>
    %606 = arith.mulf %605, %605 : vector<16x32xf32>
    %cst_417 = arith.constant dense<0.000000e+00> : vector<16xf32>
    %607 = vector.multi_reduction <add>, %606, %cst_417 [1] : vector<16x32xf32> to vector<16xf32>
    %608 = vector.shape_cast %607 : vector<16xf32> to vector<16x1xf32>
    %cst_418 = arith.constant 3.200000e+01 : f32
    %609 = vector.broadcast %cst_418 : f32 to vector<16x1xf32>
    %610 = arith.divf %608, %609 : vector<16x1xf32>
    %611 = vector.broadcast %603 : vector<16x1xf32> to vector<16x32xf32>
    %612 = arith.subf %595, %611 : vector<16x32xf32>
    %cst_419 = arith.constant 9.99999974E-6 : f32
    %613 = vector.broadcast %cst_419 : f32 to vector<16x1xf32>
    %614 = arith.addf %610, %613 : vector<16x1xf32>
    %615 = math.rsqrt %614 : vector<16x1xf32>
    %616 = vector.broadcast %615 : vector<16x1xf32> to vector<16x32xf32>
    %617 = arith.mulf %612, %616 : vector<16x32xf32>
    %618 = vector.broadcast %597 : vector<1x32xf32> to vector<16x32xf32>
    %619 = arith.mulf %617, %618 : vector<16x32xf32>
    %620 = vector.broadcast %599 : vector<1x32xf32> to vector<16x32xf32>
    %621 = arith.addf %619, %620 : vector<16x32xf32>
    %622 = vector.extract_strided_slice %621 {offsets = [0, 0], sizes = [8, 32], strides = [1, 1]} : vector<16x32xf32> to vector<8x32xf32>
    %cst_420 = arith.constant dense<0.000000e+00> : vector<32xf32>
    %623 = vector.multi_reduction <add>, %622, %cst_420 [0] : vector<8x32xf32> to vector<32xf32>
    %624 = vector.shape_cast %623 : vector<32xf32> to vector<1x32xf32>
    %cst_421 = arith.constant 8.000000e+00 : f32
    %625 = vector.broadcast %cst_421 : f32 to vector<1x32xf32>
    %626 = arith.divf %624, %625 : vector<1x32xf32>
    %627 = vector.extract_strided_slice %621 {offsets = [8, 0], sizes = [8, 32], strides = [1, 1]} : vector<16x32xf32> to vector<8x32xf32>
    %cst_422 = arith.constant dense<0.000000e+00> : vector<32xf32>
    %628 = vector.multi_reduction <add>, %627, %cst_422 [0] : vector<8x32xf32> to vector<32xf32>
    %629 = vector.shape_cast %628 : vector<32xf32> to vector<1x32xf32>
    %cst_423 = arith.constant 8.000000e+00 : f32
    %630 = vector.broadcast %cst_423 : f32 to vector<1x32xf32>
    %631 = arith.divf %629, %630 : vector<1x32xf32>
    %632 = tpu.concatenate %626, %631 in 0 : vector<1x32xf32>, vector<1x32xf32> -> vector<2x32xf32>
    %c0_424 = arith.constant 0 : index
    %c0_425 = arith.constant 0 : index
    %633 = vector.load %arg20[%c0_424, %c0_425] : memref<2x32xf32, #tpu.memory_space<vmem>>, vector<2x32xf32>
    tpu.vector_store %arg20[%c0_424, %c0_425], %632 {strides = array<i32>} : memref<2x32xf32, #tpu.memory_space<vmem>>, vector<2x32xf32>,
    return
  }
}

</mosaic_0001>

<llo_original>
// kernel: tpu_custom_call.1
$region0: #{tpu_custom_call.1}
  #allocation0 [shape = 'u32[]', space=smem, size = 0x4, offset = 0x4, fixed_abs, tag = 'smem constant byte address 0x4 - core index']
  #allocation1 [shape = 'u32[144,128]{1,0:T(1,128)}', space=vmem, size = 0x12000, scoped, tag = 'internal scratch']
  %s0 = inlined_call_operand.vmem [shape: f32[16,16], index: 0, kind: input, shape index: {}]
  %s1 = inlined_call_operand.vmem [shape: f32[16,32], index: 1, kind: input, shape index: {}]
  %s2 = inlined_call_operand.vmem [shape: f32[1,32], index: 2, kind: input, shape index: {}]
  %s3 = inlined_call_operand.vmem [shape: f32[16,32], index: 3, kind: input, shape index: {}]
  %s4 = inlined_call_operand.vmem [shape: f32[2,4,32,8], index: 4, kind: input, shape index: {}]
  %s5 = inlined_call_operand.vmem [shape: f32[2,4,1,8], index: 5, kind: input, shape index: {}]
  %s6 = inlined_call_operand.vmem [shape: f32[2,4,32,8], index: 6, kind: input, shape index: {}]
  %s7 = inlined_call_operand.vmem [shape: f32[2,4,1,8], index: 7, kind: input, shape index: {}]
  %s8 = inlined_call_operand.vmem [shape: f32[2,4,32,8], index: 8, kind: input, shape index: {}]
  %s9 = inlined_call_operand.vmem [shape: f32[2,4,1,8], index: 9, kind: input, shape index: {}]
  %s10 = inlined_call_operand.vmem [shape: f32[2,4,8,32], index: 10, kind: input, shape index: {}]
  %s11 = inlined_call_operand.vmem [shape: f32[2,1,32], index: 11, kind: input, shape index: {}]
  %s12 = inlined_call_operand.vmem [shape: f32[2,1,32], index: 12, kind: input, shape index: {}]
  %s13 = inlined_call_operand.vmem [shape: f32[2,1,32], index: 13, kind: input, shape index: {}]
  %s14 = inlined_call_operand.vmem [shape: bf16[2,32,2048], index: 14, kind: input, shape index: {}]
  %s15 = inlined_call_operand.vmem [shape: f32[2,1,2048], index: 15, kind: input, shape index: {}]
  %s16 = inlined_call_operand.vmem [shape: bf16[2,2048,32], index: 16, kind: input, shape index: {}]
  %s17 = inlined_call_operand.vmem [shape: f32[2,1,32], index: 17, kind: input, shape index: {}]
  %s18 = inlined_call_operand.vmem [shape: f32[2,1,32], index: 18, kind: input, shape index: {}]
  %s19 = inlined_call_operand.vmem [shape: f32[2,1,32], index: 19, kind: input, shape index: {}]
  %s20 = inlined_call_operand.hbm [shape: f32[2,32], index: 20, kind: output, shape index: {}]
  %s21 = sld [smem:[#allocation0]]
  $region90: #{tpu_custom_call.1} parent=0
    _
  %s23 = ssub.s32 1, %s21
  %s24 = scalar_select 0, %s23, %s21
  $region1: #{tpu_custom_call.1} parent=0
    #allocation2 [shape = 'u8[1024]{0}', space=vmem, size = 0x400, scoped, tag = 'output window, operand 0, single buffered']
    #allocation3 [shape = 's32[1]{0}', space=sflag, size = 0x4, scoped, tag = 'scoped memory for tpu_custom_call.1']
    %25 = vsyncpa [#allocation3], 0
    // Predicated region
    $region2: #{tpu_custom_call.1} parent=1 // pred_check
      _
    $region3: #{tpu_custom_call.1} parent=1 // pred_check_branch
      %27 = sbr.rel (0) target = $region5
    $region4: #{tpu_custom_call.1} parent=1 // pred_region
      _
    $region5: #{tpu_custom_call.1} parent=1 // pred_fallthru
      _
    // Predicated region
    $region6: #{tpu_custom_call.1} parent=1 // pred_check
      _
    $region7: #{tpu_custom_call.1} parent=1 // pred_check_branch
      %29 = sbr.rel (0) target = $region9
    $region8: #{tpu_custom_call.1} parent=1 // pred_region
      _
    $region9: #{tpu_custom_call.1} parent=1 // pred_fallthru
      _
    // Predicated region
    $region10: #{tpu_custom_call.1} parent=1 // pred_check
      _
    $region11: #{tpu_custom_call.1} parent=1 // pred_check_branch
      %31 = sbr.rel (0) target = $region13
    $region12: #{tpu_custom_call.1} parent=1 // pred_region
      _
    $region13: #{tpu_custom_call.1} parent=1 // pred_fallthru
      _
    // Predicated region
    $region14: #{tpu_custom_call.1} parent=1 // pred_check
      _
    $region15: #{tpu_custom_call.1} parent=1 // pred_check_branch
      %33 = sbr.rel (0) target = $region17
    $region16: #{tpu_custom_call.1} parent=1 // pred_region
      _
    $region17: #{tpu_custom_call.1} parent=1 // pred_fallthru
      _
    // Predicated region
    $region18: #{tpu_custom_call.1} parent=1 // pred_check
      _
    $region19: #{tpu_custom_call.1} parent=1 // pred_check_branch
      %35 = sbr.rel (0) target = $region21
    $region20: #{tpu_custom_call.1} parent=1 // pred_region
      _
    $region21: #{tpu_custom_call.1} parent=1 // pred_fallthru
      _
    // Predicated region
    $region22: #{tpu_custom_call.1} parent=1 // pred_check
      _
    $region23: #{tpu_custom_call.1} parent=1 // pred_check_branch
      %37 = sbr.rel (0) target = $region25
    $region24: #{tpu_custom_call.1} parent=1 // pred_region
      _
    $region25: #{tpu_custom_call.1} parent=1 // pred_fallthru
      _
    // Predicated region
    $region26: #{tpu_custom_call.1} parent=1 // pred_check
      _
    $region27: #{tpu_custom_call.1} parent=1 // pred_check_branch
      %39 = sbr.rel (0) target = $region29
    $region28: #{tpu_custom_call.1} parent=1 // pred_region
      _
    $region29: #{tpu_custom_call.1} parent=1 // pred_fallthru
      _
    // Predicated region
    $region30: #{tpu_custom_call.1} parent=1 // pred_check
      _
    $region31: #{tpu_custom_call.1} parent=1 // pred_check_branch
      %41 = sbr.rel (0) target = $region33
    $region32: #{tpu_custom_call.1} parent=1 // pred_region
      _
    $region33: #{tpu_custom_call.1} parent=1 // pred_fallthru
      _
    // Predicated region
    $region34: #{tpu_custom_call.1} parent=1 // pred_check
      _
    $region35: #{tpu_custom_call.1} parent=1 // pred_check_branch
      %43 = sbr.rel (0) target = $region37
    $region36: #{tpu_custom_call.1} parent=1 // pred_region
      _
    $region37: #{tpu_custom_call.1} parent=1 // pred_fallthru
      _
    // Predicated region
    $region38: #{tpu_custom_call.1} parent=1 // pred_check
      _
    $region39: #{tpu_custom_call.1} parent=1 // pred_check_branch
      %45 = sbr.rel (0) target = $region41
    $region40: #{tpu_custom_call.1} parent=1 // pred_region
      _
    $region41: #{tpu_custom_call.1} parent=1 // pred_fallthru
      _
    // Predicated region
    $region42: #{tpu_custom_call.1} parent=1 // pred_check
      _
    $region43: #{tpu_custom_call.1} parent=1 // pred_check_branch
      %47 = sbr.rel (0) target = $region45
    $region44: #{tpu_custom_call.1} parent=1 // pred_region
      _
    $region45: #{tpu_custom_call.1} parent=1 // pred_fallthru
      _
    // Predicated region
    $region46: #{tpu_custom_call.1} parent=1 // pred_check
      _
    $region47: #{tpu_custom_call.1} parent=1 // pred_check_branch
      %49 = sbr.rel (0) target = $region49
    $region48: #{tpu_custom_call.1} parent=1 // pred_region
      _
    $region49: #{tpu_custom_call.1} parent=1 // pred_fallthru
      _
    // Predicated region
    $region50: #{tpu_custom_call.1} parent=1 // pred_check
      _
    $region51: #{tpu_custom_call.1} parent=1 // pred_check_branch
      %51 = sbr.rel (0) target = $region53
    $region52: #{tpu_custom_call.1} parent=1 // pred_region
      _
    $region53: #{tpu_custom_call.1} parent=1 // pred_fallthru
      _
    // Predicated region
    $region54: #{tpu_custom_call.1} parent=1 // pred_check
      _
    $region55: #{tpu_custom_call.1} parent=1 // pred_check_branch
      %53 = sbr.rel (0) target = $region57
    $region56: #{tpu_custom_call.1} parent=1 // pred_region
      _
    $region57: #{tpu_custom_call.1} parent=1 // pred_fallthru
      _
    // Predicated region
    $region58: #{tpu_custom_call.1} parent=1 // pred_check
      _
    $region59: #{tpu_custom_call.1} parent=1 // pred_check_branch
      %55 = sbr.rel (0) target = $region61
    $region60: #{tpu_custom_call.1} parent=1 // pred_region
      _
    $region61: #{tpu_custom_call.1} parent=1 // pred_fallthru
      _
    // Predicated region
    $region62: #{tpu_custom_call.1} parent=1 // pred_check
      _
    $region63: #{tpu_custom_call.1} parent=1 // pred_check_branch
      %57 = sbr.rel (0) target = $region65
    $region64: #{tpu_custom_call.1} parent=1 // pred_region
      _
    $region65: #{tpu_custom_call.1} parent=1 // pred_fallthru
      _
    // Predicated region
    $region66: #{tpu_custom_call.1} parent=1 // pred_check
      _
    $region67: #{tpu_custom_call.1} parent=1 // pred_check_branch
      %59 = sbr.rel (0) target = $region69
    $region68: #{tpu_custom_call.1} parent=1 // pred_region
      _
    $region69: #{tpu_custom_call.1} parent=1 // pred_fallthru
      _
    // Predicated region
    $region70: #{tpu_custom_call.1} parent=1 // pred_check
      _
    $region71: #{tpu_custom_call.1} parent=1 // pred_check_branch
      %61 = sbr.rel (0) target = $region73
    $region72: #{tpu_custom_call.1} parent=1 // pred_region
      _
    $region73: #{tpu_custom_call.1} parent=1 // pred_fallthru
      _
    // Predicated region
    $region74: #{tpu_custom_call.1} parent=1 // pred_check
      _
    $region75: #{tpu_custom_call.1} parent=1 // pred_check_branch
      %63 = sbr.rel (0) target = $region77
    $region76: #{tpu_custom_call.1} parent=1 // pred_region
      _
    $region77: #{tpu_custom_call.1} parent=1 // pred_fallthru
      _
    // Predicated region
    $region78: #{tpu_custom_call.1} parent=1 // pred_check
      _
    $region79: #{tpu_custom_call.1} parent=1 // pred_check_branch
      %65 = sbr.rel (0) target = $region81
    $region80: #{tpu_custom_call.1} parent=1 // pred_region
      _
    $region81: #{tpu_custom_call.1} parent=1 // pred_fallthru
      _
    %v67 = vld [vmem:[%s0] sm:$0xff]
    %v68 = vld [vmem:[%s0 + $0x8] sm:$0xff]
    %v69 = vld [vmem:[%s1] sm:$0xff]
    %v70 = vld [vmem:[%s1 + $0x8] sm:$0xff]
    %v71 = vld [vmem:[%s2] sm:$0x1]
    %v73 = vlaneseq
    %v74 = vshrl.u32 %v73, 7
    %v75 = vsub.s32 0, %v74
    %v76 = vrot.slane %v71, %v75
    %vm78 = vcmask 130048
    %v80 = vsel %vm78, %v67, 0
    %v83 = vsel %vm78, %v68, 0
    %85 = vmatprep.subr.mxu0 0.0
    %86 = vmatpush1.msra.mxu0 %v69
    %87 = vmatprep.subr.mxu0 0.0
    %88 = vmatpush1.msra.mxu0 %v70
    %89 = vmatprep.subr.mxu0 0.0
    %90 = vmatpush1.msra.mxu0 0.0
    %91 = vmatprep.subr.mxu0 0.0
    %92 = vmatpush1.msra.mxu0 0.0
    %93 = vmatprep.subr.mxu0 0.0
    %94 = vmatpush1.msra.mxu0 0.0
    %95 = vmatprep.subr.mxu0 0.0
    %96 = vmatpush1.msra.mxu0 0.0
    %97 = vmatprep.subr.mxu0 0.0
    %98 = vmatpush1.msra.mxu0 0.0
    %99 = vmatprep.subr.mxu0 0.0
    %100 = vmatpush1.msra.mxu0 0.0
    %101 = vmatprep.subr.mxu0 0.0
    %102 = vmatpush1.msra.mxu0 0.0
    %103 = vmatprep.subr.mxu0 0.0
    %104 = vmatpush1.msra.mxu0 0.0
    %105 = vmatprep.subr.mxu0 0.0
    %106 = vmatpush1.msra.mxu0 0.0
    %107 = vmatprep.subr.mxu0 0.0
    %108 = vmatpush1.msra.mxu0 0.0
    %109 = vmatprep.subr.mxu0 0.0
    %110 = vmatpush1.msra.mxu0 0.0
    %111 = vmatprep.subr.mxu0 0.0
    %112 = vmatpush1.msra.mxu0 0.0
    %113 = vmatprep.subr.mxu0 0.0
    %114 = vmatpush1.msra.mxu0 0.0
    %115 = vmatprep.subr.mxu0 0.0
    %116 = vmatpush1.msra.mxu0 0.0
    %117 = vmatprep.subr.mxu0 0.0
    %118 = vmatpush1.msra.mxu0 0.0
    %119 = vmatprep.subr.mxu0 0.0
    %120 = vmatpush1.msra.mxu0 0.0
    %121 = vmatprep.subr.mxu0 0.0
    %122 = vmatpush1.msra.mxu0 0.0
    %123 = vmatprep.subr.mxu0 0.0
    %124 = vmatpush1.msra.mxu0 0.0
    %125 = vmatprep.subr.mxu0 0.0
    %126 = vmatpush1.msra.mxu0 0.0
    %127 = vmatprep.subr.mxu0 0.0
    %128 = vmatpush1.msra.mxu0 0.0
    %129 = vmatprep.subr.mxu0 0.0
    %130 = vmatpush1.msra.mxu0 0.0
    %131 = vmatprep.subr.mxu0 0.0
    %132 = vmatpush1.msra.mxu0 0.0
    %133 = vmatprep.subr.mxu0 0.0
    %134 = vmatpush1.msra.mxu0 0.0
    %135 = vmatprep.subr.mxu0 0.0
    %136 = vmatpush1.msra.mxu0 0.0
    %137 = vmatprep.subr.mxu0 0.0
    %138 = vmatpush1.msra.mxu0 0.0
    %139 = vmatprep.subr.mxu0 0.0
    %140 = vmatpush1.msra.mxu0 0.0
    %141 = vmatprep.subr.mxu0 0.0
    %142 = vmatpush1.msra.mxu0 0.0
    %143 = vmatprep.subr.mxu0 0.0
    %144 = vmatpush1.msra.mxu0 0.0
    %145 = vmatprep.subr.mxu0 0.0
    %146 = vmatpush1.msra.mxu0 0.0
    %147 = vmatprep.subr.mxu0 0.0
    %148 = vmatpush1.msra.mxu0 0.0
    %149 = vmatprep.mubr.f32.mxu0 0.0
    %150 = vmatmul.mubr.f32.gmra.mrb[0].mxu0 %v80
    %v151 = vpop.f32.mrb[0].mxu0
    %v152 = vadd.f32 %v76, %v151
    %v153 = vpop.f32.mrb[0].mxu0
    %154 = vmatprep.mubr.f32.mxu0 0.0
    %155 = vmatmul.mubr.f32.gmra.mrb[0].mxu0 %v83
    %v156 = vpop.f32.mrb[0].mxu0
    %v157 = vadd.f32 %v76, %v156
    %v158 = vpop.f32.mrb[0].mxu0
    %159 = vdwg.mxu0
    %v160 = vld [vmem:[%s3] sm:$0xff]
    %v161 = vld [vmem:[%s3 + $0x8] sm:$0xff]
    %v162 = vadd.f32 %v152, %v160
    %v163 = vadd.f32 %v157, %v161
    %v164 = vld [vmem:[%s11] sm:$0x1]
    %v165 = vld [vmem:[%s4] sm:$0xff]
    %v166 = vld [vmem:[%s4 + $0x8] sm:$0xff]
    %v167 = vld [vmem:[%s4 + $0x10] sm:$0xff]
    %v168 = vld [vmem:[%s4 + $0x18] sm:$0xff]
    %v169 = vld [vmem:[%s5] sm:$0x1]
    %v171 = vlaneseq
    %v172 = vshrl.u32 %v171, 7
    %v173 = vsub.s32 0, %v172
    %v174 = vrot.slane %v169, %v173
    %vm176 = vcmask 261120
    %v178 = vsel %vm176, %v162, 0
    %v181 = vsel %vm176, %v163, 0
    %183 = vmatprep.subr.mxu0 0.0
    %184 = vmatpush1.msra.mxu0 %v165
    %185 = vmatprep.subr.mxu0 0.0
    %186 = vmatpush1.msra.mxu0 %v166
    %187 = vmatprep.subr.mxu0 0.0
    %188 = vmatpush1.msra.mxu0 %v167
    %189 = vmatprep.subr.mxu0 0.0
    %190 = vmatpush1.msra.mxu0 %v168
    %191 = vmatprep.subr.mxu0 0.0
    %192 = vmatpush1.msra.mxu0 0.0
    %193 = vmatprep.subr.mxu0 0.0
    %194 = vmatpush1.msra.mxu0 0.0
    %195 = vmatprep.subr.mxu0 0.0
    %196 = vmatpush1.msra.mxu0 0.0
    %197 = vmatprep.subr.mxu0 0.0
    %198 = vmatpush1.msra.mxu0 0.0
    %199 = vmatprep.subr.mxu0 0.0
    %200 = vmatpush1.msra.mxu0 0.0
    %201 = vmatprep.subr.mxu0 0.0
    %202 = vmatpush1.msra.mxu0 0.0
    %203 = vmatprep.subr.mxu0 0.0
    %204 = vmatpush1.msra.mxu0 0.0
    %205 = vmatprep.subr.mxu0 0.0
    %206 = vmatpush1.msra.mxu0 0.0
    %207 = vmatprep.subr.mxu0 0.0
    %208 = vmatpush1.msra.mxu0 0.0
    %209 = vmatprep.subr.mxu0 0.0
    %210 = vmatpush1.msra.mxu0 0.0
    %211 = vmatprep.subr.mxu0 0.0
    %212 = vmatpush1.msra.mxu0 0.0
    %213 = vmatprep.subr.mxu0 0.0
    %214 = vmatpush1.msra.mxu0 0.0
    %215 = vmatprep.subr.mxu0 0.0
    %216 = vmatpush1.msra.mxu0 0.0
    %217 = vmatprep.subr.mxu0 0.0
    %218 = vmatpush1.msra.mxu0 0.0
    %219 = vmatprep.subr.mxu0 0.0
    %220 = vmatpush1.msra.mxu0 0.0
    %221 = vmatprep.subr.mxu0 0.0
    %222 = vmatpush1.msra.mxu0 0.0
    %223 = vmatprep.subr.mxu0 0.0
    %224 = vmatpush1.msra.mxu0 0.0
    %225 = vmatprep.subr.mxu0 0.0
    %226 = vmatpush1.msra.mxu0 0.0
    %227 = vmatprep.subr.mxu0 0.0
    %228 = vmatpush1.msra.mxu0 0.0
    %229 = vmatprep.subr.mxu0 0.0
    %230 = vmatpush1.msra.mxu0 0.0
    %231 = vmatprep.subr.mxu0 0.0
    %232 = vmatpush1.msra.mxu0 0.0
    %233 = vmatprep.subr.mxu0 0.0
    %234 = vmatpush1.msra.mxu0 0.0
    %235 = vmatprep.subr.mxu0 0.0
    %236 = vmatpush1.msra.mxu0 0.0
    %237 = vmatprep.subr.mxu0 0.0
    %238 = vmatpush1.msra.mxu0 0.0
    %239 = vmatprep.subr.mxu0 0.0
    %240 = vmatpush1.msra.mxu0 0.0
    %241 = vmatprep.subr.mxu0 0.0
    %242 = vmatpush1.msra.mxu0 0.0
    %243 = vmatprep.subr.mxu0 0.0
    %244 = vmatpush1.msra.mxu0 0.0
    %245 = vmatprep.subr.mxu0 0.0
    %246 = vmatpush1.msra.mxu0 0.0
    %247 = vmatprep.mubr.f32.mxu0 0.0
    %248 = vmatmul.mubr.f32.gmra.mrb[0].mxu0 %v178
    %v249 = vpop.f32.mrb[0].mxu0
    %v250 = vadd.f32 %v174, %v249
    %v251 = vpop.f32.mrb[0].mxu0
    %252 = vmatprep.mubr.f32.mxu0 0.0
    %253 = vmatmul.mubr.f32.gmra.mrb[0].mxu0 %v181
    %v254 = vpop.f32.mrb[0].mxu0
    %v255 = vadd.f32 %v174, %v254
    %v256 = vpop.f32.mrb[0].mxu0
    %257 = vdwg.mxu0
    %v258 = vld [vmem:[%s6] sm:$0xff]
    %v259 = vld [vmem:[%s6 + $0x8] sm:$0xff]
    %v260 = vld [vmem:[%s6 + $0x10] sm:$0xff]
    %v261 = vld [vmem:[%s6 + $0x18] sm:$0xff]
    %v262 = vld [vmem:[%s7] sm:$0x1]
    %v264 = vlaneseq
    %v265 = vshrl.u32 %v264, 7
    %v266 = vsub.s32 0, %v265
    %v267 = vrot.slane %v262, %v266
    %269 = vmatprep.subr.mxu0 0.0
    %270 = vmatpush1.msra.mxu0 %v258
    %271 = vmatprep.subr.mxu0 0.0
    %272 = vmatpush1.msra.mxu0 %v259
    %273 = vmatprep.subr.mxu0 0.0
    %274 = vmatpush1.msra.mxu0 %v260
    %275 = vmatprep.subr.mxu0 0.0
    %276 = vmatpush1.msra.mxu0 %v261
    %277 = vmatprep.subr.mxu0 0.0
    %278 = vmatpush1.msra.mxu0 0.0
    %279 = vmatprep.subr.mxu0 0.0
    %280 = vmatpush1.msra.mxu0 0.0
    %281 = vmatprep.subr.mxu0 0.0
    %282 = vmatpush1.msra.mxu0 0.0
    %283 = vmatprep.subr.mxu0 0.0
    %284 = vmatpush1.msra.mxu0 0.0
    %285 = vmatprep.subr.mxu0 0.0
    %286 = vmatpush1.msra.mxu0 0.0
    %287 = vmatprep.subr.mxu0 0.0
    %288 = vmatpush1.msra.mxu0 0.0
    %289 = vmatprep.subr.mxu0 0.0
    %290 = vmatpush1.msra.mxu0 0.0
    %291 = vmatprep.subr.mxu0 0.0
    %292 = vmatpush1.msra.mxu0 0.0
    %293 = vmatprep.subr.mxu0 0.0
    %294 = vmatpush1.msra.mxu0 0.0
    %295 = vmatprep.subr.mxu0 0.0
    %296 = vmatpush1.msra.mxu0 0.0
    %297 = vmatprep.subr.mxu0 0.0
    %298 = vmatpush1.msra.mxu0 0.0
    %299 = vmatprep.subr.mxu0 0.0
    %300 = vmatpush1.msra.mxu0 0.0
    %301 = vmatprep.subr.mxu0 0.0
    %302 = vmatpush1.msra.mxu0 0.0
    %303 = vmatprep.subr.mxu0 0.0
    %304 = vmatpush1.msra.mxu0 0.0
    %305 = vmatprep.subr.mxu0 0.0
    %306 = vmatpush1.msra.mxu0 0.0
    %307 = vmatprep.subr.mxu0 0.0
    %308 = vmatpush1.msra.mxu0 0.0
    %309 = vmatprep.subr.mxu0 0.0
    %310 = vmatpush1.msra.mxu0 0.0
    %311 = vmatprep.subr.mxu0 0.0
    %312 = vmatpush1.msra.mxu0 0.0
    %313 = vmatprep.subr.mxu0 0.0
    %314 = vmatpush1.msra.mxu0 0.0
    %315 = vmatprep.subr.mxu0 0.0
    %316 = vmatpush1.msra.mxu0 0.0
    %317 = vmatprep.subr.mxu0 0.0
    %318 = vmatpush1.msra.mxu0 0.0
    %319 = vmatprep.subr.mxu0 0.0
    %320 = vmatpush1.msra.mxu0 0.0
    %321 = vmatprep.subr.mxu0 0.0
    %322 = vmatpush1.msra.mxu0 0.0
    %323 = vmatprep.subr.mxu0 0.0
    %324 = vmatpush1.msra.mxu0 0.0
    %325 = vmatprep.subr.mxu0 0.0
    %326 = vmatpush1.msra.mxu0 0.0
    %327 = vmatprep.subr.mxu0 0.0
    %328 = vmatpush1.msra.mxu0 0.0
    %329 = vmatprep.subr.mxu0 0.0
    %330 = vmatpush1.msra.mxu0 0.0
    %331 = vmatprep.subr.mxu0 0.0
    %332 = vmatpush1.msra.mxu0 0.0
    %333 = vmatprep.mubr.f32.mxu0 0.0
    %334 = vmatmul.mubr.f32.gmra.mrb[0].mxu0 %v178
    %v335 = vpop.f32.mrb[0].mxu0
    %v336 = vadd.f32 %v267, %v335
    %v337 = vpop.f32.mrb[0].mxu0
    %338 = vmatprep.mubr.f32.mxu0 0.0
    %339 = vmatmul.mubr.f32.gmra.mrb[0].mxu0 %v181
    %v340 = vpop.f32.mrb[0].mxu0
    %v341 = vadd.f32 %v267, %v340
    %v342 = vpop.f32.mrb[0].mxu0
    %343 = vdwg.mxu0
    %v344 = vld [vmem:[%s8] sm:$0xff]
    %v345 = vld [vmem:[%s8 + $0x8] sm:$0xff]
    %v346 = vld [vmem:[%s8 + $0x10] sm:$0xff]
    %v347 = vld [vmem:[%s8 + $0x18] sm:$0xff]
    %v348 = vld [vmem:[%s9] sm:$0x1]
    %v350 = vlaneseq
    %v351 = vshrl.u32 %v350, 7
    %v352 = vsub.s32 0, %v351
    %v353 = vrot.slane %v348, %v352
    %355 = vmatprep.subr.mxu0 0.0
    %356 = vmatpush1.msra.mxu0 %v344
    %357 = vmatprep.subr.mxu0 0.0
    %358 = vmatpush1.msra.mxu0 %v345
    %359 = vmatprep.subr.mxu0 0.0
    %360 = vmatpush1.msra.mxu0 %v346
    %361 = vmatprep.subr.mxu0 0.0
    %362 = vmatpush1.msra.mxu0 %v347
    %363 = vmatprep.subr.mxu0 0.0
    %364 = vmatpush1.msra.mxu0 0.0
    %365 = vmatprep.subr.mxu0 0.0
    %366 = vmatpush1.msra.mxu0 0.0
    %367 = vmatprep.subr.mxu0 0.0
    %368 = vmatpush1.msra.mxu0 0.0
    %369 = vmatprep.subr.mxu0 0.0
    %370 = vmatpush1.msra.mxu0 0.0
    %371 = vmatprep.subr.mxu0 0.0
    %372 = vmatpush1.msra.mxu0 0.0
    %373 = vmatprep.subr.mxu0 0.0
    %374 = vmatpush1.msra.mxu0 0.0
    %375 = vmatprep.subr.mxu0 0.0
    %376 = vmatpush1.msra.mxu0 0.0
    %377 = vmatprep.subr.mxu0 0.0
    %378 = vmatpush1.msra.mxu0 0.0
    %379 = vmatprep.subr.mxu0 0.0
    %380 = vmatpush1.msra.mxu0 0.0
    %381 = vmatprep.subr.mxu0 0.0
    %382 = vmatpush1.msra.mxu0 0.0
    %383 = vmatprep.subr.mxu0 0.0
    %384 = vmatpush1.msra.mxu0 0.0
    %385 = vmatprep.subr.mxu0 0.0
    %386 = vmatpush1.msra.mxu0 0.0
    %387 = vmatprep.subr.mxu0 0.0
    %388 = vmatpush1.msra.mxu0 0.0
    %389 = vmatprep.subr.mxu0 0.0
    %390 = vmatpush1.msra.mxu0 0.0
    %391 = vmatprep.subr.mxu0 0.0
    %392 = vmatpush1.msra.mxu0 0.0
    %393 = vmatprep.subr.mxu0 0.0
    %394 = vmatpush1.msra.mxu0 0.0
    %395 = vmatprep.subr.mxu0 0.0
    %396 = vmatpush1.msra.mxu0 0.0
    %397 = vmatprep.subr.mxu0 0.0
    %398 = vmatpush1.msra.mxu0 0.0
    %399 = vmatprep.subr.mxu0 0.0
    %400 = vmatpush1.msra.mxu0 0.0
    %401 = vmatprep.subr.mxu0 0.0
    %402 = vmatpush1.msra.mxu0 0.0
    %403 = vmatprep.subr.mxu0 0.0
    %404 = vmatpush1.msra.mxu0 0.0
    %405 = vmatprep.subr.mxu0 0.0
    %406 = vmatpush1.msra.mxu0 0.0
    %407 = vmatprep.subr.mxu0 0.0
    %408 = vmatpush1.msra.mxu0 0.0
    %409 = vmatprep.subr.mxu0 0.0
    %410 = vmatpush1.msra.mxu0 0.0
    %411 = vmatprep.subr.mxu0 0.0
    %412 = vmatpush1.msra.mxu0 0.0
    %413 = vmatprep.subr.mxu0 0.0
    %414 = vmatpush1.msra.mxu0 0.0
    %415 = vmatprep.subr.mxu0 0.0
    %416 = vmatpush1.msra.mxu0 0.0
    %417 = vmatprep.subr.mxu0 0.0
    %418 = vmatpush1.msra.mxu0 0.0
    %419 = vmatprep.mubr.f32.mxu0 0.0
    %420 = vmatmul.mubr.f32.gmra.mrb[0].mxu0 %v178
    %v421 = vpop.f32.mrb[0].mxu0
    %v422 = vadd.f32 %v353, %v421
    %v423 = vpop.f32.mrb[0].mxu0
    %424 = vmatprep.mubr.f32.mxu0 0.0
    %425 = vmatmul.mubr.f32.gmra.mrb[0].mxu0 %v181
    %v426 = vpop.f32.mrb[0].mxu0
    %v427 = vadd.f32 %v353, %v426
    %v428 = vpop.f32.mrb[0].mxu0
    %429 = vdwg.mxu0
    %vm430 = vcmask 64512
    %v432 = vsel %vm430, %v250, 0
    %v435 = vsel %vm430, %v336, 0
    %437 = vmatprep.subr.mxu0 0.0
    %438 = vmatpush1.xpose.msra.mxu0 %v435
    %439 = vmatprep.subr.mxu0 0.0
    %440 = vmatpush1.xpose.msra.mxu0 0.0
    %441 = vmatprep.subr.mxu0 0.0
    %442 = vmatpush1.xpose.msra.mxu0 0.0
    %443 = vmatprep.subr.mxu0 0.0
    %444 = vmatpush1.xpose.msra.mxu0 0.0
    %445 = vmatprep.subr.mxu0 0.0
    %446 = vmatpush1.xpose.msra.mxu0 0.0
    %447 = vmatprep.subr.mxu0 0.0
    %448 = vmatpush1.xpose.msra.mxu0 0.0
    %449 = vmatprep.subr.mxu0 0.0
    %450 = vmatpush1.xpose.msra.mxu0 0.0
    %451 = vmatprep.subr.mxu0 0.0
    %452 = vmatpush1.xpose.msra.mxu0 0.0
    %453 = vmatprep.subr.mxu0 0.0
    %454 = vmatpush1.xpose.msra.mxu0 0.0
    %455 = vmatprep.subr.mxu0 0.0
    %456 = vmatpush1.xpose.msra.mxu0 0.0
    %457 = vmatprep.subr.mxu0 0.0
    %458 = vmatpush1.xpose.msra.mxu0 0.0
    %459 = vmatprep.subr.mxu0 0.0
    %460 = vmatpush1.xpose.msra.mxu0 0.0
    %461 = vmatprep.subr.mxu0 0.0
    %462 = vmatpush1.xpose.msra.mxu0 0.0
    %463 = vmatprep.subr.mxu0 0.0
    %464 = vmatpush1.xpose.msra.mxu0 0.0
    %465 = vmatprep.subr.mxu0 0.0
    %466 = vmatpush1.xpose.msra.mxu0 0.0
    %467 = vmatprep.subr.mxu0 0.0
    %468 = vmatpush1.xpose.msra.mxu0 0.0
    %469 = vmatprep.subr.mxu0 0.0
    %470 = vmatpush1.xpose.msra.mxu0 0.0
    %471 = vmatprep.subr.mxu0 0.0
    %472 = vmatpush1.xpose.msra.mxu0 0.0
    %473 = vmatprep.subr.mxu0 0.0
    %474 = vmatpush1.xpose.msra.mxu0 0.0
    %475 = vmatprep.subr.mxu0 0.0
    %476 = vmatpush1.xpose.msra.mxu0 0.0
    %477 = vmatprep.subr.mxu0 0.0
    %478 = vmatpush1.xpose.msra.mxu0 0.0
    %479 = vmatprep.subr.mxu0 0.0
    %480 = vmatpush1.xpose.msra.mxu0 0.0
    %481 = vmatprep.subr.mxu0 0.0
    %482 = vmatpush1.xpose.msra.mxu0 0.0
    %483 = vmatprep.subr.mxu0 0.0
    %484 = vmatpush1.xpose.msra.mxu0 0.0
    %485 = vmatprep.subr.mxu0 0.0
    %486 = vmatpush1.xpose.msra.mxu0 0.0
    %487 = vmatprep.subr.mxu0 0.0
    %488 = vmatpush1.xpose.msra.mxu0 0.0
    %489 = vmatprep.subr.mxu0 0.0
    %490 = vmatpush1.xpose.msra.mxu0 0.0
    %491 = vmatprep.subr.mxu0 0.0
    %492 = vmatpush1.xpose.msra.mxu0 0.0
    %493 = vmatprep.subr.mxu0 0.0
    %494 = vmatpush1.xpose.msra.mxu0 0.0
    %495 = vmatprep.subr.mxu0 0.0
    %496 = vmatpush1.xpose.msra.mxu0 0.0
    %497 = vmatprep.subr.mxu0 0.0
    %498 = vmatpush1.xpose.msra.mxu0 0.0
    %499 = vmatprep.subr.mxu0 0.0
    %500 = vmatpush1.xpose.msra.mxu0 0.0
    %501 = vmatprep.mubr.f32.mxu0 0.0
    %502 = vmatmul.mubr.f32.gmra.mrb[0].mxu0 %v432
    %v503 = vpop.f32.mrb[0].mxu0
    %v504 = vadd.f32 0.0, %v503
    %v505 = vpop.f32.mrb[0].mxu0
    %506 = vdwg.mxu0
    %v507 = vmul.f32 %v504, 0.35355338
    %v508 = vsel %vm430, %v507, -inf
    %509 = vmax.xlane.f32.xlu0 %v508
    %v510 = vpop.xlane.xlu0 %509
    %v511 = vsub.f32 %v507, %v510
    %v512 = vmul.f32 %v511, 1.442695
    %v513 = vpow.pop %v512
    %v514 = vsel %vm430, %v513, 0.0
    %515 = vadd.xlane.f32.xlu0 %v514
    %v516 = vpop.xlane.xlu0 %515
    %v517 = vrcp.pop %v516
    %v518 = vmul.f32 %v513, %v517
    %v520 = vsel %vm430, %v518, 0
    %522 = vmatprep.subr.mxu0 0.0
    %523 = vmatpush1.msra.mxu0 %v422
    %524 = vmatprep.subr.mxu0 0.0
    %525 = vmatpush1.msra.mxu0 0.0
    %526 = vmatprep.subr.mxu0 0.0
    %527 = vmatpush1.msra.mxu0 0.0
    %528 = vmatprep.subr.mxu0 0.0
    %529 = vmatpush1.msra.mxu0 0.0
    %530 = vmatprep.subr.mxu0 0.0
    %531 = vmatpush1.msra.mxu0 0.0
    %532 = vmatprep.subr.mxu0 0.0
    %533 = vmatpush1.msra.mxu0 0.0
    %534 = vmatprep.subr.mxu0 0.0
    %535 = vmatpush1.msra.mxu0 0.0
    %536 = vmatprep.subr.mxu0 0.0
    %537 = vmatpush1.msra.mxu0 0.0
    %538 = vmatprep.subr.mxu0 0.0
    %539 = vmatpush1.msra.mxu0 0.0
    %540 = vmatprep.subr.mxu0 0.0
    %541 = vmatpush1.msra.mxu0 0.0
    %542 = vmatprep.subr.mxu0 0.0
    %543 = vmatpush1.msra.mxu0 0.0
    %544 = vmatprep.subr.mxu0 0.0
    %545 = vmatpush1.msra.mxu0 0.0
    %546 = vmatprep.subr.mxu0 0.0
    %547 = vmatpush1.msra.mxu0 0.0
    %548 = vmatprep.subr.mxu0 0.0
    %549 = vmatpush1.msra.mxu0 0.0
    %550 = vmatprep.subr.mxu0 0.0
    %551 = vmatpush1.msra.mxu0 0.0
    %552 = vmatprep.subr.mxu0 0.0
    %553 = vmatpush1.msra.mxu0 0.0
    %554 = vmatprep.subr.mxu0 0.0
    %555 = vmatpush1.msra.mxu0 0.0
    %556 = vmatprep.subr.mxu0 0.0
    %557 = vmatpush1.msra.mxu0 0.0
    %558 = vmatprep.subr.mxu0 0.0
    %559 = vmatpush1.msra.mxu0 0.0
    %560 = vmatprep.subr.mxu0 0.0
    %561 = vmatpush1.msra.mxu0 0.0
    %562 = vmatprep.subr.mxu0 0.0
    %563 = vmatpush1.msra.mxu0 0.0
    %564 = vmatprep.subr.mxu0 0.0
    %565 = vmatpush1.msra.mxu0 0.0
    %566 = vmatprep.subr.mxu0 0.0
    %567 = vmatpush1.msra.mxu0 0.0
    %568 = vmatprep.subr.mxu0 0.0
    %569 = vmatpush1.msra.mxu0 0.0
    %570 = vmatprep.subr.mxu0 0.0
    %571 = vmatpush1.msra.mxu0 0.0
    %572 = vmatprep.subr.mxu0 0.0
    %573 = vmatpush1.msra.mxu0 0.0
    %574 = vmatprep.subr.mxu0 0.0
    %575 = vmatpush1.msra.mxu0 0.0
    %576 = vmatprep.subr.mxu0 0.0
    %577 = vmatpush1.msra.mxu0 0.0
    %578 = vmatprep.subr.mxu0 0.0
    %579 = vmatpush1.msra.mxu0 0.0
    %580 = vmatprep.subr.mxu0 0.0
    %581 = vmatpush1.msra.mxu0 0.0
    %582 = vmatprep.subr.mxu0 0.0
    %583 = vmatpush1.msra.mxu0 0.0
    %584 = vmatprep.subr.mxu0 0.0
    %585 = vmatpush1.msra.mxu0 0.0
    %586 = vmatprep.mubr.f32.mxu0 0.0
    %587 = vmatmul.mubr.f32.gmra.mrb[0].mxu0 %v520
    %v588 = vpop.f32.mrb[0].mxu0
    %v589 = vadd.f32 0.0, %v588
    %v590 = vpop.f32.mrb[0].mxu0
    %591 = vdwg.mxu0
    %v593 = vsel %vm430, %v255, 0
    %v596 = vsel %vm430, %v341, 0
    %598 = vmatprep.subr.mxu0 0.0
    %599 = vmatpush1.xpose.msra.mxu0 %v596
    %600 = vmatprep.subr.mxu0 0.0
    %601 = vmatpush1.xpose.msra.mxu0 0.0
    %602 = vmatprep.subr.mxu0 0.0
    %603 = vmatpush1.xpose.msra.mxu0 0.0
    %604 = vmatprep.subr.mxu0 0.0
    %605 = vmatpush1.xpose.msra.mxu0 0.0
    %606 = vmatprep.subr.mxu0 0.0
    %607 = vmatpush1.xpose.msra.mxu0 0.0
    %608 = vmatprep.subr.mxu0 0.0
    %609 = vmatpush1.xpose.msra.mxu0 0.0
    %610 = vmatprep.subr.mxu0 0.0
    %611 = vmatpush1.xpose.msra.mxu0 0.0
    %612 = vmatprep.subr.mxu0 0.0
    %613 = vmatpush1.xpose.msra.mxu0 0.0
    %614 = vmatprep.subr.mxu0 0.0
    %615 = vmatpush1.xpose.msra.mxu0 0.0
    %616 = vmatprep.subr.mxu0 0.0
    %617 = vmatpush1.xpose.msra.mxu0 0.0
    %618 = vmatprep.subr.mxu0 0.0
    %619 = vmatpush1.xpose.msra.mxu0 0.0
    %620 = vmatprep.subr.mxu0 0.0
    %621 = vmatpush1.xpose.msra.mxu0 0.0
    %622 = vmatprep.subr.mxu0 0.0
    %623 = vmatpush1.xpose.msra.mxu0 0.0
    %624 = vmatprep.subr.mxu0 0.0
    %625 = vmatpush1.xpose.msra.mxu0 0.0
    %626 = vmatprep.subr.mxu0 0.0
    %627 = vmatpush1.xpose.msra.mxu0 0.0
    %628 = vmatprep.subr.mxu0 0.0
    %629 = vmatpush1.xpose.msra.mxu0 0.0
    %630 = vmatprep.subr.mxu0 0.0
    %631 = vmatpush1.xpose.msra.mxu0 0.0
    %632 = vmatprep.subr.mxu0 0.0
    %633 = vmatpush1.xpose.msra.mxu0 0.0
    %634 = vmatprep.subr.mxu0 0.0
    %635 = vmatpush1.xpose.msra.mxu0 0.0
    %636 = vmatprep.subr.mxu0 0.0
    %637 = vmatpush1.xpose.msra.mxu0 0.0
    %638 = vmatprep.subr.mxu0 0.0
    %639 = vmatpush1.xpose.msra.mxu0 0.0
    %640 = vmatprep.subr.mxu0 0.0
    %641 = vmatpush1.xpose.msra.mxu0 0.0
    %642 = vmatprep.subr.mxu0 0.0
    %643 = vmatpush1.xpose.msra.mxu0 0.0
    %644 = vmatprep.subr.mxu0 0.0
    %645 = vmatpush1.xpose.msra.mxu0 0.0
    %646 = vmatprep.subr.mxu0 0.0
    %647 = vmatpush1.xpose.msra.mxu0 0.0
    %648 = vmatprep.subr.mxu0 0.0
    %649 = vmatpush1.xpose.msra.mxu0 0.0
    %650 = vmatprep.subr.mxu0 0.0
    %651 = vmatpush1.xpose.msra.mxu0 0.0
    %652 = vmatprep.subr.mxu0 0.0
    %653 = vmatpush1.xpose.msra.mxu0 0.0
    %654 = vmatprep.subr.mxu0 0.0
    %655 = vmatpush1.xpose.msra.mxu0 0.0
    %656 = vmatprep.subr.mxu0 0.0
    %657 = vmatpush1.xpose.msra.mxu0 0.0
    %658 = vmatprep.subr.mxu0 0.0
    %659 = vmatpush1.xpose.msra.mxu0 0.0
    %660 = vmatprep.subr.mxu0 0.0
    %661 = vmatpush1.xpose.msra.mxu0 0.0
    %662 = vmatprep.mubr.f32.mxu0 0.0
    %663 = vmatmul.mubr.f32.gmra.mrb[0].mxu0 %v593
    %v664 = vpop.f32.mrb[0].mxu0
    %v665 = vadd.f32 0.0, %v664
    %v666 = vpop.f32.mrb[0].mxu0
    %667 = vdwg.mxu0
    %v668 = vmul.f32 %v665, 0.35355338
    %v669 = vsel %vm430, %v668, -inf
    %670 = vmax.xlane.f32.xlu0 %v669
    %v671 = vpop.xlane.xlu0 %670
    %v672 = vsub.f32 %v668, %v671
    %v673 = vmul.f32 %v672, 1.442695
    %v674 = vpow.pop %v673
    %v675 = vsel %vm430, %v674, 0.0
    %676 = vadd.xlane.f32.xlu0 %v675
    %v677 = vpop.xlane.xlu0 %676
    %v678 = vrcp.pop %v677
    %v679 = vmul.f32 %v674, %v678
    %v681 = vsel %vm430, %v679, 0
    %683 = vmatprep.subr.mxu0 0.0
    %684 = vmatpush1.msra.mxu0 %v427
    %685 = vmatprep.subr.mxu0 0.0
    %686 = vmatpush1.msra.mxu0 0.0
    %687 = vmatprep.subr.mxu0 0.0
    %688 = vmatpush1.msra.mxu0 0.0
    %689 = vmatprep.subr.mxu0 0.0
    %690 = vmatpush1.msra.mxu0 0.0
    %691 = vmatprep.subr.mxu0 0.0
    %692 = vmatpush1.msra.mxu0 0.0
    %693 = vmatprep.subr.mxu0 0.0
    %694 = vmatpush1.msra.mxu0 0.0
    %695 = vmatprep.subr.mxu0 0.0
    %696 = vmatpush1.msra.mxu0 0.0
    %697 = vmatprep.subr.mxu0 0.0
    %698 = vmatpush1.msra.mxu0 0.0
    %699 = vmatprep.subr.mxu0 0.0
    %700 = vmatpush1.msra.mxu0 0.0
    %701 = vmatprep.subr.mxu0 0.0
    %702 = vmatpush1.msra.mxu0 0.0
    %703 = vmatprep.subr.mxu0 0.0
    %704 = vmatpush1.msra.mxu0 0.0
    %705 = vmatprep.subr.mxu0 0.0
    %706 = vmatpush1.msra.mxu0 0.0
    %707 = vmatprep.subr.mxu0 0.0
    %708 = vmatpush1.msra.mxu0 0.0
    %709 = vmatprep.subr.mxu0 0.0
    %710 = vmatpush1.msra.mxu0 0.0
    %711 = vmatprep.subr.mxu0 0.0
    %712 = vmatpush1.msra.mxu0 0.0
    %713 = vmatprep.subr.mxu0 0.0
    %714 = vmatpush1.msra.mxu0 0.0
    %715 = vmatprep.subr.mxu0 0.0
    %716 = vmatpush1.msra.mxu0 0.0
    %717 = vmatprep.subr.mxu0 0.0
    %718 = vmatpush1.msra.mxu0 0.0
    %719 = vmatprep.subr.mxu0 0.0
    %720 = vmatpush1.msra.mxu0 0.0
    %721 = vmatprep.subr.mxu0 0.0
    %722 = vmatpush1.msra.mxu0 0.0
    %723 = vmatprep.subr.mxu0 0.0
    %724 = vmatpush1.msra.mxu0 0.0
    %725 = vmatprep.subr.mxu0 0.0
    %726 = vmatpush1.msra.mxu0 0.0
    %727 = vmatprep.subr.mxu0 0.0
    %728 = vmatpush1.msra.mxu0 0.0
    %729 = vmatprep.subr.mxu0 0.0
    %730 = vmatpush1.msra.mxu0 0.0
    %731 = vmatprep.subr.mxu0 0.0
    %732 = vmatpush1.msra.mxu0 0.0
    %733 = vmatprep.subr.mxu0 0.0
    %734 = vmatpush1.msra.mxu0 0.0
    %735 = vmatprep.subr.mxu0 0.0
    %736 = vmatpush1.msra.mxu0 0.0
    %737 = vmatprep.subr.mxu0 0.0
    %738 = vmatpush1.msra.mxu0 0.0
    %739 = vmatprep.subr.mxu0 0.0
    %740 = vmatpush1.msra.mxu0 0.0
    %741 = vmatprep.subr.mxu0 0.0
    %742 = vmatpush1.msra.mxu0 0.0
    %743 = vmatprep.subr.mxu0 0.0
    %744 = vmatpush1.msra.mxu0 0.0
    %745 = vmatprep.subr.mxu0 0.0
    %746 = vmatpush1.msra.mxu0 0.0
    %747 = vmatprep.mubr.f32.mxu0 0.0
    %748 = vmatmul.mubr.f32.gmra.mrb[0].mxu0 %v681
    %v749 = vpop.f32.mrb[0].mxu0
    %v750 = vadd.f32 0.0, %v749
    %v751 = vpop.f32.mrb[0].mxu0
    %752 = vdwg.mxu0
    %v753 = vld [vmem:[%s10] sm:$0xff]
    %v755 = vsel %vm430, %v589, 0
    %v758 = vsel %vm430, %v750, 0
    %760 = vmatprep.subr.mxu0 0.0
    %761 = vmatpush1.msra.mxu0 %v753
    %762 = vmatprep.subr.mxu0 0.0
    %763 = vmatpush1.msra.mxu0 0.0
    %764 = vmatprep.subr.mxu0 0.0
    %765 = vmatpush1.msra.mxu0 0.0
    %766 = vmatprep.subr.mxu0 0.0
    %767 = vmatpush1.msra.mxu0 0.0
    %768 = vmatprep.subr.mxu0 0.0
    %769 = vmatpush1.msra.mxu0 0.0
    %770 = vmatprep.subr.mxu0 0.0
    %771 = vmatpush1.msra.mxu0 0.0
    %772 = vmatprep.subr.mxu0 0.0
    %773 = vmatpush1.msra.mxu0 0.0
    %774 = vmatprep.subr.mxu0 0.0
    %775 = vmatpush1.msra.mxu0 0.0
    %776 = vmatprep.subr.mxu0 0.0
    %777 = vmatpush1.msra.mxu0 0.0
    %778 = vmatprep.subr.mxu0 0.0
    %779 = vmatpush1.msra.mxu0 0.0
    %780 = vmatprep.subr.mxu0 0.0
    %781 = vmatpush1.msra.mxu0 0.0
    %782 = vmatprep.subr.mxu0 0.0
    %783 = vmatpush1.msra.mxu0 0.0
    %784 = vmatprep.subr.mxu0 0.0
    %785 = vmatpush1.msra.mxu0 0.0
    %786 = vmatprep.subr.mxu0 0.0
    %787 = vmatpush1.msra.mxu0 0.0
    %788 = vmatprep.subr.mxu0 0.0
    %789 = vmatpush1.msra.mxu0 0.0
    %790 = vmatprep.subr.mxu0 0.0
    %791 = vmatpush1.msra.mxu0 0.0
    %792 = vmatprep.subr.mxu0 0.0
    %793 = vmatpush1.msra.mxu0 0.0
    %794 = vmatprep.subr.mxu0 0.0
    %795 = vmatpush1.msra.mxu0 0.0
    %796 = vmatprep.subr.mxu0 0.0
    %797 = vmatpush1.msra.mxu0 0.0
    %798 = vmatprep.subr.mxu0 0.0
    %799 = vmatpush1.msra.mxu0 0.0
    %800 = vmatprep.subr.mxu0 0.0
    %801 = vmatpush1.msra.mxu0 0.0
    %802 = vmatprep.subr.mxu0 0.0
    %803 = vmatpush1.msra.mxu0 0.0
    %804 = vmatprep.subr.mxu0 0.0
    %805 = vmatpush1.msra.mxu0 0.0
    %806 = vmatprep.subr.mxu0 0.0
    %807 = vmatpush1.msra.mxu0 0.0
    %808 = vmatprep.subr.mxu0 0.0
    %809 = vmatpush1.msra.mxu0 0.0
    %810 = vmatprep.subr.mxu0 0.0
    %811 = vmatpush1.msra.mxu0 0.0
    %812 = vmatprep.subr.mxu0 0.0
    %813 = vmatpush1.msra.mxu0 0.0
    %814 = vmatprep.subr.mxu0 0.0
    %815 = vmatpush1.msra.mxu0 0.0
    %816 = vmatprep.subr.mxu0 0.0
    %817 = vmatpush1.msra.mxu0 0.0
    %818 = vmatprep.subr.mxu0 0.0
    %819 = vmatpush1.msra.mxu0 0.0
    %820 = vmatprep.subr.mxu0 0.0
    %821 = vmatpush1.msra.mxu0 0.0
    %822 = vmatprep.subr.mxu0 0.0
    %823 = vmatpush1.msra.mxu0 0.0
    %824 = vmatprep.mubr.f32.mxu0 0.0
    %825 = vmatmul.mubr.f32.gmra.mrb[0].mxu0 %v755
    %v826 = vpop.f32.mrb[0].mxu0
    %v827 = vadd.f32 0.0, %v826
    %v828 = vpop.f32.mrb[0].mxu0
    %829 = vmatprep.mubr.f32.mxu0 0.0
    %830 = vmatmul.mubr.f32.gmra.mrb[0].mxu0 %v758
    %v831 = vpop.f32.mrb[0].mxu0
    %v832 = vadd.f32 0.0, %v831
    %v833 = vpop.f32.mrb[0].mxu0
    %834 = vdwg.mxu0
    %v836 = vlaneseq
    %v837 = vshrl.u32 %v836, 7
    %v838 = vsub.s32 0, %v837
    %v839 = vrot.slane %v164, %v838
    %v841 = vadd.f32 %v839, %v827
    %v842 = vadd.f32 %v839, %v832
    %s843 = scalar_lea.vmem %s4, 32
    %v844 = vld [vmem:[%s843] sm:$0xff]
    %v845 = vld [vmem:[%s843 + $0x8] sm:$0xff]
    %v846 = vld [vmem:[%s843 + $0x10] sm:$0xff]
    %v847 = vld [vmem:[%s843 + $0x18] sm:$0xff]
    %s848 = scalar_lea.vmem %s5, 1
    %v849 = vld [vmem:[%s848] sm:$0x1]
    %v851 = vlaneseq
    %v852 = vshrl.u32 %v851, 7
    %v853 = vsub.s32 0, %v852
    %v854 = vrot.slane %v849, %v853
    %856 = vmatprep.subr.mxu0 0.0
    %857 = vmatpush1.msra.mxu0 %v844
    %858 = vmatprep.subr.mxu0 0.0
    %859 = vmatpush1.msra.mxu0 %v845
    %860 = vmatprep.subr.mxu0 0.0
    %861 = vmatpush1.msra.mxu0 %v846
    %862 = vmatprep.subr.mxu0 0.0
    %863 = vmatpush1.msra.mxu0 %v847
    %864 = vmatprep.subr.mxu0 0.0
    %865 = vmatpush1.msra.mxu0 0.0
    %866 = vmatprep.subr.mxu0 0.0
    %867 = vmatpush1.msra.mxu0 0.0
    %868 = vmatprep.subr.mxu0 0.0
    %869 = vmatpush1.msra.mxu0 0.0
    %870 = vmatprep.subr.mxu0 0.0
    %871 = vmatpush1.msra.mxu0 0.0
    %872 = vmatprep.subr.mxu0 0.0
    %873 = vmatpush1.msra.mxu0 0.0
    %874 = vmatprep.subr.mxu0 0.0
    %875 = vmatpush1.msra.mxu0 0.0
    %876 = vmatprep.subr.mxu0 0.0
    %877 = vmatpush1.msra.mxu0 0.0
    %878 = vmatprep.subr.mxu0 0.0
    %879 = vmatpush1.msra.mxu0 0.0
    %880 = vmatprep.subr.mxu0 0.0
    %881 = vmatpush1.msra.mxu0 0.0
    %882 = vmatprep.subr.mxu0 0.0
    %883 = vmatpush1.msra.mxu0 0.0
    %884 = vmatprep.subr.mxu0 0.0
    %885 = vmatpush1.msra.mxu0 0.0
    %886 = vmatprep.subr.mxu0 0.0
    %887 = vmatpush1.msra.mxu0 0.0
    %888 = vmatprep.subr.mxu0 0.0
    %889 = vmatpush1.msra.mxu0 0.0
    %890 = vmatprep.subr.mxu0 0.0
    %891 = vmatpush1.msra.mxu0 0.0
    %892 = vmatprep.subr.mxu0 0.0
    %893 = vmatpush1.msra.mxu0 0.0
    %894 = vmatprep.subr.mxu0 0.0
    %895 = vmatpush1.msra.mxu0 0.0
    %896 = vmatprep.subr.mxu0 0.0
    %897 = vmatpush1.msra.mxu0 0.0
    %898 = vmatprep.subr.mxu0 0.0
    %899 = vmatpush1.msra.mxu0 0.0
    %900 = vmatprep.subr.mxu0 0.0
    %901 = vmatpush1.msra.mxu0 0.0
    %902 = vmatprep.subr.mxu0 0.0
    %903 = vmatpush1.msra.mxu0 0.0
    %904 = vmatprep.subr.mxu0 0.0
    %905 = vmatpush1.msra.mxu0 0.0
    %906 = vmatprep.subr.mxu0 0.0
    %907 = vmatpush1.msra.mxu0 0.0
    %908 = vmatprep.subr.mxu0 0.0
    %909 = vmatpush1.msra.mxu0 0.0
    %910 = vmatprep.subr.mxu0 0.0
    %911 = vmatpush1.msra.mxu0 0.0
    %912 = vmatprep.subr.mxu0 0.0
    %913 = vmatpush1.msra.mxu0 0.0
    %914 = vmatprep.subr.mxu0 0.0
    %915 = vmatpush1.msra.mxu0 0.0
    %916 = vmatprep.subr.mxu0 0.0
    %917 = vmatpush1.msra.mxu0 0.0
    %918 = vmatprep.subr.mxu0 0.0
    %919 = vmatpush1.msra.mxu0 0.0
    %920 = vmatprep.mubr.f32.mxu0 0.0
    %921 = vmatmul.mubr.f32.gmra.mrb[0].mxu0 %v178
    %v922 = vpop.f32.mrb[0].mxu0
    %v923 = vadd.f32 %v854, %v922
    %v924 = vpop.f32.mrb[0].mxu0
    %925 = vmatprep.mubr.f32.mxu0 0.0
    %926 = vmatmul.mubr.f32.gmra.mrb[0].mxu0 %v181
    %v927 = vpop.f32.mrb[0].mxu0
    %v928 = vadd.f32 %v854, %v927
    %v929 = vpop.f32.mrb[0].mxu0
    %930 = vdwg.mxu0
    %s931 = scalar_lea.vmem %s6, 32
    %v932 = vld [vmem:[%s931] sm:$0xff]
    %v933 = vld [vmem:[%s931 + $0x8] sm:$0xff]
    %v934 = vld [vmem:[%s931 + $0x10] sm:$0xff]
    %v935 = vld [vmem:[%s931 + $0x18] sm:$0xff]
    %s936 = scalar_lea.vmem %s7, 1
    %v937 = vld [vmem:[%s936] sm:$0x1]
    %v939 = vlaneseq
    %v940 = vshrl.u32 %v939, 7
    %v941 = vsub.s32 0, %v940
    %v942 = vrot.slane %v937, %v941
    %944 = vmatprep.subr.mxu0 0.0
    %945 = vmatpush1.msra.mxu0 %v932
    %946 = vmatprep.subr.mxu0 0.0
    %947 = vmatpush1.msra.mxu0 %v933
    %948 = vmatprep.subr.mxu0 0.0
    %949 = vmatpush1.msra.mxu0 %v934
    %950 = vmatprep.subr.mxu0 0.0
    %951 = vmatpush1.msra.mxu0 %v935
    %952 = vmatprep.subr.mxu0 0.0
    %953 = vmatpush1.msra.mxu0 0.0
    %954 = vmatprep.subr.mxu0 0.0
    %955 = vmatpush1.msra.mxu0 0.0
    %956 = vmatprep.subr.mxu0 0.0
    %957 = vmatpush1.msra.mxu0 0.0
    %958 = vmatprep.subr.mxu0 0.0
    %959 = vmatpush1.msra.mxu0 0.0
    %960 = vmatprep.subr.mxu0 0.0
    %961 = vmatpush1.msra.mxu0 0.0
    %962 = vmatprep.subr.mxu0 0.0
    %963 = vmatpush1.msra.mxu0 0.0
    %964 = vmatprep.subr.mxu0 0.0
    %965 = vmatpush1.msra.mxu0 0.0
    %966 = vmatprep.subr.mxu0 0.0
    %967 = vmatpush1.msra.mxu0 0.0
    %968 = vmatprep.subr.mxu0 0.0
    %969 = vmatpush1.msra.mxu0 0.0
    %970 = vmatprep.subr.mxu0 0.0
    %971 = vmatpush1.msra.mxu0 0.0
    %972 = vmatprep.subr.mxu0 0.0
    %973 = vmatpush1.msra.mxu0 0.0
    %974 = vmatprep.subr.mxu0 0.0
    %975 = vmatpush1.msra.mxu0 0.0
    %976 = vmatprep.subr.mxu0 0.0
    %977 = vmatpush1.msra.mxu0 0.0
    %978 = vmatprep.subr.mxu0 0.0
    %979 = vmatpush1.msra.mxu0 0.0
    %980 = vmatprep.subr.mxu0 0.0
    %981 = vmatpush1.msra.mxu0 0.0
    %982 = vmatprep.subr.mxu0 0.0
    %983 = vmatpush1.msra.mxu0 0.0
    %984 = vmatprep.subr.mxu0 0.0
    %985 = vmatpush1.msra.mxu0 0.0
    %986 = vmatprep.subr.mxu0 0.0
    %987 = vmatpush1.msra.mxu0 0.0
    %988 = vmatprep.subr.mxu0 0.0
    %989 = vmatpush1.msra.mxu0 0.0
    %990 = vmatprep.subr.mxu0 0.0
    %991 = vmatpush1.msra.mxu0 0.0
    %992 = vmatprep.subr.mxu0 0.0
    %993 = vmatpush1.msra.mxu0 0.0
    %994 = vmatprep.subr.mxu0 0.0
    %995 = vmatpush1.msra.mxu0 0.0
    %996 = vmatprep.subr.mxu0 0.0
    %997 = vmatpush1.msra.mxu0 0.0
    %998 = vmatprep.subr.mxu0 0.0
    %999 = vmatpush1.msra.mxu0 0.0
    %1000 = vmatprep.subr.mxu0 0.0
    %1001 = vmatpush1.msra.mxu0 0.0
    %1002 = vmatprep.subr.mxu0 0.0
    %1003 = vmatpush1.msra.mxu0 0.0
    %1004 = vmatprep.subr.mxu0 0.0
    %1005 = vmatpush1.msra.mxu0 0.0
    %1006 = vmatprep.subr.mxu0 0.0
    %1007 = vmatpush1.msra.mxu0 0.0
    %1008 = vmatprep.mubr.f32.mxu0 0.0
    %1009 = vmatmul.mubr.f32.gmra.mrb[0].mxu0 %v178
    %v1010 = vpop.f32.mrb[0].mxu0
    %v1011 = vadd.f32 %v942, %v1010
    %v1012 = vpop.f32.mrb[0].mxu0
    %1013 = vmatprep.mubr.f32.mxu0 0.0
    %1014 = vmatmul.mubr.f32.gmra.mrb[0].mxu0 %v181
    %v1015 = vpop.f32.mrb[0].mxu0
    %v1016 = vadd.f32 %v942, %v1015
    %v1017 = vpop.f32.mrb[0].mxu0
    %1018 = vdwg.mxu0
    %s1019 = scalar_lea.vmem %s8, 32
    %v1020 = vld [vmem:[%s1019] sm:$0xff]
    %v1021 = vld [vmem:[%s1019 + $0x8] sm:$0xff]
    %v1022 = vld [vmem:[%s1019 + $0x10] sm:$0xff]
    %v1023 = vld [vmem:[%s1019 + $0x18] sm:$0xff]
    %s1024 = scalar_lea.vmem %s9, 1
    %v1025 = vld [vmem:[%s1024] sm:$0x1]
    %v1027 = vlaneseq
    %v1028 = vshrl.u32 %v1027, 7
    %v1029 = vsub.s32 0, %v1028
    %v1030 = vrot.slane %v1025, %v1029
    %1032 = vmatprep.subr.mxu0 0.0
    %1033 = vmatpush1.msra.mxu0 %v1020
    %1034 = vmatprep.subr.mxu0 0.0
    %1035 = vmatpush1.msra.mxu0 %v1021
    %1036 = vmatprep.subr.mxu0 0.0
    %1037 = vmatpush1.msra.mxu0 %v1022
    %1038 = vmatprep.subr.mxu0 0.0
    %1039 = vmatpush1.msra.mxu0 %v1023
    %1040 = vmatprep.subr.mxu0 0.0
    %1041 = vmatpush1.msra.mxu0 0.0
    %1042 = vmatprep.subr.mxu0 0.0
    %1043 = vmatpush1.msra.mxu0 0.0
    %1044 = vmatprep.subr.mxu0 0.0
    %1045 = vmatpush1.msra.mxu0 0.0
    %1046 = vmatprep.subr.mxu0 0.0
    %1047 = vmatpush1.msra.mxu0 0.0
    %1048 = vmatprep.subr.mxu0 0.0
    %1049 = vmatpush1.msra.mxu0 0.0
    %1050 = vmatprep.subr.mxu0 0.0
    %1051 = vmatpush1.msra.mxu0 0.0
    %1052 = vmatprep.subr.mxu0 0.0
    %1053 = vmatpush1.msra.mxu0 0.0
    %1054 = vmatprep.subr.mxu0 0.0
    %1055 = vmatpush1.msra.mxu0 0.0
    %1056 = vmatprep.subr.mxu0 0.0
    %1057 = vmatpush1.msra.mxu0 0.0
    %1058 = vmatprep.subr.mxu0 0.0
    %1059 = vmatpush1.msra.mxu0 0.0
    %1060 = vmatprep.subr.mxu0 0.0
    %1061 = vmatpush1.msra.mxu0 0.0
    %1062 = vmatprep.subr.mxu0 0.0
    %1063 = vmatpush1.msra.mxu0 0.0
    %1064 = vmatprep.subr.mxu0 0.0
    %1065 = vmatpush1.msra.mxu0 0.0
    %1066 = vmatprep.subr.mxu0 0.0
    %1067 = vmatpush1.msra.mxu0 0.0
    %1068 = vmatprep.subr.mxu0 0.0
    %1069 = vmatpush1.msra.mxu0 0.0
    %1070 = vmatprep.subr.mxu0 0.0
    %1071 = vmatpush1.msra.mxu0 0.0
    %1072 = vmatprep.subr.mxu0 0.0
    %1073 = vmatpush1.msra.mxu0 0.0
    %1074 = vmatprep.subr.mxu0 0.0
    %1075 = vmatpush1.msra.mxu0 0.0
    %1076 = vmatprep.subr.mxu0 0.0
    %1077 = vmatpush1.msra.mxu0 0.0
    %1078 = vmatprep.subr.mxu0 0.0
    %1079 = vmatpush1.msra.mxu0 0.0
    %1080 = vmatprep.subr.mxu0 0.0
    %1081 = vmatpush1.msra.mxu0 0.0
    %1082 = vmatprep.subr.mxu0 0.0
    %1083 = vmatpush1.msra.mxu0 0.0
    %1084 = vmatprep.subr.mxu0 0.0
    %1085 = vmatpush1.msra.mxu0 0.0
    %1086 = vmatprep.subr.mxu0 0.0
    %1087 = vmatpush1.msra.mxu0 0.0
    %1088 = vmatprep.subr.mxu0 0.0
    %1089 = vmatpush1.msra.mxu0 0.0
    %1090 = vmatprep.subr.mxu0 0.0
    %1091 = vmatpush1.msra.mxu0 0.0
    %1092 = vmatprep.subr.mxu0 0.0
    %1093 = vmatpush1.msra.mxu0 0.0
    %1094 = vmatprep.subr.mxu0 0.0
    %1095 = vmatpush1.msra.mxu0 0.0
    %1096 = vmatprep.mubr.f32.mxu0 0.0
    %1097 = vmatmul.mubr.f32.gmra.mrb[0].mxu0 %v178
    %v1098 = vpop.f32.mrb[0].mxu0
    %v1099 = vadd.f32 %v1030, %v1098
    %v1100 = vpop.f32.mrb[0].mxu0
    %1101 = vmatprep.mubr.f32.mxu0 0.0
    %1102 = vmatmul.mubr.f32.gmra.mrb[0].mxu0 %v181
    %v1103 = vpop.f32.mrb[0].mxu0
    %v1104 = vadd.f32 %v1030, %v1103
    %v1105 = vpop.f32.mrb[0].mxu0
    %1106 = vdwg.mxu0
    %v1108 = vsel %vm430, %v923, 0
    %v1111 = vsel %vm430, %v1011, 0
    %1113 = vmatprep.subr.mxu0 0.0
    %1114 = vmatpush1.xpose.msra.mxu0 %v1111
    %1115 = vmatprep.subr.mxu0 0.0
    %1116 = vmatpush1.xpose.msra.mxu0 0.0
    %1117 = vmatprep.subr.mxu0 0.0
    %1118 = vmatpush1.xpose.msra.mxu0 0.0
    %1119 = vmatprep.subr.mxu0 0.0
    %1120 = vmatpush1.xpose.msra.mxu0 0.0
    %1121 = vmatprep.subr.mxu0 0.0
    %1122 = vmatpush1.xpose.msra.mxu0 0.0
    %1123 = vmatprep.subr.mxu0 0.0
    %1124 = vmatpush1.xpose.msra.mxu0 0.0
    %1125 = vmatprep.subr.mxu0 0.0
    %1126 = vmatpush1.xpose.msra.mxu0 0.0
    %1127 = vmatprep.subr.mxu0 0.0
    %1128 = vmatpush1.xpose.msra.mxu0 0.0
    %1129 = vmatprep.subr.mxu0 0.0
    %1130 = vmatpush1.xpose.msra.mxu0 0.0
    %1131 = vmatprep.subr.mxu0 0.0
    %1132 = vmatpush1.xpose.msra.mxu0 0.0
    %1133 = vmatprep.subr.mxu0 0.0
    %1134 = vmatpush1.xpose.msra.mxu0 0.0
    %1135 = vmatprep.subr.mxu0 0.0
    %1136 = vmatpush1.xpose.msra.mxu0 0.0
    %1137 = vmatprep.subr.mxu0 0.0
    %1138 = vmatpush1.xpose.msra.mxu0 0.0
    %1139 = vmatprep.subr.mxu0 0.0
    %1140 = vmatpush1.xpose.msra.mxu0 0.0
    %1141 = vmatprep.subr.mxu0 0.0
    %1142 = vmatpush1.xpose.msra.mxu0 0.0
    %1143 = vmatprep.subr.mxu0 0.0
    %1144 = vmatpush1.xpose.msra.mxu0 0.0
    %1145 = vmatprep.subr.mxu0 0.0
    %1146 = vmatpush1.xpose.msra.mxu0 0.0
    %1147 = vmatprep.subr.mxu0 0.0
    %1148 = vmatpush1.xpose.msra.mxu0 0.0
    %1149 = vmatprep.subr.mxu0 0.0
    %1150 = vmatpush1.xpose.msra.mxu0 0.0
    %1151 = vmatprep.subr.mxu0 0.0
    %1152 = vmatpush1.xpose.msra.mxu0 0.0
    %1153 = vmatprep.subr.mxu0 0.0
    %1154 = vmatpush1.xpose.msra.mxu0 0.0
    %1155 = vmatprep.subr.mxu0 0.0
    %1156 = vmatpush1.xpose.msra.mxu0 0.0
    %1157 = vmatprep.subr.mxu0 0.0
    %1158 = vmatpush1.xpose.msra.mxu0 0.0
    %1159 = vmatprep.subr.mxu0 0.0
    %1160 = vmatpush1.xpose.msra.mxu0 0.0
    %1161 = vmatprep.subr.mxu0 0.0
    %1162 = vmatpush1.xpose.msra.mxu0 0.0
    %1163 = vmatprep.subr.mxu0 0.0
    %1164 = vmatpush1.xpose.msra.mxu0 0.0
    %1165 = vmatprep.subr.mxu0 0.0
    %1166 = vmatpush1.xpose.msra.mxu0 0.0
    %1167 = vmatprep.subr.mxu0 0.0
    %1168 = vmatpush1.xpose.msra.mxu0 0.0
    %1169 = vmatprep.subr.mxu0 0.0
    %1170 = vmatpush1.xpose.msra.mxu0 0.0
    %1171 = vmatprep.subr.mxu0 0.0
    %1172 = vmatpush1.xpose.msra.mxu0 0.0
    %1173 = vmatprep.subr.mxu0 0.0
    %1174 = vmatpush1.xpose.msra.mxu0 0.0
    %1175 = vmatprep.subr.mxu0 0.0
    %1176 = vmatpush1.xpose.msra.mxu0 0.0
    %1177 = vmatprep.mubr.f32.mxu0 0.0
    %1178 = vmatmul.mubr.f32.gmra.mrb[0].mxu0 %v1108
    %v1179 = vpop.f32.mrb[0].mxu0
    %v1180 = vadd.f32 0.0, %v1179
    %v1181 = vpop.f32.mrb[0].mxu0
    %1182 = vdwg.mxu0
    %v1183 = vmul.f32 %v1180, 0.35355338
    %v1184 = vsel %vm430, %v1183, -inf
    %1185 = vmax.xlane.f32.xlu0 %v1184
    %v1186 = vpop.xlane.xlu0 %1185
    %v1187 = vsub.f32 %v1183, %v1186
    %v1188 = vmul.f32 %v1187, 1.442695
    %v1189 = vpow.pop %v1188
    %v1190 = vsel %vm430, %v1189, 0.0
    %1191 = vadd.xlane.f32.xlu0 %v1190
    %v1192 = vpop.xlane.xlu0 %1191
    %v1193 = vrcp.pop %v1192
    %v1194 = vmul.f32 %v1189, %v1193
    %v1196 = vsel %vm430, %v1194, 0
    %1198 = vmatprep.subr.mxu0 0.0
    %1199 = vmatpush1.msra.mxu0 %v1099
    %1200 = vmatprep.subr.mxu0 0.0
    %1201 = vmatpush1.msra.mxu0 0.0
    %1202 = vmatprep.subr.mxu0 0.0
    %1203 = vmatpush1.msra.mxu0 0.0
    %1204 = vmatprep.subr.mxu0 0.0
    %1205 = vmatpush1.msra.mxu0 0.0
    %1206 = vmatprep.subr.mxu0 0.0
    %1207 = vmatpush1.msra.mxu0 0.0
    %1208 = vmatprep.subr.mxu0 0.0
    %1209 = vmatpush1.msra.mxu0 0.0
    %1210 = vmatprep.subr.mxu0 0.0
    %1211 = vmatpush1.msra.mxu0 0.0
    %1212 = vmatprep.subr.mxu0 0.0
    %1213 = vmatpush1.msra.mxu0 0.0
    %1214 = vmatprep.subr.mxu0 0.0
    %1215 = vmatpush1.msra.mxu0 0.0
    %1216 = vmatprep.subr.mxu0 0.0
    %1217 = vmatpush1.msra.mxu0 0.0
    %1218 = vmatprep.subr.mxu0 0.0
    %1219 = vmatpush1.msra.mxu0 0.0
    %1220 = vmatprep.subr.mxu0 0.0
    %1221 = vmatpush1.msra.mxu0 0.0
    %1222 = vmatprep.subr.mxu0 0.0
    %1223 = vmatpush1.msra.mxu0 0.0
    %1224 = vmatprep.subr.mxu0 0.0
    %1225 = vmatpush1.msra.mxu0 0.0
    %1226 = vmatprep.subr.mxu0 0.0
    %1227 = vmatpush1.msra.mxu0 0.0
    %1228 = vmatprep.subr.mxu0 0.0
    %1229 = vmatpush1.msra.mxu0 0.0
    %1230 = vmatprep.subr.mxu0 0.0
    %1231 = vmatpush1.msra.mxu0 0.0
    %1232 = vmatprep.subr.mxu0 0.0
    %1233 = vmatpush1.msra.mxu0 0.0
    %1234 = vmatprep.subr.mxu0 0.0
    %1235 = vmatpush1.msra.mxu0 0.0
    %1236 = vmatprep.subr.mxu0 0.0
    %1237 = vmatpush1.msra.mxu0 0.0
    %1238 = vmatprep.subr.mxu0 0.0
    %1239 = vmatpush1.msra.mxu0 0.0
    %1240 = vmatprep.subr.mxu0 0.0
    %1241 = vmatpush1.msra.mxu0 0.0
    %1242 = vmatprep.subr.mxu0 0.0
    %1243 = vmatpush1.msra.mxu0 0.0
    %1244 = vmatprep.subr.mxu0 0.0
    %1245 = vmatpush1.msra.mxu0 0.0
    %1246 = vmatprep.subr.mxu0 0.0
    %1247 = vmatpush1.msra.mxu0 0.0
    %1248 = vmatprep.subr.mxu0 0.0
    %1249 = vmatpush1.msra.mxu0 0.0
    %1250 = vmatprep.subr.mxu0 0.0
    %1251 = vmatpush1.msra.mxu0 0.0
    %1252 = vmatprep.subr.mxu0 0.0
    %1253 = vmatpush1.msra.mxu0 0.0
    %1254 = vmatprep.subr.mxu0 0.0
    %1255 = vmatpush1.msra.mxu0 0.0
    %1256 = vmatprep.subr.mxu0 0.0
    %1257 = vmatpush1.msra.mxu0 0.0
    %1258 = vmatprep.subr.mxu0 0.0
    %1259 = vmatpush1.msra.mxu0 0.0
    %1260 = vmatprep.subr.mxu0 0.0
    %1261 = vmatpush1.msra.mxu0 0.0
    %1262 = vmatprep.mubr.f32.mxu0 0.0
    %1263 = vmatmul.mubr.f32.gmra.mrb[0].mxu0 %v1196
    %v1264 = vpop.f32.mrb[0].mxu0
    %v1265 = vadd.f32 0.0, %v1264
    %v1266 = vpop.f32.mrb[0].mxu0
    %1267 = vdwg.mxu0
    %v1269 = vsel %vm430, %v928, 0
    %v1272 = vsel %vm430, %v1016, 0
    %1274 = vmatprep.subr.mxu0 0.0
    %1275 = vmatpush1.xpose.msra.mxu0 %v1272
    %1276 = vmatprep.subr.mxu0 0.0
    %1277 = vmatpush1.xpose.msra.mxu0 0.0
    %1278 = vmatprep.subr.mxu0 0.0
    %1279 = vmatpush1.xpose.msra.mxu0 0.0
    %1280 = vmatprep.subr.mxu0 0.0
    %1281 = vmatpush1.xpose.msra.mxu0 0.0
    %1282 = vmatprep.subr.mxu0 0.0
    %1283 = vmatpush1.xpose.msra.mxu0 0.0
    %1284 = vmatprep.subr.mxu0 0.0
    %1285 = vmatpush1.xpose.msra.mxu0 0.0
    %1286 = vmatprep.subr.mxu0 0.0
    %1287 = vmatpush1.xpose.msra.mxu0 0.0
    %1288 = vmatprep.subr.mxu0 0.0
    %1289 = vmatpush1.xpose.msra.mxu0 0.0
    %1290 = vmatprep.subr.mxu0 0.0
    %1291 = vmatpush1.xpose.msra.mxu0 0.0
    %1292 = vmatprep.subr.mxu0 0.0
    %1293 = vmatpush1.xpose.msra.mxu0 0.0
    %1294 = vmatprep.subr.mxu0 0.0
    %1295 = vmatpush1.xpose.msra.mxu0 0.0
    %1296 = vmatprep.subr.mxu0 0.0
    %1297 = vmatpush1.xpose.msra.mxu0 0.0
    %1298 = vmatprep.subr.mxu0 0.0
    %1299 = vmatpush1.xpose.msra.mxu0 0.0
    %1300 = vmatprep.subr.mxu0 0.0
    %1301 = vmatpush1.xpose.msra.mxu0 0.0
    %1302 = vmatprep.subr.mxu0 0.0
    %1303 = vmatpush1.xpose.msra.mxu0 0.0
    %1304 = vmatprep.subr.mxu0 0.0
    %1305 = vmatpush1.xpose.msra.mxu0 0.0
    %1306 = vmatprep.subr.mxu0 0.0
    %1307 = vmatpush1.xpose.msra.mxu0 0.0
    %1308 = vmatprep.subr.mxu0 0.0
    %1309 = vmatpush1.xpose.msra.mxu0 0.0
    %1310 = vmatprep.subr.mxu0 0.0
    %1311 = vmatpush1.xpose.msra.mxu0 0.0
    %1312 = vmatprep.subr.mxu0 0.0
    %1313 = vmatpush1.xpose.msra.mxu0 0.0
    %1314 = vmatprep.subr.mxu0 0.0
    %1315 = vmatpush1.xpose.msra.mxu0 0.0
    %1316 = vmatprep.subr.mxu0 0.0
    %1317 = vmatpush1.xpose.msra.mxu0 0.0
    %1318 = vmatprep.subr.mxu0 0.0
    %1319 = vmatpush1.xpose.msra.mxu0 0.0
    %1320 = vmatprep.subr.mxu0 0.0
    %1321 = vmatpush1.xpose.msra.mxu0 0.0
    %1322 = vmatprep.subr.mxu0 0.0
    %1323 = vmatpush1.xpose.msra.mxu0 0.0
    %1324 = vmatprep.subr.mxu0 0.0
    %1325 = vmatpush1.xpose.msra.mxu0 0.0
    %1326 = vmatprep.subr.mxu0 0.0
    %1327 = vmatpush1.xpose.msra.mxu0 0.0
    %1328 = vmatprep.subr.mxu0 0.0
    %1329 = vmatpush1.xpose.msra.mxu0 0.0
    %1330 = vmatprep.subr.mxu0 0.0
    %1331 = vmatpush1.xpose.msra.mxu0 0.0
    %1332 = vmatprep.subr.mxu0 0.0
    %1333 = vmatpush1.xpose.msra.mxu0 0.0
    %1334 = vmatprep.subr.mxu0 0.0
    %1335 = vmatpush1.xpose.msra.mxu0 0.0
    %1336 = vmatprep.subr.mxu0 0.0
    %1337 = vmatpush1.xpose.msra.mxu0 0.0
    %1338 = vmatprep.mubr.f32.mxu0 0.0
    %1339 = vmatmul.mubr.f32.gmra.mrb[0].mxu0 %v1269
    %v1340 = vpop.f32.mrb[0].mxu0
    %v1341 = vadd.f32 0.0, %v1340
    %v1342 = vpop.f32.mrb[0].mxu0
    %1343 = vdwg.mxu0
    %v1344 = vmul.f32 %v1341, 0.35355338
    %v1345 = vsel %vm430, %v1344, -inf
    %1346 = vmax.xlane.f32.xlu0 %v1345
    %v1347 = vpop.xlane.xlu0 %1346
    %v1348 = vsub.f32 %v1344, %v1347
    %v1349 = vmul.f32 %v1348, 1.442695
    %v1350 = vpow.pop %v1349
    %v1351 = vsel %vm430, %v1350, 0.0
    %1352 = vadd.xlane.f32.xlu0 %v1351
    %v1353 = vpop.xlane.xlu0 %1352
    %v1354 = vrcp.pop %v1353
    %v1355 = vmul.f32 %v1350, %v1354
    %v1357 = vsel %vm430, %v1355, 0
    %1359 = vmatprep.subr.mxu0 0.0
    %1360 = vmatpush1.msra.mxu0 %v1104
    %1361 = vmatprep.subr.mxu0 0.0
    %1362 = vmatpush1.msra.mxu0 0.0
    %1363 = vmatprep.subr.mxu0 0.0
    %1364 = vmatpush1.msra.mxu0 0.0
    %1365 = vmatprep.subr.mxu0 0.0
    %1366 = vmatpush1.msra.mxu0 0.0
    %1367 = vmatprep.subr.mxu0 0.0
    %1368 = vmatpush1.msra.mxu0 0.0
    %1369 = vmatprep.subr.mxu0 0.0
    %1370 = vmatpush1.msra.mxu0 0.0
    %1371 = vmatprep.subr.mxu0 0.0
    %1372 = vmatpush1.msra.mxu0 0.0
    %1373 = vmatprep.subr.mxu0 0.0
    %1374 = vmatpush1.msra.mxu0 0.0
    %1375 = vmatprep.subr.mxu0 0.0
    %1376 = vmatpush1.msra.mxu0 0.0
    %1377 = vmatprep.subr.mxu0 0.0
    %1378 = vmatpush1.msra.mxu0 0.0
    %1379 = vmatprep.subr.mxu0 0.0
    %1380 = vmatpush1.msra.mxu0 0.0
    %1381 = vmatprep.subr.mxu0 0.0
    %1382 = vmatpush1.msra.mxu0 0.0
    %1383 = vmatprep.subr.mxu0 0.0
    %1384 = vmatpush1.msra.mxu0 0.0
    %1385 = vmatprep.subr.mxu0 0.0
    %1386 = vmatpush1.msra.mxu0 0.0
    %1387 = vmatprep.subr.mxu0 0.0
    %1388 = vmatpush1.msra.mxu0 0.0
    %1389 = vmatprep.subr.mxu0 0.0
    %1390 = vmatpush1.msra.mxu0 0.0
    %1391 = vmatprep.subr.mxu0 0.0
    %1392 = vmatpush1.msra.mxu0 0.0
    %1393 = vmatprep.subr.mxu0 0.0
    %1394 = vmatpush1.msra.mxu0 0.0
    %1395 = vmatprep.subr.mxu0 0.0
    %1396 = vmatpush1.msra.mxu0 0.0
    %1397 = vmatprep.subr.mxu0 0.0
    %1398 = vmatpush1.msra.mxu0 0.0
    %1399 = vmatprep.subr.mxu0 0.0
    %1400 = vmatpush1.msra.mxu0 0.0
    %1401 = vmatprep.subr.mxu0 0.0
    %1402 = vmatpush1.msra.mxu0 0.0
    %1403 = vmatprep.subr.mxu0 0.0
    %1404 = vmatpush1.msra.mxu0 0.0
    %1405 = vmatprep.subr.mxu0 0.0
    %1406 = vmatpush1.msra.mxu0 0.0
    %1407 = vmatprep.subr.mxu0 0.0
    %1408 = vmatpush1.msra.mxu0 0.0
    %1409 = vmatprep.subr.mxu0 0.0
    %1410 = vmatpush1.msra.mxu0 0.0
    %1411 = vmatprep.subr.mxu0 0.0
    %1412 = vmatpush1.msra.mxu0 0.0
    %1413 = vmatprep.subr.mxu0 0.0
    %1414 = vmatpush1.msra.mxu0 0.0
    %1415 = vmatprep.subr.mxu0 0.0
    %1416 = vmatpush1.msra.mxu0 0.0
    %1417 = vmatprep.subr.mxu0 0.0
    %1418 = vmatpush1.msra.mxu0 0.0
    %1419 = vmatprep.subr.mxu0 0.0
    %1420 = vmatpush1.msra.mxu0 0.0
    %1421 = vmatprep.subr.mxu0 0.0
    %1422 = vmatpush1.msra.mxu0 0.0
    %1423 = vmatprep.mubr.f32.mxu0 0.0
    %1424 = vmatmul.mubr.f32.gmra.mrb[0].mxu0 %v1357
    %v1425 = vpop.f32.mrb[0].mxu0
    %v1426 = vadd.f32 0.0, %v1425
    %v1427 = vpop.f32.mrb[0].mxu0
    %1428 = vdwg.mxu0
    %s1429 = scalar_lea.vmem %s10, 8
    %v1430 = vld [vmem:[%s1429] sm:$0xff]
    %v1432 = vsel %vm430, %v1265, 0
    %v1435 = vsel %vm430, %v1426, 0
    %1437 = vmatprep.subr.mxu0 0.0
    %1438 = vmatpush1.msra.mxu0 %v1430
    %1439 = vmatprep.subr.mxu0 0.0
    %1440 = vmatpush1.msra.mxu0 0.0
    %1441 = vmatprep.subr.mxu0 0.0
    %1442 = vmatpush1.msra.mxu0 0.0
    %1443 = vmatprep.subr.mxu0 0.0
    %1444 = vmatpush1.msra.mxu0 0.0
    %1445 = vmatprep.subr.mxu0 0.0
    %1446 = vmatpush1.msra.mxu0 0.0
    %1447 = vmatprep.subr.mxu0 0.0
    %1448 = vmatpush1.msra.mxu0 0.0
    %1449 = vmatprep.subr.mxu0 0.0
    %1450 = vmatpush1.msra.mxu0 0.0
    %1451 = vmatprep.subr.mxu0 0.0
    %1452 = vmatpush1.msra.mxu0 0.0
    %1453 = vmatprep.subr.mxu0 0.0
    %1454 = vmatpush1.msra.mxu0 0.0
    %1455 = vmatprep.subr.mxu0 0.0
    %1456 = vmatpush1.msra.mxu0 0.0
    %1457 = vmatprep.subr.mxu0 0.0
    %1458 = vmatpush1.msra.mxu0 0.0
    %1459 = vmatprep.subr.mxu0 0.0
    %1460 = vmatpush1.msra.mxu0 0.0
    %1461 = vmatprep.subr.mxu0 0.0
    %1462 = vmatpush1.msra.mxu0 0.0
    %1463 = vmatprep.subr.mxu0 0.0
    %1464 = vmatpush1.msra.mxu0 0.0
    %1465 = vmatprep.subr.mxu0 0.0
    %1466 = vmatpush1.msra.mxu0 0.0
    %1467 = vmatprep.subr.mxu0 0.0
    %1468 = vmatpush1.msra.mxu0 0.0
    %1469 = vmatprep.subr.mxu0 0.0
    %1470 = vmatpush1.msra.mxu0 0.0
    %1471 = vmatprep.subr.mxu0 0.0
    %1472 = vmatpush1.msra.mxu0 0.0
    %1473 = vmatprep.subr.mxu0 0.0
    %1474 = vmatpush1.msra.mxu0 0.0
    %1475 = vmatprep.subr.mxu0 0.0
    %1476 = vmatpush1.msra.mxu0 0.0
    %1477 = vmatprep.subr.mxu0 0.0
    %1478 = vmatpush1.msra.mxu0 0.0
    %1479 = vmatprep.subr.mxu0 0.0
    %1480 = vmatpush1.msra.mxu0 0.0
    %1481 = vmatprep.subr.mxu0 0.0
    %1482 = vmatpush1.msra.mxu0 0.0
    %1483 = vmatprep.subr.mxu0 0.0
    %1484 = vmatpush1.msra.mxu0 0.0
    %1485 = vmatprep.subr.mxu0 0.0
    %1486 = vmatpush1.msra.mxu0 0.0
    %1487 = vmatprep.subr.mxu0 0.0
    %1488 = vmatpush1.msra.mxu0 0.0
    %1489 = vmatprep.subr.mxu0 0.0
    %1490 = vmatpush1.msra.mxu0 0.0
    %1491 = vmatprep.subr.mxu0 0.0
    %1492 = vmatpush1.msra.mxu0 0.0
    %1493 = vmatprep.subr.mxu0 0.0
    %1494 = vmatpush1.msra.mxu0 0.0
    %1495 = vmatprep.subr.mxu0 0.0
    %1496 = vmatpush1.msra.mxu0 0.0
    %1497 = vmatprep.subr.mxu0 0.0
    %1498 = vmatpush1.msra.mxu0 0.0
    %1499 = vmatprep.subr.mxu0 0.0
    %1500 = vmatpush1.msra.mxu0 0.0
    %1501 = vmatprep.mubr.f32.mxu0 0.0
    %1502 = vmatmul.mubr.f32.gmra.mrb[0].mxu0 %v1432
    %v1503 = vpop.f32.mrb[0].mxu0
    %v1504 = vadd.f32 0.0, %v1503
    %v1505 = vpop.f32.mrb[0].mxu0
    %1506 = vmatprep.mubr.f32.mxu0 0.0
    %1507 = vmatmul.mubr.f32.gmra.mrb[0].mxu0 %v1435
    %v1508 = vpop.f32.mrb[0].mxu0
    %v1509 = vadd.f32 0.0, %v1508
    %v1510 = vpop.f32.mrb[0].mxu0
    %1511 = vdwg.mxu0
    %v1512 = vadd.f32 %v841, %v1504
    %v1513 = vadd.f32 %v842, %v1509
    %s1514 = scalar_lea.vmem %s4, 64
    %v1515 = vld [vmem:[%s1514] sm:$0xff]
    %v1516 = vld [vmem:[%s1514 + $0x8] sm:$0xff]
    %v1517 = vld [vmem:[%s1514 + $0x10] sm:$0xff]
    %v1518 = vld [vmem:[%s1514 + $0x18] sm:$0xff]
    %s1519 = scalar_lea.vmem %s5, 2
    %v1520 = vld [vmem:[%s1519] sm:$0x1]
    %v1522 = vlaneseq
    %v1523 = vshrl.u32 %v1522, 7
    %v1524 = vsub.s32 0, %v1523
    %v1525 = vrot.slane %v1520, %v1524
    %1527 = vmatprep.subr.mxu0 0.0
    %1528 = vmatpush1.msra.mxu0 %v1515
    %1529 = vmatprep.subr.mxu0 0.0
    %1530 = vmatpush1.msra.mxu0 %v1516
    %1531 = vmatprep.subr.mxu0 0.0
    %1532 = vmatpush1.msra.mxu0 %v1517
    %1533 = vmatprep.subr.mxu0 0.0
    %1534 = vmatpush1.msra.mxu0 %v1518
    %1535 = vmatprep.subr.mxu0 0.0
    %1536 = vmatpush1.msra.mxu0 0.0
    %1537 = vmatprep.subr.mxu0 0.0
    %1538 = vmatpush1.msra.mxu0 0.0
    %1539 = vmatprep.subr.mxu0 0.0
    %1540 = vmatpush1.msra.mxu0 0.0
    %1541 = vmatprep.subr.mxu0 0.0
    %1542 = vmatpush1.msra.mxu0 0.0
    %1543 = vmatprep.subr.mxu0 0.0
    %1544 = vmatpush1.msra.mxu0 0.0
    %1545 = vmatprep.subr.mxu0 0.0
    %1546 = vmatpush1.msra.mxu0 0.0
    %1547 = vmatprep.subr.mxu0 0.0
    %1548 = vmatpush1.msra.mxu0 0.0
    %1549 = vmatprep.subr.mxu0 0.0
    %1550 = vmatpush1.msra.mxu0 0.0
    %1551 = vmatprep.subr.mxu0 0.0
    %1552 = vmatpush1.msra.mxu0 0.0
    %1553 = vmatprep.subr.mxu0 0.0
    %1554 = vmatpush1.msra.mxu0 0.0
    %1555 = vmatprep.subr.mxu0 0.0
    %1556 = vmatpush1.msra.mxu0 0.0
    %1557 = vmatprep.subr.mxu0 0.0
    %1558 = vmatpush1.msra.mxu0 0.0
    %1559 = vmatprep.subr.mxu0 0.0
    %1560 = vmatpush1.msra.mxu0 0.0
    %1561 = vmatprep.subr.mxu0 0.0
    %1562 = vmatpush1.msra.mxu0 0.0
    %1563 = vmatprep.subr.mxu0 0.0
    %1564 = vmatpush1.msra.mxu0 0.0
    %1565 = vmatprep.subr.mxu0 0.0
    %1566 = vmatpush1.msra.mxu0 0.0
    %1567 = vmatprep.subr.mxu0 0.0
    %1568 = vmatpush1.msra.mxu0 0.0
    %1569 = vmatprep.subr.mxu0 0.0
    %1570 = vmatpush1.msra.mxu0 0.0
    %1571 = vmatprep.subr.mxu0 0.0
    %1572 = vmatpush1.msra.mxu0 0.0
    %1573 = vmatprep.subr.mxu0 0.0
    %1574 = vmatpush1.msra.mxu0 0.0
    %1575 = vmatprep.subr.mxu0 0.0
    %1576 = vmatpush1.msra.mxu0 0.0
    %1577 = vmatprep.subr.mxu0 0.0
    %1578 = vmatpush1.msra.mxu0 0.0
    %1579 = vmatprep.subr.mxu0 0.0
    %1580 = vmatpush1.msra.mxu0 0.0
    %1581 = vmatprep.subr.mxu0 0.0
    %1582 = vmatpush1.msra.mxu0 0.0
    %1583 = vmatprep.subr.mxu0 0.0
    %1584 = vmatpush1.msra.mxu0 0.0
    %1585 = vmatprep.subr.mxu0 0.0
    %1586 = vmatpush1.msra.mxu0 0.0
    %1587 = vmatprep.subr.mxu0 0.0
    %1588 = vmatpush1.msra.mxu0 0.0
    %1589 = vmatprep.subr.mxu0 0.0
    %1590 = vmatpush1.msra.mxu0 0.0
    %1591 = vmatprep.mubr.f32.mxu0 0.0
    %1592 = vmatmul.mubr.f32.gmra.mrb[0].mxu0 %v178
    %v1593 = vpop.f32.mrb[0].mxu0
    %v1594 = vadd.f32 %v1525, %v1593
    %v1595 = vpop.f32.mrb[0].mxu0
    %1596 = vmatprep.mubr.f32.mxu0 0.0
    %1597 = vmatmul.mubr.f32.gmra.mrb[0].mxu0 %v181
    %v1598 = vpop.f32.mrb[0].mxu0
    %v1599 = vadd.f32 %v1525, %v1598
    %v1600 = vpop.f32.mrb[0].mxu0
    %1601 = vdwg.mxu0
    %s1602 = scalar_lea.vmem %s6, 64
    %v1603 = vld [vmem:[%s1602] sm:$0xff]
    %v1604 = vld [vmem:[%s1602 + $0x8] sm:$0xff]
    %v1605 = vld [vmem:[%s1602 + $0x10] sm:$0xff]
    %v1606 = vld [vmem:[%s1602 + $0x18] sm:$0xff]
    %s1607 = scalar_lea.vmem %s7, 2
    %v1608 = vld [vmem:[%s1607] sm:$0x1]
    %v1610 = vlaneseq
    %v1611 = vshrl.u32 %v1610, 7
    %v1612 = vsub.s32 0, %v1611
    %v1613 = vrot.slane %v1608, %v1612
    %1615 = vmatprep.subr.mxu0 0.0
    %1616 = vmatpush1.msra.mxu0 %v1603
    %1617 = vmatprep.subr.mxu0 0.0
    %1618 = vmatpush1.msra.mxu0 %v1604
    %1619 = vmatprep.subr.mxu0 0.0
    %1620 = vmatpush1.msra.mxu0 %v1605
    %1621 = vmatprep.subr.mxu0 0.0
    %1622 = vmatpush1.msra.mxu0 %v1606
    %1623 = vmatprep.subr.mxu0 0.0
    %1624 = vmatpush1.msra.mxu0 0.0
    %1625 = vmatprep.subr.mxu0 0.0
    %1626 = vmatpush1.msra.mxu0 0.0
    %1627 = vmatprep.subr.mxu0 0.0
    %1628 = vmatpush1.msra.mxu0 0.0
    %1629 = vmatprep.subr.mxu0 0.0
    %1630 = vmatpush1.msra.mxu0 0.0
    %1631 = vmatprep.subr.mxu0 0.0
    %1632 = vmatpush1.msra.mxu0 0.0
    %1633 = vmatprep.subr.mxu0 0.0
    %1634 = vmatpush1.msra.mxu0 0.0
    %1635 = vmatprep.subr.mxu0 0.0
    %1636 = vmatpush1.msra.mxu0 0.0
    %1637 = vmatprep.subr.mxu0 0.0
    %1638 = vmatpush1.msra.mxu0 0.0
    %1639 = vmatprep.subr.mxu0 0.0
    %1640 = vmatpush1.msra.mxu0 0.0
    %1641 = vmatprep.subr.mxu0 0.0
    %1642 = vmatpush1.msra.mxu0 0.0
    %1643 = vmatprep.subr.mxu0 0.0
    %1644 = vmatpush1.msra.mxu0 0.0
    %1645 = vmatprep.subr.mxu0 0.0
    %1646 = vmatpush1.msra.mxu0 0.0
    %1647 = vmatprep.subr.mxu0 0.0
    %1648 = vmatpush1.msra.mxu0 0.0
    %1649 = vmatprep.subr.mxu0 0.0
    %1650 = vmatpush1.msra.mxu0 0.0
    %1651 = vmatprep.subr.mxu0 0.0
    %1652 = vmatpush1.msra.mxu0 0.0
    %1653 = vmatprep.subr.mxu0 0.0
    %1654 = vmatpush1.msra.mxu0 0.0
    %1655 = vmatprep.subr.mxu0 0.0
    %1656 = vmatpush1.msra.mxu0 0.0
    %1657 = vmatprep.subr.mxu0 0.0
    %1658 = vmatpush1.msra.mxu0 0.0
    %1659 = vmatprep.subr.mxu0 0.0
    %1660 = vmatpush1.msra.mxu0 0.0
    %1661 = vmatprep.subr.mxu0 0.0
    %1662 = vmatpush1.msra.mxu0 0.0
    %1663 = vmatprep.subr.mxu0 0.0
    %1664 = vmatpush1.msra.mxu0 0.0
    %1665 = vmatprep.subr.mxu0 0.0
    %1666 = vmatpush1.msra.mxu0 0.0
    %1667 = vmatprep.subr.mxu0 0.0
    %1668 = vmatpush1.msra.mxu0 0.0
    %1669 = vmatprep.subr.mxu0 0.0
    %1670 = vmatpush1.msra.mxu0 0.0
    %1671 = vmatprep.subr.mxu0 0.0
    %1672 = vmatpush1.msra.mxu0 0.0
    %1673 = vmatprep.subr.mxu0 0.0
    %1674 = vmatpush1.msra.mxu0 0.0
    %1675 = vmatprep.subr.mxu0 0.0
    %1676 = vmatpush1.msra.mxu0 0.0
    %1677 = vmatprep.subr.mxu0 0.0
    %1678 = vmatpush1.msra.mxu0 0.0
    %1679 = vmatprep.mubr.f32.mxu0 0.0
    %1680 = vmatmul.mubr.f32.gmra.mrb[0].mxu0 %v178
    %v1681 = vpop.f32.mrb[0].mxu0
    %v1682 = vadd.f32 %v1613, %v1681
    %v1683 = vpop.f32.mrb[0].mxu0
    %1684 = vmatprep.mubr.f32.mxu0 0.0
    %1685 = vmatmul.mubr.f32.gmra.mrb[0].mxu0 %v181
    %v1686 = vpop.f32.mrb[0].mxu0
    %v1687 = vadd.f32 %v1613, %v1686
    %v1688 = vpop.f32.mrb[0].mxu0
    %1689 = vdwg.mxu0
    %s1690 = scalar_lea.vmem %s8, 64
    %v1691 = vld [vmem:[%s1690] sm:$0xff]
    %v1692 = vld [vmem:[%s1690 + $0x8] sm:$0xff]
    %v1693 = vld [vmem:[%s1690 + $0x10] sm:$0xff]
    %v1694 = vld [vmem:[%s1690 + $0x18] sm:$0xff]
    %s1695 = scalar_lea.vmem %s9, 2
    %v1696 = vld [vmem:[%s1695] sm:$0x1]
    %v1698 = vlaneseq
    %v1699 = vshrl.u32 %v1698, 7
    %v1700 = vsub.s32 0, %v1699
    %v1701 = vrot.slane %v1696, %v1700
    %1703 = vmatprep.subr.mxu0 0.0
    %1704 = vmatpush1.msra.mxu0 %v1691
    %1705 = vmatprep.subr.mxu0 0.0
    %1706 = vmatpush1.msra.mxu0 %v1692
    %1707 = vmatprep.subr.mxu0 0.0
    %1708 = vmatpush1.msra.mxu0 %v1693
    %1709 = vmatprep.subr.mxu0 0.0
    %1710 = vmatpush1.msra.mxu0 %v1694
    %1711 = vmatprep.subr.mxu0 0.0
    %1712 = vmatpush1.msra.mxu0 0.0
    %1713 = vmatprep.subr.mxu0 0.0
    %1714 = vmatpush1.msra.mxu0 0.0
    %1715 = vmatprep.subr.mxu0 0.0
    %1716 = vmatpush1.msra.mxu0 0.0
    %1717 = vmatprep.subr.mxu0 0.0
    %1718 = vmatpush1.msra.mxu0 0.0
    %1719 = vmatprep.subr.mxu0 0.0
    %1720 = vmatpush1.msra.mxu0 0.0
    %1721 = vmatprep.subr.mxu0 0.0
    %1722 = vmatpush1.msra.mxu0 0.0
    %1723 = vmatprep.subr.mxu0 0.0
    %1724 = vmatpush1.msra.mxu0 0.0
    %1725 = vmatprep.subr.mxu0 0.0
    %1726 = vmatpush1.msra.mxu0 0.0
    %1727 = vmatprep.subr.mxu0 0.0
    %1728 = vmatpush1.msra.mxu0 0.0
    %1729 = vmatprep.subr.mxu0 0.0
    %1730 = vmatpush1.msra.mxu0 0.0
    %1731 = vmatprep.subr.mxu0 0.0
    %1732 = vmatpush1.msra.mxu0 0.0
    %1733 = vmatprep.subr.mxu0 0.0
    %1734 = vmatpush1.msra.mxu0 0.0
    %1735 = vmatprep.subr.mxu0 0.0
    %1736 = vmatpush1.msra.mxu0 0.0
    %1737 = vmatprep.subr.mxu0 0.0
    %1738 = vmatpush1.msra.mxu0 0.0
    %1739 = vmatprep.subr.mxu0 0.0
    %1740 = vmatpush1.msra.mxu0 0.0
    %1741 = vmatprep.subr.mxu0 0.0
    %1742 = vmatpush1.msra.mxu0 0.0
    %1743 = vmatprep.subr.mxu0 0.0
    %1744 = vmatpush1.msra.mxu0 0.0
    %1745 = vmatprep.subr.mxu0 0.0
    %1746 = vmatpush1.msra.mxu0 0.0
    %1747 = vmatprep.subr.mxu0 0.0
    %1748 = vmatpush1.msra.mxu0 0.0
    %1749 = vmatprep.subr.mxu0 0.0
    %1750 = vmatpush1.msra.mxu0 0.0
    %1751 = vmatprep.subr.mxu0 0.0
    %1752 = vmatpush1.msra.mxu0 0.0
    %1753 = vmatprep.subr.mxu0 0.0
    %1754 = vmatpush1.msra.mxu0 0.0
    %1755 = vmatprep.subr.mxu0 0.0
    %1756 = vmatpush1.msra.mxu0 0.0
    %1757 = vmatprep.subr.mxu0 0.0
    %1758 = vmatpush1.msra.mxu0 0.0
    %1759 = vmatprep.subr.mxu0 0.0
    %1760 = vmatpush1.msra.mxu0 0.0
    %1761 = vmatprep.subr.mxu0 0.0
    %1762 = vmatpush1.msra.mxu0 0.0
    %1763 = vmatprep.subr.mxu0 0.0
    %1764 = vmatpush1.msra.mxu0 0.0
    %1765 = vmatprep.subr.mxu0 0.0
    %1766 = vmatpush1.msra.mxu0 0.0
    %1767 = vmatprep.mubr.f32.mxu0 0.0
    %1768 = vmatmul.mubr.f32.gmra.mrb[0].mxu0 %v178
    %v1769 = vpop.f32.mrb[0].mxu0
    %v1770 = vadd.f32 %v1701, %v1769
    %v1771 = vpop.f32.mrb[0].mxu0
    %1772 = vmatprep.mubr.f32.mxu0 0.0
    %1773 = vmatmul.mubr.f32.gmra.mrb[0].mxu0 %v181
    %v1774 = vpop.f32.mrb[0].mxu0
    %v1775 = vadd.f32 %v1701, %v1774
    %v1776 = vpop.f32.mrb[0].mxu0
    %1777 = vdwg.mxu0
    %v1779 = vsel %vm430, %v1594, 0
    %v1782 = vsel %vm430, %v1682, 0
    %1784 = vmatprep.subr.mxu0 0.0
    %1785 = vmatpush1.xpose.msra.mxu0 %v1782
    %1786 = vmatprep.subr.mxu0 0.0
    %1787 = vmatpush1.xpose.msra.mxu0 0.0
    %1788 = vmatprep.subr.mxu0 0.0
    %1789 = vmatpush1.xpose.msra.mxu0 0.0
    %1790 = vmatprep.subr.mxu0 0.0
    %1791 = vmatpush1.xpose.msra.mxu0 0.0
    %1792 = vmatprep.subr.mxu0 0.0
    %1793 = vmatpush1.xpose.msra.mxu0 0.0
    %1794 = vmatprep.subr.mxu0 0.0
    %1795 = vmatpush1.xpose.msra.mxu0 0.0
    %1796 = vmatprep.subr.mxu0 0.0
    %1797 = vmatpush1.xpose.msra.mxu0 0.0
    %1798 = vmatprep.subr.mxu0 0.0
    %1799 = vmatpush1.xpose.msra.mxu0 0.0
    %1800 = vmatprep.subr.mxu0 0.0
    %1801 = vmatpush1.xpose.msra.mxu0 0.0
    %1802 = vmatprep.subr.mxu0 0.0
    %1803 = vmatpush1.xpose.msra.mxu0 0.0
    %1804 = vmatprep.subr.mxu0 0.0
    %1805 = vmatpush1.xpose.msra.mxu0 0.0
    %1806 = vmatprep.subr.mxu0 0.0
    %1807 = vmatpush1.xpose.msra.mxu0 0.0
    %1808 = vmatprep.subr.mxu0 0.0
    %1809 = vmatpush1.xpose.msra.mxu0 0.0
    %1810 = vmatprep.subr.mxu0 0.0
    %1811 = vmatpush1.xpose.msra.mxu0 0.0
    %1812 = vmatprep.subr.mxu0 0.0
    %1813 = vmatpush1.xpose.msra.mxu0 0.0
    %1814 = vmatprep.subr.mxu0 0.0
    %1815 = vmatpush1.xpose.msra.mxu0 0.0
    %1816 = vmatprep.subr.mxu0 0.0
    %1817 = vmatpush1.xpose.msra.mxu0 0.0
    %1818 = vmatprep.subr.mxu0 0.0
    %1819 = vmatpush1.xpose.msra.mxu0 0.0
    %1820 = vmatprep.subr.mxu0 0.0
    %1821 = vmatpush1.xpose.msra.mxu0 0.0
    %1822 = vmatprep.subr.mxu0 0.0
    %1823 = vmatpush1.xpose.msra.mxu0 0.0
    %1824 = vmatprep.subr.mxu0 0.0
    %1825 = vmatpush1.xpose.msra.mxu0 0.0
    %1826 = vmatprep.subr.mxu0 0.0
    %1827 = vmatpush1.xpose.msra.mxu0 0.0
    %1828 = vmatprep.subr.mxu0 0.0
    %1829 = vmatpush1.xpose.msra.mxu0 0.0
    %1830 = vmatprep.subr.mxu0 0.0
    %1831 = vmatpush1.xpose.msra.mxu0 0.0
    %1832 = vmatprep.subr.mxu0 0.0
    %1833 = vmatpush1.xpose.msra.mxu0 0.0
    %1834 = vmatprep.subr.mxu0 0.0
    %1835 = vmatpush1.xpose.msra.mxu0 0.0
    %1836 = vmatprep.subr.mxu0 0.0
    %1837 = vmatpush1.xpose.msra.mxu0 0.0
    %1838 = vmatprep.subr.mxu0 0.0
    %1839 = vmatpush1.xpose.msra.mxu0 0.0
    %1840 = vmatprep.subr.mxu0 0.0
    %1841 = vmatpush1.xpose.msra.mxu0 0.0
    %1842 = vmatprep.subr.mxu0 0.0
    %1843 = vmatpush1.xpose.msra.mxu0 0.0
    %1844 = vmatprep.subr.mxu0 0.0
    %1845 = vmatpush1.xpose.msra.mxu0 0.0
    %1846 = vmatprep.subr.mxu0 0.0
    %1847 = vmatpush1.xpose.msra.mxu0 0.0
    %1848 = vmatprep.mubr.f32.mxu0 0.0
    %1849 = vmatmul.mubr.f32.gmra.mrb[0].mxu0 %v1779
    %v1850 = vpop.f32.mrb[0].mxu0
    %v1851 = vadd.f32 0.0, %v1850
    %v1852 = vpop.f32.mrb[0].mxu0
    %1853 = vdwg.mxu0
    %v1854 = vmul.f32 %v1851, 0.35355338
    %v1855 = vsel %vm430, %v1854, -inf
    %1856 = vmax.xlane.f32.xlu0 %v1855
    %v1857 = vpop.xlane.xlu0 %1856
    %v1858 = vsub.f32 %v1854, %v1857
    %v1859 = vmul.f32 %v1858, 1.442695
    %v1860 = vpow.pop %v1859
    %v1861 = vsel %vm430, %v1860, 0.0
    %1862 = vadd.xlane.f32.xlu0 %v1861
    %v1863 = vpop.xlane.xlu0 %1862
    %v1864 = vrcp.pop %v1863
    %v1865 = vmul.f32 %v1860, %v1864
    %v1867 = vsel %vm430, %v1865, 0
    %1869 = vmatprep.subr.mxu0 0.0
    %1870 = vmatpush1.msra.mxu0 %v1770
    %1871 = vmatprep.subr.mxu0 0.0
    %1872 = vmatpush1.msra.mxu0 0.0
    %1873 = vmatprep.subr.mxu0 0.0
    %1874 = vmatpush1.msra.mxu0 0.0
    %1875 = vmatprep.subr.mxu0 0.0
    %1876 = vmatpush1.msra.mxu0 0.0
    %1877 = vmatprep.subr.mxu0 0.0
    %1878 = vmatpush1.msra.mxu0 0.0
    %1879 = vmatprep.subr.mxu0 0.0
    %1880 = vmatpush1.msra.mxu0 0.0
    %1881 = vmatprep.subr.mxu0 0.0
    %1882 = vmatpush1.msra.mxu0 0.0
    %1883 = vmatprep.subr.mxu0 0.0
    %1884 = vmatpush1.msra.mxu0 0.0
    %1885 = vmatprep.subr.mxu0 0.0
    %1886 = vmatpush1.msra.mxu0 0.0
    %1887 = vmatprep.subr.mxu0 0.0
    %1888 = vmatpush1.msra.mxu0 0.0
    %1889 = vmatprep.subr.mxu0 0.0
    %1890 = vmatpush1.msra.mxu0 0.0
    %1891 = vmatprep.subr.mxu0 0.0
    %1892 = vmatpush1.msra.mxu0 0.0
    %1893 = vmatprep.subr.mxu0 0.0
    %1894 = vmatpush1.msra.mxu0 0.0
    %1895 = vmatprep.subr.mxu0 0.0
    %1896 = vmatpush1.msra.mxu0 0.0
    %1897 = vmatprep.subr.mxu0 0.0
    %1898 = vmatpush1.msra.mxu0 0.0
    %1899 = vmatprep.subr.mxu0 0.0
    %1900 = vmatpush1.msra.mxu0 0.0
    %1901 = vmatprep.subr.mxu0 0.0
    %1902 = vmatpush1.msra.mxu0 0.0
    %1903 = vmatprep.subr.mxu0 0.0
    %1904 = vmatpush1.msra.mxu0 0.0
    %1905 = vmatprep.subr.mxu0 0.0
    %1906 = vmatpush1.msra.mxu0 0.0
    %1907 = vmatprep.subr.mxu0 0.0
    %1908 = vmatpush1.msra.mxu0 0.0
    %1909 = vmatprep.subr.mxu0 0.0
    %1910 = vmatpush1.msra.mxu0 0.0
    %1911 = vmatprep.subr.mxu0 0.0
    %1912 = vmatpush1.msra.mxu0 0.0
    %1913 = vmatprep.subr.mxu0 0.0
    %1914 = vmatpush1.msra.mxu0 0.0
    %1915 = vmatprep.subr.mxu0 0.0
    %1916 = vmatpush1.msra.mxu0 0.0
    %1917 = vmatprep.subr.mxu0 0.0
    %1918 = vmatpush1.msra.mxu0 0.0
    %1919 = vmatprep.subr.mxu0 0.0
    %1920 = vmatpush1.msra.mxu0 0.0
    %1921 = vmatprep.subr.mxu0 0.0
    %1922 = vmatpush1.msra.mxu0 0.0
    %1923 = vmatprep.subr.mxu0 0.0
    %1924 = vmatpush1.msra.mxu0 0.0
    %1925 = vmatprep.subr.mxu0 0.0
    %1926 = vmatpush1.msra.mxu0 0.0
    %1927 = vmatprep.subr.mxu0 0.0
    %1928 = vmatpush1.msra.mxu0 0.0
    %1929 = vmatprep.subr.mxu0 0.0
    %1930 = vmatpush1.msra.mxu0 0.0
    %1931 = vmatprep.subr.mxu0 0.0
    %1932 = vmatpush1.msra.mxu0 0.0
    %1933 = vmatprep.mubr.f32.mxu0 0.0
    %1934 = vmatmul.mubr.f32.gmra.mrb[0].mxu0 %v1867
    %v1935 = vpop.f32.mrb[0].mxu0
    %v1936 = vadd.f32 0.0, %v1935
    %v1937 = vpop.f32.mrb[0].mxu0
    %1938 = vdwg.mxu0
    %v1940 = vsel %vm430, %v1599, 0
    %v1943 = vsel %vm430, %v1687, 0
    %1945 = vmatprep.subr.mxu0 0.0
    %1946 = vmatpush1.xpose.msra.mxu0 %v1943
    %1947 = vmatprep.subr.mxu0 0.0
    %1948 = vmatpush1.xpose.msra.mxu0 0.0
    %1949 = vmatprep.subr.mxu0 0.0
    %1950 = vmatpush1.xpose.msra.mxu0 0.0
    %1951 = vmatprep.subr.mxu0 0.0
    %1952 = vmatpush1.xpose.msra.mxu0 0.0
    %1953 = vmatprep.subr.mxu0 0.0
    %1954 = vmatpush1.xpose.msra.mxu0 0.0
    %1955 = vmatprep.subr.mxu0 0.0
    %1956 = vmatpush1.xpose.msra.mxu0 0.0
    %1957 = vmatprep.subr.mxu0 0.0
    %1958 = vmatpush1.xpose.msra.mxu0 0.0
    %1959 = vmatprep.subr.mxu0 0.0
    %1960 = vmatpush1.xpose.msra.mxu0 0.0
    %1961 = vmatprep.subr.mxu0 0.0
    %1962 = vmatpush1.xpose.msra.mxu0 0.0
    %1963 = vmatprep.subr.mxu0 0.0
    %1964 = vmatpush1.xpose.msra.mxu0 0.0
    %1965 = vmatprep.subr.mxu0 0.0
    %1966 = vmatpush1.xpose.msra.mxu0 0.0
    %1967 = vmatprep.subr.mxu0 0.0
    %1968 = vmatpush1.xpose.msra.mxu0 0.0
    %1969 = vmatprep.subr.mxu0 0.0
    %1970 = vmatpush1.xpose.msra.mxu0 0.0
    %1971 = vmatprep.subr.mxu0 0.0
    %1972 = vmatpush1.xpose.msra.mxu0 0.0
    %1973 = vmatprep.subr.mxu0 0.0
    %1974 = vmatpush1.xpose.msra.mxu0 0.0
    %1975 = vmatprep.subr.mxu0 0.0
    %1976 = vmatpush1.xpose.msra.mxu0 0.0
    %1977 = vmatprep.subr.mxu0 0.0
    %1978 = vmatpush1.xpose.msra.mxu0 0.0
    %1979 = vmatprep.subr.mxu0 0.0
    %1980 = vmatpush1.xpose.msra.mxu0 0.0
    %1981 = vmatprep.subr.mxu0 0.0
    %1982 = vmatpush1.xpose.msra.mxu0 0.0
    %1983 = vmatprep.subr.mxu0 0.0
    %1984 = vmatpush1.xpose.msra.mxu0 0.0
    %1985 = vmatprep.subr.mxu0 0.0
    %1986 = vmatpush1.xpose.msra.mxu0 0.0
    %1987 = vmatprep.subr.mxu0 0.0
    %1988 = vmatpush1.xpose.msra.mxu0 0.0
    %1989 = vmatprep.subr.mxu0 0.0
    %1990 = vmatpush1.xpose.msra.mxu0 0.0
    %1991 = vmatprep.subr.mxu0 0.0
    %1992 = vmatpush1.xpose.msra.mxu0 0.0
    %1993 = vmatprep.subr.mxu0 0.0
    %1994 = vmatpush1.xpose.msra.mxu0 0.0
    %1995 = vmatprep.subr.mxu0 0.0
    %1996 = vmatpush1.xpose.msra.mxu0 0.0
    %1997 = vmatprep.subr.mxu0 0.0
    %1998 = vmatpush1.xpose.msra.mxu0 0.0
    %1999 = vmatprep.subr.mxu0 0.0
    %2000 = vmatpush1.xpose.msra.mxu0 0.0
    %2001 = vmatprep.subr.mxu0 0.0
    %2002 = vmatpush1.xpose.msra.mxu0 0.0
    %2003 = vmatprep.subr.mxu0 0.0
    %2004 = vmatpush1.xpose.msra.mxu0 0.0
    %2005 = vmatprep.subr.mxu0 0.0
    %2006 = vmatpush1.xpose.msra.mxu0 0.0
    %2007 = vmatprep.subr.mxu0 0.0
    %2008 = vmatpush1.xpose.msra.mxu0 0.0
    %2009 = vmatprep.mubr.f32.mxu0 0.0
    %2010 = vmatmul.mubr.f32.gmra.mrb[0].mxu0 %v1940
    %v2011 = vpop.f32.mrb[0].mxu0
    %v2012 = vadd.f32 0.0, %v2011
    %v2013 = vpop.f32.mrb[0].mxu0
    %2014 = vdwg.mxu0
    %v2015 = vmul.f32 %v2012, 0.35355338
    %v2016 = vsel %vm430, %v2015, -inf
    %2017 = vmax.xlane.f32.xlu0 %v2016
    %v2018 = vpop.xlane.xlu0 %2017
    %v2019 = vsub.f32 %v2015, %v2018
    %v2020 = vmul.f32 %v2019, 1.442695
    %v2021 = vpow.pop %v2020
    %v2022 = vsel %vm430, %v2021, 0.0
    %2023 = vadd.xlane.f32.xlu0 %v2022
    %v2024 = vpop.xlane.xlu0 %2023
    %v2025 = vrcp.pop %v2024
    %v2026 = vmul.f32 %v2021, %v2025
    %v2028 = vsel %vm430, %v2026, 0
    %2030 = vmatprep.subr.mxu0 0.0
    %2031 = vmatpush1.msra.mxu0 %v1775
    %2032 = vmatprep.subr.mxu0 0.0
    %2033 = vmatpush1.msra.mxu0 0.0
    %2034 = vmatprep.subr.mxu0 0.0
    %2035 = vmatpush1.msra.mxu0 0.0
    %2036 = vmatprep.subr.mxu0 0.0
    %2037 = vmatpush1.msra.mxu0 0.0
    %2038 = vmatprep.subr.mxu0 0.0
    %2039 = vmatpush1.msra.mxu0 0.0
    %2040 = vmatprep.subr.mxu0 0.0
    %2041 = vmatpush1.msra.mxu0 0.0
    %2042 = vmatprep.subr.mxu0 0.0
    %2043 = vmatpush1.msra.mxu0 0.0
    %2044 = vmatprep.subr.mxu0 0.0
    %2045 = vmatpush1.msra.mxu0 0.0
    %2046 = vmatprep.subr.mxu0 0.0
    %2047 = vmatpush1.msra.mxu0 0.0
    %2048 = vmatprep.subr.mxu0 0.0
    %2049 = vmatpush1.msra.mxu0 0.0
    %2050 = vmatprep.subr.mxu0 0.0
    %2051 = vmatpush1.msra.mxu0 0.0
    %2052 = vmatprep.subr.mxu0 0.0
    %2053 = vmatpush1.msra.mxu0 0.0
    %2054 = vmatprep.subr.mxu0 0.0
    %2055 = vmatpush1.msra.mxu0 0.0
    %2056 = vmatprep.subr.mxu0 0.0
    %2057 = vmatpush1.msra.mxu0 0.0
    %2058 = vmatprep.subr.mxu0 0.0
    %2059 = vmatpush1.msra.mxu0 0.0
    %2060 = vmatprep.subr.mxu0 0.0
    %2061 = vmatpush1.msra.mxu0 0.0
    %2062 = vmatprep.subr.mxu0 0.0
    %2063 = vmatpush1.msra.mxu0 0.0
    %2064 = vmatprep.subr.mxu0 0.0
    %2065 = vmatpush1.msra.mxu0 0.0
    %2066 = vmatprep.subr.mxu0 0.0
    %2067 = vmatpush1.msra.mxu0 0.0
    %2068 = vmatprep.subr.mxu0 0.0
    %2069 = vmatpush1.msra.mxu0 0.0
    %2070 = vmatprep.subr.mxu0 0.0
    %2071 = vmatpush1.msra.mxu0 0.0
    %2072 = vmatprep.subr.mxu0 0.0
    %2073 = vmatpush1.msra.mxu0 0.0
    %2074 = vmatprep.subr.mxu0 0.0
    %2075 = vmatpush1.msra.mxu0 0.0
    %2076 = vmatprep.subr.mxu0 0.0
    %2077 = vmatpush1.msra.mxu0 0.0
    %2078 = vmatprep.subr.mxu0 0.0
    %2079 = vmatpush1.msra.mxu0 0.0
    %2080 = vmatprep.subr.mxu0 0.0
    %2081 = vmatpush1.msra.mxu0 0.0
    %2082 = vmatprep.subr.mxu0 0.0
    %2083 = vmatpush1.msra.mxu0 0.0
    %2084 = vmatprep.subr.mxu0 0.0
    %2085 = vmatpush1.msra.mxu0 0.0
    %2086 = vmatprep.subr.mxu0 0.0
    %2087 = vmatpush1.msra.mxu0 0.0
    %2088 = vmatprep.subr.mxu0 0.0
    %2089 = vmatpush1.msra.mxu0 0.0
    %2090 = vmatprep.subr.mxu0 0.0
    %2091 = vmatpush1.msra.mxu0 0.0
    %2092 = vmatprep.subr.mxu0 0.0
    %2093 = vmatpush1.msra.mxu0 0.0
    %2094 = vmatprep.mubr.f32.mxu0 0.0
    %2095 = vmatmul.mubr.f32.gmra.mrb[0].mxu0 %v2028
    %v2096 = vpop.f32.mrb[0].mxu0
    %v2097 = vadd.f32 0.0, %v2096
    %v2098 = vpop.f32.mrb[0].mxu0
    %2099 = vdwg.mxu0
    %s2100 = scalar_lea.vmem %s10, 16
    %v2101 = vld [vmem:[%s2100] sm:$0xff]
    %v2103 = vsel %vm430, %v1936, 0
    %v2106 = vsel %vm430, %v2097, 0
    %2108 = vmatprep.subr.mxu0 0.0
    %2109 = vmatpush1.msra.mxu0 %v2101
    %2110 = vmatprep.subr.mxu0 0.0
    %2111 = vmatpush1.msra.mxu0 0.0
    %2112 = vmatprep.subr.mxu0 0.0
    %2113 = vmatpush1.msra.mxu0 0.0
    %2114 = vmatprep.subr.mxu0 0.0
    %2115 = vmatpush1.msra.mxu0 0.0
    %2116 = vmatprep.subr.mxu0 0.0
    %2117 = vmatpush1.msra.mxu0 0.0
    %2118 = vmatprep.subr.mxu0 0.0
    %2119 = vmatpush1.msra.mxu0 0.0
    %2120 = vmatprep.subr.mxu0 0.0
    %2121 = vmatpush1.msra.mxu0 0.0
    %2122 = vmatprep.subr.mxu0 0.0
    %2123 = vmatpush1.msra.mxu0 0.0
    %2124 = vmatprep.subr.mxu0 0.0
    %2125 = vmatpush1.msra.mxu0 0.0
    %2126 = vmatprep.subr.mxu0 0.0
    %2127 = vmatpush1.msra.mxu0 0.0
    %2128 = vmatprep.subr.mxu0 0.0
    %2129 = vmatpush1.msra.mxu0 0.0
    %2130 = vmatprep.subr.mxu0 0.0
    %2131 = vmatpush1.msra.mxu0 0.0
    %2132 = vmatprep.subr.mxu0 0.0
    %2133 = vmatpush1.msra.mxu0 0.0
    %2134 = vmatprep.subr.mxu0 0.0
    %2135 = vmatpush1.msra.mxu0 0.0
    %2136 = vmatprep.subr.mxu0 0.0
    %2137 = vmatpush1.msra.mxu0 0.0
    %2138 = vmatprep.subr.mxu0 0.0
    %2139 = vmatpush1.msra.mxu0 0.0
    %2140 = vmatprep.subr.mxu0 0.0
    %2141 = vmatpush1.msra.mxu0 0.0
    %2142 = vmatprep.subr.mxu0 0.0
    %2143 = vmatpush1.msra.mxu0 0.0
    %2144 = vmatprep.subr.mxu0 0.0
    %2145 = vmatpush1.msra.mxu0 0.0
    %2146 = vmatprep.subr.mxu0 0.0
    %2147 = vmatpush1.msra.mxu0 0.0
    %2148 = vmatprep.subr.mxu0 0.0
    %2149 = vmatpush1.msra.mxu0 0.0
    %2150 = vmatprep.subr.mxu0 0.0
    %2151 = vmatpush1.msra.mxu0 0.0
    %2152 = vmatprep.subr.mxu0 0.0
    %2153 = vmatpush1.msra.mxu0 0.0
    %2154 = vmatprep.subr.mxu0 0.0
    %2155 = vmatpush1.msra.mxu0 0.0
    %2156 = vmatprep.subr.mxu0 0.0
    %2157 = vmatpush1.msra.mxu0 0.0
    %2158 = vmatprep.subr.mxu0 0.0
    %2159 = vmatpush1.msra.mxu0 0.0
    %2160 = vmatprep.subr.mxu0 0.0
    %2161 = vmatpush1.msra.mxu0 0.0
    %2162 = vmatprep.subr.mxu0 0.0
    %2163 = vmatpush1.msra.mxu0 0.0
    %2164 = vmatprep.subr.mxu0 0.0
    %2165 = vmatpush1.msra.mxu0 0.0
    %2166 = vmatprep.subr.mxu0 0.0
    %2167 = vmatpush1.msra.mxu0 0.0
    %2168 = vmatprep.subr.mxu0 0.0
    %2169 = vmatpush1.msra.mxu0 0.0
    %2170 = vmatprep.subr.mxu0 0.0
    %2171 = vmatpush1.msra.mxu0 0.0
    %2172 = vmatprep.mubr.f32.mxu0 0.0
    %2173 = vmatmul.mubr.f32.gmra.mrb[0].mxu0 %v2103
    %v2174 = vpop.f32.mrb[0].mxu0
    %v2175 = vadd.f32 0.0, %v2174
    %v2176 = vpop.f32.mrb[0].mxu0
    %2177 = vmatprep.mubr.f32.mxu0 0.0
    %2178 = vmatmul.mubr.f32.gmra.mrb[0].mxu0 %v2106
    %v2179 = vpop.f32.mrb[0].mxu0
    %v2180 = vadd.f32 0.0, %v2179
    %v2181 = vpop.f32.mrb[0].mxu0
    %2182 = vdwg.mxu0
    %v2183 = vadd.f32 %v1512, %v2175
    %v2184 = vadd.f32 %v1513, %v2180
    %s2185 = scalar_lea.vmem %s4, 96
    %v2186 = vld [vmem:[%s2185] sm:$0xff]
    %v2187 = vld [vmem:[%s2185 + $0x8] sm:$0xff]
    %v2188 = vld [vmem:[%s2185 + $0x10] sm:$0xff]
    %v2189 = vld [vmem:[%s2185 + $0x18] sm:$0xff]
    %s2190 = scalar_lea.vmem %s5, 3
    %v2191 = vld [vmem:[%s2190] sm:$0x1]
    %v2193 = vlaneseq
    %v2194 = vshrl.u32 %v2193, 7
    %v2195 = vsub.s32 0, %v2194
    %v2196 = vrot.slane %v2191, %v2195
    %2198 = vmatprep.subr.mxu0 0.0
    %2199 = vmatpush1.msra.mxu0 %v2186
    %2200 = vmatprep.subr.mxu0 0.0
    %2201 = vmatpush1.msra.mxu0 %v2187
    %2202 = vmatprep.subr.mxu0 0.0
    %2203 = vmatpush1.msra.mxu0 %v2188
    %2204 = vmatprep.subr.mxu0 0.0
    %2205 = vmatpush1.msra.mxu0 %v2189
    %2206 = vmatprep.subr.mxu0 0.0
    %2207 = vmatpush1.msra.mxu0 0.0
    %2208 = vmatprep.subr.mxu0 0.0
    %2209 = vmatpush1.msra.mxu0 0.0
    %2210 = vmatprep.subr.mxu0 0.0
    %2211 = vmatpush1.msra.mxu0 0.0
    %2212 = vmatprep.subr.mxu0 0.0
    %2213 = vmatpush1.msra.mxu0 0.0
    %2214 = vmatprep.subr.mxu0 0.0
    %2215 = vmatpush1.msra.mxu0 0.0
    %2216 = vmatprep.subr.mxu0 0.0
    %2217 = vmatpush1.msra.mxu0 0.0
    %2218 = vmatprep.subr.mxu0 0.0
    %2219 = vmatpush1.msra.mxu0 0.0
    %2220 = vmatprep.subr.mxu0 0.0
    %2221 = vmatpush1.msra.mxu0 0.0
    %2222 = vmatprep.subr.mxu0 0.0
    %2223 = vmatpush1.msra.mxu0 0.0
    %2224 = vmatprep.subr.mxu0 0.0
    %2225 = vmatpush1.msra.mxu0 0.0
    %2226 = vmatprep.subr.mxu0 0.0
    %2227 = vmatpush1.msra.mxu0 0.0
    %2228 = vmatprep.subr.mxu0 0.0
    %2229 = vmatpush1.msra.mxu0 0.0
    %2230 = vmatprep.subr.mxu0 0.0
    %2231 = vmatpush1.msra.mxu0 0.0
    %2232 = vmatprep.subr.mxu0 0.0
    %2233 = vmatpush1.msra.mxu0 0.0
    %2234 = vmatprep.subr.mxu0 0.0
    %2235 = vmatpush1.msra.mxu0 0.0
    %2236 = vmatprep.subr.mxu0 0.0
    %2237 = vmatpush1.msra.mxu0 0.0
    %2238 = vmatprep.subr.mxu0 0.0
    %2239 = vmatpush1.msra.mxu0 0.0
    %2240 = vmatprep.subr.mxu0 0.0
    %2241 = vmatpush1.msra.mxu0 0.0
    %2242 = vmatprep.subr.mxu0 0.0
    %2243 = vmatpush1.msra.mxu0 0.0
    %2244 = vmatprep.subr.mxu0 0.0
    %2245 = vmatpush1.msra.mxu0 0.0
    %2246 = vmatprep.subr.mxu0 0.0
    %2247 = vmatpush1.msra.mxu0 0.0
    %2248 = vmatprep.subr.mxu0 0.0
    %2249 = vmatpush1.msra.mxu0 0.0
    %2250 = vmatprep.subr.mxu0 0.0
    %2251 = vmatpush1.msra.mxu0 0.0
    %2252 = vmatprep.subr.mxu0 0.0
    %2253 = vmatpush1.msra.mxu0 0.0
    %2254 = vmatprep.subr.mxu0 0.0
    %2255 = vmatpush1.msra.mxu0 0.0
    %2256 = vmatprep.subr.mxu0 0.0
    %2257 = vmatpush1.msra.mxu0 0.0
    %2258 = vmatprep.subr.mxu0 0.0
    %2259 = vmatpush1.msra.mxu0 0.0
    %2260 = vmatprep.subr.mxu0 0.0
    %2261 = vmatpush1.msra.mxu0 0.0
    %2262 = vmatprep.mubr.f32.mxu0 0.0
    %2263 = vmatmul.mubr.f32.gmra.mrb[0].mxu0 %v178
    %v2264 = vpop.f32.mrb[0].mxu0
    %v2265 = vadd.f32 %v2196, %v2264
    %v2266 = vpop.f32.mrb[0].mxu0
    %2267 = vmatprep.mubr.f32.mxu0 0.0
    %2268 = vmatmul.mubr.f32.gmra.mrb[0].mxu0 %v181
    %v2269 = vpop.f32.mrb[0].mxu0
    %v2270 = vadd.f32 %v2196, %v2269
    %v2271 = vpop.f32.mrb[0].mxu0
    %2272 = vdwg.mxu0
    %s2273 = scalar_lea.vmem %s6, 96
    %v2274 = vld [vmem:[%s2273] sm:$0xff]
    %v2275 = vld [vmem:[%s2273 + $0x8] sm:$0xff]
    %v2276 = vld [vmem:[%s2273 + $0x10] sm:$0xff]
    %v2277 = vld [vmem:[%s2273 + $0x18] sm:$0xff]
    %s2278 = scalar_lea.vmem %s7, 3
    %v2279 = vld [vmem:[%s2278] sm:$0x1]
    %v2281 = vlaneseq
    %v2282 = vshrl.u32 %v2281, 7
    %v2283 = vsub.s32 0, %v2282
    %v2284 = vrot.slane %v2279, %v2283
    %2286 = vmatprep.subr.mxu0 0.0
    %2287 = vmatpush1.msra.mxu0 %v2274
    %2288 = vmatprep.subr.mxu0 0.0
    %2289 = vmatpush1.msra.mxu0 %v2275
    %2290 = vmatprep.subr.mxu0 0.0
    %2291 = vmatpush1.msra.mxu0 %v2276
    %2292 = vmatprep.subr.mxu0 0.0
    %2293 = vmatpush1.msra.mxu0 %v2277
    %2294 = vmatprep.subr.mxu0 0.0
    %2295 = vmatpush1.msra.mxu0 0.0
    %2296 = vmatprep.subr.mxu0 0.0
    %2297 = vmatpush1.msra.mxu0 0.0
    %2298 = vmatprep.subr.mxu0 0.0
    %2299 = vmatpush1.msra.mxu0 0.0
    %2300 = vmatprep.subr.mxu0 0.0
    %2301 = vmatpush1.msra.mxu0 0.0
    %2302 = vmatprep.subr.mxu0 0.0
    %2303 = vmatpush1.msra.mxu0 0.0
    %2304 = vmatprep.subr.mxu0 0.0
    %2305 = vmatpush1.msra.mxu0 0.0
    %2306 = vmatprep.subr.mxu0 0.0
    %2307 = vmatpush1.msra.mxu0 0.0
    %2308 = vmatprep.subr.mxu0 0.0
    %2309 = vmatpush1.msra.mxu0 0.0
    %2310 = vmatprep.subr.mxu0 0.0
    %2311 = vmatpush1.msra.mxu0 0.0
    %2312 = vmatprep.subr.mxu0 0.0
    %2313 = vmatpush1.msra.mxu0 0.0
    %2314 = vmatprep.subr.mxu0 0.0
    %2315 = vmatpush1.msra.mxu0 0.0
    %2316 = vmatprep.subr.mxu0 0.0
    %2317 = vmatpush1.msra.mxu0 0.0
    %2318 = vmatprep.subr.mxu0 0.0
    %2319 = vmatpush1.msra.mxu0 0.0
    %2320 = vmatprep.subr.mxu0 0.0
    %2321 = vmatpush1.msra.mxu0 0.0
    %2322 = vmatprep.subr.mxu0 0.0
    %2323 = vmatpush1.msra.mxu0 0.0
    %2324 = vmatprep.subr.mxu0 0.0
    %2325 = vmatpush1.msra.mxu0 0.0
    %2326 = vmatprep.subr.mxu0 0.0
    %2327 = vmatpush1.msra.mxu0 0.0
    %2328 = vmatprep.subr.mxu0 0.0
    %2329 = vmatpush1.msra.mxu0 0.0
    %2330 = vmatprep.subr.mxu0 0.0
    %2331 = vmatpush1.msra.mxu0 0.0
    %2332 = vmatprep.subr.mxu0 0.0
    %2333 = vmatpush1.msra.mxu0 0.0
    %2334 = vmatprep.subr.mxu0 0.0
    %2335 = vmatpush1.msra.mxu0 0.0
    %2336 = vmatprep.subr.mxu0 0.0
    %2337 = vmatpush1.msra.mxu0 0.0
    %2338 = vmatprep.subr.mxu0 0.0
    %2339 = vmatpush1.msra.mxu0 0.0
    %2340 = vmatprep.subr.mxu0 0.0
    %2341 = vmatpush1.msra.mxu0 0.0
    %2342 = vmatprep.subr.mxu0 0.0
    %2343 = vmatpush1.msra.mxu0 0.0
    %2344 = vmatprep.subr.mxu0 0.0
    %2345 = vmatpush1.msra.mxu0 0.0
    %2346 = vmatprep.subr.mxu0 0.0
    %2347 = vmatpush1.msra.mxu0 0.0
    %2348 = vmatprep.subr.mxu0 0.0
    %2349 = vmatpush1.msra.mxu0 0.0
    %2350 = vmatprep.mubr.f32.mxu0 0.0
    %2351 = vmatmul.mubr.f32.gmra.mrb[0].mxu0 %v178
    %v2352 = vpop.f32.mrb[0].mxu0
    %v2353 = vadd.f32 %v2284, %v2352
    %v2354 = vpop.f32.mrb[0].mxu0
    %2355 = vmatprep.mubr.f32.mxu0 0.0
    %2356 = vmatmul.mubr.f32.gmra.mrb[0].mxu0 %v181
    %v2357 = vpop.f32.mrb[0].mxu0
    %v2358 = vadd.f32 %v2284, %v2357
    %v2359 = vpop.f32.mrb[0].mxu0
    %2360 = vdwg.mxu0
    %s2361 = scalar_lea.vmem %s8, 96
    %v2362 = vld [vmem:[%s2361] sm:$0xff]
    %v2363 = vld [vmem:[%s2361 + $0x8] sm:$0xff]
    %v2364 = vld [vmem:[%s2361 + $0x10] sm:$0xff]
    %v2365 = vld [vmem:[%s2361 + $0x18] sm:$0xff]
    %s2366 = scalar_lea.vmem %s9, 3
    %v2367 = vld [vmem:[%s2366] sm:$0x1]
    %v2369 = vlaneseq
    %v2370 = vshrl.u32 %v2369, 7
    %v2371 = vsub.s32 0, %v2370
    %v2372 = vrot.slane %v2367, %v2371
    %2374 = vmatprep.subr.mxu0 0.0
    %2375 = vmatpush1.msra.mxu0 %v2362
    %2376 = vmatprep.subr.mxu0 0.0
    %2377 = vmatpush1.msra.mxu0 %v2363
    %2378 = vmatprep.subr.mxu0 0.0
    %2379 = vmatpush1.msra.mxu0 %v2364
    %2380 = vmatprep.subr.mxu0 0.0
    %2381 = vmatpush1.msra.mxu0 %v2365
    %2382 = vmatprep.subr.mxu0 0.0
    %2383 = vmatpush1.msra.mxu0 0.0
    %2384 = vmatprep.subr.mxu0 0.0
    %2385 = vmatpush1.msra.mxu0 0.0
    %2386 = vmatprep.subr.mxu0 0.0
    %2387 = vmatpush1.msra.mxu0 0.0
    %2388 = vmatprep.subr.mxu0 0.0
    %2389 = vmatpush1.msra.mxu0 0.0
    %2390 = vmatprep.subr.mxu0 0.0
    %2391 = vmatpush1.msra.mxu0 0.0
    %2392 = vmatprep.subr.mxu0 0.0
    %2393 = vmatpush1.msra.mxu0 0.0
    %2394 = vmatprep.subr.mxu0 0.0
    %2395 = vmatpush1.msra.mxu0 0.0
    %2396 = vmatprep.subr.mxu0 0.0
    %2397 = vmatpush1.msra.mxu0 0.0
    %2398 = vmatprep.subr.mxu0 0.0
    %2399 = vmatpush1.msra.mxu0 0.0
    %2400 = vmatprep.subr.mxu0 0.0
    %2401 = vmatpush1.msra.mxu0 0.0
    %2402 = vmatprep.subr.mxu0 0.0
    %2403 = vmatpush1.msra.mxu0 0.0
    %2404 = vmatprep.subr.mxu0 0.0
    %2405 = vmatpush1.msra.mxu0 0.0
    %2406 = vmatprep.subr.mxu0 0.0
    %2407 = vmatpush1.msra.mxu0 0.0
    %2408 = vmatprep.subr.mxu0 0.0
    %2409 = vmatpush1.msra.mxu0 0.0
    %2410 = vmatprep.subr.mxu0 0.0
    %2411 = vmatpush1.msra.mxu0 0.0
    %2412 = vmatprep.subr.mxu0 0.0
    %2413 = vmatpush1.msra.mxu0 0.0
    %2414 = vmatprep.subr.mxu0 0.0
    %2415 = vmatpush1.msra.mxu0 0.0
    %2416 = vmatprep.subr.mxu0 0.0
    %2417 = vmatpush1.msra.mxu0 0.0
    %2418 = vmatprep.subr.mxu0 0.0
    %2419 = vmatpush1.msra.mxu0 0.0
    %2420 = vmatprep.subr.mxu0 0.0
    %2421 = vmatpush1.msra.mxu0 0.0
    %2422 = vmatprep.subr.mxu0 0.0
    %2423 = vmatpush1.msra.mxu0 0.0
    %2424 = vmatprep.subr.mxu0 0.0
    %2425 = vmatpush1.msra.mxu0 0.0
    %2426 = vmatprep.subr.mxu0 0.0
    %2427 = vmatpush1.msra.mxu0 0.0
    %2428 = vmatprep.subr.mxu0 0.0
    %2429 = vmatpush1.msra.mxu0 0.0
    %2430 = vmatprep.subr.mxu0 0.0
    %2431 = vmatpush1.msra.mxu0 0.0
    %2432 = vmatprep.subr.mxu0 0.0
    %2433 = vmatpush1.msra.mxu0 0.0
    %2434 = vmatprep.subr.mxu0 0.0
    %2435 = vmatpush1.msra.mxu0 0.0
    %2436 = vmatprep.subr.mxu0 0.0
    %2437 = vmatpush1.msra.mxu0 0.0
    %2438 = vmatprep.mubr.f32.mxu0 0.0
    %2439 = vmatmul.mubr.f32.gmra.mrb[0].mxu0 %v178
    %v2440 = vpop.f32.mrb[0].mxu0
    %v2441 = vadd.f32 %v2372, %v2440
    %v2442 = vpop.f32.mrb[0].mxu0
    %2443 = vmatprep.mubr.f32.mxu0 0.0
    %2444 = vmatmul.mubr.f32.gmra.mrb[0].mxu0 %v181
    %v2445 = vpop.f32.mrb[0].mxu0
    %v2446 = vadd.f32 %v2372, %v2445
    %v2447 = vpop.f32.mrb[0].mxu0
    %2448 = vdwg.mxu0
    %v2450 = vsel %vm430, %v2265, 0
    %v2453 = vsel %vm430, %v2353, 0
    %2455 = vmatprep.subr.mxu0 0.0
    %2456 = vmatpush1.xpose.msra.mxu0 %v2453
    %2457 = vmatprep.subr.mxu0 0.0
    %2458 = vmatpush1.xpose.msra.mxu0 0.0
    %2459 = vmatprep.subr.mxu0 0.0
    %2460 = vmatpush1.xpose.msra.mxu0 0.0
    %2461 = vmatprep.subr.mxu0 0.0
    %2462 = vmatpush1.xpose.msra.mxu0 0.0
    %2463 = vmatprep.subr.mxu0 0.0
    %2464 = vmatpush1.xpose.msra.mxu0 0.0
    %2465 = vmatprep.subr.mxu0 0.0
    %2466 = vmatpush1.xpose.msra.mxu0 0.0
    %2467 = vmatprep.subr.mxu0 0.0
    %2468 = vmatpush1.xpose.msra.mxu0 0.0
    %2469 = vmatprep.subr.mxu0 0.0
    %2470 = vmatpush1.xpose.msra.mxu0 0.0
    %2471 = vmatprep.subr.mxu0 0.0
    %2472 = vmatpush1.xpose.msra.mxu0 0.0
    %2473 = vmatprep.subr.mxu0 0.0
    %2474 = vmatpush1.xpose.msra.mxu0 0.0
    %2475 = vmatprep.subr.mxu0 0.0
    %2476 = vmatpush1.xpose.msra.mxu0 0.0
    %2477 = vmatprep.subr.mxu0 0.0
    %2478 = vmatpush1.xpose.msra.mxu0 0.0
    %2479 = vmatprep.subr.mxu0 0.0
    %2480 = vmatpush1.xpose.msra.mxu0 0.0
    %2481 = vmatprep.subr.mxu0 0.0
    %2482 = vmatpush1.xpose.msra.mxu0 0.0
    %2483 = vmatprep.subr.mxu0 0.0
    %2484 = vmatpush1.xpose.msra.mxu0 0.0
    %2485 = vmatprep.subr.mxu0 0.0
    %2486 = vmatpush1.xpose.msra.mxu0 0.0
    %2487 = vmatprep.subr.mxu0 0.0
    %2488 = vmatpush1.xpose.msra.mxu0 0.0
    %2489 = vmatprep.subr.mxu0 0.0
    %2490 = vmatpush1.xpose.msra.mxu0 0.0
    %2491 = vmatprep.subr.mxu0 0.0
    %2492 = vmatpush1.xpose.msra.mxu0 0.0
    %2493 = vmatprep.subr.mxu0 0.0
    %2494 = vmatpush1.xpose.msra.mxu0 0.0
    %2495 = vmatprep.subr.mxu0 0.0
    %2496 = vmatpush1.xpose.msra.mxu0 0.0
    %2497 = vmatprep.subr.mxu0 0.0
    %2498 = vmatpush1.xpose.msra.mxu0 0.0
    %2499 = vmatprep.subr.mxu0 0.0
    %2500 = vmatpush1.xpose.msra.mxu0 0.0
    %2501 = vmatprep.subr.mxu0 0.0
    %2502 = vmatpush1.xpose.msra.mxu0 0.0
    %2503 = vmatprep.subr.mxu0 0.0
    %2504 = vmatpush1.xpose.msra.mxu0 0.0
    %2505 = vmatprep.subr.mxu0 0.0
    %2506 = vmatpush1.xpose.msra.mxu0 0.0
    %2507 = vmatprep.subr.mxu0 0.0
    %2508 = vmatpush1.xpose.msra.mxu0 0.0
    %2509 = vmatprep.subr.mxu0 0.0
    %2510 = vmatpush1.xpose.msra.mxu0 0.0
    %2511 = vmatprep.subr.mxu0 0.0
    %2512 = vmatpush1.xpose.msra.mxu0 0.0
    %2513 = vmatprep.subr.mxu0 0.0
    %2514 = vmatpush1.xpose.msra.mxu0 0.0
    %2515 = vmatprep.subr.mxu0 0.0
    %2516 = vmatpush1.xpose.msra.mxu0 0.0
    %2517 = vmatprep.subr.mxu0 0.0
    %2518 = vmatpush1.xpose.msra.mxu0 0.0
    %2519 = vmatprep.mubr.f32.mxu0 0.0
    %2520 = vmatmul.mubr.f32.gmra.mrb[0].mxu0 %v2450
    %v2521 = vpop.f32.mrb[0].mxu0
    %v2522 = vadd.f32 0.0, %v2521
    %v2523 = vpop.f32.mrb[0].mxu0
    %2524 = vdwg.mxu0
    %v2525 = vmul.f32 %v2522, 0.35355338
    %v2526 = vsel %vm430, %v2525, -inf
    %2527 = vmax.xlane.f32.xlu0 %v2526
    %v2528 = vpop.xlane.xlu0 %2527
    %v2529 = vsub.f32 %v2525, %v2528
    %v2530 = vmul.f32 %v2529, 1.442695
    %v2531 = vpow.pop %v2530
    %v2532 = vsel %vm430, %v2531, 0.0
    %2533 = vadd.xlane.f32.xlu0 %v2532
    %v2534 = vpop.xlane.xlu0 %2533
    %v2535 = vrcp.pop %v2534
    %v2536 = vmul.f32 %v2531, %v2535
    %v2538 = vsel %vm430, %v2536, 0
    %2540 = vmatprep.subr.mxu0 0.0
    %2541 = vmatpush1.msra.mxu0 %v2441
    %2542 = vmatprep.subr.mxu0 0.0
    %2543 = vmatpush1.msra.mxu0 0.0
    %2544 = vmatprep.subr.mxu0 0.0
    %2545 = vmatpush1.msra.mxu0 0.0
    %2546 = vmatprep.subr.mxu0 0.0
    %2547 = vmatpush1.msra.mxu0 0.0
    %2548 = vmatprep.subr.mxu0 0.0
    %2549 = vmatpush1.msra.mxu0 0.0
    %2550 = vmatprep.subr.mxu0 0.0
    %2551 = vmatpush1.msra.mxu0 0.0
    %2552 = vmatprep.subr.mxu0 0.0
    %2553 = vmatpush1.msra.mxu0 0.0
    %2554 = vmatprep.subr.mxu0 0.0
    %2555 = vmatpush1.msra.mxu0 0.0
    %2556 = vmatprep.subr.mxu0 0.0
    %2557 = vmatpush1.msra.mxu0 0.0
    %2558 = vmatprep.subr.mxu0 0.0
    %2559 = vmatpush1.msra.mxu0 0.0
    %2560 = vmatprep.subr.mxu0 0.0
    %2561 = vmatpush1.msra.mxu0 0.0
    %2562 = vmatprep.subr.mxu0 0.0
    %2563 = vmatpush1.msra.mxu0 0.0
    %2564 = vmatprep.subr.mxu0 0.0
    %2565 = vmatpush1.msra.mxu0 0.0
    %2566 = vmatprep.subr.mxu0 0.0
    %2567 = vmatpush1.msra.mxu0 0.0
    %2568 = vmatprep.subr.mxu0 0.0
    %2569 = vmatpush1.msra.mxu0 0.0
    %2570 = vmatprep.subr.mxu0 0.0
    %2571 = vmatpush1.msra.mxu0 0.0
    %2572 = vmatprep.subr.mxu0 0.0
    %2573 = vmatpush1.msra.mxu0 0.0
    %2574 = vmatprep.subr.mxu0 0.0
    %2575 = vmatpush1.msra.mxu0 0.0
    %2576 = vmatprep.subr.mxu0 0.0
    %2577 = vmatpush1.msra.mxu0 0.0
    %2578 = vmatprep.subr.mxu0 0.0
    %2579 = vmatpush1.msra.mxu0 0.0
    %2580 = vmatprep.subr.mxu0 0.0
    %2581 = vmatpush1.msra.mxu0 0.0
    %2582 = vmatprep.subr.mxu0 0.0
    %2583 = vmatpush1.msra.mxu0 0.0
    %2584 = vmatprep.subr.mxu0 0.0
    %2585 = vmatpush1.msra.mxu0 0.0
    %2586 = vmatprep.subr.mxu0 0.0
    %2587 = vmatpush1.msra.mxu0 0.0
    %2588 = vmatprep.subr.mxu0 0.0
    %2589 = vmatpush1.msra.mxu0 0.0
    %2590 = vmatprep.subr.mxu0 0.0
    %2591 = vmatpush1.msra.mxu0 0.0
    %2592 = vmatprep.subr.mxu0 0.0
    %2593 = vmatpush1.msra.mxu0 0.0
    %2594 = vmatprep.subr.mxu0 0.0
    %2595 = vmatpush1.msra.mxu0 0.0
    %2596 = vmatprep.subr.mxu0 0.0
    %2597 = vmatpush1.msra.mxu0 0.0
    %2598 = vmatprep.subr.mxu0 0.0
    %2599 = vmatpush1.msra.mxu0 0.0
    %2600 = vmatprep.subr.mxu0 0.0
    %2601 = vmatpush1.msra.mxu0 0.0
    %2602 = vmatprep.subr.mxu0 0.0
    %2603 = vmatpush1.msra.mxu0 0.0
    %2604 = vmatprep.mubr.f32.mxu0 0.0
    %2605 = vmatmul.mubr.f32.gmra.mrb[0].mxu0 %v2538
    %v2606 = vpop.f32.mrb[0].mxu0
    %v2607 = vadd.f32 0.0, %v2606
    %v2608 = vpop.f32.mrb[0].mxu0
    %2609 = vdwg.mxu0
    %v2611 = vsel %vm430, %v2270, 0
    %v2614 = vsel %vm430, %v2358, 0
    %2616 = vmatprep.subr.mxu0 0.0
    %2617 = vmatpush1.xpose.msra.mxu0 %v2614
    %2618 = vmatprep.subr.mxu0 0.0
    %2619 = vmatpush1.xpose.msra.mxu0 0.0
    %2620 = vmatprep.subr.mxu0 0.0
    %2621 = vmatpush1.xpose.msra.mxu0 0.0
    %2622 = vmatprep.subr.mxu0 0.0
    %2623 = vmatpush1.xpose.msra.mxu0 0.0
    %2624 = vmatprep.subr.mxu0 0.0
    %2625 = vmatpush1.xpose.msra.mxu0 0.0
    %2626 = vmatprep.subr.mxu0 0.0
    %2627 = vmatpush1.xpose.msra.mxu0 0.0
    %2628 = vmatprep.subr.mxu0 0.0
    %2629 = vmatpush1.xpose.msra.mxu0 0.0
    %2630 = vmatprep.subr.mxu0 0.0
    %2631 = vmatpush1.xpose.msra.mxu0 0.0
    %2632 = vmatprep.subr.mxu0 0.0
    %2633 = vmatpush1.xpose.msra.mxu0 0.0
    %2634 = vmatprep.subr.mxu0 0.0
    %2635 = vmatpush1.xpose.msra.mxu0 0.0
    %2636 = vmatprep.subr.mxu0 0.0
    %2637 = vmatpush1.xpose.msra.mxu0 0.0
    %2638 = vmatprep.subr.mxu0 0.0
    %2639 = vmatpush1.xpose.msra.mxu0 0.0
    %2640 = vmatprep.subr.mxu0 0.0
    %2641 = vmatpush1.xpose.msra.mxu0 0.0
    %2642 = vmatprep.subr.mxu0 0.0
    %2643 = vmatpush1.xpose.msra.mxu0 0.0
    %2644 = vmatprep.subr.mxu0 0.0
    %2645 = vmatpush1.xpose.msra.mxu0 0.0
    %2646 = vmatprep.subr.mxu0 0.0
    %2647 = vmatpush1.xpose.msra.mxu0 0.0
    %2648 = vmatprep.subr.mxu0 0.0
    %2649 = vmatpush1.xpose.msra.mxu0 0.0
    %2650 = vmatprep.subr.mxu0 0.0
    %2651 = vmatpush1.xpose.msra.mxu0 0.0
    %2652 = vmatprep.subr.mxu0 0.0
    %2653 = vmatpush1.xpose.msra.mxu0 0.0
    %2654 = vmatprep.subr.mxu0 0.0
    %2655 = vmatpush1.xpose.msra.mxu0 0.0
    %2656 = vmatprep.subr.mxu0 0.0
    %2657 = vmatpush1.xpose.msra.mxu0 0.0
    %2658 = vmatprep.subr.mxu0 0.0
    %2659 = vmatpush1.xpose.msra.mxu0 0.0
    %2660 = vmatprep.subr.mxu0 0.0
    %2661 = vmatpush1.xpose.msra.mxu0 0.0
    %2662 = vmatprep.subr.mxu0 0.0
    %2663 = vmatpush1.xpose.msra.mxu0 0.0
    %2664 = vmatprep.subr.mxu0 0.0
    %2665 = vmatpush1.xpose.msra.mxu0 0.0
    %2666 = vmatprep.subr.mxu0 0.0
    %2667 = vmatpush1.xpose.msra.mxu0 0.0
    %2668 = vmatprep.subr.mxu0 0.0
    %2669 = vmatpush1.xpose.msra.mxu0 0.0
    %2670 = vmatprep.subr.mxu0 0.0
    %2671 = vmatpush1.xpose.msra.mxu0 0.0
    %2672 = vmatprep.subr.mxu0 0.0
    %2673 = vmatpush1.xpose.msra.mxu0 0.0
    %2674 = vmatprep.subr.mxu0 0.0
    %2675 = vmatpush1.xpose.msra.mxu0 0.0
    %2676 = vmatprep.subr.mxu0 0.0
    %2677 = vmatpush1.xpose.msra.mxu0 0.0
    %2678 = vmatprep.subr.mxu0 0.0
    %2679 = vmatpush1.xpose.msra.mxu0 0.0
    %2680 = vmatprep.mubr.f32.mxu0 0.0
    %2681 = vmatmul.mubr.f32.gmra.mrb[0].mxu0 %v2611
    %v2682 = vpop.f32.mrb[0].mxu0
    %v2683 = vadd.f32 0.0, %v2682
    %v2684 = vpop.f32.mrb[0].mxu0
    %2685 = vdwg.mxu0
    %v2686 = vmul.f32 %v2683, 0.35355338
    %v2687 = vsel %vm430, %v2686, -inf
    %2688 = vmax.xlane.f32.xlu0 %v2687
    %v2689 = vpop.xlane.xlu0 %2688
    %v2690 = vsub.f32 %v2686, %v2689
    %v2691 = vmul.f32 %v2690, 1.442695
    %v2692 = vpow.pop %v2691
    %v2693 = vsel %vm430, %v2692, 0.0
    %2694 = vadd.xlane.f32.xlu0 %v2693
    %v2695 = vpop.xlane.xlu0 %2694
    %v2696 = vrcp.pop %v2695
    %v2697 = vmul.f32 %v2692, %v2696
    %v2699 = vsel %vm430, %v2697, 0
    %2701 = vmatprep.subr.mxu0 0.0
    %2702 = vmatpush1.msra.mxu0 %v2446
    %2703 = vmatprep.subr.mxu0 0.0
    %2704 = vmatpush1.msra.mxu0 0.0
    %2705 = vmatprep.subr.mxu0 0.0
    %2706 = vmatpush1.msra.mxu0 0.0
    %2707 = vmatprep.subr.mxu0 0.0
    %2708 = vmatpush1.msra.mxu0 0.0
    %2709 = vmatprep.subr.mxu0 0.0
    %2710 = vmatpush1.msra.mxu0 0.0
    %2711 = vmatprep.subr.mxu0 0.0
    %2712 = vmatpush1.msra.mxu0 0.0
    %2713 = vmatprep.subr.mxu0 0.0
    %2714 = vmatpush1.msra.mxu0 0.0
    %2715 = vmatprep.subr.mxu0 0.0
    %2716 = vmatpush1.msra.mxu0 0.0
    %2717 = vmatprep.subr.mxu0 0.0
    %2718 = vmatpush1.msra.mxu0 0.0
    %2719 = vmatprep.subr.mxu0 0.0
    %2720 = vmatpush1.msra.mxu0 0.0
    %2721 = vmatprep.subr.mxu0 0.0
    %2722 = vmatpush1.msra.mxu0 0.0
    %2723 = vmatprep.subr.mxu0 0.0
    %2724 = vmatpush1.msra.mxu0 0.0
    %2725 = vmatprep.subr.mxu0 0.0
    %2726 = vmatpush1.msra.mxu0 0.0
    %2727 = vmatprep.subr.mxu0 0.0
    %2728 = vmatpush1.msra.mxu0 0.0
    %2729 = vmatprep.subr.mxu0 0.0
    %2730 = vmatpush1.msra.mxu0 0.0
    %2731 = vmatprep.subr.mxu0 0.0
    %2732 = vmatpush1.msra.mxu0 0.0
    %2733 = vmatprep.subr.mxu0 0.0
    %2734 = vmatpush1.msra.mxu0 0.0
    %2735 = vmatprep.subr.mxu0 0.0
    %2736 = vmatpush1.msra.mxu0 0.0
    %2737 = vmatprep.subr.mxu0 0.0
    %2738 = vmatpush1.msra.mxu0 0.0
    %2739 = vmatprep.subr.mxu0 0.0
    %2740 = vmatpush1.msra.mxu0 0.0
    %2741 = vmatprep.subr.mxu0 0.0
    %2742 = vmatpush1.msra.mxu0 0.0
    %2743 = vmatprep.subr.mxu0 0.0
    %2744 = vmatpush1.msra.mxu0 0.0
    %2745 = vmatprep.subr.mxu0 0.0
    %2746 = vmatpush1.msra.mxu0 0.0
    %2747 = vmatprep.subr.mxu0 0.0
    %2748 = vmatpush1.msra.mxu0 0.0
    %2749 = vmatprep.subr.mxu0 0.0
    %2750 = vmatpush1.msra.mxu0 0.0
    %2751 = vmatprep.subr.mxu0 0.0
    %2752 = vmatpush1.msra.mxu0 0.0
    %2753 = vmatprep.subr.mxu0 0.0
    %2754 = vmatpush1.msra.mxu0 0.0
    %2755 = vmatprep.subr.mxu0 0.0
    %2756 = vmatpush1.msra.mxu0 0.0
    %2757 = vmatprep.subr.mxu0 0.0
    %2758 = vmatpush1.msra.mxu0 0.0
    %2759 = vmatprep.subr.mxu0 0.0
    %2760 = vmatpush1.msra.mxu0 0.0
    %2761 = vmatprep.subr.mxu0 0.0
    %2762 = vmatpush1.msra.mxu0 0.0
    %2763 = vmatprep.subr.mxu0 0.0
    %2764 = vmatpush1.msra.mxu0 0.0
    %2765 = vmatprep.mubr.f32.mxu0 0.0
    %2766 = vmatmul.mubr.f32.gmra.mrb[0].mxu0 %v2699
    %v2767 = vpop.f32.mrb[0].mxu0
    %v2768 = vadd.f32 0.0, %v2767
    %v2769 = vpop.f32.mrb[0].mxu0
    %2770 = vdwg.mxu0
    %s2771 = scalar_lea.vmem %s10, 24
    %v2772 = vld [vmem:[%s2771] sm:$0xff]
    %v2774 = vsel %vm430, %v2607, 0
    %v2777 = vsel %vm430, %v2768, 0
    %2779 = vmatprep.subr.mxu0 0.0
    %2780 = vmatpush1.msra.mxu0 %v2772
    %2781 = vmatprep.subr.mxu0 0.0
    %2782 = vmatpush1.msra.mxu0 0.0
    %2783 = vmatprep.subr.mxu0 0.0
    %2784 = vmatpush1.msra.mxu0 0.0
    %2785 = vmatprep.subr.mxu0 0.0
    %2786 = vmatpush1.msra.mxu0 0.0
    %2787 = vmatprep.subr.mxu0 0.0
    %2788 = vmatpush1.msra.mxu0 0.0
    %2789 = vmatprep.subr.mxu0 0.0
    %2790 = vmatpush1.msra.mxu0 0.0
    %2791 = vmatprep.subr.mxu0 0.0
    %2792 = vmatpush1.msra.mxu0 0.0
    %2793 = vmatprep.subr.mxu0 0.0
    %2794 = vmatpush1.msra.mxu0 0.0
    %2795 = vmatprep.subr.mxu0 0.0
    %2796 = vmatpush1.msra.mxu0 0.0
    %2797 = vmatprep.subr.mxu0 0.0
    %2798 = vmatpush1.msra.mxu0 0.0
    %2799 = vmatprep.subr.mxu0 0.0
    %2800 = vmatpush1.msra.mxu0 0.0
    %2801 = vmatprep.subr.mxu0 0.0
    %2802 = vmatpush1.msra.mxu0 0.0
    %2803 = vmatprep.subr.mxu0 0.0
    %2804 = vmatpush1.msra.mxu0 0.0
    %2805 = vmatprep.subr.mxu0 0.0
    %2806 = vmatpush1.msra.mxu0 0.0
    %2807 = vmatprep.subr.mxu0 0.0
    %2808 = vmatpush1.msra.mxu0 0.0
    %2809 = vmatprep.subr.mxu0 0.0
    %2810 = vmatpush1.msra.mxu0 0.0
    %2811 = vmatprep.subr.mxu0 0.0
    %2812 = vmatpush1.msra.mxu0 0.0
    %2813 = vmatprep.subr.mxu0 0.0
    %2814 = vmatpush1.msra.mxu0 0.0
    %2815 = vmatprep.subr.mxu0 0.0
    %2816 = vmatpush1.msra.mxu0 0.0
    %2817 = vmatprep.subr.mxu0 0.0
    %2818 = vmatpush1.msra.mxu0 0.0
    %2819 = vmatprep.subr.mxu0 0.0
    %2820 = vmatpush1.msra.mxu0 0.0
    %2821 = vmatprep.subr.mxu0 0.0
    %2822 = vmatpush1.msra.mxu0 0.0
    %2823 = vmatprep.subr.mxu0 0.0
    %2824 = vmatpush1.msra.mxu0 0.0
    %2825 = vmatprep.subr.mxu0 0.0
    %2826 = vmatpush1.msra.mxu0 0.0
    %2827 = vmatprep.subr.mxu0 0.0
    %2828 = vmatpush1.msra.mxu0 0.0
    %2829 = vmatprep.subr.mxu0 0.0
    %2830 = vmatpush1.msra.mxu0 0.0
    %2831 = vmatprep.subr.mxu0 0.0
    %2832 = vmatpush1.msra.mxu0 0.0
    %2833 = vmatprep.subr.mxu0 0.0
    %2834 = vmatpush1.msra.mxu0 0.0
    %2835 = vmatprep.subr.mxu0 0.0
    %2836 = vmatpush1.msra.mxu0 0.0
    %2837 = vmatprep.subr.mxu0 0.0
    %2838 = vmatpush1.msra.mxu0 0.0
    %2839 = vmatprep.subr.mxu0 0.0
    %2840 = vmatpush1.msra.mxu0 0.0
    %2841 = vmatprep.subr.mxu0 0.0
    %2842 = vmatpush1.msra.mxu0 0.0
    %2843 = vmatprep.mubr.f32.mxu0 0.0
    %2844 = vmatmul.mubr.f32.gmra.mrb[0].mxu0 %v2774
    %v2845 = vpop.f32.mrb[0].mxu0
    %v2846 = vadd.f32 0.0, %v2845
    %v2847 = vpop.f32.mrb[0].mxu0
    %2848 = vmatprep.mubr.f32.mxu0 0.0
    %2849 = vmatmul.mubr.f32.gmra.mrb[0].mxu0 %v2777
    %v2850 = vpop.f32.mrb[0].mxu0
    %v2851 = vadd.f32 0.0, %v2850
    %v2852 = vpop.f32.mrb[0].mxu0
    %2853 = vdwg.mxu0
    %v2854 = vadd.f32 %v2183, %v2846
    %v2855 = vadd.f32 %v2184, %v2851
    %v2856 = vadd.f32 %v162, %v2854
    %v2857 = vadd.f32 %v163, %v2855
    %v2858 = vld [vmem:[%s12] sm:$0x1]
    %v2859 = vld [vmem:[%s13] sm:$0x1]
    %v2860 = vsel %vm176, %v2856, 0.0
    %2861 = vadd.xlane.f32.xlu0 %v2860
    %v2862 = vpop.xlane.xlu0 %2861
    %v2863 = vsel %vm176, %v2857, 0.0
    %2864 = vadd.xlane.f32.xlu0 %v2863
    %v2865 = vpop.xlane.xlu0 %2864
    %v2866 = vrcp.pop 32.0
    %v2867 = vmul.f32 %v2862, %v2866
    %v2868 = vmul.f32 %v2865, %v2866
    %v2869 = vsub.f32 %v2856, %v2867
    %v2870 = vsub.f32 %v2857, %v2868
    %v2871 = vmul.f32 %v2869, %v2869
    %v2872 = vmul.f32 %v2870, %v2870
    %v2873 = vsel %vm176, %v2871, 0.0
    %2874 = vadd.xlane.f32.xlu0 %v2873
    %v2875 = vpop.xlane.xlu0 %2874
    %v2876 = vsel %vm176, %v2872, 0.0
    %2877 = vadd.xlane.f32.xlu0 %v2876
    %v2878 = vpop.xlane.xlu0 %2877
    %v2879 = vmul.f32 %v2875, %v2866
    %v2880 = vmul.f32 %v2878, %v2866
    %v2881 = vadd.f32 %v2879, 1e-05
    %v2882 = vadd.f32 %v2880, 1e-05
    %v2883 = vrsqrt.pop %v2881
    %v2884 = vrsqrt.pop %v2882
    %v2885 = vmul.f32 %v2869, %v2883
    %v2886 = vmul.f32 %v2870, %v2884
    %v2888 = vlaneseq
    %v2889 = vshrl.u32 %v2888, 7
    %v2890 = vsub.s32 0, %v2889
    %v2891 = vrot.slane %v2858, %v2890
    %v2893 = vmul.f32 %v2885, %v2891
    %v2894 = vmul.f32 %v2886, %v2891
    %v2896 = vlaneseq
    %v2897 = vshrl.u32 %v2896, 7
    %v2898 = vsub.s32 0, %v2897
    %v2899 = vrot.slane %v2859, %v2898
    %v2901 = vadd.f32 %v2893, %v2899
    %v2902 = vadd.f32 %v2894, %v2899
    %v2903 = vpack.c.bf16 %v2902, %v2901
    %v2904 = vld [vmem:[%s14] sm:$0xff]
    %v2905 = vld [vmem:[%s14 + $0x8] sm:$0xff]
    %v2906 = vld [vmem:[%s14 + $0x10] sm:$0xff]
    %v2907 = vld [vmem:[%s14 + $0x18] sm:$0xff]
    %v2908 = vld [vmem:[%s14 + $0x20] sm:$0xff]
    %v2909 = vld [vmem:[%s14 + $0x28] sm:$0xff]
    %v2910 = vld [vmem:[%s14 + $0x30] sm:$0xff]
    %v2911 = vld [vmem:[%s14 + $0x38] sm:$0xff]
    %v2912 = vld [vmem:[%s14 + $0x40] sm:$0xff]
    %v2913 = vld [vmem:[%s14 + $0x48] sm:$0xff]
    %v2914 = vld [vmem:[%s14 + $0x50] sm:$0xff]
    %v2915 = vld [vmem:[%s14 + $0x58] sm:$0xff]
    %v2916 = vld [vmem:[%s14 + $0x60] sm:$0xff]
    %v2917 = vld [vmem:[%s14 + $0x68] sm:$0xff]
    %v2918 = vld [vmem:[%s14 + $0x70] sm:$0xff]
    %v2919 = vld [vmem:[%s14 + $0x78] sm:$0xff]
    %v2920 = vld [vmem:[%s14 + $0x80] sm:$0xff]
    %v2921 = vld [vmem:[%s14 + $0x88] sm:$0xff]
    %v2922 = vld [vmem:[%s14 + $0x90] sm:$0xff]
    %v2923 = vld [vmem:[%s14 + $0x98] sm:$0xff]
    %v2924 = vld [vmem:[%s14 + $0xa0] sm:$0xff]
    %v2925 = vld [vmem:[%s14 + $0xa8] sm:$0xff]
    %v2926 = vld [vmem:[%s14 + $0xb0] sm:$0xff]
    %v2927 = vld [vmem:[%s14 + $0xb8] sm:$0xff]
    %v2928 = vld [vmem:[%s14 + $0xc0] sm:$0xff]
    %v2929 = vld [vmem:[%s14 + $0xc8] sm:$0xff]
    %v2930 = vld [vmem:[%s14 + $0xd0] sm:$0xff]
    %v2931 = vld [vmem:[%s14 + $0xd8] sm:$0xff]
    %v2932 = vld [vmem:[%s14 + $0xe0] sm:$0xff]
    %v2933 = vld [vmem:[%s14 + $0xe8] sm:$0xff]
    %v2934 = vld [vmem:[%s14 + $0xf0] sm:$0xff]
    %v2935 = vld [vmem:[%s14 + $0xf8] sm:$0xff]
    %v2936 = vld [vmem:[%s15] sm:$0xff]
    %v2937 = vld [vmem:[%s15 + $0x8] sm:$0xff]
    %v2940 = vlaneseq
    %v2941 = vshrl.u32 %v2940, 7
    %v2942 = vsub.s32 0, %v2941
    %v2943 = vrot.slane %v2936, %v2942
    %v2944 = vlaneseq
    %v2945 = vshrl.u32 %v2944, 7
    %v2946 = vsub.s32 1, %v2945
    %v2947 = vrot.slane %v2936, %v2946
    %v2948 = vlaneseq
    %v2949 = vshrl.u32 %v2948, 7
    %v2950 = vsub.s32 2, %v2949
    %v2951 = vrot.slane %v2936, %v2950
    %v2952 = vlaneseq
    %v2953 = vshrl.u32 %v2952, 7
    %v2954 = vsub.s32 3, %v2953
    %v2955 = vrot.slane %v2936, %v2954
    %v2956 = vlaneseq
    %v2957 = vshrl.u32 %v2956, 7
    %v2958 = vsub.s32 4, %v2957
    %v2959 = vrot.slane %v2936, %v2958
    %v2960 = vlaneseq
    %v2961 = vshrl.u32 %v2960, 7
    %v2962 = vsub.s32 5, %v2961
    %v2963 = vrot.slane %v2936, %v2962
    %v2964 = vlaneseq
    %v2965 = vshrl.u32 %v2964, 7
    %v2966 = vsub.s32 6, %v2965
    %v2967 = vrot.slane %v2936, %v2966
    %v2968 = vlaneseq
    %v2969 = vshrl.u32 %v2968, 7
    %v2970 = vsub.s32 7, %v2969
    %v2971 = vrot.slane %v2936, %v2970
    %v2972 = vlaneseq
    %v2973 = vshrl.u32 %v2972, 7
    %v2974 = vsub.s32 0, %v2973
    %v2975 = vrot.slane %v2937, %v2974
    %v2976 = vlaneseq
    %v2977 = vshrl.u32 %v2976, 7
    %v2978 = vsub.s32 1, %v2977
    %v2979 = vrot.slane %v2937, %v2978
    %v2980 = vlaneseq
    %v2981 = vshrl.u32 %v2980, 7
    %v2982 = vsub.s32 2, %v2981
    %v2983 = vrot.slane %v2937, %v2982
    %v2984 = vlaneseq
    %v2985 = vshrl.u32 %v2984, 7
    %v2986 = vsub.s32 3, %v2985
    %v2987 = vrot.slane %v2937, %v2986
    %v2988 = vlaneseq
    %v2989 = vshrl.u32 %v2988, 7
    %v2990 = vsub.s32 4, %v2989
    %v2991 = vrot.slane %v2937, %v2990
    %v2992 = vlaneseq
    %v2993 = vshrl.u32 %v2992, 7
    %v2994 = vsub.s32 5, %v2993
    %v2995 = vrot.slane %v2937, %v2994
    %v2996 = vlaneseq
    %v2997 = vshrl.u32 %v2996, 7
    %v2998 = vsub.s32 6, %v2997
    %v2999 = vrot.slane %v2937, %v2998
    %v3000 = vlaneseq
    %v3001 = vshrl.u32 %v3000, 7
    %v3002 = vsub.s32 7, %v3001
    %v3003 = vrot.slane %v2937, %v3002
    %v3052 = vunpack.c.l.b16 %v2904
    %v3053 = vunpack.c.h.b16 %v2904
    %v3054 = vunpack.c.l.b16 %v2905
    %v3055 = vunpack.c.h.b16 %v2905
    %v3056 = vunpack.c.l.b16 %v2906
    %v3057 = vunpack.c.h.b16 %v2906
    %v3058 = vunpack.c.l.b16 %v2907
    %v3059 = vunpack.c.h.b16 %v2907
    %v3060 = vunpack.c.l.b16 %v2908
    %v3061 = vunpack.c.h.b16 %v2908
    %v3062 = vunpack.c.l.b16 %v2909
    %v3063 = vunpack.c.h.b16 %v2909
    %v3064 = vunpack.c.l.b16 %v2910
    %v3065 = vunpack.c.h.b16 %v2910
    %v3066 = vunpack.c.l.b16 %v2911
    %v3067 = vunpack.c.h.b16 %v2911
    %v3068 = vunpack.c.l.b16 %v2912
    %v3069 = vunpack.c.h.b16 %v2912
    %v3070 = vunpack.c.l.b16 %v2913
    %v3071 = vunpack.c.h.b16 %v2913
    %v3072 = vunpack.c.l.b16 %v2914
    %v3073 = vunpack.c.h.b16 %v2914
    %v3074 = vunpack.c.l.b16 %v2915
    %v3075 = vunpack.c.h.b16 %v2915
    %v3076 = vunpack.c.l.b16 %v2916
    %v3077 = vunpack.c.h.b16 %v2916
    %v3078 = vunpack.c.l.b16 %v2917
    %v3079 = vunpack.c.h.b16 %v2917
    %v3080 = vunpack.c.l.b16 %v2918
    %v3081 = vunpack.c.h.b16 %v2918
    %v3082 = vunpack.c.l.b16 %v2919
    %v3083 = vunpack.c.h.b16 %v2919
    %v3084 = vunpack.c.l.b16 %v2920
    %v3085 = vunpack.c.h.b16 %v2920
    %v3086 = vunpack.c.l.b16 %v2921
    %v3087 = vunpack.c.h.b16 %v2921
    %v3088 = vunpack.c.l.b16 %v2922
    %v3089 = vunpack.c.h.b16 %v2922
    %v3090 = vunpack.c.l.b16 %v2923
    %v3091 = vunpack.c.h.b16 %v2923
    %v3092 = vunpack.c.l.b16 %v2924
    %v3093 = vunpack.c.h.b16 %v2924
    %v3094 = vunpack.c.l.b16 %v2925
    %v3095 = vunpack.c.h.b16 %v2925
    %v3096 = vunpack.c.l.b16 %v2926
    %v3097 = vunpack.c.h.b16 %v2926
    %v3098 = vunpack.c.l.b16 %v2927
    %v3099 = vunpack.c.h.b16 %v2927
    %v3100 = vunpack.c.l.b16 %v2928
    %v3101 = vunpack.c.h.b16 %v2928
    %v3102 = vunpack.c.l.b16 %v2929
    %v3103 = vunpack.c.h.b16 %v2929
    %v3104 = vunpack.c.l.b16 %v2930
    %v3105 = vunpack.c.h.b16 %v2930
    %v3106 = vunpack.c.l.b16 %v2931
    %v3107 = vunpack.c.h.b16 %v2931
    %v3108 = vunpack.c.l.b16 %v2932
    %v3109 = vunpack.c.h.b16 %v2932
    %v3110 = vunpack.c.l.b16 %v2933
    %v3111 = vunpack.c.h.b16 %v2933
    %v3112 = vunpack.c.l.b16 %v2934
    %v3113 = vunpack.c.h.b16 %v2934
    %v3114 = vunpack.c.l.b16 %v2935
    %v3115 = vunpack.c.h.b16 %v2935
    %v3116 = vpack.c.b16 %v3068, %v3052
    %v3117 = vpack.c.b16 %v3069, %v3053
    %v3118 = vpack.c.b16 %v3070, %v3054
    %v3119 = vpack.c.b16 %v3071, %v3055
    %v3120 = vpack.c.b16 %v3072, %v3056
    %v3121 = vpack.c.b16 %v3073, %v3057
    %v3122 = vpack.c.b16 %v3074, %v3058
    %v3123 = vpack.c.b16 %v3075, %v3059
    %v3124 = vpack.c.b16 %v3076, %v3060
    %v3125 = vpack.c.b16 %v3077, %v3061
    %v3126 = vpack.c.b16 %v3078, %v3062
    %v3127 = vpack.c.b16 %v3079, %v3063
    %v3128 = vpack.c.b16 %v3080, %v3064
    %v3129 = vpack.c.b16 %v3081, %v3065
    %v3130 = vpack.c.b16 %v3082, %v3066
    %v3131 = vpack.c.b16 %v3083, %v3067
    %v3132 = vpack.c.b16 %v3100, %v3084
    %v3133 = vpack.c.b16 %v3101, %v3085
    %v3134 = vpack.c.b16 %v3102, %v3086
    %v3135 = vpack.c.b16 %v3103, %v3087
    %v3136 = vpack.c.b16 %v3104, %v3088
    %v3137 = vpack.c.b16 %v3105, %v3089
    %v3138 = vpack.c.b16 %v3106, %v3090
    %v3139 = vpack.c.b16 %v3107, %v3091
    %v3140 = vpack.c.b16 %v3108, %v3092
    %v3141 = vpack.c.b16 %v3109, %v3093
    %v3142 = vpack.c.b16 %v3110, %v3094
    %v3143 = vpack.c.b16 %v3111, %v3095
    %v3144 = vpack.c.b16 %v3112, %v3096
    %v3145 = vpack.c.b16 %v3113, %v3097
    %v3146 = vpack.c.b16 %v3114, %v3098
    %v3147 = vpack.c.b16 %v3115, %v3099
    %v3181 = vsel %vm176, %v2903, 0
    %3183 = vmatprep.subr.bf16.mxu0 %v3117
    %3184 = vmatpush1.bf16.msra.mxu0 %v3116
    %3185 = vmatprep.subr.bf16.mxu0 %v3133
    %3186 = vmatpush1.bf16.msra.mxu0 %v3132
    %3187 = vmatprep.subr.bf16.mxu0 0
    %3188 = vmatpush1.bf16.msra.mxu0 0
    %3189 = vmatprep.subr.bf16.mxu0 0
    %3190 = vmatpush1.bf16.msra.mxu0 0
    %3191 = vmatprep.subr.bf16.mxu0 0
    %3192 = vmatpush1.bf16.msra.mxu0 0
    %3193 = vmatprep.subr.bf16.mxu0 0
    %3194 = vmatpush1.bf16.msra.mxu0 0
    %3195 = vmatprep.subr.bf16.mxu0 0
    %3196 = vmatpush1.bf16.msra.mxu0 0
    %3197 = vmatprep.subr.bf16.mxu0 0
    %3198 = vmatpush1.bf16.msra.mxu0 0
    %3199 = vmatprep.subr.bf16.mxu0 0
    %3200 = vmatpush1.bf16.msra.mxu0 0
    %3201 = vmatprep.subr.bf16.mxu0 0
    %3202 = vmatpush1.bf16.msra.mxu0 0
    %3203 = vmatprep.subr.bf16.mxu0 0
    %3204 = vmatpush1.bf16.msra.mxu0 0
    %3205 = vmatprep.subr.bf16.mxu0 0
    %3206 = vmatpush1.bf16.msra.mxu0 0
    %3207 = vmatprep.subr.bf16.mxu0 0
    %3208 = vmatpush1.bf16.msra.mxu0 0
    %3209 = vmatprep.subr.bf16.mxu0 0
    %3210 = vmatpush1.bf16.msra.mxu0 0
    %3211 = vmatprep.subr.bf16.mxu0 0
    %3212 = vmatpush1.bf16.msra.mxu0 0
    %3213 = vmatprep.subr.bf16.mxu0 0
    %3214 = vmatpush1.bf16.msra.mxu0 0
    %3215 = vmatprep.mubr.bf16.mxu0 0
    %3216 = vmatmul.mubr.bf16.gmra.mrb[0].mxu0 %v3181
    %v3217 = vpop.f32.mrb[0].mxu0
    %v3218 = vadd.f32 %v2943, %v3217
    %v3219 = vpop.f32.mrb[0].mxu0
    %v3220 = vadd.f32 %v2947, %v3219
    %v3221 = vpop.f32.mrb[0].mxu0
    %v3222 = vadd.f32 %v2943, %v3221
    %v3223 = vpop.f32.mrb[0].mxu0
    %v3224 = vadd.f32 %v2947, %v3223
    %3225 = vdwg.mxu0
    %3226 = vmatprep.subr.bf16.mxu0 %v3119
    %3227 = vmatpush1.bf16.msra.mxu0 %v3118
    %3228 = vmatprep.subr.bf16.mxu0 %v3135
    %3229 = vmatpush1.bf16.msra.mxu0 %v3134
    %3230 = vmatprep.subr.bf16.mxu0 0
    %3231 = vmatpush1.bf16.msra.mxu0 0
    %3232 = vmatprep.subr.bf16.mxu0 0
    %3233 = vmatpush1.bf16.msra.mxu0 0
    %3234 = vmatprep.subr.bf16.mxu0 0
    %3235 = vmatpush1.bf16.msra.mxu0 0
    %3236 = vmatprep.subr.bf16.mxu0 0
    %3237 = vmatpush1.bf16.msra.mxu0 0
    %3238 = vmatprep.subr.bf16.mxu0 0
    %3239 = vmatpush1.bf16.msra.mxu0 0
    %3240 = vmatprep.subr.bf16.mxu0 0
    %3241 = vmatpush1.bf16.msra.mxu0 0
    %3242 = vmatprep.subr.bf16.mxu0 0
    %3243 = vmatpush1.bf16.msra.mxu0 0
    %3244 = vmatprep.subr.bf16.mxu0 0
    %3245 = vmatpush1.bf16.msra.mxu0 0
    %3246 = vmatprep.subr.bf16.mxu0 0
    %3247 = vmatpush1.bf16.msra.mxu0 0
    %3248 = vmatprep.subr.bf16.mxu0 0
    %3249 = vmatpush1.bf16.msra.mxu0 0
    %3250 = vmatprep.subr.bf16.mxu0 0
    %3251 = vmatpush1.bf16.msra.mxu0 0
    %3252 = vmatprep.subr.bf16.mxu0 0
    %3253 = vmatpush1.bf16.msra.mxu0 0
    %3254 = vmatprep.subr.bf16.mxu0 0
    %3255 = vmatpush1.bf16.msra.mxu0 0
    %3256 = vmatprep.subr.bf16.mxu0 0
    %3257 = vmatpush1.bf16.msra.mxu0 0
    %3258 = vmatprep.mubr.bf16.mxu0 0
    %3259 = vmatmul.mubr.bf16.gmra.mrb[0].mxu0 %v3181
    %v3260 = vpop.f32.mrb[0].mxu0
    %v3261 = vadd.f32 %v2951, %v3260
    %v3262 = vpop.f32.mrb[0].mxu0
    %v3263 = vadd.f32 %v2955, %v3262
    %v3264 = vpop.f32.mrb[0].mxu0
    %v3265 = vadd.f32 %v2951, %v3264
    %v3266 = vpop.f32.mrb[0].mxu0
    %v3267 = vadd.f32 %v2955, %v3266
    %3268 = vdwg.mxu0
    %3269 = vmatprep.subr.bf16.mxu0 %v3121
    %3270 = vmatpush1.bf16.msra.mxu0 %v3120
    %3271 = vmatprep.subr.bf16.mxu0 %v3137
    %3272 = vmatpush1.bf16.msra.mxu0 %v3136
    %3273 = vmatprep.subr.bf16.mxu0 0
    %3274 = vmatpush1.bf16.msra.mxu0 0
    %3275 = vmatprep.subr.bf16.mxu0 0
    %3276 = vmatpush1.bf16.msra.mxu0 0
    %3277 = vmatprep.subr.bf16.mxu0 0
    %3278 = vmatpush1.bf16.msra.mxu0 0
    %3279 = vmatprep.subr.bf16.mxu0 0
    %3280 = vmatpush1.bf16.msra.mxu0 0
    %3281 = vmatprep.subr.bf16.mxu0 0
    %3282 = vmatpush1.bf16.msra.mxu0 0
    %3283 = vmatprep.subr.bf16.mxu0 0
    %3284 = vmatpush1.bf16.msra.mxu0 0
    %3285 = vmatprep.subr.bf16.mxu0 0
    %3286 = vmatpush1.bf16.msra.mxu0 0
    %3287 = vmatprep.subr.bf16.mxu0 0
    %3288 = vmatpush1.bf16.msra.mxu0 0
    %3289 = vmatprep.subr.bf16.mxu0 0
    %3290 = vmatpush1.bf16.msra.mxu0 0
    %3291 = vmatprep.subr.bf16.mxu0 0
    %3292 = vmatpush1.bf16.msra.mxu0 0
    %3293 = vmatprep.subr.bf16.mxu0 0
    %3294 = vmatpush1.bf16.msra.mxu0 0
    %3295 = vmatprep.subr.bf16.mxu0 0
    %3296 = vmatpush1.bf16.msra.mxu0 0
    %3297 = vmatprep.subr.bf16.mxu0 0
    %3298 = vmatpush1.bf16.msra.mxu0 0
    %3299 = vmatprep.subr.bf16.mxu0 0
    %3300 = vmatpush1.bf16.msra.mxu0 0
    %3301 = vmatprep.mubr.bf16.mxu0 0
    %3302 = vmatmul.mubr.bf16.gmra.mrb[0].mxu0 %v3181
    %v3303 = vpop.f32.mrb[0].mxu0
    %v3304 = vadd.f32 %v2959, %v3303
    %v3305 = vpop.f32.mrb[0].mxu0
    %v3306 = vadd.f32 %v2963, %v3305
    %v3307 = vpop.f32.mrb[0].mxu0
    %v3308 = vadd.f32 %v2959, %v3307
    %v3309 = vpop.f32.mrb[0].mxu0
    %v3310 = vadd.f32 %v2963, %v3309
    %3311 = vdwg.mxu0
    %3312 = vmatprep.subr.bf16.mxu0 %v3123
    %3313 = vmatpush1.bf16.msra.mxu0 %v3122
    %3314 = vmatprep.subr.bf16.mxu0 %v3139
    %3315 = vmatpush1.bf16.msra.mxu0 %v3138
    %3316 = vmatprep.subr.bf16.mxu0 0
    %3317 = vmatpush1.bf16.msra.mxu0 0
    %3318 = vmatprep.subr.bf16.mxu0 0
    %3319 = vmatpush1.bf16.msra.mxu0 0
    %3320 = vmatprep.subr.bf16.mxu0 0
    %3321 = vmatpush1.bf16.msra.mxu0 0
    %3322 = vmatprep.subr.bf16.mxu0 0
    %3323 = vmatpush1.bf16.msra.mxu0 0
    %3324 = vmatprep.subr.bf16.mxu0 0
    %3325 = vmatpush1.bf16.msra.mxu0 0
    %3326 = vmatprep.subr.bf16.mxu0 0
    %3327 = vmatpush1.bf16.msra.mxu0 0
    %3328 = vmatprep.subr.bf16.mxu0 0
    %3329 = vmatpush1.bf16.msra.mxu0 0
    %3330 = vmatprep.subr.bf16.mxu0 0
    %3331 = vmatpush1.bf16.msra.mxu0 0
    %3332 = vmatprep.subr.bf16.mxu0 0
    %3333 = vmatpush1.bf16.msra.mxu0 0
    %3334 = vmatprep.subr.bf16.mxu0 0
    %3335 = vmatpush1.bf16.msra.mxu0 0
    %3336 = vmatprep.subr.bf16.mxu0 0
    %3337 = vmatpush1.bf16.msra.mxu0 0
    %3338 = vmatprep.subr.bf16.mxu0 0
    %3339 = vmatpush1.bf16.msra.mxu0 0
    %3340 = vmatprep.subr.bf16.mxu0 0
    %3341 = vmatpush1.bf16.msra.mxu0 0
    %3342 = vmatprep.subr.bf16.mxu0 0
    %3343 = vmatpush1.bf16.msra.mxu0 0
    %3344 = vmatprep.mubr.bf16.mxu0 0
    %3345 = vmatmul.mubr.bf16.gmra.mrb[0].mxu0 %v3181
    %v3346 = vpop.f32.mrb[0].mxu0
    %v3347 = vadd.f32 %v2967, %v3346
    %v3348 = vpop.f32.mrb[0].mxu0
    %v3349 = vadd.f32 %v2971, %v3348
    %v3350 = vpop.f32.mrb[0].mxu0
    %v3351 = vadd.f32 %v2967, %v3350
    %v3352 = vpop.f32.mrb[0].mxu0
    %v3353 = vadd.f32 %v2971, %v3352
    %3354 = vdwg.mxu0
    %3355 = vmatprep.subr.bf16.mxu0 %v3125
    %3356 = vmatpush1.bf16.msra.mxu0 %v3124
    %3357 = vmatprep.subr.bf16.mxu0 %v3141
    %3358 = vmatpush1.bf16.msra.mxu0 %v3140
    %3359 = vmatprep.subr.bf16.mxu0 0
    %3360 = vmatpush1.bf16.msra.mxu0 0
    %3361 = vmatprep.subr.bf16.mxu0 0
    %3362 = vmatpush1.bf16.msra.mxu0 0
    %3363 = vmatprep.subr.bf16.mxu0 0
    %3364 = vmatpush1.bf16.msra.mxu0 0
    %3365 = vmatprep.subr.bf16.mxu0 0
    %3366 = vmatpush1.bf16.msra.mxu0 0
    %3367 = vmatprep.subr.bf16.mxu0 0
    %3368 = vmatpush1.bf16.msra.mxu0 0
    %3369 = vmatprep.subr.bf16.mxu0 0
    %3370 = vmatpush1.bf16.msra.mxu0 0
    %3371 = vmatprep.subr.bf16.mxu0 0
    %3372 = vmatpush1.bf16.msra.mxu0 0
    %3373 = vmatprep.subr.bf16.mxu0 0
    %3374 = vmatpush1.bf16.msra.mxu0 0
    %3375 = vmatprep.subr.bf16.mxu0 0
    %3376 = vmatpush1.bf16.msra.mxu0 0
    %3377 = vmatprep.subr.bf16.mxu0 0
    %3378 = vmatpush1.bf16.msra.mxu0 0
    %3379 = vmatprep.subr.bf16.mxu0 0
    %3380 = vmatpush1.bf16.msra.mxu0 0
    %3381 = vmatprep.subr.bf16.mxu0 0
    %3382 = vmatpush1.bf16.msra.mxu0 0
    %3383 = vmatprep.subr.bf16.mxu0 0
    %3384 = vmatpush1.bf16.msra.mxu0 0
    %3385 = vmatprep.subr.bf16.mxu0 0
    %3386 = vmatpush1.bf16.msra.mxu0 0
    %3387 = vmatprep.mubr.bf16.mxu0 0
    %3388 = vmatmul.mubr.bf16.gmra.mrb[0].mxu0 %v3181
    %v3389 = vpop.f32.mrb[0].mxu0
    %v3390 = vadd.f32 %v2975, %v3389
    %v3391 = vpop.f32.mrb[0].mxu0
    %v3392 = vadd.f32 %v2979, %v3391
    %v3393 = vpop.f32.mrb[0].mxu0
    %v3394 = vadd.f32 %v2975, %v3393
    %v3395 = vpop.f32.mrb[0].mxu0
    %v3396 = vadd.f32 %v2979, %v3395
    %3397 = vdwg.mxu0
    %3398 = vmatprep.subr.bf16.mxu0 %v3127
    %3399 = vmatpush1.bf16.msra.mxu0 %v3126
    %3400 = vmatprep.subr.bf16.mxu0 %v3143
    %3401 = vmatpush1.bf16.msra.mxu0 %v3142
    %3402 = vmatprep.subr.bf16.mxu0 0
    %3403 = vmatpush1.bf16.msra.mxu0 0
    %3404 = vmatprep.subr.bf16.mxu0 0
    %3405 = vmatpush1.bf16.msra.mxu0 0
    %3406 = vmatprep.subr.bf16.mxu0 0
    %3407 = vmatpush1.bf16.msra.mxu0 0
    %3408 = vmatprep.subr.bf16.mxu0 0
    %3409 = vmatpush1.bf16.msra.mxu0 0
    %3410 = vmatprep.subr.bf16.mxu0 0
    %3411 = vmatpush1.bf16.msra.mxu0 0
    %3412 = vmatprep.subr.bf16.mxu0 0
    %3413 = vmatpush1.bf16.msra.mxu0 0
    %3414 = vmatprep.subr.bf16.mxu0 0
    %3415 = vmatpush1.bf16.msra.mxu0 0
    %3416 = vmatprep.subr.bf16.mxu0 0
    %3417 = vmatpush1.bf16.msra.mxu0 0
    %3418 = vmatprep.subr.bf16.mxu0 0
    %3419 = vmatpush1.bf16.msra.mxu0 0
    %3420 = vmatprep.subr.bf16.mxu0 0
    %3421 = vmatpush1.bf16.msra.mxu0 0
    %3422 = vmatprep.subr.bf16.mxu0 0
    %3423 = vmatpush1.bf16.msra.mxu0 0
    %3424 = vmatprep.subr.bf16.mxu0 0
    %3425 = vmatpush1.bf16.msra.mxu0 0
    %3426 = vmatprep.subr.bf16.mxu0 0
    %3427 = vmatpush1.bf16.msra.mxu0 0
    %3428 = vmatprep.subr.bf16.mxu0 0
    %3429 = vmatpush1.bf16.msra.mxu0 0
    %3430 = vmatprep.mubr.bf16.mxu0 0
    %3431 = vmatmul.mubr.bf16.gmra.mrb[0].mxu0 %v3181
    %v3432 = vpop.f32.mrb[0].mxu0
    %v3433 = vadd.f32 %v2983, %v3432
    %v3434 = vpop.f32.mrb[0].mxu0
    %v3435 = vadd.f32 %v2987, %v3434
    %v3436 = vpop.f32.mrb[0].mxu0
    %v3437 = vadd.f32 %v2983, %v3436
    %v3438 = vpop.f32.mrb[0].mxu0
    %v3439 = vadd.f32 %v2987, %v3438
    %3440 = vdwg.mxu0
    %3441 = vmatprep.subr.bf16.mxu0 %v3129
    %3442 = vmatpush1.bf16.msra.mxu0 %v3128
    %3443 = vmatprep.subr.bf16.mxu0 %v3145
    %3444 = vmatpush1.bf16.msra.mxu0 %v3144
    %3445 = vmatprep.subr.bf16.mxu0 0
    %3446 = vmatpush1.bf16.msra.mxu0 0
    %3447 = vmatprep.subr.bf16.mxu0 0
    %3448 = vmatpush1.bf16.msra.mxu0 0
    %3449 = vmatprep.subr.bf16.mxu0 0
    %3450 = vmatpush1.bf16.msra.mxu0 0
    %3451 = vmatprep.subr.bf16.mxu0 0
    %3452 = vmatpush1.bf16.msra.mxu0 0
    %3453 = vmatprep.subr.bf16.mxu0 0
    %3454 = vmatpush1.bf16.msra.mxu0 0
    %3455 = vmatprep.subr.bf16.mxu0 0
    %3456 = vmatpush1.bf16.msra.mxu0 0
    %3457 = vmatprep.subr.bf16.mxu0 0
    %3458 = vmatpush1.bf16.msra.mxu0 0
    %3459 = vmatprep.subr.bf16.mxu0 0
    %3460 = vmatpush1.bf16.msra.mxu0 0
    %3461 = vmatprep.subr.bf16.mxu0 0
    %3462 = vmatpush1.bf16.msra.mxu0 0
    %3463 = vmatprep.subr.bf16.mxu0 0
    %3464 = vmatpush1.bf16.msra.mxu0 0
    %3465 = vmatprep.subr.bf16.mxu0 0
    %3466 = vmatpush1.bf16.msra.mxu0 0
    %3467 = vmatprep.subr.bf16.mxu0 0
    %3468 = vmatpush1.bf16.msra.mxu0 0
    %3469 = vmatprep.subr.bf16.mxu0 0
    %3470 = vmatpush1.bf16.msra.mxu0 0
    %3471 = vmatprep.subr.bf16.mxu0 0
    %3472 = vmatpush1.bf16.msra.mxu0 0
    %3473 = vmatprep.mubr.bf16.mxu0 0
    %3474 = vmatmul.mubr.bf16.gmra.mrb[0].mxu0 %v3181
    %v3475 = vpop.f32.mrb[0].mxu0
    %v3476 = vadd.f32 %v2991, %v3475
    %v3477 = vpop.f32.mrb[0].mxu0
    %v3478 = vadd.f32 %v2995, %v3477
    %v3479 = vpop.f32.mrb[0].mxu0
    %v3480 = vadd.f32 %v2991, %v3479
    %v3481 = vpop.f32.mrb[0].mxu0
    %v3482 = vadd.f32 %v2995, %v3481
    %3483 = vdwg.mxu0
    %3484 = vmatprep.subr.bf16.mxu0 %v3131
    %3485 = vmatpush1.bf16.msra.mxu0 %v3130
    %3486 = vmatprep.subr.bf16.mxu0 %v3147
    %3487 = vmatpush1.bf16.msra.mxu0 %v3146
    %3488 = vmatprep.subr.bf16.mxu0 0
    %3489 = vmatpush1.bf16.msra.mxu0 0
    %3490 = vmatprep.subr.bf16.mxu0 0
    %3491 = vmatpush1.bf16.msra.mxu0 0
    %3492 = vmatprep.subr.bf16.mxu0 0
    %3493 = vmatpush1.bf16.msra.mxu0 0
    %3494 = vmatprep.subr.bf16.mxu0 0
    %3495 = vmatpush1.bf16.msra.mxu0 0
    %3496 = vmatprep.subr.bf16.mxu0 0
    %3497 = vmatpush1.bf16.msra.mxu0 0
    %3498 = vmatprep.subr.bf16.mxu0 0
    %3499 = vmatpush1.bf16.msra.mxu0 0
    %3500 = vmatprep.subr.bf16.mxu0 0
    %3501 = vmatpush1.bf16.msra.mxu0 0
    %3502 = vmatprep.subr.bf16.mxu0 0
    %3503 = vmatpush1.bf16.msra.mxu0 0
    %3504 = vmatprep.subr.bf16.mxu0 0
    %3505 = vmatpush1.bf16.msra.mxu0 0
    %3506 = vmatprep.subr.bf16.mxu0 0
    %3507 = vmatpush1.bf16.msra.mxu0 0
    %3508 = vmatprep.subr.bf16.mxu0 0
    %3509 = vmatpush1.bf16.msra.mxu0 0
    %3510 = vmatprep.subr.bf16.mxu0 0
    %3511 = vmatpush1.bf16.msra.mxu0 0
    %3512 = vmatprep.subr.bf16.mxu0 0
    %3513 = vmatpush1.bf16.msra.mxu0 0
    %3514 = vmatprep.subr.bf16.mxu0 0
    %3515 = vmatpush1.bf16.msra.mxu0 0
    %3516 = vmatprep.mubr.bf16.mxu0 0
    %3517 = vmatmul.mubr.bf16.gmra.mrb[0].mxu0 %v3181
    %v3518 = vpop.f32.mrb[0].mxu0
    %v3519 = vadd.f32 %v2999, %v3518
    %v3520 = vpop.f32.mrb[0].mxu0
    %v3521 = vadd.f32 %v3003, %v3520
    %v3522 = vpop.f32.mrb[0].mxu0
    %v3523 = vadd.f32 %v2999, %v3522
    %v3524 = vpop.f32.mrb[0].mxu0
    %v3525 = vadd.f32 %v3003, %v3524
    %3526 = vdwg.mxu0
    %v3527 = vmax.f32 %v3218, 0.0
    %v3528 = vmax.f32 %v3220, 0.0
    %v3529 = vmax.f32 %v3261, 0.0
    %v3530 = vmax.f32 %v3263, 0.0
    %v3531 = vmax.f32 %v3304, 0.0
    %v3532 = vmax.f32 %v3306, 0.0
    %v3533 = vmax.f32 %v3347, 0.0
    %v3534 = vmax.f32 %v3349, 0.0
    %v3535 = vmax.f32 %v3390, 0.0
    %v3536 = vmax.f32 %v3392, 0.0
    %v3537 = vmax.f32 %v3433, 0.0
    %v3538 = vmax.f32 %v3435, 0.0
    %v3539 = vmax.f32 %v3476, 0.0
    %v3540 = vmax.f32 %v3478, 0.0
    %v3541 = vmax.f32 %v3519, 0.0
    %v3542 = vmax.f32 %v3521, 0.0
    %v3543 = vmax.f32 %v3222, 0.0
    %v3544 = vmax.f32 %v3224, 0.0
    %v3545 = vmax.f32 %v3265, 0.0
    %v3546 = vmax.f32 %v3267, 0.0
    %v3547 = vmax.f32 %v3308, 0.0
    %v3548 = vmax.f32 %v3310, 0.0
    %v3549 = vmax.f32 %v3351, 0.0
    %v3550 = vmax.f32 %v3353, 0.0
    %v3551 = vmax.f32 %v3394, 0.0
    %v3552 = vmax.f32 %v3396, 0.0
    %v3553 = vmax.f32 %v3437, 0.0
    %v3554 = vmax.f32 %v3439, 0.0
    %v3555 = vmax.f32 %v3480, 0.0
    %v3556 = vmax.f32 %v3482, 0.0
    %v3557 = vmax.f32 %v3523, 0.0
    %v3558 = vmax.f32 %v3525, 0.0
    %v3559 = vpack.c.bf16 %v3543, %v3527
    %v3560 = vpack.c.bf16 %v3544, %v3528
    %v3561 = vpack.c.bf16 %v3545, %v3529
    %v3562 = vpack.c.bf16 %v3546, %v3530
    %v3563 = vpack.c.bf16 %v3547, %v3531
    %v3564 = vpack.c.bf16 %v3548, %v3532
    %v3565 = vpack.c.bf16 %v3549, %v3533
    %v3566 = vpack.c.bf16 %v3550, %v3534
    %v3567 = vpack.c.bf16 %v3551, %v3535
    %v3568 = vpack.c.bf16 %v3552, %v3536
    %v3569 = vpack.c.bf16 %v3553, %v3537
    %v3570 = vpack.c.bf16 %v3554, %v3538
    %v3571 = vpack.c.bf16 %v3555, %v3539
    %v3572 = vpack.c.bf16 %v3556, %v3540
    %v3573 = vpack.c.bf16 %v3557, %v3541
    %v3574 = vpack.c.bf16 %v3558, %v3542
    %v3575 = vld [vmem:[%s16] sm:$0xf]
    %v3576 = vld [vmem:[%s16 + $0x4] sm:$0xf]
    %v3577 = vld [vmem:[%s16 + $0x8] sm:$0xf]
    %v3578 = vld [vmem:[%s16 + $0xc] sm:$0xf]
    %v3579 = vld [vmem:[%s16 + $0x10] sm:$0xf]
    %v3580 = vld [vmem:[%s16 + $0x14] sm:$0xf]
    %v3581 = vld [vmem:[%s16 + $0x18] sm:$0xf]
    %v3582 = vld [vmem:[%s16 + $0x1c] sm:$0xf]
    %v3583 = vld [vmem:[%s16 + $0x20] sm:$0xf]
    %v3584 = vld [vmem:[%s16 + $0x24] sm:$0xf]
    %v3585 = vld [vmem:[%s16 + $0x28] sm:$0xf]
    %v3586 = vld [vmem:[%s16 + $0x2c] sm:$0xf]
    %v3587 = vld [vmem:[%s16 + $0x30] sm:$0xf]
    %v3588 = vld [vmem:[%s16 + $0x34] sm:$0xf]
    %v3589 = vld [vmem:[%s16 + $0x38] sm:$0xf]
    %v3590 = vld [vmem:[%s16 + $0x3c] sm:$0xf]
    %v3591 = vld [vmem:[%s16 + $0x40] sm:$0xf]
    %v3592 = vld [vmem:[%s16 + $0x44] sm:$0xf]
    %v3593 = vld [vmem:[%s16 + $0x48] sm:$0xf]
    %v3594 = vld [vmem:[%s16 + $0x4c] sm:$0xf]
    %v3595 = vld [vmem:[%s16 + $0x50] sm:$0xf]
    %v3596 = vld [vmem:[%s16 + $0x54] sm:$0xf]
    %v3597 = vld [vmem:[%s16 + $0x58] sm:$0xf]
    %v3598 = vld [vmem:[%s16 + $0x5c] sm:$0xf]
    %v3599 = vld [vmem:[%s16 + $0x60] sm:$0xf]
    %v3600 = vld [vmem:[%s16 + $0x64] sm:$0xf]
    %v3601 = vld [vmem:[%s16 + $0x68] sm:$0xf]
    %v3602 = vld [vmem:[%s16 + $0x6c] sm:$0xf]
    %v3603 = vld [vmem:[%s16 + $0x70] sm:$0xf]
    %v3604 = vld [vmem:[%s16 + $0x74] sm:$0xf]
    %v3605 = vld [vmem:[%s16 + $0x78] sm:$0xf]
    %v3606 = vld [vmem:[%s16 + $0x7c] sm:$0xf]
    %v3607 = vld [vmem:[%s16 + $0x80] sm:$0xf]
    %v3608 = vld [vmem:[%s16 + $0x84] sm:$0xf]
    %v3609 = vld [vmem:[%s16 + $0x88] sm:$0xf]
    %v3610 = vld [vmem:[%s16 + $0x8c] sm:$0xf]
    %v3611 = vld [vmem:[%s16 + $0x90] sm:$0xf]
    %v3612 = vld [vmem:[%s16 + $0x94] sm:$0xf]
    %v3613 = vld [vmem:[%s16 + $0x98] sm:$0xf]
    %v3614 = vld [vmem:[%s16 + $0x9c] sm:$0xf]
    %v3615 = vld [vmem:[%s16 + $0xa0] sm:$0xf]
    %v3616 = vld [vmem:[%s16 + $0xa4] sm:$0xf]
    %v3617 = vld [vmem:[%s16 + $0xa8] sm:$0xf]
    %v3618 = vld [vmem:[%s16 + $0xac] sm:$0xf]
    %v3619 = vld [vmem:[%s16 + $0xb0] sm:$0xf]
    %v3620 = vld [vmem:[%s16 + $0xb4] sm:$0xf]
    %v3621 = vld [vmem:[%s16 + $0xb8] sm:$0xf]
    %v3622 = vld [vmem:[%s16 + $0xbc] sm:$0xf]
    %v3623 = vld [vmem:[%s16 + $0xc0] sm:$0xf]
    %v3624 = vld [vmem:[%s16 + $0xc4] sm:$0xf]
    %v3625 = vld [vmem:[%s16 + $0xc8] sm:$0xf]
    %v3626 = vld [vmem:[%s16 + $0xcc] sm:$0xf]
    %v3627 = vld [vmem:[%s16 + $0xd0] sm:$0xf]
    %v3628 = vld [vmem:[%s16 + $0xd4] sm:$0xf]
    %v3629 = vld [vmem:[%s16 + $0xd8] sm:$0xf]
    %v3630 = vld [vmem:[%s16 + $0xdc] sm:$0xf]
    %v3631 = vld [vmem:[%s16 + $0xe0] sm:$0xf]
    %v3632 = vld [vmem:[%s16 + $0xe4] sm:$0xf]
    %v3633 = vld [vmem:[%s16 + $0xe8] sm:$0xf]
    %v3634 = vld [vmem:[%s16 + $0xec] sm:$0xf]
    %v3635 = vld [vmem:[%s16 + $0xf0] sm:$0xf]
    %v3636 = vld [vmem:[%s16 + $0xf4] sm:$0xf]
    %v3637 = vld [vmem:[%s16 + $0xf8] sm:$0xf]
    %v3638 = vld [vmem:[%s16 + $0xfc] sm:$0xf]
    %v3639 = vld [vmem:[%s16 + $0x100] sm:$0xf]
    %v3640 = vld [vmem:[%s16 + $0x104] sm:$0xf]
    %v3641 = vld [vmem:[%s16 + $0x108] sm:$0xf]
    %v3642 = vld [vmem:[%s16 + $0x10c] sm:$0xf]
    %v3643 = vld [vmem:[%s16 + $0x110] sm:$0xf]
    %v3644 = vld [vmem:[%s16 + $0x114] sm:$0xf]
    %v3645 = vld [vmem:[%s16 + $0x118] sm:$0xf]
    %v3646 = vld [vmem:[%s16 + $0x11c] sm:$0xf]
    %v3647 = vld [vmem:[%s16 + $0x120] sm:$0xf]
    %v3648 = vld [vmem:[%s16 + $0x124] sm:$0xf]
    %v3649 = vld [vmem:[%s16 + $0x128] sm:$0xf]
    %v3650 = vld [vmem:[%s16 + $0x12c] sm:$0xf]
    %v3651 = vld [vmem:[%s16 + $0x130] sm:$0xf]
    %v3652 = vld [vmem:[%s16 + $0x134] sm:$0xf]
    %v3653 = vld [vmem:[%s16 + $0x138] sm:$0xf]
    %v3654 = vld [vmem:[%s16 + $0x13c] sm:$0xf]
    %v3655 = vld [vmem:[%s16 + $0x140] sm:$0xf]
    %v3656 = vld [vmem:[%s16 + $0x144] sm:$0xf]
    %v3657 = vld [vmem:[%s16 + $0x148] sm:$0xf]
    %v3658 = vld [vmem:[%s16 + $0x14c] sm:$0xf]
    %v3659 = vld [vmem:[%s16 + $0x150] sm:$0xf]
    %v3660 = vld [vmem:[%s16 + $0x154] sm:$0xf]
    %v3661 = vld [vmem:[%s16 + $0x158] sm:$0xf]
    %v3662 = vld [vmem:[%s16 + $0x15c] sm:$0xf]
    %v3663 = vld [vmem:[%s16 + $0x160] sm:$0xf]
    %v3664 = vld [vmem:[%s16 + $0x164] sm:$0xf]
    %v3665 = vld [vmem:[%s16 + $0x168] sm:$0xf]
    %v3666 = vld [vmem:[%s16 + $0x16c] sm:$0xf]
    %v3667 = vld [vmem:[%s16 + $0x170] sm:$0xf]
    %v3668 = vld [vmem:[%s16 + $0x174] sm:$0xf]
    %v3669 = vld [vmem:[%s16 + $0x178] sm:$0xf]
    %v3670 = vld [vmem:[%s16 + $0x17c] sm:$0xf]
    %v3671 = vld [vmem:[%s16 + $0x180] sm:$0xf]
    %v3672 = vld [vmem:[%s16 + $0x184] sm:$0xf]
    %v3673 = vld [vmem:[%s16 + $0x188] sm:$0xf]
    %v3674 = vld [vmem:[%s16 + $0x18c] sm:$0xf]
    %v3675 = vld [vmem:[%s16 + $0x190] sm:$0xf]
    %v3676 = vld [vmem:[%s16 + $0x194] sm:$0xf]
    %v3677 = vld [vmem:[%s16 + $0x198] sm:$0xf]
    %v3678 = vld [vmem:[%s16 + $0x19c] sm:$0xf]
    %v3679 = vld [vmem:[%s16 + $0x1a0] sm:$0xf]
    %v3680 = vld [vmem:[%s16 + $0x1a4] sm:$0xf]
    %v3681 = vld [vmem:[%s16 + $0x1a8] sm:$0xf]
    %v3682 = vld [vmem:[%s16 + $0x1ac] sm:$0xf]
    %v3683 = vld [vmem:[%s16 + $0x1b0] sm:$0xf]
    %v3684 = vld [vmem:[%s16 + $0x1b4] sm:$0xf]
    %v3685 = vld [vmem:[%s16 + $0x1b8] sm:$0xf]
    %v3686 = vld [vmem:[%s16 + $0x1bc] sm:$0xf]
    %v3687 = vld [vmem:[%s16 + $0x1c0] sm:$0xf]
    %v3688 = vld [vmem:[%s16 + $0x1c4] sm:$0xf]
    %v3689 = vld [vmem:[%s16 + $0x1c8] sm:$0xf]
    %v3690 = vld [vmem:[%s16 + $0x1cc] sm:$0xf]
    %v3691 = vld [vmem:[%s16 + $0x1d0] sm:$0xf]
    %v3692 = vld [vmem:[%s16 + $0x1d4] sm:$0xf]
    %v3693 = vld [vmem:[%s16 + $0x1d8] sm:$0xf]
    %v3694 = vld [vmem:[%s16 + $0x1dc] sm:$0xf]
    %v3695 = vld [vmem:[%s16 + $0x1e0] sm:$0xf]
    %v3696 = vld [vmem:[%s16 + $0x1e4] sm:$0xf]
    %v3697 = vld [vmem:[%s16 + $0x1e8] sm:$0xf]
    %v3698 = vld [vmem:[%s16 + $0x1ec] sm:$0xf]
    %v3699 = vld [vmem:[%s16 + $0x1f0] sm:$0xf]
    %v3700 = vld [vmem:[%s16 + $0x1f4] sm:$0xf]
    %v3701 = vld [vmem:[%s16 + $0x1f8] sm:$0xf]
    %v3702 = vld [vmem:[%s16 + $0x1fc] sm:$0xf]
    %v3703 = vld [vmem:[%s16 + $0x200] sm:$0xf]
    %v3704 = vld [vmem:[%s16 + $0x204] sm:$0xf]
    %v3705 = vld [vmem:[%s16 + $0x208] sm:$0xf]
    %v3706 = vld [vmem:[%s16 + $0x20c] sm:$0xf]
    %v3707 = vld [vmem:[%s16 + $0x210] sm:$0xf]
    %v3708 = vld [vmem:[%s16 + $0x214] sm:$0xf]
    %v3709 = vld [vmem:[%s16 + $0x218] sm:$0xf]
    %v3710 = vld [vmem:[%s16 + $0x21c] sm:$0xf]
    %v3711 = vld [vmem:[%s16 + $0x220] sm:$0xf]
    %v3712 = vld [vmem:[%s16 + $0x224] sm:$0xf]
    %v3713 = vld [vmem:[%s16 + $0x228] sm:$0xf]
    %v3714 = vld [vmem:[%s16 + $0x22c] sm:$0xf]
    %v3715 = vld [vmem:[%s16 + $0x230] sm:$0xf]
    %v3716 = vld [vmem:[%s16 + $0x234] sm:$0xf]
    %v3717 = vld [vmem:[%s16 + $0x238] sm:$0xf]
    %v3718 = vld [vmem:[%s16 + $0x23c] sm:$0xf]
    %v3719 = vld [vmem:[%s16 + $0x240] sm:$0xf]
    %v3720 = vld [vmem:[%s16 + $0x244] sm:$0xf]
    %v3721 = vld [vmem:[%s16 + $0x248] sm:$0xf]
    %v3722 = vld [vmem:[%s16 + $0x24c] sm:$0xf]
    %v3723 = vld [vmem:[%s16 + $0x250] sm:$0xf]
    %v3724 = vld [vmem:[%s16 + $0x254] sm:$0xf]
    %v3725 = vld [vmem:[%s16 + $0x258] sm:$0xf]
    %v3726 = vld [vmem:[%s16 + $0x25c] sm:$0xf]
    %v3727 = vld [vmem:[%s16 + $0x260] sm:$0xf]
    %v3728 = vld [vmem:[%s16 + $0x264] sm:$0xf]
    %v3729 = vld [vmem:[%s16 + $0x268] sm:$0xf]
    %v3730 = vld [vmem:[%s16 + $0x26c] sm:$0xf]
    %v3731 = vld [vmem:[%s16 + $0x270] sm:$0xf]
    %v3732 = vld [vmem:[%s16 + $0x274] sm:$0xf]
    %v3733 = vld [vmem:[%s16 + $0x278] sm:$0xf]
    %v3734 = vld [vmem:[%s16 + $0x27c] sm:$0xf]
    %v3735 = vld [vmem:[%s16 + $0x280] sm:$0xf]
    %v3736 = vld [vmem:[%s16 + $0x284] sm:$0xf]
    %v3737 = vld [vmem:[%s16 + $0x288] sm:$0xf]
    %v3738 = vld [vmem:[%s16 + $0x28c] sm:$0xf]
    %v3739 = vld [vmem:[%s16 + $0x290] sm:$0xf]
    %v3740 = vld [vmem:[%s16 + $0x294] sm:$0xf]
    %v3741 = vld [vmem:[%s16 + $0x298] sm:$0xf]
    %v3742 = vld [vmem:[%s16 + $0x29c] sm:$0xf]
    %v3743 = vld [vmem:[%s16 + $0x2a0] sm:$0xf]
    %v3744 = vld [vmem:[%s16 + $0x2a4] sm:$0xf]
    %v3745 = vld [vmem:[%s16 + $0x2a8] sm:$0xf]
    %v3746 = vld [vmem:[%s16 + $0x2ac] sm:$0xf]
    %v3747 = vld [vmem:[%s16 + $0x2b0] sm:$0xf]
    %v3748 = vld [vmem:[%s16 + $0x2b4] sm:$0xf]
    %v3749 = vld [vmem:[%s16 + $0x2b8] sm:$0xf]
    %v3750 = vld [vmem:[%s16 + $0x2bc] sm:$0xf]
    %v3751 = vld [vmem:[%s16 + $0x2c0] sm:$0xf]
    %v3752 = vld [vmem:[%s16 + $0x2c4] sm:$0xf]
    %v3753 = vld [vmem:[%s16 + $0x2c8] sm:$0xf]
    %v3754 = vld [vmem:[%s16 + $0x2cc] sm:$0xf]
    %v3755 = vld [vmem:[%s16 + $0x2d0] sm:$0xf]
    %v3756 = vld [vmem:[%s16 + $0x2d4] sm:$0xf]
    %v3757 = vld [vmem:[%s16 + $0x2d8] sm:$0xf]
    %v3758 = vld [vmem:[%s16 + $0x2dc] sm:$0xf]
    %v3759 = vld [vmem:[%s16 + $0x2e0] sm:$0xf]
    %v3760 = vld [vmem:[%s16 + $0x2e4] sm:$0xf]
    %v3761 = vld [vmem:[%s16 + $0x2e8] sm:$0xf]
    %v3762 = vld [vmem:[%s16 + $0x2ec] sm:$0xf]
    %v3763 = vld [vmem:[%s16 + $0x2f0] sm:$0xf]
    %v3764 = vld [vmem:[%s16 + $0x2f4] sm:$0xf]
    %v3765 = vld [vmem:[%s16 + $0x2f8] sm:$0xf]
    %v3766 = vld [vmem:[%s16 + $0x2fc] sm:$0xf]
    %v3767 = vld [vmem:[%s16 + $0x300] sm:$0xf]
    %v3768 = vld [vmem:[%s16 + $0x304] sm:$0xf]
    %v3769 = vld [vmem:[%s16 + $0x308] sm:$0xf]
    %v3770 = vld [vmem:[%s16 + $0x30c] sm:$0xf]
    %v3771 = vld [vmem:[%s16 + $0x310] sm:$0xf]
    %v3772 = vld [vmem:[%s16 + $0x314] sm:$0xf]
    %v3773 = vld [vmem:[%s16 + $0x318] sm:$0xf]
    %v3774 = vld [vmem:[%s16 + $0x31c] sm:$0xf]
    %v3775 = vld [vmem:[%s16 + $0x320] sm:$0xf]
    %v3776 = vld [vmem:[%s16 + $0x324] sm:$0xf]
    %v3777 = vld [vmem:[%s16 + $0x328] sm:$0xf]
    %v3778 = vld [vmem:[%s16 + $0x32c] sm:$0xf]
    %v3779 = vld [vmem:[%s16 + $0x330] sm:$0xf]
    %v3780 = vld [vmem:[%s16 + $0x334] sm:$0xf]
    %v3781 = vld [vmem:[%s16 + $0x338] sm:$0xf]
    %v3782 = vld [vmem:[%s16 + $0x33c] sm:$0xf]
    %v3783 = vld [vmem:[%s16 + $0x340] sm:$0xf]
    %v3784 = vld [vmem:[%s16 + $0x344] sm:$0xf]
    %v3785 = vld [vmem:[%s16 + $0x348] sm:$0xf]
    %v3786 = vld [vmem:[%s16 + $0x34c] sm:$0xf]
    %v3787 = vld [vmem:[%s16 + $0x350] sm:$0xf]
    %v3788 = vld [vmem:[%s16 + $0x354] sm:$0xf]
    %v3789 = vld [vmem:[%s16 + $0x358] sm:$0xf]
    %v3790 = vld [vmem:[%s16 + $0x35c] sm:$0xf]
    %v3791 = vld [vmem:[%s16 + $0x360] sm:$0xf]
    %v3792 = vld [vmem:[%s16 + $0x364] sm:$0xf]
    %v3793 = vld [vmem:[%s16 + $0x368] sm:$0xf]
    %v3794 = vld [vmem:[%s16 + $0x36c] sm:$0xf]
    %v3795 = vld [vmem:[%s16 + $0x370] sm:$0xf]
    %v3796 = vld [vmem:[%s16 + $0x374] sm:$0xf]
    %v3797 = vld [vmem:[%s16 + $0x378] sm:$0xf]
    %v3798 = vld [vmem:[%s16 + $0x37c] sm:$0xf]
    %v3799 = vld [vmem:[%s16 + $0x380] sm:$0xf]
    %v3800 = vld [vmem:[%s16 + $0x384] sm:$0xf]
    %v3801 = vld [vmem:[%s16 + $0x388] sm:$0xf]
    %v3802 = vld [vmem:[%s16 + $0x38c] sm:$0xf]
    %v3803 = vld [vmem:[%s16 + $0x390] sm:$0xf]
    %v3804 = vld [vmem:[%s16 + $0x394] sm:$0xf]
    %v3805 = vld [vmem:[%s16 + $0x398] sm:$0xf]
    %v3806 = vld [vmem:[%s16 + $0x39c] sm:$0xf]
    %v3807 = vld [vmem:[%s16 + $0x3a0] sm:$0xf]
    %v3808 = vld [vmem:[%s16 + $0x3a4] sm:$0xf]
    %v3809 = vld [vmem:[%s16 + $0x3a8] sm:$0xf]
    %v3810 = vld [vmem:[%s16 + $0x3ac] sm:$0xf]
    %v3811 = vld [vmem:[%s16 + $0x3b0] sm:$0xf]
    %v3812 = vld [vmem:[%s16 + $0x3b4] sm:$0xf]
    %v3813 = vld [vmem:[%s16 + $0x3b8] sm:$0xf]
    %v3814 = vld [vmem:[%s16 + $0x3bc] sm:$0xf]
    %v3815 = vld [vmem:[%s16 + $0x3c0] sm:$0xf]
    %v3816 = vld [vmem:[%s16 + $0x3c4] sm:$0xf]
    %v3817 = vld [vmem:[%s16 + $0x3c8] sm:$0xf]
    %v3818 = vld [vmem:[%s16 + $0x3cc] sm:$0xf]
    %v3819 = vld [vmem:[%s16 + $0x3d0] sm:$0xf]
    %v3820 = vld [vmem:[%s16 + $0x3d4] sm:$0xf]
    %v3821 = vld [vmem:[%s16 + $0x3d8] sm:$0xf]
    %v3822 = vld [vmem:[%s16 + $0x3dc] sm:$0xf]
    %v3823 = vld [vmem:[%s16 + $0x3e0] sm:$0xf]
    %v3824 = vld [vmem:[%s16 + $0x3e4] sm:$0xf]
    %v3825 = vld [vmem:[%s16 + $0x3e8] sm:$0xf]
    %v3826 = vld [vmem:[%s16 + $0x3ec] sm:$0xf]
    %v3827 = vld [vmem:[%s16 + $0x3f0] sm:$0xf]
    %v3828 = vld [vmem:[%s16 + $0x3f4] sm:$0xf]
    %v3829 = vld [vmem:[%s16 + $0x3f8] sm:$0xf]
    %v3830 = vld [vmem:[%s16 + $0x3fc] sm:$0xf]
    %v3831 = vld [vmem:[%s17] sm:$0x1]
    %v3833 = vlaneseq
    %v3834 = vshrl.u32 %v3833, 7
    %v3835 = vsub.s32 0, %v3834
    %v3836 = vrot.slane %v3831, %v3835
    %v4094 = vunpack.c.l.b16 %v3575
    %v4095 = vunpack.c.l.b16 %v3576
    %v4096 = vunpack.c.l.b16 %v3577
    %v4097 = vunpack.c.l.b16 %v3578
    %v4098 = vunpack.c.l.b16 %v3579
    %v4099 = vunpack.c.l.b16 %v3580
    %v4100 = vunpack.c.l.b16 %v3581
    %v4101 = vunpack.c.l.b16 %v3582
    %v4102 = vunpack.c.l.b16 %v3583
    %v4103 = vunpack.c.l.b16 %v3584
    %v4104 = vunpack.c.l.b16 %v3585
    %v4105 = vunpack.c.l.b16 %v3586
    %v4106 = vunpack.c.l.b16 %v3587
    %v4107 = vunpack.c.l.b16 %v3588
    %v4108 = vunpack.c.l.b16 %v3589
    %v4109 = vunpack.c.l.b16 %v3590
    %v4110 = vunpack.c.l.b16 %v3591
    %v4111 = vunpack.c.l.b16 %v3592
    %v4112 = vunpack.c.l.b16 %v3593
    %v4113 = vunpack.c.l.b16 %v3594
    %v4114 = vunpack.c.l.b16 %v3595
    %v4115 = vunpack.c.l.b16 %v3596
    %v4116 = vunpack.c.l.b16 %v3597
    %v4117 = vunpack.c.l.b16 %v3598
    %v4118 = vunpack.c.l.b16 %v3599
    %v4119 = vunpack.c.l.b16 %v3600
    %v4120 = vunpack.c.l.b16 %v3601
    %v4121 = vunpack.c.l.b16 %v3602
    %v4122 = vunpack.c.l.b16 %v3603
    %v4123 = vunpack.c.l.b16 %v3604
    %v4124 = vunpack.c.l.b16 %v3605
    %v4125 = vunpack.c.l.b16 %v3606
    %v4126 = vunpack.c.l.b16 %v3607
    %v4127 = vunpack.c.l.b16 %v3608
    %v4128 = vunpack.c.l.b16 %v3609
    %v4129 = vunpack.c.l.b16 %v3610
    %v4130 = vunpack.c.l.b16 %v3611
    %v4131 = vunpack.c.l.b16 %v3612
    %v4132 = vunpack.c.l.b16 %v3613
    %v4133 = vunpack.c.l.b16 %v3614
    %v4134 = vunpack.c.l.b16 %v3615
    %v4135 = vunpack.c.l.b16 %v3616
    %v4136 = vunpack.c.l.b16 %v3617
    %v4137 = vunpack.c.l.b16 %v3618
    %v4138 = vunpack.c.l.b16 %v3619
    %v4139 = vunpack.c.l.b16 %v3620
    %v4140 = vunpack.c.l.b16 %v3621
    %v4141 = vunpack.c.l.b16 %v3622
    %v4142 = vunpack.c.l.b16 %v3623
    %v4143 = vunpack.c.l.b16 %v3624
    %v4144 = vunpack.c.l.b16 %v3625
    %v4145 = vunpack.c.l.b16 %v3626
    %v4146 = vunpack.c.l.b16 %v3627
    %v4147 = vunpack.c.l.b16 %v3628
    %v4148 = vunpack.c.l.b16 %v3629
    %v4149 = vunpack.c.l.b16 %v3630
    %v4150 = vunpack.c.l.b16 %v3631
    %v4151 = vunpack.c.l.b16 %v3632
    %v4152 = vunpack.c.l.b16 %v3633
    %v4153 = vunpack.c.l.b16 %v3634
    %v4154 = vunpack.c.l.b16 %v3635
    %v4155 = vunpack.c.l.b16 %v3636
    %v4156 = vunpack.c.l.b16 %v3637
    %v4157 = vunpack.c.l.b16 %v3638
    %v4158 = vunpack.c.l.b16 %v3639
    %v4159 = vunpack.c.l.b16 %v3640
    %v4160 = vunpack.c.l.b16 %v3641
    %v4161 = vunpack.c.l.b16 %v3642
    %v4162 = vunpack.c.l.b16 %v3643
    %v4163 = vunpack.c.l.b16 %v3644
    %v4164 = vunpack.c.l.b16 %v3645
    %v4165 = vunpack.c.l.b16 %v3646
    %v4166 = vunpack.c.l.b16 %v3647
    %v4167 = vunpack.c.l.b16 %v3648
    %v4168 = vunpack.c.l.b16 %v3649
    %v4169 = vunpack.c.l.b16 %v3650
    %v4170 = vunpack.c.l.b16 %v3651
    %v4171 = vunpack.c.l.b16 %v3652
    %v4172 = vunpack.c.l.b16 %v3653
    %v4173 = vunpack.c.l.b16 %v3654
    %v4174 = vunpack.c.l.b16 %v3655
    %v4175 = vunpack.c.l.b16 %v3656
    %v4176 = vunpack.c.l.b16 %v3657
    %v4177 = vunpack.c.l.b16 %v3658
    %v4178 = vunpack.c.l.b16 %v3659
    %v4179 = vunpack.c.l.b16 %v3660
    %v4180 = vunpack.c.l.b16 %v3661
    %v4181 = vunpack.c.l.b16 %v3662
    %v4182 = vunpack.c.l.b16 %v3663
    %v4183 = vunpack.c.l.b16 %v3664
    %v4184 = vunpack.c.l.b16 %v3665
    %v4185 = vunpack.c.l.b16 %v3666
    %v4186 = vunpack.c.l.b16 %v3667
    %v4187 = vunpack.c.l.b16 %v3668
    %v4188 = vunpack.c.l.b16 %v3669
    %v4189 = vunpack.c.l.b16 %v3670
    %v4190 = vunpack.c.l.b16 %v3671
    %v4191 = vunpack.c.l.b16 %v3672
    %v4192 = vunpack.c.l.b16 %v3673
    %v4193 = vunpack.c.l.b16 %v3674
    %v4194 = vunpack.c.l.b16 %v3675
    %v4195 = vunpack.c.l.b16 %v3676
    %v4196 = vunpack.c.l.b16 %v3677
    %v4197 = vunpack.c.l.b16 %v3678
    %v4198 = vunpack.c.l.b16 %v3679
    %v4199 = vunpack.c.l.b16 %v3680
    %v4200 = vunpack.c.l.b16 %v3681
    %v4201 = vunpack.c.l.b16 %v3682
    %v4202 = vunpack.c.l.b16 %v3683
    %v4203 = vunpack.c.l.b16 %v3684
    %v4204 = vunpack.c.l.b16 %v3685
    %v4205 = vunpack.c.l.b16 %v3686
    %v4206 = vunpack.c.l.b16 %v3687
    %v4207 = vunpack.c.l.b16 %v3688
    %v4208 = vunpack.c.l.b16 %v3689
    %v4209 = vunpack.c.l.b16 %v3690
    %v4210 = vunpack.c.l.b16 %v3691
    %v4211 = vunpack.c.l.b16 %v3692
    %v4212 = vunpack.c.l.b16 %v3693
    %v4213 = vunpack.c.l.b16 %v3694
    %v4214 = vunpack.c.l.b16 %v3695
    %v4215 = vunpack.c.l.b16 %v3696
    %v4216 = vunpack.c.l.b16 %v3697
    %v4217 = vunpack.c.l.b16 %v3698
    %v4218 = vunpack.c.l.b16 %v3699
    %v4219 = vunpack.c.l.b16 %v3700
    %v4220 = vunpack.c.l.b16 %v3701
    %v4221 = vunpack.c.l.b16 %v3702
    %v4222 = vunpack.c.l.b16 %v3703
    %v4223 = vunpack.c.l.b16 %v3704
    %v4224 = vunpack.c.l.b16 %v3705
    %v4225 = vunpack.c.l.b16 %v3706
    %v4226 = vunpack.c.l.b16 %v3707
    %v4227 = vunpack.c.l.b16 %v3708
    %v4228 = vunpack.c.l.b16 %v3709
    %v4229 = vunpack.c.l.b16 %v3710
    %v4230 = vunpack.c.l.b16 %v3711
    %v4231 = vunpack.c.l.b16 %v3712
    %v4232 = vunpack.c.l.b16 %v3713
    %v4233 = vunpack.c.l.b16 %v3714
    %v4234 = vunpack.c.l.b16 %v3715
    %v4235 = vunpack.c.l.b16 %v3716
    %v4236 = vunpack.c.l.b16 %v3717
    %v4237 = vunpack.c.l.b16 %v3718
    %v4238 = vunpack.c.l.b16 %v3719
    %v4239 = vunpack.c.l.b16 %v3720
    %v4240 = vunpack.c.l.b16 %v3721
    %v4241 = vunpack.c.l.b16 %v3722
    %v4242 = vunpack.c.l.b16 %v3723
    %v4243 = vunpack.c.l.b16 %v3724
    %v4244 = vunpack.c.l.b16 %v3725
    %v4245 = vunpack.c.l.b16 %v3726
    %v4246 = vunpack.c.l.b16 %v3727
    %v4247 = vunpack.c.l.b16 %v3728
    %v4248 = vunpack.c.l.b16 %v3729
    %v4249 = vunpack.c.l.b16 %v3730
    %v4250 = vunpack.c.l.b16 %v3731
    %v4251 = vunpack.c.l.b16 %v3732
    %v4252 = vunpack.c.l.b16 %v3733
    %v4253 = vunpack.c.l.b16 %v3734
    %v4254 = vunpack.c.l.b16 %v3735
    %v4255 = vunpack.c.l.b16 %v3736
    %v4256 = vunpack.c.l.b16 %v3737
    %v4257 = vunpack.c.l.b16 %v3738
    %v4258 = vunpack.c.l.b16 %v3739
    %v4259 = vunpack.c.l.b16 %v3740
    %v4260 = vunpack.c.l.b16 %v3741
    %v4261 = vunpack.c.l.b16 %v3742
    %v4262 = vunpack.c.l.b16 %v3743
    %v4263 = vunpack.c.l.b16 %v3744
    %v4264 = vunpack.c.l.b16 %v3745
    %v4265 = vunpack.c.l.b16 %v3746
    %v4266 = vunpack.c.l.b16 %v3747
    %v4267 = vunpack.c.l.b16 %v3748
    %v4268 = vunpack.c.l.b16 %v3749
    %v4269 = vunpack.c.l.b16 %v3750
    %v4270 = vunpack.c.l.b16 %v3751
    %v4271 = vunpack.c.l.b16 %v3752
    %v4272 = vunpack.c.l.b16 %v3753
    %v4273 = vunpack.c.l.b16 %v3754
    %v4274 = vunpack.c.l.b16 %v3755
    %v4275 = vunpack.c.l.b16 %v3756
    %v4276 = vunpack.c.l.b16 %v3757
    %v4277 = vunpack.c.l.b16 %v3758
    %v4278 = vunpack.c.l.b16 %v3759
    %v4279 = vunpack.c.l.b16 %v3760
    %v4280 = vunpack.c.l.b16 %v3761
    %v4281 = vunpack.c.l.b16 %v3762
    %v4282 = vunpack.c.l.b16 %v3763
    %v4283 = vunpack.c.l.b16 %v3764
    %v4284 = vunpack.c.l.b16 %v3765
    %v4285 = vunpack.c.l.b16 %v3766
    %v4286 = vunpack.c.l.b16 %v3767
    %v4287 = vunpack.c.l.b16 %v3768
    %v4288 = vunpack.c.l.b16 %v3769
    %v4289 = vunpack.c.l.b16 %v3770
    %v4290 = vunpack.c.l.b16 %v3771
    %v4291 = vunpack.c.l.b16 %v3772
    %v4292 = vunpack.c.l.b16 %v3773
    %v4293 = vunpack.c.l.b16 %v3774
    %v4294 = vunpack.c.l.b16 %v3775
    %v4295 = vunpack.c.l.b16 %v3776
    %v4296 = vunpack.c.l.b16 %v3777
    %v4297 = vunpack.c.l.b16 %v3778
    %v4298 = vunpack.c.l.b16 %v3779
    %v4299 = vunpack.c.l.b16 %v3780
    %v4300 = vunpack.c.l.b16 %v3781
    %v4301 = vunpack.c.l.b16 %v3782
    %v4302 = vunpack.c.l.b16 %v3783
    %v4303 = vunpack.c.l.b16 %v3784
    %v4304 = vunpack.c.l.b16 %v3785
    %v4305 = vunpack.c.l.b16 %v3786
    %v4306 = vunpack.c.l.b16 %v3787
    %v4307 = vunpack.c.l.b16 %v3788
    %v4308 = vunpack.c.l.b16 %v3789
    %v4309 = vunpack.c.l.b16 %v3790
    %v4310 = vunpack.c.l.b16 %v3791
    %v4311 = vunpack.c.l.b16 %v3792
    %v4312 = vunpack.c.l.b16 %v3793
    %v4313 = vunpack.c.l.b16 %v3794
    %v4314 = vunpack.c.l.b16 %v3795
    %v4315 = vunpack.c.l.b16 %v3796
    %v4316 = vunpack.c.l.b16 %v3797
    %v4317 = vunpack.c.l.b16 %v3798
    %v4318 = vunpack.c.l.b16 %v3799
    %v4319 = vunpack.c.l.b16 %v3800
    %v4320 = vunpack.c.l.b16 %v3801
    %v4321 = vunpack.c.l.b16 %v3802
    %v4322 = vunpack.c.l.b16 %v3803
    %v4323 = vunpack.c.l.b16 %v3804
    %v4324 = vunpack.c.l.b16 %v3805
    %v4325 = vunpack.c.l.b16 %v3806
    %v4326 = vunpack.c.l.b16 %v3807
    %v4327 = vunpack.c.l.b16 %v3808
    %v4328 = vunpack.c.l.b16 %v3809
    %v4329 = vunpack.c.l.b16 %v3810
    %v4330 = vunpack.c.l.b16 %v3811
    %v4331 = vunpack.c.l.b16 %v3812
    %v4332 = vunpack.c.l.b16 %v3813
    %v4333 = vunpack.c.l.b16 %v3814
    %v4334 = vunpack.c.l.b16 %v3815
    %v4335 = vunpack.c.l.b16 %v3816
    %v4336 = vunpack.c.l.b16 %v3817
    %v4337 = vunpack.c.l.b16 %v3818
    %v4338 = vunpack.c.l.b16 %v3819
    %v4339 = vunpack.c.l.b16 %v3820
    %v4340 = vunpack.c.l.b16 %v3821
    %v4341 = vunpack.c.l.b16 %v3822
    %v4342 = vunpack.c.l.b16 %v3823
    %v4343 = vunpack.c.l.b16 %v3824
    %v4344 = vunpack.c.l.b16 %v3825
    %v4345 = vunpack.c.l.b16 %v3826
    %v4346 = vunpack.c.l.b16 %v3827
    %v4347 = vunpack.c.l.b16 %v3828
    %v4348 = vunpack.c.l.b16 %v3829
    %v4349 = vunpack.c.l.b16 %v3830
    %v4350 = vpack.c.b16 %v4095, %v4094
    %v4351 = vpack.c.b16 %v4097, %v4096
    %v4352 = vpack.c.b16 %v4099, %v4098
    %v4353 = vpack.c.b16 %v4101, %v4100
    %v4354 = vpack.c.b16 %v4103, %v4102
    %v4355 = vpack.c.b16 %v4105, %v4104
    %v4356 = vpack.c.b16 %v4107, %v4106
    %v4357 = vpack.c.b16 %v4109, %v4108
    %v4358 = vpack.c.b16 %v4111, %v4110
    %v4359 = vpack.c.b16 %v4113, %v4112
    %v4360 = vpack.c.b16 %v4115, %v4114
    %v4361 = vpack.c.b16 %v4117, %v4116
    %v4362 = vpack.c.b16 %v4119, %v4118
    %v4363 = vpack.c.b16 %v4121, %v4120
    %v4364 = vpack.c.b16 %v4123, %v4122
    %v4365 = vpack.c.b16 %v4125, %v4124
    %v4366 = vpack.c.b16 %v4127, %v4126
    %v4367 = vpack.c.b16 %v4129, %v4128
    %v4368 = vpack.c.b16 %v4131, %v4130
    %v4369 = vpack.c.b16 %v4133, %v4132
    %v4370 = vpack.c.b16 %v4135, %v4134
    %v4371 = vpack.c.b16 %v4137, %v4136
    %v4372 = vpack.c.b16 %v4139, %v4138
    %v4373 = vpack.c.b16 %v4141, %v4140
    %v4374 = vpack.c.b16 %v4143, %v4142
    %v4375 = vpack.c.b16 %v4145, %v4144
    %v4376 = vpack.c.b16 %v4147, %v4146
    %v4377 = vpack.c.b16 %v4149, %v4148
    %v4378 = vpack.c.b16 %v4151, %v4150
    %v4379 = vpack.c.b16 %v4153, %v4152
    %v4380 = vpack.c.b16 %v4155, %v4154
    %v4381 = vpack.c.b16 %v4157, %v4156
    %v4382 = vpack.c.b16 %v4159, %v4158
    %v4383 = vpack.c.b16 %v4161, %v4160
    %v4384 = vpack.c.b16 %v4163, %v4162
    %v4385 = vpack.c.b16 %v4165, %v4164
    %v4386 = vpack.c.b16 %v4167, %v4166
    %v4387 = vpack.c.b16 %v4169, %v4168
    %v4388 = vpack.c.b16 %v4171, %v4170
    %v4389 = vpack.c.b16 %v4173, %v4172
    %v4390 = vpack.c.b16 %v4175, %v4174
    %v4391 = vpack.c.b16 %v4177, %v4176
    %v4392 = vpack.c.b16 %v4179, %v4178
    %v4393 = vpack.c.b16 %v4181, %v4180
    %v4394 = vpack.c.b16 %v4183, %v4182
    %v4395 = vpack.c.b16 %v4185, %v4184
    %v4396 = vpack.c.b16 %v4187, %v4186
    %v4397 = vpack.c.b16 %v4189, %v4188
    %v4398 = vpack.c.b16 %v4191, %v4190
    %v4399 = vpack.c.b16 %v4193, %v4192
    %v4400 = vpack.c.b16 %v4195, %v4194
    %v4401 = vpack.c.b16 %v4197, %v4196
    %v4402 = vpack.c.b16 %v4199, %v4198
    %v4403 = vpack.c.b16 %v4201, %v4200
    %v4404 = vpack.c.b16 %v4203, %v4202
    %v4405 = vpack.c.b16 %v4205, %v4204
    %v4406 = vpack.c.b16 %v4207, %v4206
    %v4407 = vpack.c.b16 %v4209, %v4208
    %v4408 = vpack.c.b16 %v4211, %v4210
    %v4409 = vpack.c.b16 %v4213, %v4212
    %v4410 = vpack.c.b16 %v4215, %v4214
    %v4411 = vpack.c.b16 %v4217, %v4216
    %v4412 = vpack.c.b16 %v4219, %v4218
    %v4413 = vpack.c.b16 %v4221, %v4220
    %v4414 = vpack.c.b16 %v4223, %v4222
    %v4415 = vpack.c.b16 %v4225, %v4224
    %v4416 = vpack.c.b16 %v4227, %v4226
    %v4417 = vpack.c.b16 %v4229, %v4228
    %v4418 = vpack.c.b16 %v4231, %v4230
    %v4419 = vpack.c.b16 %v4233, %v4232
    %v4420 = vpack.c.b16 %v4235, %v4234
    %v4421 = vpack.c.b16 %v4237, %v4236
    %v4422 = vpack.c.b16 %v4239, %v4238
    %v4423 = vpack.c.b16 %v4241, %v4240
    %v4424 = vpack.c.b16 %v4243, %v4242
    %v4425 = vpack.c.b16 %v4245, %v4244
    %v4426 = vpack.c.b16 %v4247, %v4246
    %v4427 = vpack.c.b16 %v4249, %v4248
    %v4428 = vpack.c.b16 %v4251, %v4250
    %v4429 = vpack.c.b16 %v4253, %v4252
    %v4430 = vpack.c.b16 %v4255, %v4254
    %v4431 = vpack.c.b16 %v4257, %v4256
    %v4432 = vpack.c.b16 %v4259, %v4258
    %v4433 = vpack.c.b16 %v4261, %v4260
    %v4434 = vpack.c.b16 %v4263, %v4262
    %v4435 = vpack.c.b16 %v4265, %v4264
    %v4436 = vpack.c.b16 %v4267, %v4266
    %v4437 = vpack.c.b16 %v4269, %v4268
    %v4438 = vpack.c.b16 %v4271, %v4270
    %v4439 = vpack.c.b16 %v4273, %v4272
    %v4440 = vpack.c.b16 %v4275, %v4274
    %v4441 = vpack.c.b16 %v4277, %v4276
    %v4442 = vpack.c.b16 %v4279, %v4278
    %v4443 = vpack.c.b16 %v4281, %v4280
    %v4444 = vpack.c.b16 %v4283, %v4282
    %v4445 = vpack.c.b16 %v4285, %v4284
    %v4446 = vpack.c.b16 %v4287, %v4286
    %v4447 = vpack.c.b16 %v4289, %v4288
    %v4448 = vpack.c.b16 %v4291, %v4290
    %v4449 = vpack.c.b16 %v4293, %v4292
    %v4450 = vpack.c.b16 %v4295, %v4294
    %v4451 = vpack.c.b16 %v4297, %v4296
    %v4452 = vpack.c.b16 %v4299, %v4298
    %v4453 = vpack.c.b16 %v4301, %v4300
    %v4454 = vpack.c.b16 %v4303, %v4302
    %v4455 = vpack.c.b16 %v4305, %v4304
    %v4456 = vpack.c.b16 %v4307, %v4306
    %v4457 = vpack.c.b16 %v4309, %v4308
    %v4458 = vpack.c.b16 %v4311, %v4310
    %v4459 = vpack.c.b16 %v4313, %v4312
    %v4460 = vpack.c.b16 %v4315, %v4314
    %v4461 = vpack.c.b16 %v4317, %v4316
    %v4462 = vpack.c.b16 %v4319, %v4318
    %v4463 = vpack.c.b16 %v4321, %v4320
    %v4464 = vpack.c.b16 %v4323, %v4322
    %v4465 = vpack.c.b16 %v4325, %v4324
    %v4466 = vpack.c.b16 %v4327, %v4326
    %v4467 = vpack.c.b16 %v4329, %v4328
    %v4468 = vpack.c.b16 %v4331, %v4330
    %v4469 = vpack.c.b16 %v4333, %v4332
    %v4470 = vpack.c.b16 %v4335, %v4334
    %v4471 = vpack.c.b16 %v4337, %v4336
    %v4472 = vpack.c.b16 %v4339, %v4338
    %v4473 = vpack.c.b16 %v4341, %v4340
    %v4474 = vpack.c.b16 %v4343, %v4342
    %v4475 = vpack.c.b16 %v4345, %v4344
    %v4476 = vpack.c.b16 %v4347, %v4346
    %v4477 = vpack.c.b16 %v4349, %v4348
    %4606 = vmatprep.subr.bf16.mxu0 0
    %4607 = vmatpush1.bf16.msra.mxu0 %v4350
    %4608 = vmatprep.subr.bf16.mxu0 0
    %4609 = vmatpush1.bf16.msra.mxu0 %v4351
    %4610 = vmatprep.subr.bf16.mxu0 0
    %4611 = vmatpush1.bf16.msra.mxu0 %v4352
    %4612 = vmatprep.subr.bf16.mxu0 0
    %4613 = vmatpush1.bf16.msra.mxu0 %v4353
    %4614 = vmatprep.subr.bf16.mxu0 0
    %4615 = vmatpush1.bf16.msra.mxu0 %v4354
    %4616 = vmatprep.subr.bf16.mxu0 0
    %4617 = vmatpush1.bf16.msra.mxu0 %v4355
    %4618 = vmatprep.subr.bf16.mxu0 0
    %4619 = vmatpush1.bf16.msra.mxu0 %v4356
    %4620 = vmatprep.subr.bf16.mxu0 0
    %4621 = vmatpush1.bf16.msra.mxu0 %v4357
    %4622 = vmatprep.subr.bf16.mxu0 0
    %4623 = vmatpush1.bf16.msra.mxu0 %v4358
    %4624 = vmatprep.subr.bf16.mxu0 0
    %4625 = vmatpush1.bf16.msra.mxu0 %v4359
    %4626 = vmatprep.subr.bf16.mxu0 0
    %4627 = vmatpush1.bf16.msra.mxu0 %v4360
    %4628 = vmatprep.subr.bf16.mxu0 0
    %4629 = vmatpush1.bf16.msra.mxu0 %v4361
    %4630 = vmatprep.subr.bf16.mxu0 0
    %4631 = vmatpush1.bf16.msra.mxu0 %v4362
    %4632 = vmatprep.subr.bf16.mxu0 0
    %4633 = vmatpush1.bf16.msra.mxu0 %v4363
    %4634 = vmatprep.subr.bf16.mxu0 0
    %4635 = vmatpush1.bf16.msra.mxu0 %v4364
    %4636 = vmatprep.subr.bf16.mxu0 0
    %4637 = vmatpush1.bf16.msra.mxu0 %v4365
    %4638 = vmatprep.mubr.bf16.mxu0 %v3560
    %4639 = vmatmul.mubr.bf16.gmra.mrb[0].mxu0 %v3559
    %v4640 = vpop.f32.mrb[0].mxu0
    %v4641 = vadd.f32 %v3836, %v4640
    %v4642 = vpop.f32.mrb[0].mxu0
    %v4643 = vpop.f32.mrb[0].mxu0
    %v4644 = vadd.f32 %v3836, %v4643
    %v4645 = vpop.f32.mrb[0].mxu0
    %4646 = vdwg.mxu0
    %4647 = vmatprep.subr.bf16.mxu0 0
    %4648 = vmatpush1.bf16.msra.mxu0 %v4366
    %4649 = vmatprep.subr.bf16.mxu0 0
    %4650 = vmatpush1.bf16.msra.mxu0 %v4367
    %4651 = vmatprep.subr.bf16.mxu0 0
    %4652 = vmatpush1.bf16.msra.mxu0 %v4368
    %4653 = vmatprep.subr.bf16.mxu0 0
    %4654 = vmatpush1.bf16.msra.mxu0 %v4369
    %4655 = vmatprep.subr.bf16.mxu0 0
    %4656 = vmatpush1.bf16.msra.mxu0 %v4370
    %4657 = vmatprep.subr.bf16.mxu0 0
    %4658 = vmatpush1.bf16.msra.mxu0 %v4371
    %4659 = vmatprep.subr.bf16.mxu0 0
    %4660 = vmatpush1.bf16.msra.mxu0 %v4372
    %4661 = vmatprep.subr.bf16.mxu0 0
    %4662 = vmatpush1.bf16.msra.mxu0 %v4373
    %4663 = vmatprep.subr.bf16.mxu0 0
    %4664 = vmatpush1.bf16.msra.mxu0 %v4374
    %4665 = vmatprep.subr.bf16.mxu0 0
    %4666 = vmatpush1.bf16.msra.mxu0 %v4375
    %4667 = vmatprep.subr.bf16.mxu0 0
    %4668 = vmatpush1.bf16.msra.mxu0 %v4376
    %4669 = vmatprep.subr.bf16.mxu0 0
    %4670 = vmatpush1.bf16.msra.mxu0 %v4377
    %4671 = vmatprep.subr.bf16.mxu0 0
    %4672 = vmatpush1.bf16.msra.mxu0 %v4378
    %4673 = vmatprep.subr.bf16.mxu0 0
    %4674 = vmatpush1.bf16.msra.mxu0 %v4379
    %4675 = vmatprep.subr.bf16.mxu0 0
    %4676 = vmatpush1.bf16.msra.mxu0 %v4380
    %4677 = vmatprep.subr.bf16.mxu0 0
    %4678 = vmatpush1.bf16.msra.mxu0 %v4381
    %4679 = vmatprep.mubr.bf16.mxu0 %v3562
    %4680 = vmatmul.mubr.bf16.gmra.mrb[0].mxu0 %v3561
    %v4681 = vpop.f32.mrb[0].mxu0
    %v4682 = vadd.f32 %v4641, %v4681
    %v4683 = vpop.f32.mrb[0].mxu0
    %v4684 = vpop.f32.mrb[0].mxu0
    %v4685 = vadd.f32 %v4644, %v4684
    %v4686 = vpop.f32.mrb[0].mxu0
    %4687 = vdwg.mxu0
    %4688 = vmatprep.subr.bf16.mxu0 0
    %4689 = vmatpush1.bf16.msra.mxu0 %v4382
    %4690 = vmatprep.subr.bf16.mxu0 0
    %4691 = vmatpush1.bf16.msra.mxu0 %v4383
    %4692 = vmatprep.subr.bf16.mxu0 0
    %4693 = vmatpush1.bf16.msra.mxu0 %v4384
    %4694 = vmatprep.subr.bf16.mxu0 0
    %4695 = vmatpush1.bf16.msra.mxu0 %v4385
    %4696 = vmatprep.subr.bf16.mxu0 0
    %4697 = vmatpush1.bf16.msra.mxu0 %v4386
    %4698 = vmatprep.subr.bf16.mxu0 0
    %4699 = vmatpush1.bf16.msra.mxu0 %v4387
    %4700 = vmatprep.subr.bf16.mxu0 0
    %4701 = vmatpush1.bf16.msra.mxu0 %v4388
    %4702 = vmatprep.subr.bf16.mxu0 0
    %4703 = vmatpush1.bf16.msra.mxu0 %v4389
    %4704 = vmatprep.subr.bf16.mxu0 0
    %4705 = vmatpush1.bf16.msra.mxu0 %v4390
    %4706 = vmatprep.subr.bf16.mxu0 0
    %4707 = vmatpush1.bf16.msra.mxu0 %v4391
    %4708 = vmatprep.subr.bf16.mxu0 0
    %4709 = vmatpush1.bf16.msra.mxu0 %v4392
    %4710 = vmatprep.subr.bf16.mxu0 0
    %4711 = vmatpush1.bf16.msra.mxu0 %v4393
    %4712 = vmatprep.subr.bf16.mxu0 0
    %4713 = vmatpush1.bf16.msra.mxu0 %v4394
    %4714 = vmatprep.subr.bf16.mxu0 0
    %4715 = vmatpush1.bf16.msra.mxu0 %v4395
    %4716 = vmatprep.subr.bf16.mxu0 0
    %4717 = vmatpush1.bf16.msra.mxu0 %v4396
    %4718 = vmatprep.subr.bf16.mxu0 0
    %4719 = vmatpush1.bf16.msra.mxu0 %v4397
    %4720 = vmatprep.mubr.bf16.mxu0 %v3564
    %4721 = vmatmul.mubr.bf16.gmra.mrb[0].mxu0 %v3563
    %v4722 = vpop.f32.mrb[0].mxu0
    %v4723 = vadd.f32 %v4682, %v4722
    %v4724 = vpop.f32.mrb[0].mxu0
    %v4725 = vpop.f32.mrb[0].mxu0
    %v4726 = vadd.f32 %v4685, %v4725
    %v4727 = vpop.f32.mrb[0].mxu0
    %4728 = vdwg.mxu0
    %4729 = vmatprep.subr.bf16.mxu0 0
    %4730 = vmatpush1.bf16.msra.mxu0 %v4398
    %4731 = vmatprep.subr.bf16.mxu0 0
    %4732 = vmatpush1.bf16.msra.mxu0 %v4399
    %4733 = vmatprep.subr.bf16.mxu0 0
    %4734 = vmatpush1.bf16.msra.mxu0 %v4400
    %4735 = vmatprep.subr.bf16.mxu0 0
    %4736 = vmatpush1.bf16.msra.mxu0 %v4401
    %4737 = vmatprep.subr.bf16.mxu0 0
    %4738 = vmatpush1.bf16.msra.mxu0 %v4402
    %4739 = vmatprep.subr.bf16.mxu0 0
    %4740 = vmatpush1.bf16.msra.mxu0 %v4403
    %4741 = vmatprep.subr.bf16.mxu0 0
    %4742 = vmatpush1.bf16.msra.mxu0 %v4404
    %4743 = vmatprep.subr.bf16.mxu0 0
    %4744 = vmatpush1.bf16.msra.mxu0 %v4405
    %4745 = vmatprep.subr.bf16.mxu0 0
    %4746 = vmatpush1.bf16.msra.mxu0 %v4406
    %4747 = vmatprep.subr.bf16.mxu0 0
    %4748 = vmatpush1.bf16.msra.mxu0 %v4407
    %4749 = vmatprep.subr.bf16.mxu0 0
    %4750 = vmatpush1.bf16.msra.mxu0 %v4408
    %4751 = vmatprep.subr.bf16.mxu0 0
    %4752 = vmatpush1.bf16.msra.mxu0 %v4409
    %4753 = vmatprep.subr.bf16.mxu0 0
    %4754 = vmatpush1.bf16.msra.mxu0 %v4410
    %4755 = vmatprep.subr.bf16.mxu0 0
    %4756 = vmatpush1.bf16.msra.mxu0 %v4411
    %4757 = vmatprep.subr.bf16.mxu0 0
    %4758 = vmatpush1.bf16.msra.mxu0 %v4412
    %4759 = vmatprep.subr.bf16.mxu0 0
    %4760 = vmatpush1.bf16.msra.mxu0 %v4413
    %4761 = vmatprep.mubr.bf16.mxu0 %v3566
    %4762 = vmatmul.mubr.bf16.gmra.mrb[0].mxu0 %v3565
    %v4763 = vpop.f32.mrb[0].mxu0
    %v4764 = vadd.f32 %v4723, %v4763
    %v4765 = vpop.f32.mrb[0].mxu0
    %v4766 = vpop.f32.mrb[0].mxu0
    %v4767 = vadd.f32 %v4726, %v4766
    %v4768 = vpop.f32.mrb[0].mxu0
    %4769 = vdwg.mxu0
    %4770 = vmatprep.subr.bf16.mxu0 0
    %4771 = vmatpush1.bf16.msra.mxu0 %v4414
    %4772 = vmatprep.subr.bf16.mxu0 0
    %4773 = vmatpush1.bf16.msra.mxu0 %v4415
    %4774 = vmatprep.subr.bf16.mxu0 0
    %4775 = vmatpush1.bf16.msra.mxu0 %v4416
    %4776 = vmatprep.subr.bf16.mxu0 0
    %4777 = vmatpush1.bf16.msra.mxu0 %v4417
    %4778 = vmatprep.subr.bf16.mxu0 0
    %4779 = vmatpush1.bf16.msra.mxu0 %v4418
    %4780 = vmatprep.subr.bf16.mxu0 0
    %4781 = vmatpush1.bf16.msra.mxu0 %v4419
    %4782 = vmatprep.subr.bf16.mxu0 0
    %4783 = vmatpush1.bf16.msra.mxu0 %v4420
    %4784 = vmatprep.subr.bf16.mxu0 0
    %4785 = vmatpush1.bf16.msra.mxu0 %v4421
    %4786 = vmatprep.subr.bf16.mxu0 0
    %4787 = vmatpush1.bf16.msra.mxu0 %v4422
    %4788 = vmatprep.subr.bf16.mxu0 0
    %4789 = vmatpush1.bf16.msra.mxu0 %v4423
    %4790 = vmatprep.subr.bf16.mxu0 0
    %4791 = vmatpush1.bf16.msra.mxu0 %v4424
    %4792 = vmatprep.subr.bf16.mxu0 0
    %4793 = vmatpush1.bf16.msra.mxu0 %v4425
    %4794 = vmatprep.subr.bf16.mxu0 0
    %4795 = vmatpush1.bf16.msra.mxu0 %v4426
    %4796 = vmatprep.subr.bf16.mxu0 0
    %4797 = vmatpush1.bf16.msra.mxu0 %v4427
    %4798 = vmatprep.subr.bf16.mxu0 0
    %4799 = vmatpush1.bf16.msra.mxu0 %v4428
    %4800 = vmatprep.subr.bf16.mxu0 0
    %4801 = vmatpush1.bf16.msra.mxu0 %v4429
    %4802 = vmatprep.mubr.bf16.mxu0 %v3568
    %4803 = vmatmul.mubr.bf16.gmra.mrb[0].mxu0 %v3567
    %v4804 = vpop.f32.mrb[0].mxu0
    %v4805 = vadd.f32 %v4764, %v4804
    %v4806 = vpop.f32.mrb[0].mxu0
    %v4807 = vpop.f32.mrb[0].mxu0
    %v4808 = vadd.f32 %v4767, %v4807
    %v4809 = vpop.f32.mrb[0].mxu0
    %4810 = vdwg.mxu0
    %4811 = vmatprep.subr.bf16.mxu0 0
    %4812 = vmatpush1.bf16.msra.mxu0 %v4430
    %4813 = vmatprep.subr.bf16.mxu0 0
    %4814 = vmatpush1.bf16.msra.mxu0 %v4431
    %4815 = vmatprep.subr.bf16.mxu0 0
    %4816 = vmatpush1.bf16.msra.mxu0 %v4432
    %4817 = vmatprep.subr.bf16.mxu0 0
    %4818 = vmatpush1.bf16.msra.mxu0 %v4433
    %4819 = vmatprep.subr.bf16.mxu0 0
    %4820 = vmatpush1.bf16.msra.mxu0 %v4434
    %4821 = vmatprep.subr.bf16.mxu0 0
    %4822 = vmatpush1.bf16.msra.mxu0 %v4435
    %4823 = vmatprep.subr.bf16.mxu0 0
    %4824 = vmatpush1.bf16.msra.mxu0 %v4436
    %4825 = vmatprep.subr.bf16.mxu0 0
    %4826 = vmatpush1.bf16.msra.mxu0 %v4437
    %4827 = vmatprep.subr.bf16.mxu0 0
    %4828 = vmatpush1.bf16.msra.mxu0 %v4438
    %4829 = vmatprep.subr.bf16.mxu0 0
    %4830 = vmatpush1.bf16.msra.mxu0 %v4439
    %4831 = vmatprep.subr.bf16.mxu0 0
    %4832 = vmatpush1.bf16.msra.mxu0 %v4440
    %4833 = vmatprep.subr.bf16.mxu0 0
    %4834 = vmatpush1.bf16.msra.mxu0 %v4441
    %4835 = vmatprep.subr.bf16.mxu0 0
    %4836 = vmatpush1.bf16.msra.mxu0 %v4442
    %4837 = vmatprep.subr.bf16.mxu0 0
    %4838 = vmatpush1.bf16.msra.mxu0 %v4443
    %4839 = vmatprep.subr.bf16.mxu0 0
    %4840 = vmatpush1.bf16.msra.mxu0 %v4444
    %4841 = vmatprep.subr.bf16.mxu0 0
    %4842 = vmatpush1.bf16.msra.mxu0 %v4445
    %4843 = vmatprep.mubr.bf16.mxu0 %v3570
    %4844 = vmatmul.mubr.bf16.gmra.mrb[0].mxu0 %v3569
    %v4845 = vpop.f32.mrb[0].mxu0
    %v4846 = vadd.f32 %v4805, %v4845
    %v4847 = vpop.f32.mrb[0].mxu0
    %v4848 = vpop.f32.mrb[0].mxu0
    %v4849 = vadd.f32 %v4808, %v4848
    %v4850 = vpop.f32.mrb[0].mxu0
    %4851 = vdwg.mxu0
    %4852 = vmatprep.subr.bf16.mxu0 0
    %4853 = vmatpush1.bf16.msra.mxu0 %v4446
    %4854 = vmatprep.subr.bf16.mxu0 0
    %4855 = vmatpush1.bf16.msra.mxu0 %v4447
    %4856 = vmatprep.subr.bf16.mxu0 0
    %4857 = vmatpush1.bf16.msra.mxu0 %v4448
    %4858 = vmatprep.subr.bf16.mxu0 0
    %4859 = vmatpush1.bf16.msra.mxu0 %v4449
    %4860 = vmatprep.subr.bf16.mxu0 0
    %4861 = vmatpush1.bf16.msra.mxu0 %v4450
    %4862 = vmatprep.subr.bf16.mxu0 0
    %4863 = vmatpush1.bf16.msra.mxu0 %v4451
    %4864 = vmatprep.subr.bf16.mxu0 0
    %4865 = vmatpush1.bf16.msra.mxu0 %v4452
    %4866 = vmatprep.subr.bf16.mxu0 0
    %4867 = vmatpush1.bf16.msra.mxu0 %v4453
    %4868 = vmatprep.subr.bf16.mxu0 0
    %4869 = vmatpush1.bf16.msra.mxu0 %v4454
    %4870 = vmatprep.subr.bf16.mxu0 0
    %4871 = vmatpush1.bf16.msra.mxu0 %v4455
    %4872 = vmatprep.subr.bf16.mxu0 0
    %4873 = vmatpush1.bf16.msra.mxu0 %v4456
    %4874 = vmatprep.subr.bf16.mxu0 0
    %4875 = vmatpush1.bf16.msra.mxu0 %v4457
    %4876 = vmatprep.subr.bf16.mxu0 0
    %4877 = vmatpush1.bf16.msra.mxu0 %v4458
    %4878 = vmatprep.subr.bf16.mxu0 0
    %4879 = vmatpush1.bf16.msra.mxu0 %v4459
    %4880 = vmatprep.subr.bf16.mxu0 0
    %4881 = vmatpush1.bf16.msra.mxu0 %v4460
    %4882 = vmatprep.subr.bf16.mxu0 0
    %4883 = vmatpush1.bf16.msra.mxu0 %v4461
    %4884 = vmatprep.mubr.bf16.mxu0 %v3572
    %4885 = vmatmul.mubr.bf16.gmra.mrb[0].mxu0 %v3571
    %v4886 = vpop.f32.mrb[0].mxu0
    %v4887 = vadd.f32 %v4846, %v4886
    %v4888 = vpop.f32.mrb[0].mxu0
    %v4889 = vpop.f32.mrb[0].mxu0
    %v4890 = vadd.f32 %v4849, %v4889
    %v4891 = vpop.f32.mrb[0].mxu0
    %4892 = vdwg.mxu0
    %4893 = vmatprep.subr.bf16.mxu0 0
    %4894 = vmatpush1.bf16.msra.mxu0 %v4462
    %4895 = vmatprep.subr.bf16.mxu0 0
    %4896 = vmatpush1.bf16.msra.mxu0 %v4463
    %4897 = vmatprep.subr.bf16.mxu0 0
    %4898 = vmatpush1.bf16.msra.mxu0 %v4464
    %4899 = vmatprep.subr.bf16.mxu0 0
    %4900 = vmatpush1.bf16.msra.mxu0 %v4465
    %4901 = vmatprep.subr.bf16.mxu0 0
    %4902 = vmatpush1.bf16.msra.mxu0 %v4466
    %4903 = vmatprep.subr.bf16.mxu0 0
    %4904 = vmatpush1.bf16.msra.mxu0 %v4467
    %4905 = vmatprep.subr.bf16.mxu0 0
    %4906 = vmatpush1.bf16.msra.mxu0 %v4468
    %4907 = vmatprep.subr.bf16.mxu0 0
    %4908 = vmatpush1.bf16.msra.mxu0 %v4469
    %4909 = vmatprep.subr.bf16.mxu0 0
    %4910 = vmatpush1.bf16.msra.mxu0 %v4470
    %4911 = vmatprep.subr.bf16.mxu0 0
    %4912 = vmatpush1.bf16.msra.mxu0 %v4471
    %4913 = vmatprep.subr.bf16.mxu0 0
    %4914 = vmatpush1.bf16.msra.mxu0 %v4472
    %4915 = vmatprep.subr.bf16.mxu0 0
    %4916 = vmatpush1.bf16.msra.mxu0 %v4473
    %4917 = vmatprep.subr.bf16.mxu0 0
    %4918 = vmatpush1.bf16.msra.mxu0 %v4474
    %4919 = vmatprep.subr.bf16.mxu0 0
    %4920 = vmatpush1.bf16.msra.mxu0 %v4475
    %4921 = vmatprep.subr.bf16.mxu0 0
    %4922 = vmatpush1.bf16.msra.mxu0 %v4476
    %4923 = vmatprep.subr.bf16.mxu0 0
    %4924 = vmatpush1.bf16.msra.mxu0 %v4477
    %4925 = vmatprep.mubr.bf16.mxu0 %v3574
    %4926 = vmatmul.mubr.bf16.gmra.mrb[0].mxu0 %v3573
    %v4927 = vpop.f32.mrb[0].mxu0
    %v4928 = vadd.f32 %v4887, %v4927
    %v4929 = vpop.f32.mrb[0].mxu0
    %v4930 = vpop.f32.mrb[0].mxu0
    %v4931 = vadd.f32 %v4890, %v4930
    %v4932 = vpop.f32.mrb[0].mxu0
    %4933 = vdwg.mxu0
    %v4934 = vadd.f32 %v2901, %v4928
    %v4935 = vadd.f32 %v2902, %v4931
    %v4936 = vld [vmem:[%s18] sm:$0x1]
    %v4937 = vld [vmem:[%s19] sm:$0x1]
    %v4938 = vsel %vm176, %v4934, 0.0
    %4939 = vadd.xlane.f32.xlu0 %v4938
    %v4940 = vpop.xlane.xlu0 %4939
    %v4941 = vsel %vm176, %v4935, 0.0
    %4942 = vadd.xlane.f32.xlu0 %v4941
    %v4943 = vpop.xlane.xlu0 %4942
    %v4944 = vmul.f32 %v4940, %v2866
    %v4945 = vmul.f32 %v4943, %v2866
    %v4946 = vsub.f32 %v4934, %v4944
    %v4947 = vsub.f32 %v4935, %v4945
    %v4948 = vmul.f32 %v4946, %v4946
    %v4949 = vmul.f32 %v4947, %v4947
    %v4950 = vsel %vm176, %v4948, 0.0
    %4951 = vadd.xlane.f32.xlu0 %v4950
    %v4952 = vpop.xlane.xlu0 %4951
    %v4953 = vsel %vm176, %v4949, 0.0
    %4954 = vadd.xlane.f32.xlu0 %v4953
    %v4955 = vpop.xlane.xlu0 %4954
    %v4956 = vmul.f32 %v4952, %v2866
    %v4957 = vmul.f32 %v4955, %v2866
    %v4958 = vadd.f32 %v4956, 1e-05
    %v4959 = vadd.f32 %v4957, 1e-05
    %v4960 = vrsqrt.pop %v4958
    %v4961 = vrsqrt.pop %v4959
    %v4962 = vmul.f32 %v4946, %v4960
    %v4963 = vmul.f32 %v4947, %v4961
    %v4965 = vlaneseq
    %v4966 = vshrl.u32 %v4965, 7
    %v4967 = vsub.s32 0, %v4966
    %v4968 = vrot.slane %v4936, %v4967
    %v4970 = vmul.f32 %v4962, %v4968
    %v4971 = vmul.f32 %v4963, %v4968
    %v4973 = vlaneseq
    %v4974 = vshrl.u32 %v4973, 7
    %v4975 = vsub.s32 0, %v4974
    %v4976 = vrot.slane %v4937, %v4975
    %v4978 = vadd.f32 %v4970, %v4976
    %v4979 = vadd.f32 %v4971, %v4976
    %s4980 = scalar_lea.vmem %s11, 1
    %v4981 = vld [vmem:[%s4980] sm:$0x1]
    %s4982 = scalar_lea.vmem %s4, 128
    %v4983 = vld [vmem:[%s4982] sm:$0xff]
    %v4984 = vld [vmem:[%s4982 + $0x8] sm:$0xff]
    %v4985 = vld [vmem:[%s4982 + $0x10] sm:$0xff]
    %v4986 = vld [vmem:[%s4982 + $0x18] sm:$0xff]
    %s4987 = scalar_lea.vmem %s5, 4
    %v4988 = vld [vmem:[%s4987] sm:$0x1]
    %v4990 = vlaneseq
    %v4991 = vshrl.u32 %v4990, 7
    %v4992 = vsub.s32 0, %v4991
    %v4993 = vrot.slane %v4988, %v4992
    %v4996 = vsel %vm176, %v4978, 0
    %v4999 = vsel %vm176, %v4979, 0
    %5001 = vmatprep.subr.mxu0 0.0
    %5002 = vmatpush1.msra.mxu0 %v4983
    %5003 = vmatprep.subr.mxu0 0.0
    %5004 = vmatpush1.msra.mxu0 %v4984
    %5005 = vmatprep.subr.mxu0 0.0
    %5006 = vmatpush1.msra.mxu0 %v4985
    %5007 = vmatprep.subr.mxu0 0.0
    %5008 = vmatpush1.msra.mxu0 %v4986
    %5009 = vmatprep.subr.mxu0 0.0
    %5010 = vmatpush1.msra.mxu0 0.0
    %5011 = vmatprep.subr.mxu0 0.0
    %5012 = vmatpush1.msra.mxu0 0.0
    %5013 = vmatprep.subr.mxu0 0.0
    %5014 = vmatpush1.msra.mxu0 0.0
    %5015 = vmatprep.subr.mxu0 0.0
    %5016 = vmatpush1.msra.mxu0 0.0
    %5017 = vmatprep.subr.mxu0 0.0
    %5018 = vmatpush1.msra.mxu0 0.0
    %5019 = vmatprep.subr.mxu0 0.0
    %5020 = vmatpush1.msra.mxu0 0.0
    %5021 = vmatprep.subr.mxu0 0.0
    %5022 = vmatpush1.msra.mxu0 0.0
    %5023 = vmatprep.subr.mxu0 0.0
    %5024 = vmatpush1.msra.mxu0 0.0
    %5025 = vmatprep.subr.mxu0 0.0
    %5026 = vmatpush1.msra.mxu0 0.0
    %5027 = vmatprep.subr.mxu0 0.0
    %5028 = vmatpush1.msra.mxu0 0.0
    %5029 = vmatprep.subr.mxu0 0.0
    %5030 = vmatpush1.msra.mxu0 0.0
    %5031 = vmatprep.subr.mxu0 0.0
    %5032 = vmatpush1.msra.mxu0 0.0
    %5033 = vmatprep.subr.mxu0 0.0
    %5034 = vmatpush1.msra.mxu0 0.0
    %5035 = vmatprep.subr.mxu0 0.0
    %5036 = vmatpush1.msra.mxu0 0.0
    %5037 = vmatprep.subr.mxu0 0.0
    %5038 = vmatpush1.msra.mxu0 0.0
    %5039 = vmatprep.subr.mxu0 0.0
    %5040 = vmatpush1.msra.mxu0 0.0
    %5041 = vmatprep.subr.mxu0 0.0
    %5042 = vmatpush1.msra.mxu0 0.0
    %5043 = vmatprep.subr.mxu0 0.0
    %5044 = vmatpush1.msra.mxu0 0.0
    %5045 = vmatprep.subr.mxu0 0.0
    %5046 = vmatpush1.msra.mxu0 0.0
    %5047 = vmatprep.subr.mxu0 0.0
    %5048 = vmatpush1.msra.mxu0 0.0
    %5049 = vmatprep.subr.mxu0 0.0
    %5050 = vmatpush1.msra.mxu0 0.0
    %5051 = vmatprep.subr.mxu0 0.0
    %5052 = vmatpush1.msra.mxu0 0.0
    %5053 = vmatprep.subr.mxu0 0.0
    %5054 = vmatpush1.msra.mxu0 0.0
    %5055 = vmatprep.subr.mxu0 0.0
    %5056 = vmatpush1.msra.mxu0 0.0
    %5057 = vmatprep.subr.mxu0 0.0
    %5058 = vmatpush1.msra.mxu0 0.0
    %5059 = vmatprep.subr.mxu0 0.0
    %5060 = vmatpush1.msra.mxu0 0.0
    %5061 = vmatprep.subr.mxu0 0.0
    %5062 = vmatpush1.msra.mxu0 0.0
    %5063 = vmatprep.subr.mxu0 0.0
    %5064 = vmatpush1.msra.mxu0 0.0
    %5065 = vmatprep.mubr.f32.mxu0 0.0
    %5066 = vmatmul.mubr.f32.gmra.mrb[0].mxu0 %v4996
    %v5067 = vpop.f32.mrb[0].mxu0
    %v5068 = vadd.f32 %v4993, %v5067
    %v5069 = vpop.f32.mrb[0].mxu0
    %5070 = vmatprep.mubr.f32.mxu0 0.0
    %5071 = vmatmul.mubr.f32.gmra.mrb[0].mxu0 %v4999
    %v5072 = vpop.f32.mrb[0].mxu0
    %v5073 = vadd.f32 %v4993, %v5072
    %v5074 = vpop.f32.mrb[0].mxu0
    %5075 = vdwg.mxu0
    %s5076 = scalar_lea.vmem %s6, 128
    %v5077 = vld [vmem:[%s5076] sm:$0xff]
    %v5078 = vld [vmem:[%s5076 + $0x8] sm:$0xff]
    %v5079 = vld [vmem:[%s5076 + $0x10] sm:$0xff]
    %v5080 = vld [vmem:[%s5076 + $0x18] sm:$0xff]
    %s5081 = scalar_lea.vmem %s7, 4
    %v5082 = vld [vmem:[%s5081] sm:$0x1]
    %v5084 = vlaneseq
    %v5085 = vshrl.u32 %v5084, 7
    %v5086 = vsub.s32 0, %v5085
    %v5087 = vrot.slane %v5082, %v5086
    %5089 = vmatprep.subr.mxu0 0.0
    %5090 = vmatpush1.msra.mxu0 %v5077
    %5091 = vmatprep.subr.mxu0 0.0
    %5092 = vmatpush1.msra.mxu0 %v5078
    %5093 = vmatprep.subr.mxu0 0.0
    %5094 = vmatpush1.msra.mxu0 %v5079
    %5095 = vmatprep.subr.mxu0 0.0
    %5096 = vmatpush1.msra.mxu0 %v5080
    %5097 = vmatprep.subr.mxu0 0.0
    %5098 = vmatpush1.msra.mxu0 0.0
    %5099 = vmatprep.subr.mxu0 0.0
    %5100 = vmatpush1.msra.mxu0 0.0
    %5101 = vmatprep.subr.mxu0 0.0
    %5102 = vmatpush1.msra.mxu0 0.0
    %5103 = vmatprep.subr.mxu0 0.0
    %5104 = vmatpush1.msra.mxu0 0.0
    %5105 = vmatprep.subr.mxu0 0.0
    %5106 = vmatpush1.msra.mxu0 0.0
    %5107 = vmatprep.subr.mxu0 0.0
    %5108 = vmatpush1.msra.mxu0 0.0
    %5109 = vmatprep.subr.mxu0 0.0
    %5110 = vmatpush1.msra.mxu0 0.0
    %5111 = vmatprep.subr.mxu0 0.0
    %5112 = vmatpush1.msra.mxu0 0.0
    %5113 = vmatprep.subr.mxu0 0.0
    %5114 = vmatpush1.msra.mxu0 0.0
    %5115 = vmatprep.subr.mxu0 0.0
    %5116 = vmatpush1.msra.mxu0 0.0
    %5117 = vmatprep.subr.mxu0 0.0
    %5118 = vmatpush1.msra.mxu0 0.0
    %5119 = vmatprep.subr.mxu0 0.0
    %5120 = vmatpush1.msra.mxu0 0.0
    %5121 = vmatprep.subr.mxu0 0.0
    %5122 = vmatpush1.msra.mxu0 0.0
    %5123 = vmatprep.subr.mxu0 0.0
    %5124 = vmatpush1.msra.mxu0 0.0
    %5125 = vmatprep.subr.mxu0 0.0
    %5126 = vmatpush1.msra.mxu0 0.0
    %5127 = vmatprep.subr.mxu0 0.0
    %5128 = vmatpush1.msra.mxu0 0.0
    %5129 = vmatprep.subr.mxu0 0.0
    %5130 = vmatpush1.msra.mxu0 0.0
    %5131 = vmatprep.subr.mxu0 0.0
    %5132 = vmatpush1.msra.mxu0 0.0
    %5133 = vmatprep.subr.mxu0 0.0
    %5134 = vmatpush1.msra.mxu0 0.0
    %5135 = vmatprep.subr.mxu0 0.0
    %5136 = vmatpush1.msra.mxu0 0.0
    %5137 = vmatprep.subr.mxu0 0.0
    %5138 = vmatpush1.msra.mxu0 0.0
    %5139 = vmatprep.subr.mxu0 0.0
    %5140 = vmatpush1.msra.mxu0 0.0
    %5141 = vmatprep.subr.mxu0 0.0
    %5142 = vmatpush1.msra.mxu0 0.0
    %5143 = vmatprep.subr.mxu0 0.0
    %5144 = vmatpush1.msra.mxu0 0.0
    %5145 = vmatprep.subr.mxu0 0.0
    %5146 = vmatpush1.msra.mxu0 0.0
    %5147 = vmatprep.subr.mxu0 0.0
    %5148 = vmatpush1.msra.mxu0 0.0
    %5149 = vmatprep.subr.mxu0 0.0
    %5150 = vmatpush1.msra.mxu0 0.0
    %5151 = vmatprep.subr.mxu0 0.0
    %5152 = vmatpush1.msra.mxu0 0.0
    %5153 = vmatprep.mubr.f32.mxu0 0.0
    %5154 = vmatmul.mubr.f32.gmra.mrb[0].mxu0 %v4996
    %v5155 = vpop.f32.mrb[0].mxu0
    %v5156 = vadd.f32 %v5087, %v5155
    %v5157 = vpop.f32.mrb[0].mxu0
    %5158 = vmatprep.mubr.f32.mxu0 0.0
    %5159 = vmatmul.mubr.f32.gmra.mrb[0].mxu0 %v4999
    %v5160 = vpop.f32.mrb[0].mxu0
    %v5161 = vadd.f32 %v5087, %v5160
    %v5162 = vpop.f32.mrb[0].mxu0
    %5163 = vdwg.mxu0
    %s5164 = scalar_lea.vmem %s8, 128
    %v5165 = vld [vmem:[%s5164] sm:$0xff]
    %v5166 = vld [vmem:[%s5164 + $0x8] sm:$0xff]
    %v5167 = vld [vmem:[%s5164 + $0x10] sm:$0xff]
    %v5168 = vld [vmem:[%s5164 + $0x18] sm:$0xff]
    %s5169 = scalar_lea.vmem %s9, 4
    %v5170 = vld [vmem:[%s5169] sm:$0x1]
    %v5172 = vlaneseq
    %v5173 = vshrl.u32 %v5172, 7
    %v5174 = vsub.s32 0, %v5173
    %v5175 = vrot.slane %v5170, %v5174
    %5177 = vmatprep.subr.mxu0 0.0
    %5178 = vmatpush1.msra.mxu0 %v5165
    %5179 = vmatprep.subr.mxu0 0.0
    %5180 = vmatpush1.msra.mxu0 %v5166
    %5181 = vmatprep.subr.mxu0 0.0
    %5182 = vmatpush1.msra.mxu0 %v5167
    %5183 = vmatprep.subr.mxu0 0.0
    %5184 = vmatpush1.msra.mxu0 %v5168
    %5185 = vmatprep.subr.mxu0 0.0
    %5186 = vmatpush1.msra.mxu0 0.0
    %5187 = vmatprep.subr.mxu0 0.0
    %5188 = vmatpush1.msra.mxu0 0.0
    %5189 = vmatprep.subr.mxu0 0.0
    %5190 = vmatpush1.msra.mxu0 0.0
    %5191 = vmatprep.subr.mxu0 0.0
    %5192 = vmatpush1.msra.mxu0 0.0
    %5193 = vmatprep.subr.mxu0 0.0
    %5194 = vmatpush1.msra.mxu0 0.0
    %5195 = vmatprep.subr.mxu0 0.0
    %5196 = vmatpush1.msra.mxu0 0.0
    %5197 = vmatprep.subr.mxu0 0.0
    %5198 = vmatpush1.msra.mxu0 0.0
    %5199 = vmatprep.subr.mxu0 0.0
    %5200 = vmatpush1.msra.mxu0 0.0
    %5201 = vmatprep.subr.mxu0 0.0
    %5202 = vmatpush1.msra.mxu0 0.0
    %5203 = vmatprep.subr.mxu0 0.0
    %5204 = vmatpush1.msra.mxu0 0.0
    %5205 = vmatprep.subr.mxu0 0.0
    %5206 = vmatpush1.msra.mxu0 0.0
    %5207 = vmatprep.subr.mxu0 0.0
    %5208 = vmatpush1.msra.mxu0 0.0
    %5209 = vmatprep.subr.mxu0 0.0
    %5210 = vmatpush1.msra.mxu0 0.0
    %5211 = vmatprep.subr.mxu0 0.0
    %5212 = vmatpush1.msra.mxu0 0.0
    %5213 = vmatprep.subr.mxu0 0.0
    %5214 = vmatpush1.msra.mxu0 0.0
    %5215 = vmatprep.subr.mxu0 0.0
    %5216 = vmatpush1.msra.mxu0 0.0
    %5217 = vmatprep.subr.mxu0 0.0
    %5218 = vmatpush1.msra.mxu0 0.0
    %5219 = vmatprep.subr.mxu0 0.0
    %5220 = vmatpush1.msra.mxu0 0.0
    %5221 = vmatprep.subr.mxu0 0.0
    %5222 = vmatpush1.msra.mxu0 0.0
    %5223 = vmatprep.subr.mxu0 0.0
    %5224 = vmatpush1.msra.mxu0 0.0
    %5225 = vmatprep.subr.mxu0 0.0
    %5226 = vmatpush1.msra.mxu0 0.0
    %5227 = vmatprep.subr.mxu0 0.0
    %5228 = vmatpush1.msra.mxu0 0.0
    %5229 = vmatprep.subr.mxu0 0.0
    %5230 = vmatpush1.msra.mxu0 0.0
    %5231 = vmatprep.subr.mxu0 0.0
    %5232 = vmatpush1.msra.mxu0 0.0
    %5233 = vmatprep.subr.mxu0 0.0
    %5234 = vmatpush1.msra.mxu0 0.0
    %5235 = vmatprep.subr.mxu0 0.0
    %5236 = vmatpush1.msra.mxu0 0.0
    %5237 = vmatprep.subr.mxu0 0.0
    %5238 = vmatpush1.msra.mxu0 0.0
    %5239 = vmatprep.subr.mxu0 0.0
    %5240 = vmatpush1.msra.mxu0 0.0
    %5241 = vmatprep.mubr.f32.mxu0 0.0
    %5242 = vmatmul.mubr.f32.gmra.mrb[0].mxu0 %v4996
    %v5243 = vpop.f32.mrb[0].mxu0
    %v5244 = vadd.f32 %v5175, %v5243
    %v5245 = vpop.f32.mrb[0].mxu0
    %5246 = vmatprep.mubr.f32.mxu0 0.0
    %5247 = vmatmul.mubr.f32.gmra.mrb[0].mxu0 %v4999
    %v5248 = vpop.f32.mrb[0].mxu0
    %v5249 = vadd.f32 %v5175, %v5248
    %v5250 = vpop.f32.mrb[0].mxu0
    %5251 = vdwg.mxu0
    %v5253 = vsel %vm430, %v5068, 0
    %v5256 = vsel %vm430, %v5156, 0
    %5258 = vmatprep.subr.mxu0 0.0
    %5259 = vmatpush1.xpose.msra.mxu0 %v5256
    %5260 = vmatprep.subr.mxu0 0.0
    %5261 = vmatpush1.xpose.msra.mxu0 0.0
    %5262 = vmatprep.subr.mxu0 0.0
    %5263 = vmatpush1.xpose.msra.mxu0 0.0
    %5264 = vmatprep.subr.mxu0 0.0
    %5265 = vmatpush1.xpose.msra.mxu0 0.0
    %5266 = vmatprep.subr.mxu0 0.0
    %5267 = vmatpush1.xpose.msra.mxu0 0.0
    %5268 = vmatprep.subr.mxu0 0.0
    %5269 = vmatpush1.xpose.msra.mxu0 0.0
    %5270 = vmatprep.subr.mxu0 0.0
    %5271 = vmatpush1.xpose.msra.mxu0 0.0
    %5272 = vmatprep.subr.mxu0 0.0
    %5273 = vmatpush1.xpose.msra.mxu0 0.0
    %5274 = vmatprep.subr.mxu0 0.0
    %5275 = vmatpush1.xpose.msra.mxu0 0.0
    %5276 = vmatprep.subr.mxu0 0.0
    %5277 = vmatpush1.xpose.msra.mxu0 0.0
    %5278 = vmatprep.subr.mxu0 0.0
    %5279 = vmatpush1.xpose.msra.mxu0 0.0
    %5280 = vmatprep.subr.mxu0 0.0
    %5281 = vmatpush1.xpose.msra.mxu0 0.0
    %5282 = vmatprep.subr.mxu0 0.0
    %5283 = vmatpush1.xpose.msra.mxu0 0.0
    %5284 = vmatprep.subr.mxu0 0.0
    %5285 = vmatpush1.xpose.msra.mxu0 0.0
    %5286 = vmatprep.subr.mxu0 0.0
    %5287 = vmatpush1.xpose.msra.mxu0 0.0
    %5288 = vmatprep.subr.mxu0 0.0
    %5289 = vmatpush1.xpose.msra.mxu0 0.0
    %5290 = vmatprep.subr.mxu0 0.0
    %5291 = vmatpush1.xpose.msra.mxu0 0.0
    %5292 = vmatprep.subr.mxu0 0.0
    %5293 = vmatpush1.xpose.msra.mxu0 0.0
    %5294 = vmatprep.subr.mxu0 0.0
    %5295 = vmatpush1.xpose.msra.mxu0 0.0
    %5296 = vmatprep.subr.mxu0 0.0
    %5297 = vmatpush1.xpose.msra.mxu0 0.0
    %5298 = vmatprep.subr.mxu0 0.0
    %5299 = vmatpush1.xpose.msra.mxu0 0.0
    %5300 = vmatprep.subr.mxu0 0.0
    %5301 = vmatpush1.xpose.msra.mxu0 0.0
    %5302 = vmatprep.subr.mxu0 0.0
    %5303 = vmatpush1.xpose.msra.mxu0 0.0
    %5304 = vmatprep.subr.mxu0 0.0
    %5305 = vmatpush1.xpose.msra.mxu0 0.0
    %5306 = vmatprep.subr.mxu0 0.0
    %5307 = vmatpush1.xpose.msra.mxu0 0.0
    %5308 = vmatprep.subr.mxu0 0.0
    %5309 = vmatpush1.xpose.msra.mxu0 0.0
    %5310 = vmatprep.subr.mxu0 0.0
    %5311 = vmatpush1.xpose.msra.mxu0 0.0
    %5312 = vmatprep.subr.mxu0 0.0
    %5313 = vmatpush1.xpose.msra.mxu0 0.0
    %5314 = vmatprep.subr.mxu0 0.0
    %5315 = vmatpush1.xpose.msra.mxu0 0.0
    %5316 = vmatprep.subr.mxu0 0.0
    %5317 = vmatpush1.xpose.msra.mxu0 0.0
    %5318 = vmatprep.subr.mxu0 0.0
    %5319 = vmatpush1.xpose.msra.mxu0 0.0
    %5320 = vmatprep.subr.mxu0 0.0
    %5321 = vmatpush1.xpose.msra.mxu0 0.0
    %5322 = vmatprep.mubr.f32.mxu0 0.0
    %5323 = vmatmul.mubr.f32.gmra.mrb[0].mxu0 %v5253
    %v5324 = vpop.f32.mrb[0].mxu0
    %v5325 = vadd.f32 0.0, %v5324
    %v5326 = vpop.f32.mrb[0].mxu0
    %5327 = vdwg.mxu0
    %v5328 = vmul.f32 %v5325, 0.35355338
    %v5329 = vsel %vm430, %v5328, -inf
    %5330 = vmax.xlane.f32.xlu0 %v5329
    %v5331 = vpop.xlane.xlu0 %5330
    %v5332 = vsub.f32 %v5328, %v5331
    %v5333 = vmul.f32 %v5332, 1.442695
    %v5334 = vpow.pop %v5333
    %v5335 = vsel %vm430, %v5334, 0.0
    %5336 = vadd.xlane.f32.xlu0 %v5335
    %v5337 = vpop.xlane.xlu0 %5336
    %v5338 = vrcp.pop %v5337
    %v5339 = vmul.f32 %v5334, %v5338
    %v5341 = vsel %vm430, %v5339, 0
    %5343 = vmatprep.subr.mxu0 0.0
    %5344 = vmatpush1.msra.mxu0 %v5244
    %5345 = vmatprep.subr.mxu0 0.0
    %5346 = vmatpush1.msra.mxu0 0.0
    %5347 = vmatprep.subr.mxu0 0.0
    %5348 = vmatpush1.msra.mxu0 0.0
    %5349 = vmatprep.subr.mxu0 0.0
    %5350 = vmatpush1.msra.mxu0 0.0
    %5351 = vmatprep.subr.mxu0 0.0
    %5352 = vmatpush1.msra.mxu0 0.0
    %5353 = vmatprep.subr.mxu0 0.0
    %5354 = vmatpush1.msra.mxu0 0.0
    %5355 = vmatprep.subr.mxu0 0.0
    %5356 = vmatpush1.msra.mxu0 0.0
    %5357 = vmatprep.subr.mxu0 0.0
    %5358 = vmatpush1.msra.mxu0 0.0
    %5359 = vmatprep.subr.mxu0 0.0
    %5360 = vmatpush1.msra.mxu0 0.0
    %5361 = vmatprep.subr.mxu0 0.0
    %5362 = vmatpush1.msra.mxu0 0.0
    %5363 = vmatprep.subr.mxu0 0.0
    %5364 = vmatpush1.msra.mxu0 0.0
    %5365 = vmatprep.subr.mxu0 0.0
    %5366 = vmatpush1.msra.mxu0 0.0
    %5367 = vmatprep.subr.mxu0 0.0
    %5368 = vmatpush1.msra.mxu0 0.0
    %5369 = vmatprep.subr.mxu0 0.0
    %5370 = vmatpush1.msra.mxu0 0.0
    %5371 = vmatprep.subr.mxu0 0.0
    %5372 = vmatpush1.msra.mxu0 0.0
    %5373 = vmatprep.subr.mxu0 0.0
    %5374 = vmatpush1.msra.mxu0 0.0
    %5375 = vmatprep.subr.mxu0 0.0
    %5376 = vmatpush1.msra.mxu0 0.0
    %5377 = vmatprep.subr.mxu0 0.0
    %5378 = vmatpush1.msra.mxu0 0.0
    %5379 = vmatprep.subr.mxu0 0.0
    %5380 = vmatpush1.msra.mxu0 0.0
    %5381 = vmatprep.subr.mxu0 0.0
    %5382 = vmatpush1.msra.mxu0 0.0
    %5383 = vmatprep.subr.mxu0 0.0
    %5384 = vmatpush1.msra.mxu0 0.0
    %5385 = vmatprep.subr.mxu0 0.0
    %5386 = vmatpush1.msra.mxu0 0.0
    %5387 = vmatprep.subr.mxu0 0.0
    %5388 = vmatpush1.msra.mxu0 0.0
    %5389 = vmatprep.subr.mxu0 0.0
    %5390 = vmatpush1.msra.mxu0 0.0
    %5391 = vmatprep.subr.mxu0 0.0
    %5392 = vmatpush1.msra.mxu0 0.0
    %5393 = vmatprep.subr.mxu0 0.0
    %5394 = vmatpush1.msra.mxu0 0.0
    %5395 = vmatprep.subr.mxu0 0.0
    %5396 = vmatpush1.msra.mxu0 0.0
    %5397 = vmatprep.subr.mxu0 0.0
    %5398 = vmatpush1.msra.mxu0 0.0
    %5399 = vmatprep.subr.mxu0 0.0
    %5400 = vmatpush1.msra.mxu0 0.0
    %5401 = vmatprep.subr.mxu0 0.0
    %5402 = vmatpush1.msra.mxu0 0.0
    %5403 = vmatprep.subr.mxu0 0.0
    %5404 = vmatpush1.msra.mxu0 0.0
    %5405 = vmatprep.subr.mxu0 0.0
    %5406 = vmatpush1.msra.mxu0 0.0
    %5407 = vmatprep.mubr.f32.mxu0 0.0
    %5408 = vmatmul.mubr.f32.gmra.mrb[0].mxu0 %v5341
    %v5409 = vpop.f32.mrb[0].mxu0
    %v5410 = vadd.f32 0.0, %v5409
    %v5411 = vpop.f32.mrb[0].mxu0
    %5412 = vdwg.mxu0
    %v5414 = vsel %vm430, %v5073, 0
    %v5417 = vsel %vm430, %v5161, 0
    %5419 = vmatprep.subr.mxu0 0.0
    %5420 = vmatpush1.xpose.msra.mxu0 %v5417
    %5421 = vmatprep.subr.mxu0 0.0
    %5422 = vmatpush1.xpose.msra.mxu0 0.0
    %5423 = vmatprep.subr.mxu0 0.0
    %5424 = vmatpush1.xpose.msra.mxu0 0.0
    %5425 = vmatprep.subr.mxu0 0.0
    %5426 = vmatpush1.xpose.msra.mxu0 0.0
    %5427 = vmatprep.subr.mxu0 0.0
    %5428 = vmatpush1.xpose.msra.mxu0 0.0
    %5429 = vmatprep.subr.mxu0 0.0
    %5430 = vmatpush1.xpose.msra.mxu0 0.0
    %5431 = vmatprep.subr.mxu0 0.0
    %5432 = vmatpush1.xpose.msra.mxu0 0.0
    %5433 = vmatprep.subr.mxu0 0.0
    %5434 = vmatpush1.xpose.msra.mxu0 0.0
    %5435 = vmatprep.subr.mxu0 0.0
    %5436 = vmatpush1.xpose.msra.mxu0 0.0
    %5437 = vmatprep.subr.mxu0 0.0
    %5438 = vmatpush1.xpose.msra.mxu0 0.0
    %5439 = vmatprep.subr.mxu0 0.0
    %5440 = vmatpush1.xpose.msra.mxu0 0.0
    %5441 = vmatprep.subr.mxu0 0.0
    %5442 = vmatpush1.xpose.msra.mxu0 0.0
    %5443 = vmatprep.subr.mxu0 0.0
    %5444 = vmatpush1.xpose.msra.mxu0 0.0
    %5445 = vmatprep.subr.mxu0 0.0
    %5446 = vmatpush1.xpose.msra.mxu0 0.0
    %5447 = vmatprep.subr.mxu0 0.0
    %5448 = vmatpush1.xpose.msra.mxu0 0.0
    %5449 = vmatprep.subr.mxu0 0.0
    %5450 = vmatpush1.xpose.msra.mxu0 0.0
    %5451 = vmatprep.subr.mxu0 0.0
    %5452 = vmatpush1.xpose.msra.mxu0 0.0
    %5453 = vmatprep.subr.mxu0 0.0
    %5454 = vmatpush1.xpose.msra.mxu0 0.0
    %5455 = vmatprep.subr.mxu0 0.0
    %5456 = vmatpush1.xpose.msra.mxu0 0.0
    %5457 = vmatprep.subr.mxu0 0.0
    %5458 = vmatpush1.xpose.msra.mxu0 0.0
    %5459 = vmatprep.subr.mxu0 0.0
    %5460 = vmatpush1.xpose.msra.mxu0 0.0
    %5461 = vmatprep.subr.mxu0 0.0
    %5462 = vmatpush1.xpose.msra.mxu0 0.0
    %5463 = vmatprep.subr.mxu0 0.0
    %5464 = vmatpush1.xpose.msra.mxu0 0.0
    %5465 = vmatprep.subr.mxu0 0.0
    %5466 = vmatpush1.xpose.msra.mxu0 0.0
    %5467 = vmatprep.subr.mxu0 0.0
    %5468 = vmatpush1.xpose.msra.mxu0 0.0
    %5469 = vmatprep.subr.mxu0 0.0
    %5470 = vmatpush1.xpose.msra.mxu0 0.0
    %5471 = vmatprep.subr.mxu0 0.0
    %5472 = vmatpush1.xpose.msra.mxu0 0.0
    %5473 = vmatprep.subr.mxu0 0.0
    %5474 = vmatpush1.xpose.msra.mxu0 0.0
    %5475 = vmatprep.subr.mxu0 0.0
    %5476 = vmatpush1.xpose.msra.mxu0 0.0
    %5477 = vmatprep.subr.mxu0 0.0
    %5478 = vmatpush1.xpose.msra.mxu0 0.0
    %5479 = vmatprep.subr.mxu0 0.0
    %5480 = vmatpush1.xpose.msra.mxu0 0.0
    %5481 = vmatprep.subr.mxu0 0.0
    %5482 = vmatpush1.xpose.msra.mxu0 0.0
    %5483 = vmatprep.mubr.f32.mxu0 0.0
    %5484 = vmatmul.mubr.f32.gmra.mrb[0].mxu0 %v5414
    %v5485 = vpop.f32.mrb[0].mxu0
    %v5486 = vadd.f32 0.0, %v5485
    %v5487 = vpop.f32.mrb[0].mxu0
    %5488 = vdwg.mxu0
    %v5489 = vmul.f32 %v5486, 0.35355338
    %v5490 = vsel %vm430, %v5489, -inf
    %5491 = vmax.xlane.f32.xlu0 %v5490
    %v5492 = vpop.xlane.xlu0 %5491
    %v5493 = vsub.f32 %v5489, %v5492
    %v5494 = vmul.f32 %v5493, 1.442695
    %v5495 = vpow.pop %v5494
    %v5496 = vsel %vm430, %v5495, 0.0
    %5497 = vadd.xlane.f32.xlu0 %v5496
    %v5498 = vpop.xlane.xlu0 %5497
    %v5499 = vrcp.pop %v5498
    %v5500 = vmul.f32 %v5495, %v5499
    %v5502 = vsel %vm430, %v5500, 0
    %5504 = vmatprep.subr.mxu0 0.0
    %5505 = vmatpush1.msra.mxu0 %v5249
    %5506 = vmatprep.subr.mxu0 0.0
    %5507 = vmatpush1.msra.mxu0 0.0
    %5508 = vmatprep.subr.mxu0 0.0
    %5509 = vmatpush1.msra.mxu0 0.0
    %5510 = vmatprep.subr.mxu0 0.0
    %5511 = vmatpush1.msra.mxu0 0.0
    %5512 = vmatprep.subr.mxu0 0.0
    %5513 = vmatpush1.msra.mxu0 0.0
    %5514 = vmatprep.subr.mxu0 0.0
    %5515 = vmatpush1.msra.mxu0 0.0
    %5516 = vmatprep.subr.mxu0 0.0
    %5517 = vmatpush1.msra.mxu0 0.0
    %5518 = vmatprep.subr.mxu0 0.0
    %5519 = vmatpush1.msra.mxu0 0.0
    %5520 = vmatprep.subr.mxu0 0.0
    %5521 = vmatpush1.msra.mxu0 0.0
    %5522 = vmatprep.subr.mxu0 0.0
    %5523 = vmatpush1.msra.mxu0 0.0
    %5524 = vmatprep.subr.mxu0 0.0
    %5525 = vmatpush1.msra.mxu0 0.0
    %5526 = vmatprep.subr.mxu0 0.0
    %5527 = vmatpush1.msra.mxu0 0.0
    %5528 = vmatprep.subr.mxu0 0.0
    %5529 = vmatpush1.msra.mxu0 0.0
    %5530 = vmatprep.subr.mxu0 0.0
    %5531 = vmatpush1.msra.mxu0 0.0
    %5532 = vmatprep.subr.mxu0 0.0
    %5533 = vmatpush1.msra.mxu0 0.0
    %5534 = vmatprep.subr.mxu0 0.0
    %5535 = vmatpush1.msra.mxu0 0.0
    %5536 = vmatprep.subr.mxu0 0.0
    %5537 = vmatpush1.msra.mxu0 0.0
    %5538 = vmatprep.subr.mxu0 0.0
    %5539 = vmatpush1.msra.mxu0 0.0
    %5540 = vmatprep.subr.mxu0 0.0
    %5541 = vmatpush1.msra.mxu0 0.0
    %5542 = vmatprep.subr.mxu0 0.0
    %5543 = vmatpush1.msra.mxu0 0.0
    %5544 = vmatprep.subr.mxu0 0.0
    %5545 = vmatpush1.msra.mxu0 0.0
    %5546 = vmatprep.subr.mxu0 0.0
    %5547 = vmatpush1.msra.mxu0 0.0
    %5548 = vmatprep.subr.mxu0 0.0
    %5549 = vmatpush1.msra.mxu0 0.0
    %5550 = vmatprep.subr.mxu0 0.0
    %5551 = vmatpush1.msra.mxu0 0.0
    %5552 = vmatprep.subr.mxu0 0.0
    %5553 = vmatpush1.msra.mxu0 0.0
    %5554 = vmatprep.subr.mxu0 0.0
    %5555 = vmatpush1.msra.mxu0 0.0
    %5556 = vmatprep.subr.mxu0 0.0
    %5557 = vmatpush1.msra.mxu0 0.0
    %5558 = vmatprep.subr.mxu0 0.0
    %5559 = vmatpush1.msra.mxu0 0.0
    %5560 = vmatprep.subr.mxu0 0.0
    %5561 = vmatpush1.msra.mxu0 0.0
    %5562 = vmatprep.subr.mxu0 0.0
    %5563 = vmatpush1.msra.mxu0 0.0
    %5564 = vmatprep.subr.mxu0 0.0
    %5565 = vmatpush1.msra.mxu0 0.0
    %5566 = vmatprep.subr.mxu0 0.0
    %5567 = vmatpush1.msra.mxu0 0.0
    %5568 = vmatprep.mubr.f32.mxu0 0.0
    %5569 = vmatmul.mubr.f32.gmra.mrb[0].mxu0 %v5502
    %v5570 = vpop.f32.mrb[0].mxu0
    %v5571 = vadd.f32 0.0, %v5570
    %v5572 = vpop.f32.mrb[0].mxu0
    %5573 = vdwg.mxu0
    %s5574 = scalar_lea.vmem %s10, 32
    %v5575 = vld [vmem:[%s5574] sm:$0xff]
    %v5577 = vsel %vm430, %v5410, 0
    %v5580 = vsel %vm430, %v5571, 0
    %5582 = vmatprep.subr.mxu0 0.0
    %5583 = vmatpush1.msra.mxu0 %v5575
    %5584 = vmatprep.subr.mxu0 0.0
    %5585 = vmatpush1.msra.mxu0 0.0
    %5586 = vmatprep.subr.mxu0 0.0
    %5587 = vmatpush1.msra.mxu0 0.0
    %5588 = vmatprep.subr.mxu0 0.0
    %5589 = vmatpush1.msra.mxu0 0.0
    %5590 = vmatprep.subr.mxu0 0.0
    %5591 = vmatpush1.msra.mxu0 0.0
    %5592 = vmatprep.subr.mxu0 0.0
    %5593 = vmatpush1.msra.mxu0 0.0
    %5594 = vmatprep.subr.mxu0 0.0
    %5595 = vmatpush1.msra.mxu0 0.0
    %5596 = vmatprep.subr.mxu0 0.0
    %5597 = vmatpush1.msra.mxu0 0.0
    %5598 = vmatprep.subr.mxu0 0.0
    %5599 = vmatpush1.msra.mxu0 0.0
    %5600 = vmatprep.subr.mxu0 0.0
    %5601 = vmatpush1.msra.mxu0 0.0
    %5602 = vmatprep.subr.mxu0 0.0
    %5603 = vmatpush1.msra.mxu0 0.0
    %5604 = vmatprep.subr.mxu0 0.0
    %5605 = vmatpush1.msra.mxu0 0.0
    %5606 = vmatprep.subr.mxu0 0.0
    %5607 = vmatpush1.msra.mxu0 0.0
    %5608 = vmatprep.subr.mxu0 0.0
    %5609 = vmatpush1.msra.mxu0 0.0
    %5610 = vmatprep.subr.mxu0 0.0
    %5611 = vmatpush1.msra.mxu0 0.0
    %5612 = vmatprep.subr.mxu0 0.0
    %5613 = vmatpush1.msra.mxu0 0.0
    %5614 = vmatprep.subr.mxu0 0.0
    %5615 = vmatpush1.msra.mxu0 0.0
    %5616 = vmatprep.subr.mxu0 0.0
    %5617 = vmatpush1.msra.mxu0 0.0
    %5618 = vmatprep.subr.mxu0 0.0
    %5619 = vmatpush1.msra.mxu0 0.0
    %5620 = vmatprep.subr.mxu0 0.0
    %5621 = vmatpush1.msra.mxu0 0.0
    %5622 = vmatprep.subr.mxu0 0.0
    %5623 = vmatpush1.msra.mxu0 0.0
    %5624 = vmatprep.subr.mxu0 0.0
    %5625 = vmatpush1.msra.mxu0 0.0
    %5626 = vmatprep.subr.mxu0 0.0
    %5627 = vmatpush1.msra.mxu0 0.0
    %5628 = vmatprep.subr.mxu0 0.0
    %5629 = vmatpush1.msra.mxu0 0.0
    %5630 = vmatprep.subr.mxu0 0.0
    %5631 = vmatpush1.msra.mxu0 0.0
    %5632 = vmatprep.subr.mxu0 0.0
    %5633 = vmatpush1.msra.mxu0 0.0
    %5634 = vmatprep.subr.mxu0 0.0
    %5635 = vmatpush1.msra.mxu0 0.0
    %5636 = vmatprep.subr.mxu0 0.0
    %5637 = vmatpush1.msra.mxu0 0.0
    %5638 = vmatprep.subr.mxu0 0.0
    %5639 = vmatpush1.msra.mxu0 0.0
    %5640 = vmatprep.subr.mxu0 0.0
    %5641 = vmatpush1.msra.mxu0 0.0
    %5642 = vmatprep.subr.mxu0 0.0
    %5643 = vmatpush1.msra.mxu0 0.0
    %5644 = vmatprep.subr.mxu0 0.0
    %5645 = vmatpush1.msra.mxu0 0.0
    %5646 = vmatprep.mubr.f32.mxu0 0.0
    %5647 = vmatmul.mubr.f32.gmra.mrb[0].mxu0 %v5577
    %v5648 = vpop.f32.mrb[0].mxu0
    %v5649 = vadd.f32 0.0, %v5648
    %v5650 = vpop.f32.mrb[0].mxu0
    %5651 = vmatprep.mubr.f32.mxu0 0.0
    %5652 = vmatmul.mubr.f32.gmra.mrb[0].mxu0 %v5580
    %v5653 = vpop.f32.mrb[0].mxu0
    %v5654 = vadd.f32 0.0, %v5653
    %v5655 = vpop.f32.mrb[0].mxu0
    %5656 = vdwg.mxu0
    %v5658 = vlaneseq
    %v5659 = vshrl.u32 %v5658, 7
    %v5660 = vsub.s32 0, %v5659
    %v5661 = vrot.slane %v4981, %v5660
    %v5663 = vadd.f32 %v5661, %v5649
    %v5664 = vadd.f32 %v5661, %v5654
    %s5665 = scalar_lea.vmem %s4, 160
    %v5666 = vld [vmem:[%s5665] sm:$0xff]
    %v5667 = vld [vmem:[%s5665 + $0x8] sm:$0xff]
    %v5668 = vld [vmem:[%s5665 + $0x10] sm:$0xff]
    %v5669 = vld [vmem:[%s5665 + $0x18] sm:$0xff]
    %s5670 = scalar_lea.vmem %s5, 5
    %v5671 = vld [vmem:[%s5670] sm:$0x1]
    %v5673 = vlaneseq
    %v5674 = vshrl.u32 %v5673, 7
    %v5675 = vsub.s32 0, %v5674
    %v5676 = vrot.slane %v5671, %v5675
    %5678 = vmatprep.subr.mxu0 0.0
    %5679 = vmatpush1.msra.mxu0 %v5666
    %5680 = vmatprep.subr.mxu0 0.0
    %5681 = vmatpush1.msra.mxu0 %v5667
    %5682 = vmatprep.subr.mxu0 0.0
    %5683 = vmatpush1.msra.mxu0 %v5668
    %5684 = vmatprep.subr.mxu0 0.0
    %5685 = vmatpush1.msra.mxu0 %v5669
    %5686 = vmatprep.subr.mxu0 0.0
    %5687 = vmatpush1.msra.mxu0 0.0
    %5688 = vmatprep.subr.mxu0 0.0
    %5689 = vmatpush1.msra.mxu0 0.0
    %5690 = vmatprep.subr.mxu0 0.0
    %5691 = vmatpush1.msra.mxu0 0.0
    %5692 = vmatprep.subr.mxu0 0.0
    %5693 = vmatpush1.msra.mxu0 0.0
    %5694 = vmatprep.subr.mxu0 0.0
    %5695 = vmatpush1.msra.mxu0 0.0
    %5696 = vmatprep.subr.mxu0 0.0
    %5697 = vmatpush1.msra.mxu0 0.0
    %5698 = vmatprep.subr.mxu0 0.0
    %5699 = vmatpush1.msra.mxu0 0.0
    %5700 = vmatprep.subr.mxu0 0.0
    %5701 = vmatpush1.msra.mxu0 0.0
    %5702 = vmatprep.subr.mxu0 0.0
    %5703 = vmatpush1.msra.mxu0 0.0
    %5704 = vmatprep.subr.mxu0 0.0
    %5705 = vmatpush1.msra.mxu0 0.0
    %5706 = vmatprep.subr.mxu0 0.0
    %5707 = vmatpush1.msra.mxu0 0.0
    %5708 = vmatprep.subr.mxu0 0.0
    %5709 = vmatpush1.msra.mxu0 0.0
    %5710 = vmatprep.subr.mxu0 0.0
    %5711 = vmatpush1.msra.mxu0 0.0
    %5712 = vmatprep.subr.mxu0 0.0
    %5713 = vmatpush1.msra.mxu0 0.0
    %5714 = vmatprep.subr.mxu0 0.0
    %5715 = vmatpush1.msra.mxu0 0.0
    %5716 = vmatprep.subr.mxu0 0.0
    %5717 = vmatpush1.msra.mxu0 0.0
    %5718 = vmatprep.subr.mxu0 0.0
    %5719 = vmatpush1.msra.mxu0 0.0
    %5720 = vmatprep.subr.mxu0 0.0
    %5721 = vmatpush1.msra.mxu0 0.0
    %5722 = vmatprep.subr.mxu0 0.0
    %5723 = vmatpush1.msra.mxu0 0.0
    %5724 = vmatprep.subr.mxu0 0.0
    %5725 = vmatpush1.msra.mxu0 0.0
    %5726 = vmatprep.subr.mxu0 0.0
    %5727 = vmatpush1.msra.mxu0 0.0
    %5728 = vmatprep.subr.mxu0 0.0
    %5729 = vmatpush1.msra.mxu0 0.0
    %5730 = vmatprep.subr.mxu0 0.0
    %5731 = vmatpush1.msra.mxu0 0.0
    %5732 = vmatprep.subr.mxu0 0.0
    %5733 = vmatpush1.msra.mxu0 0.0
    %5734 = vmatprep.subr.mxu0 0.0
    %5735 = vmatpush1.msra.mxu0 0.0
    %5736 = vmatprep.subr.mxu0 0.0
    %5737 = vmatpush1.msra.mxu0 0.0
    %5738 = vmatprep.subr.mxu0 0.0
    %5739 = vmatpush1.msra.mxu0 0.0
    %5740 = vmatprep.subr.mxu0 0.0
    %5741 = vmatpush1.msra.mxu0 0.0
    %5742 = vmatprep.mubr.f32.mxu0 0.0
    %5743 = vmatmul.mubr.f32.gmra.mrb[0].mxu0 %v4996
    %v5744 = vpop.f32.mrb[0].mxu0
    %v5745 = vadd.f32 %v5676, %v5744
    %v5746 = vpop.f32.mrb[0].mxu0
    %5747 = vmatprep.mubr.f32.mxu0 0.0
    %5748 = vmatmul.mubr.f32.gmra.mrb[0].mxu0 %v4999
    %v5749 = vpop.f32.mrb[0].mxu0
    %v5750 = vadd.f32 %v5676, %v5749
    %v5751 = vpop.f32.mrb[0].mxu0
    %5752 = vdwg.mxu0
    %s5753 = scalar_lea.vmem %s6, 160
    %v5754 = vld [vmem:[%s5753] sm:$0xff]
    %v5755 = vld [vmem:[%s5753 + $0x8] sm:$0xff]
    %v5756 = vld [vmem:[%s5753 + $0x10] sm:$0xff]
    %v5757 = vld [vmem:[%s5753 + $0x18] sm:$0xff]
    %s5758 = scalar_lea.vmem %s7, 5
    %v5759 = vld [vmem:[%s5758] sm:$0x1]
    %v5761 = vlaneseq
    %v5762 = vshrl.u32 %v5761, 7
    %v5763 = vsub.s32 0, %v5762
    %v5764 = vrot.slane %v5759, %v5763
    %5766 = vmatprep.subr.mxu0 0.0
    %5767 = vmatpush1.msra.mxu0 %v5754
    %5768 = vmatprep.subr.mxu0 0.0
    %5769 = vmatpush1.msra.mxu0 %v5755
    %5770 = vmatprep.subr.mxu0 0.0
    %5771 = vmatpush1.msra.mxu0 %v5756
    %5772 = vmatprep.subr.mxu0 0.0
    %5773 = vmatpush1.msra.mxu0 %v5757
    %5774 = vmatprep.subr.mxu0 0.0
    %5775 = vmatpush1.msra.mxu0 0.0
    %5776 = vmatprep.subr.mxu0 0.0
    %5777 = vmatpush1.msra.mxu0 0.0
    %5778 = vmatprep.subr.mxu0 0.0
    %5779 = vmatpush1.msra.mxu0 0.0
    %5780 = vmatprep.subr.mxu0 0.0
    %5781 = vmatpush1.msra.mxu0 0.0
    %5782 = vmatprep.subr.mxu0 0.0
    %5783 = vmatpush1.msra.mxu0 0.0
    %5784 = vmatprep.subr.mxu0 0.0
    %5785 = vmatpush1.msra.mxu0 0.0
    %5786 = vmatprep.subr.mxu0 0.0
    %5787 = vmatpush1.msra.mxu0 0.0
    %5788 = vmatprep.subr.mxu0 0.0
    %5789 = vmatpush1.msra.mxu0 0.0
    %5790 = vmatprep.subr.mxu0 0.0
    %5791 = vmatpush1.msra.mxu0 0.0
    %5792 = vmatprep.subr.mxu0 0.0
    %5793 = vmatpush1.msra.mxu0 0.0
    %5794 = vmatprep.subr.mxu0 0.0
    %5795 = vmatpush1.msra.mxu0 0.0
    %5796 = vmatprep.subr.mxu0 0.0
    %5797 = vmatpush1.msra.mxu0 0.0
    %5798 = vmatprep.subr.mxu0 0.0
    %5799 = vmatpush1.msra.mxu0 0.0
    %5800 = vmatprep.subr.mxu0 0.0
    %5801 = vmatpush1.msra.mxu0 0.0
    %5802 = vmatprep.subr.mxu0 0.0
    %5803 = vmatpush1.msra.mxu0 0.0
    %5804 = vmatprep.subr.mxu0 0.0
    %5805 = vmatpush1.msra.mxu0 0.0
    %5806 = vmatprep.subr.mxu0 0.0
    %5807 = vmatpush1.msra.mxu0 0.0
    %5808 = vmatprep.subr.mxu0 0.0
    %5809 = vmatpush1.msra.mxu0 0.0
    %5810 = vmatprep.subr.mxu0 0.0
    %5811 = vmatpush1.msra.mxu0 0.0
    %5812 = vmatprep.subr.mxu0 0.0
    %5813 = vmatpush1.msra.mxu0 0.0
    %5814 = vmatprep.subr.mxu0 0.0
    %5815 = vmatpush1.msra.mxu0 0.0
    %5816 = vmatprep.subr.mxu0 0.0
    %5817 = vmatpush1.msra.mxu0 0.0
    %5818 = vmatprep.subr.mxu0 0.0
    %5819 = vmatpush1.msra.mxu0 0.0
    %5820 = vmatprep.subr.mxu0 0.0
    %5821 = vmatpush1.msra.mxu0 0.0
    %5822 = vmatprep.subr.mxu0 0.0
    %5823 = vmatpush1.msra.mxu0 0.0
    %5824 = vmatprep.subr.mxu0 0.0
    %5825 = vmatpush1.msra.mxu0 0.0
    %5826 = vmatprep.subr.mxu0 0.0
    %5827 = vmatpush1.msra.mxu0 0.0
    %5828 = vmatprep.subr.mxu0 0.0
    %5829 = vmatpush1.msra.mxu0 0.0
    %5830 = vmatprep.mubr.f32.mxu0 0.0
    %5831 = vmatmul.mubr.f32.gmra.mrb[0].mxu0 %v4996
    %v5832 = vpop.f32.mrb[0].mxu0
    %v5833 = vadd.f32 %v5764, %v5832
    %v5834 = vpop.f32.mrb[0].mxu0
    %5835 = vmatprep.mubr.f32.mxu0 0.0
    %5836 = vmatmul.mubr.f32.gmra.mrb[0].mxu0 %v4999
    %v5837 = vpop.f32.mrb[0].mxu0
    %v5838 = vadd.f32 %v5764, %v5837
    %v5839 = vpop.f32.mrb[0].mxu0
    %5840 = vdwg.mxu0
    %s5841 = scalar_lea.vmem %s8, 160
    %v5842 = vld [vmem:[%s5841] sm:$0xff]
    %v5843 = vld [vmem:[%s5841 + $0x8] sm:$0xff]
    %v5844 = vld [vmem:[%s5841 + $0x10] sm:$0xff]
    %v5845 = vld [vmem:[%s5841 + $0x18] sm:$0xff]
    %s5846 = scalar_lea.vmem %s9, 5
    %v5847 = vld [vmem:[%s5846] sm:$0x1]
    %v5849 = vlaneseq
    %v5850 = vshrl.u32 %v5849, 7
    %v5851 = vsub.s32 0, %v5850
    %v5852 = vrot.slane %v5847, %v5851
    %5854 = vmatprep.subr.mxu0 0.0
    %5855 = vmatpush1.msra.mxu0 %v5842
    %5856 = vmatprep.subr.mxu0 0.0
    %5857 = vmatpush1.msra.mxu0 %v5843
    %5858 = vmatprep.subr.mxu0 0.0
    %5859 = vmatpush1.msra.mxu0 %v5844
    %5860 = vmatprep.subr.mxu0 0.0
    %5861 = vmatpush1.msra.mxu0 %v5845
    %5862 = vmatprep.subr.mxu0 0.0
    %5863 = vmatpush1.msra.mxu0 0.0
    %5864 = vmatprep.subr.mxu0 0.0
    %5865 = vmatpush1.msra.mxu0 0.0
    %5866 = vmatprep.subr.mxu0 0.0
    %5867 = vmatpush1.msra.mxu0 0.0
    %5868 = vmatprep.subr.mxu0 0.0
    %5869 = vmatpush1.msra.mxu0 0.0
    %5870 = vmatprep.subr.mxu0 0.0
    %5871 = vmatpush1.msra.mxu0 0.0
    %5872 = vmatprep.subr.mxu0 0.0
    %5873 = vmatpush1.msra.mxu0 0.0
    %5874 = vmatprep.subr.mxu0 0.0
    %5875 = vmatpush1.msra.mxu0 0.0
    %5876 = vmatprep.subr.mxu0 0.0
    %5877 = vmatpush1.msra.mxu0 0.0
    %5878 = vmatprep.subr.mxu0 0.0
    %5879 = vmatpush1.msra.mxu0 0.0
    %5880 = vmatprep.subr.mxu0 0.0
    %5881 = vmatpush1.msra.mxu0 0.0
    %5882 = vmatprep.subr.mxu0 0.0
    %5883 = vmatpush1.msra.mxu0 0.0
    %5884 = vmatprep.subr.mxu0 0.0
    %5885 = vmatpush1.msra.mxu0 0.0
    %5886 = vmatprep.subr.mxu0 0.0
    %5887 = vmatpush1.msra.mxu0 0.0
    %5888 = vmatprep.subr.mxu0 0.0
    %5889 = vmatpush1.msra.mxu0 0.0
    %5890 = vmatprep.subr.mxu0 0.0
    %5891 = vmatpush1.msra.mxu0 0.0
    %5892 = vmatprep.subr.mxu0 0.0
    %5893 = vmatpush1.msra.mxu0 0.0
    %5894 = vmatprep.subr.mxu0 0.0
    %5895 = vmatpush1.msra.mxu0 0.0
    %5896 = vmatprep.subr.mxu0 0.0
    %5897 = vmatpush1.msra.mxu0 0.0
    %5898 = vmatprep.subr.mxu0 0.0
    %5899 = vmatpush1.msra.mxu0 0.0
    %5900 = vmatprep.subr.mxu0 0.0
    %5901 = vmatpush1.msra.mxu0 0.0
    %5902 = vmatprep.subr.mxu0 0.0
    %5903 = vmatpush1.msra.mxu0 0.0
    %5904 = vmatprep.subr.mxu0 0.0
    %5905 = vmatpush1.msra.mxu0 0.0
    %5906 = vmatprep.subr.mxu0 0.0
    %5907 = vmatpush1.msra.mxu0 0.0
    %5908 = vmatprep.subr.mxu0 0.0
    %5909 = vmatpush1.msra.mxu0 0.0
    %5910 = vmatprep.subr.mxu0 0.0
    %5911 = vmatpush1.msra.mxu0 0.0
    %5912 = vmatprep.subr.mxu0 0.0
    %5913 = vmatpush1.msra.mxu0 0.0
    %5914 = vmatprep.subr.mxu0 0.0
    %5915 = vmatpush1.msra.mxu0 0.0
    %5916 = vmatprep.subr.mxu0 0.0
    %5917 = vmatpush1.msra.mxu0 0.0
    %5918 = vmatprep.mubr.f32.mxu0 0.0
    %5919 = vmatmul.mubr.f32.gmra.mrb[0].mxu0 %v4996
    %v5920 = vpop.f32.mrb[0].mxu0
    %v5921 = vadd.f32 %v5852, %v5920
    %v5922 = vpop.f32.mrb[0].mxu0
    %5923 = vmatprep.mubr.f32.mxu0 0.0
    %5924 = vmatmul.mubr.f32.gmra.mrb[0].mxu0 %v4999
    %v5925 = vpop.f32.mrb[0].mxu0
    %v5926 = vadd.f32 %v5852, %v5925
    %v5927 = vpop.f32.mrb[0].mxu0
    %5928 = vdwg.mxu0
    %v5930 = vsel %vm430, %v5745, 0
    %v5933 = vsel %vm430, %v5833, 0
    %5935 = vmatprep.subr.mxu0 0.0
    %5936 = vmatpush1.xpose.msra.mxu0 %v5933
    %5937 = vmatprep.subr.mxu0 0.0
    %5938 = vmatpush1.xpose.msra.mxu0 0.0
    %5939 = vmatprep.subr.mxu0 0.0
    %5940 = vmatpush1.xpose.msra.mxu0 0.0
    %5941 = vmatprep.subr.mxu0 0.0
    %5942 = vmatpush1.xpose.msra.mxu0 0.0
    %5943 = vmatprep.subr.mxu0 0.0
    %5944 = vmatpush1.xpose.msra.mxu0 0.0
    %5945 = vmatprep.subr.mxu0 0.0
    %5946 = vmatpush1.xpose.msra.mxu0 0.0
    %5947 = vmatprep.subr.mxu0 0.0
    %5948 = vmatpush1.xpose.msra.mxu0 0.0
    %5949 = vmatprep.subr.mxu0 0.0
    %5950 = vmatpush1.xpose.msra.mxu0 0.0
    %5951 = vmatprep.subr.mxu0 0.0
    %5952 = vmatpush1.xpose.msra.mxu0 0.0
    %5953 = vmatprep.subr.mxu0 0.0
    %5954 = vmatpush1.xpose.msra.mxu0 0.0
    %5955 = vmatprep.subr.mxu0 0.0
    %5956 = vmatpush1.xpose.msra.mxu0 0.0
    %5957 = vmatprep.subr.mxu0 0.0
    %5958 = vmatpush1.xpose.msra.mxu0 0.0
    %5959 = vmatprep.subr.mxu0 0.0
    %5960 = vmatpush1.xpose.msra.mxu0 0.0
    %5961 = vmatprep.subr.mxu0 0.0
    %5962 = vmatpush1.xpose.msra.mxu0 0.0
    %5963 = vmatprep.subr.mxu0 0.0
    %5964 = vmatpush1.xpose.msra.mxu0 0.0
    %5965 = vmatprep.subr.mxu0 0.0
    %5966 = vmatpush1.xpose.msra.mxu0 0.0
    %5967 = vmatprep.subr.mxu0 0.0
    %5968 = vmatpush1.xpose.msra.mxu0 0.0
    %5969 = vmatprep.subr.mxu0 0.0
    %5970 = vmatpush1.xpose.msra.mxu0 0.0
    %5971 = vmatprep.subr.mxu0 0.0
    %5972 = vmatpush1.xpose.msra.mxu0 0.0
    %5973 = vmatprep.subr.mxu0 0.0
    %5974 = vmatpush1.xpose.msra.mxu0 0.0
    %5975 = vmatprep.subr.mxu0 0.0
    %5976 = vmatpush1.xpose.msra.mxu0 0.0
    %5977 = vmatprep.subr.mxu0 0.0
    %5978 = vmatpush1.xpose.msra.mxu0 0.0
    %5979 = vmatprep.subr.mxu0 0.0
    %5980 = vmatpush1.xpose.msra.mxu0 0.0
    %5981 = vmatprep.subr.mxu0 0.0
    %5982 = vmatpush1.xpose.msra.mxu0 0.0
    %5983 = vmatprep.subr.mxu0 0.0
    %5984 = vmatpush1.xpose.msra.mxu0 0.0
    %5985 = vmatprep.subr.mxu0 0.0
    %5986 = vmatpush1.xpose.msra.mxu0 0.0
    %5987 = vmatprep.subr.mxu0 0.0
    %5988 = vmatpush1.xpose.msra.mxu0 0.0
    %5989 = vmatprep.subr.mxu0 0.0
    %5990 = vmatpush1.xpose.msra.mxu0 0.0
    %5991 = vmatprep.subr.mxu0 0.0
    %5992 = vmatpush1.xpose.msra.mxu0 0.0
    %5993 = vmatprep.subr.mxu0 0.0
    %5994 = vmatpush1.xpose.msra.mxu0 0.0
    %5995 = vmatprep.subr.mxu0 0.0
    %5996 = vmatpush1.xpose.msra.mxu0 0.0
    %5997 = vmatprep.subr.mxu0 0.0
    %5998 = vmatpush1.xpose.msra.mxu0 0.0
    %5999 = vmatprep.mubr.f32.mxu0 0.0
    %6000 = vmatmul.mubr.f32.gmra.mrb[0].mxu0 %v5930
    %v6001 = vpop.f32.mrb[0].mxu0
    %v6002 = vadd.f32 0.0, %v6001
    %v6003 = vpop.f32.mrb[0].mxu0
    %6004 = vdwg.mxu0
    %v6005 = vmul.f32 %v6002, 0.35355338
    %v6006 = vsel %vm430, %v6005, -inf
    %6007 = vmax.xlane.f32.xlu0 %v6006
    %v6008 = vpop.xlane.xlu0 %6007
    %v6009 = vsub.f32 %v6005, %v6008
    %v6010 = vmul.f32 %v6009, 1.442695
    %v6011 = vpow.pop %v6010
    %v6012 = vsel %vm430, %v6011, 0.0
    %6013 = vadd.xlane.f32.xlu0 %v6012
    %v6014 = vpop.xlane.xlu0 %6013
    %v6015 = vrcp.pop %v6014
    %v6016 = vmul.f32 %v6011, %v6015
    %v6018 = vsel %vm430, %v6016, 0
    %6020 = vmatprep.subr.mxu0 0.0
    %6021 = vmatpush1.msra.mxu0 %v5921
    %6022 = vmatprep.subr.mxu0 0.0
    %6023 = vmatpush1.msra.mxu0 0.0
    %6024 = vmatprep.subr.mxu0 0.0
    %6025 = vmatpush1.msra.mxu0 0.0
    %6026 = vmatprep.subr.mxu0 0.0
    %6027 = vmatpush1.msra.mxu0 0.0
    %6028 = vmatprep.subr.mxu0 0.0
    %6029 = vmatpush1.msra.mxu0 0.0
    %6030 = vmatprep.subr.mxu0 0.0
    %6031 = vmatpush1.msra.mxu0 0.0
    %6032 = vmatprep.subr.mxu0 0.0
    %6033 = vmatpush1.msra.mxu0 0.0
    %6034 = vmatprep.subr.mxu0 0.0
    %6035 = vmatpush1.msra.mxu0 0.0
    %6036 = vmatprep.subr.mxu0 0.0
    %6037 = vmatpush1.msra.mxu0 0.0
    %6038 = vmatprep.subr.mxu0 0.0
    %6039 = vmatpush1.msra.mxu0 0.0
    %6040 = vmatprep.subr.mxu0 0.0
    %6041 = vmatpush1.msra.mxu0 0.0
    %6042 = vmatprep.subr.mxu0 0.0
    %6043 = vmatpush1.msra.mxu0 0.0
    %6044 = vmatprep.subr.mxu0 0.0
    %6045 = vmatpush1.msra.mxu0 0.0
    %6046 = vmatprep.subr.mxu0 0.0
    %6047 = vmatpush1.msra.mxu0 0.0
    %6048 = vmatprep.subr.mxu0 0.0
    %6049 = vmatpush1.msra.mxu0 0.0
    %6050 = vmatprep.subr.mxu0 0.0
    %6051 = vmatpush1.msra.mxu0 0.0
    %6052 = vmatprep.subr.mxu0 0.0
    %6053 = vmatpush1.msra.mxu0 0.0
    %6054 = vmatprep.subr.mxu0 0.0
    %6055 = vmatpush1.msra.mxu0 0.0
    %6056 = vmatprep.subr.mxu0 0.0
    %6057 = vmatpush1.msra.mxu0 0.0
    %6058 = vmatprep.subr.mxu0 0.0
    %6059 = vmatpush1.msra.mxu0 0.0
    %6060 = vmatprep.subr.mxu0 0.0
    %6061 = vmatpush1.msra.mxu0 0.0
    %6062 = vmatprep.subr.mxu0 0.0
    %6063 = vmatpush1.msra.mxu0 0.0
    %6064 = vmatprep.subr.mxu0 0.0
    %6065 = vmatpush1.msra.mxu0 0.0
    %6066 = vmatprep.subr.mxu0 0.0
    %6067 = vmatpush1.msra.mxu0 0.0
    %6068 = vmatprep.subr.mxu0 0.0
    %6069 = vmatpush1.msra.mxu0 0.0
    %6070 = vmatprep.subr.mxu0 0.0
    %6071 = vmatpush1.msra.mxu0 0.0
    %6072 = vmatprep.subr.mxu0 0.0
    %6073 = vmatpush1.msra.mxu0 0.0
    %6074 = vmatprep.subr.mxu0 0.0
    %6075 = vmatpush1.msra.mxu0 0.0
    %6076 = vmatprep.subr.mxu0 0.0
    %6077 = vmatpush1.msra.mxu0 0.0
    %6078 = vmatprep.subr.mxu0 0.0
    %6079 = vmatpush1.msra.mxu0 0.0
    %6080 = vmatprep.subr.mxu0 0.0
    %6081 = vmatpush1.msra.mxu0 0.0
    %6082 = vmatprep.subr.mxu0 0.0
    %6083 = vmatpush1.msra.mxu0 0.0
    %6084 = vmatprep.mubr.f32.mxu0 0.0
    %6085 = vmatmul.mubr.f32.gmra.mrb[0].mxu0 %v6018
    %v6086 = vpop.f32.mrb[0].mxu0
    %v6087 = vadd.f32 0.0, %v6086
    %v6088 = vpop.f32.mrb[0].mxu0
    %6089 = vdwg.mxu0
    %v6091 = vsel %vm430, %v5750, 0
    %v6094 = vsel %vm430, %v5838, 0
    %6096 = vmatprep.subr.mxu0 0.0
    %6097 = vmatpush1.xpose.msra.mxu0 %v6094
    %6098 = vmatprep.subr.mxu0 0.0
    %6099 = vmatpush1.xpose.msra.mxu0 0.0
    %6100 = vmatprep.subr.mxu0 0.0
    %6101 = vmatpush1.xpose.msra.mxu0 0.0
    %6102 = vmatprep.subr.mxu0 0.0
    %6103 = vmatpush1.xpose.msra.mxu0 0.0
    %6104 = vmatprep.subr.mxu0 0.0
    %6105 = vmatpush1.xpose.msra.mxu0 0.0
    %6106 = vmatprep.subr.mxu0 0.0
    %6107 = vmatpush1.xpose.msra.mxu0 0.0
    %6108 = vmatprep.subr.mxu0 0.0
    %6109 = vmatpush1.xpose.msra.mxu0 0.0
    %6110 = vmatprep.subr.mxu0 0.0
    %6111 = vmatpush1.xpose.msra.mxu0 0.0
    %6112 = vmatprep.subr.mxu0 0.0
    %6113 = vmatpush1.xpose.msra.mxu0 0.0
    %6114 = vmatprep.subr.mxu0 0.0
    %6115 = vmatpush1.xpose.msra.mxu0 0.0
    %6116 = vmatprep.subr.mxu0 0.0
    %6117 = vmatpush1.xpose.msra.mxu0 0.0
    %6118 = vmatprep.subr.mxu0 0.0
    %6119 = vmatpush1.xpose.msra.mxu0 0.0
    %6120 = vmatprep.subr.mxu0 0.0
    %6121 = vmatpush1.xpose.msra.mxu0 0.0
    %6122 = vmatprep.subr.mxu0 0.0
    %6123 = vmatpush1.xpose.msra.mxu0 0.0
    %6124 = vmatprep.subr.mxu0 0.0
    %6125 = vmatpush1.xpose.msra.mxu0 0.0
    %6126 = vmatprep.subr.mxu0 0.0
    %6127 = vmatpush1.xpose.msra.mxu0 0.0
    %6128 = vmatprep.subr.mxu0 0.0
    %6129 = vmatpush1.xpose.msra.mxu0 0.0
    %6130 = vmatprep.subr.mxu0 0.0
    %6131 = vmatpush1.xpose.msra.mxu0 0.0
    %6132 = vmatprep.subr.mxu0 0.0
    %6133 = vmatpush1.xpose.msra.mxu0 0.0
    %6134 = vmatprep.subr.mxu0 0.0
    %6135 = vmatpush1.xpose.msra.mxu0 0.0
    %6136 = vmatprep.subr.mxu0 0.0
    %6137 = vmatpush1.xpose.msra.mxu0 0.0
    %6138 = vmatprep.subr.mxu0 0.0
    %6139 = vmatpush1.xpose.msra.mxu0 0.0
    %6140 = vmatprep.subr.mxu0 0.0
    %6141 = vmatpush1.xpose.msra.mxu0 0.0
    %6142 = vmatprep.subr.mxu0 0.0
    %6143 = vmatpush1.xpose.msra.mxu0 0.0
    %6144 = vmatprep.subr.mxu0 0.0
    %6145 = vmatpush1.xpose.msra.mxu0 0.0
    %6146 = vmatprep.subr.mxu0 0.0
    %6147 = vmatpush1.xpose.msra.mxu0 0.0
    %6148 = vmatprep.subr.mxu0 0.0
    %6149 = vmatpush1.xpose.msra.mxu0 0.0
    %6150 = vmatprep.subr.mxu0 0.0
    %6151 = vmatpush1.xpose.msra.mxu0 0.0
    %6152 = vmatprep.subr.mxu0 0.0
    %6153 = vmatpush1.xpose.msra.mxu0 0.0
    %6154 = vmatprep.subr.mxu0 0.0
    %6155 = vmatpush1.xpose.msra.mxu0 0.0
    %6156 = vmatprep.subr.mxu0 0.0
    %6157 = vmatpush1.xpose.msra.mxu0 0.0
    %6158 = vmatprep.subr.mxu0 0.0
    %6159 = vmatpush1.xpose.msra.mxu0 0.0
    %6160 = vmatprep.mubr.f32.mxu0 0.0
    %6161 = vmatmul.mubr.f32.gmra.mrb[0].mxu0 %v6091
    %v6162 = vpop.f32.mrb[0].mxu0
    %v6163 = vadd.f32 0.0, %v6162
    %v6164 = vpop.f32.mrb[0].mxu0
    %6165 = vdwg.mxu0
    %v6166 = vmul.f32 %v6163, 0.35355338
    %v6167 = vsel %vm430, %v6166, -inf
    %6168 = vmax.xlane.f32.xlu0 %v6167
    %v6169 = vpop.xlane.xlu0 %6168
    %v6170 = vsub.f32 %v6166, %v6169
    %v6171 = vmul.f32 %v6170, 1.442695
    %v6172 = vpow.pop %v6171
    %v6173 = vsel %vm430, %v6172, 0.0
    %6174 = vadd.xlane.f32.xlu0 %v6173
    %v6175 = vpop.xlane.xlu0 %6174
    %v6176 = vrcp.pop %v6175
    %v6177 = vmul.f32 %v6172, %v6176
    %v6179 = vsel %vm430, %v6177, 0
    %6181 = vmatprep.subr.mxu0 0.0
    %6182 = vmatpush1.msra.mxu0 %v5926
    %6183 = vmatprep.subr.mxu0 0.0
    %6184 = vmatpush1.msra.mxu0 0.0
    %6185 = vmatprep.subr.mxu0 0.0
    %6186 = vmatpush1.msra.mxu0 0.0
    %6187 = vmatprep.subr.mxu0 0.0
    %6188 = vmatpush1.msra.mxu0 0.0
    %6189 = vmatprep.subr.mxu0 0.0
    %6190 = vmatpush1.msra.mxu0 0.0
    %6191 = vmatprep.subr.mxu0 0.0
    %6192 = vmatpush1.msra.mxu0 0.0
    %6193 = vmatprep.subr.mxu0 0.0
    %6194 = vmatpush1.msra.mxu0 0.0
    %6195 = vmatprep.subr.mxu0 0.0
    %6196 = vmatpush1.msra.mxu0 0.0
    %6197 = vmatprep.subr.mxu0 0.0
    %6198 = vmatpush1.msra.mxu0 0.0
    %6199 = vmatprep.subr.mxu0 0.0
    %6200 = vmatpush1.msra.mxu0 0.0
    %6201 = vmatprep.subr.mxu0 0.0
    %6202 = vmatpush1.msra.mxu0 0.0
    %6203 = vmatprep.subr.mxu0 0.0
    %6204 = vmatpush1.msra.mxu0 0.0
    %6205 = vmatprep.subr.mxu0 0.0
    %6206 = vmatpush1.msra.mxu0 0.0
    %6207 = vmatprep.subr.mxu0 0.0
    %6208 = vmatpush1.msra.mxu0 0.0
    %6209 = vmatprep.subr.mxu0 0.0
    %6210 = vmatpush1.msra.mxu0 0.0
    %6211 = vmatprep.subr.mxu0 0.0
    %6212 = vmatpush1.msra.mxu0 0.0
    %6213 = vmatprep.subr.mxu0 0.0
    %6214 = vmatpush1.msra.mxu0 0.0
    %6215 = vmatprep.subr.mxu0 0.0
    %6216 = vmatpush1.msra.mxu0 0.0
    %6217 = vmatprep.subr.mxu0 0.0
    %6218 = vmatpush1.msra.mxu0 0.0
    %6219 = vmatprep.subr.mxu0 0.0
    %6220 = vmatpush1.msra.mxu0 0.0
    %6221 = vmatprep.subr.mxu0 0.0
    %6222 = vmatpush1.msra.mxu0 0.0
    %6223 = vmatprep.subr.mxu0 0.0
    %6224 = vmatpush1.msra.mxu0 0.0
    %6225 = vmatprep.subr.mxu0 0.0
    %6226 = vmatpush1.msra.mxu0 0.0
    %6227 = vmatprep.subr.mxu0 0.0
    %6228 = vmatpush1.msra.mxu0 0.0
    %6229 = vmatprep.subr.mxu0 0.0
    %6230 = vmatpush1.msra.mxu0 0.0
    %6231 = vmatprep.subr.mxu0 0.0
    %6232 = vmatpush1.msra.mxu0 0.0
    %6233 = vmatprep.subr.mxu0 0.0
    %6234 = vmatpush1.msra.mxu0 0.0
    %6235 = vmatprep.subr.mxu0 0.0
    %6236 = vmatpush1.msra.mxu0 0.0
    %6237 = vmatprep.subr.mxu0 0.0
    %6238 = vmatpush1.msra.mxu0 0.0
    %6239 = vmatprep.subr.mxu0 0.0
    %6240 = vmatpush1.msra.mxu0 0.0
    %6241 = vmatprep.subr.mxu0 0.0
    %6242 = vmatpush1.msra.mxu0 0.0
    %6243 = vmatprep.subr.mxu0 0.0
    %6244 = vmatpush1.msra.mxu0 0.0
    %6245 = vmatprep.mubr.f32.mxu0 0.0
    %6246 = vmatmul.mubr.f32.gmra.mrb[0].mxu0 %v6179
    %v6247 = vpop.f32.mrb[0].mxu0
    %v6248 = vadd.f32 0.0, %v6247
    %v6249 = vpop.f32.mrb[0].mxu0
    %6250 = vdwg.mxu0
    %s6251 = scalar_lea.vmem %s10, 40
    %v6252 = vld [vmem:[%s6251] sm:$0xff]
    %v6254 = vsel %vm430, %v6087, 0
    %v6257 = vsel %vm430, %v6248, 0
    %6259 = vmatprep.subr.mxu0 0.0
    %6260 = vmatpush1.msra.mxu0 %v6252
    %6261 = vmatprep.subr.mxu0 0.0
    %6262 = vmatpush1.msra.mxu0 0.0
    %6263 = vmatprep.subr.mxu0 0.0
    %6264 = vmatpush1.msra.mxu0 0.0
    %6265 = vmatprep.subr.mxu0 0.0
    %6266 = vmatpush1.msra.mxu0 0.0
    %6267 = vmatprep.subr.mxu0 0.0
    %6268 = vmatpush1.msra.mxu0 0.0
    %6269 = vmatprep.subr.mxu0 0.0
    %6270 = vmatpush1.msra.mxu0 0.0
    %6271 = vmatprep.subr.mxu0 0.0
    %6272 = vmatpush1.msra.mxu0 0.0
    %6273 = vmatprep.subr.mxu0 0.0
    %6274 = vmatpush1.msra.mxu0 0.0
    %6275 = vmatprep.subr.mxu0 0.0
    %6276 = vmatpush1.msra.mxu0 0.0
    %6277 = vmatprep.subr.mxu0 0.0
    %6278 = vmatpush1.msra.mxu0 0.0
    %6279 = vmatprep.subr.mxu0 0.0
    %6280 = vmatpush1.msra.mxu0 0.0
    %6281 = vmatprep.subr.mxu0 0.0
    %6282 = vmatpush1.msra.mxu0 0.0
    %6283 = vmatprep.subr.mxu0 0.0
    %6284 = vmatpush1.msra.mxu0 0.0
    %6285 = vmatprep.subr.mxu0 0.0
    %6286 = vmatpush1.msra.mxu0 0.0
    %6287 = vmatprep.subr.mxu0 0.0
    %6288 = vmatpush1.msra.mxu0 0.0
    %6289 = vmatprep.subr.mxu0 0.0
    %6290 = vmatpush1.msra.mxu0 0.0
    %6291 = vmatprep.subr.mxu0 0.0
    %6292 = vmatpush1.msra.mxu0 0.0
    %6293 = vmatprep.subr.mxu0 0.0
    %6294 = vmatpush1.msra.mxu0 0.0
    %6295 = vmatprep.subr.mxu0 0.0
    %6296 = vmatpush1.msra.mxu0 0.0
    %6297 = vmatprep.subr.mxu0 0.0
    %6298 = vmatpush1.msra.mxu0 0.0
    %6299 = vmatprep.subr.mxu0 0.0
    %6300 = vmatpush1.msra.mxu0 0.0
    %6301 = vmatprep.subr.mxu0 0.0
    %6302 = vmatpush1.msra.mxu0 0.0
    %6303 = vmatprep.subr.mxu0 0.0
    %6304 = vmatpush1.msra.mxu0 0.0
    %6305 = vmatprep.subr.mxu0 0.0
    %6306 = vmatpush1.msra.mxu0 0.0
    %6307 = vmatprep.subr.mxu0 0.0
    %6308 = vmatpush1.msra.mxu0 0.0
    %6309 = vmatprep.subr.mxu0 0.0
    %6310 = vmatpush1.msra.mxu0 0.0
    %6311 = vmatprep.subr.mxu0 0.0
    %6312 = vmatpush1.msra.mxu0 0.0
    %6313 = vmatprep.subr.mxu0 0.0
    %6314 = vmatpush1.msra.mxu0 0.0
    %6315 = vmatprep.subr.mxu0 0.0
    %6316 = vmatpush1.msra.mxu0 0.0
    %6317 = vmatprep.subr.mxu0 0.0
    %6318 = vmatpush1.msra.mxu0 0.0
    %6319 = vmatprep.subr.mxu0 0.0
    %6320 = vmatpush1.msra.mxu0 0.0
    %6321 = vmatprep.subr.mxu0 0.0
    %6322 = vmatpush1.msra.mxu0 0.0
    %6323 = vmatprep.mubr.f32.mxu0 0.0
    %6324 = vmatmul.mubr.f32.gmra.mrb[0].mxu0 %v6254
    %v6325 = vpop.f32.mrb[0].mxu0
    %v6326 = vadd.f32 0.0, %v6325
    %v6327 = vpop.f32.mrb[0].mxu0
    %6328 = vmatprep.mubr.f32.mxu0 0.0
    %6329 = vmatmul.mubr.f32.gmra.mrb[0].mxu0 %v6257
    %v6330 = vpop.f32.mrb[0].mxu0
    %v6331 = vadd.f32 0.0, %v6330
    %v6332 = vpop.f32.mrb[0].mxu0
    %6333 = vdwg.mxu0
    %v6334 = vadd.f32 %v5663, %v6326
    %v6335 = vadd.f32 %v5664, %v6331
    %s6336 = scalar_lea.vmem %s4, 192
    %v6337 = vld [vmem:[%s6336] sm:$0xff]
    %v6338 = vld [vmem:[%s6336 + $0x8] sm:$0xff]
    %v6339 = vld [vmem:[%s6336 + $0x10] sm:$0xff]
    %v6340 = vld [vmem:[%s6336 + $0x18] sm:$0xff]
    %s6341 = scalar_lea.vmem %s5, 6
    %v6342 = vld [vmem:[%s6341] sm:$0x1]
    %v6344 = vlaneseq
    %v6345 = vshrl.u32 %v6344, 7
    %v6346 = vsub.s32 0, %v6345
    %v6347 = vrot.slane %v6342, %v6346
    %6349 = vmatprep.subr.mxu0 0.0
    %6350 = vmatpush1.msra.mxu0 %v6337
    %6351 = vmatprep.subr.mxu0 0.0
    %6352 = vmatpush1.msra.mxu0 %v6338
    %6353 = vmatprep.subr.mxu0 0.0
    %6354 = vmatpush1.msra.mxu0 %v6339
    %6355 = vmatprep.subr.mxu0 0.0
    %6356 = vmatpush1.msra.mxu0 %v6340
    %6357 = vmatprep.subr.mxu0 0.0
    %6358 = vmatpush1.msra.mxu0 0.0
    %6359 = vmatprep.subr.mxu0 0.0
    %6360 = vmatpush1.msra.mxu0 0.0
    %6361 = vmatprep.subr.mxu0 0.0
    %6362 = vmatpush1.msra.mxu0 0.0
    %6363 = vmatprep.subr.mxu0 0.0
    %6364 = vmatpush1.msra.mxu0 0.0
    %6365 = vmatprep.subr.mxu0 0.0
    %6366 = vmatpush1.msra.mxu0 0.0
    %6367 = vmatprep.subr.mxu0 0.0
    %6368 = vmatpush1.msra.mxu0 0.0
    %6369 = vmatprep.subr.mxu0 0.0
    %6370 = vmatpush1.msra.mxu0 0.0
    %6371 = vmatprep.subr.mxu0 0.0
    %6372 = vmatpush1.msra.mxu0 0.0
    %6373 = vmatprep.subr.mxu0 0.0
    %6374 = vmatpush1.msra.mxu0 0.0
    %6375 = vmatprep.subr.mxu0 0.0
    %6376 = vmatpush1.msra.mxu0 0.0
    %6377 = vmatprep.subr.mxu0 0.0
    %6378 = vmatpush1.msra.mxu0 0.0
    %6379 = vmatprep.subr.mxu0 0.0
    %6380 = vmatpush1.msra.mxu0 0.0
    %6381 = vmatprep.subr.mxu0 0.0
    %6382 = vmatpush1.msra.mxu0 0.0
    %6383 = vmatprep.subr.mxu0 0.0
    %6384 = vmatpush1.msra.mxu0 0.0
    %6385 = vmatprep.subr.mxu0 0.0
    %6386 = vmatpush1.msra.mxu0 0.0
    %6387 = vmatprep.subr.mxu0 0.0
    %6388 = vmatpush1.msra.mxu0 0.0
    %6389 = vmatprep.subr.mxu0 0.0
    %6390 = vmatpush1.msra.mxu0 0.0
    %6391 = vmatprep.subr.mxu0 0.0
    %6392 = vmatpush1.msra.mxu0 0.0
    %6393 = vmatprep.subr.mxu0 0.0
    %6394 = vmatpush1.msra.mxu0 0.0
    %6395 = vmatprep.subr.mxu0 0.0
    %6396 = vmatpush1.msra.mxu0 0.0
    %6397 = vmatprep.subr.mxu0 0.0
    %6398 = vmatpush1.msra.mxu0 0.0
    %6399 = vmatprep.subr.mxu0 0.0
    %6400 = vmatpush1.msra.mxu0 0.0
    %6401 = vmatprep.subr.mxu0 0.0
    %6402 = vmatpush1.msra.mxu0 0.0
    %6403 = vmatprep.subr.mxu0 0.0
    %6404 = vmatpush1.msra.mxu0 0.0
    %6405 = vmatprep.subr.mxu0 0.0
    %6406 = vmatpush1.msra.mxu0 0.0
    %6407 = vmatprep.subr.mxu0 0.0
    %6408 = vmatpush1.msra.mxu0 0.0
    %6409 = vmatprep.subr.mxu0 0.0
    %6410 = vmatpush1.msra.mxu0 0.0
    %6411 = vmatprep.subr.mxu0 0.0
    %6412 = vmatpush1.msra.mxu0 0.0
    %6413 = vmatprep.mubr.f32.mxu0 0.0
    %6414 = vmatmul.mubr.f32.gmra.mrb[0].mxu0 %v4996
    %v6415 = vpop.f32.mrb[0].mxu0
    %v6416 = vadd.f32 %v6347, %v6415
    %v6417 = vpop.f32.mrb[0].mxu0
    %6418 = vmatprep.mubr.f32.mxu0 0.0
    %6419 = vmatmul.mubr.f32.gmra.mrb[0].mxu0 %v4999
    %v6420 = vpop.f32.mrb[0].mxu0
    %v6421 = vadd.f32 %v6347, %v6420
    %v6422 = vpop.f32.mrb[0].mxu0
    %6423 = vdwg.mxu0
    %s6424 = scalar_lea.vmem %s6, 192
    %v6425 = vld [vmem:[%s6424] sm:$0xff]
    %v6426 = vld [vmem:[%s6424 + $0x8] sm:$0xff]
    %v6427 = vld [vmem:[%s6424 + $0x10] sm:$0xff]
    %v6428 = vld [vmem:[%s6424 + $0x18] sm:$0xff]
    %s6429 = scalar_lea.vmem %s7, 6
    %v6430 = vld [vmem:[%s6429] sm:$0x1]
    %v6432 = vlaneseq
    %v6433 = vshrl.u32 %v6432, 7
    %v6434 = vsub.s32 0, %v6433
    %v6435 = vrot.slane %v6430, %v6434
    %6437 = vmatprep.subr.mxu0 0.0
    %6438 = vmatpush1.msra.mxu0 %v6425
    %6439 = vmatprep.subr.mxu0 0.0
    %6440 = vmatpush1.msra.mxu0 %v6426
    %6441 = vmatprep.subr.mxu0 0.0
    %6442 = vmatpush1.msra.mxu0 %v6427
    %6443 = vmatprep.subr.mxu0 0.0
    %6444 = vmatpush1.msra.mxu0 %v6428
    %6445 = vmatprep.subr.mxu0 0.0
    %6446 = vmatpush1.msra.mxu0 0.0
    %6447 = vmatprep.subr.mxu0 0.0
    %6448 = vmatpush1.msra.mxu0 0.0
    %6449 = vmatprep.subr.mxu0 0.0
    %6450 = vmatpush1.msra.mxu0 0.0
    %6451 = vmatprep.subr.mxu0 0.0
    %6452 = vmatpush1.msra.mxu0 0.0
    %6453 = vmatprep.subr.mxu0 0.0
    %6454 = vmatpush1.msra.mxu0 0.0
    %6455 = vmatprep.subr.mxu0 0.0
    %6456 = vmatpush1.msra.mxu0 0.0
    %6457 = vmatprep.subr.mxu0 0.0
    %6458 = vmatpush1.msra.mxu0 0.0
    %6459 = vmatprep.subr.mxu0 0.0
    %6460 = vmatpush1.msra.mxu0 0.0
    %6461 = vmatprep.subr.mxu0 0.0
    %6462 = vmatpush1.msra.mxu0 0.0
    %6463 = vmatprep.subr.mxu0 0.0
    %6464 = vmatpush1.msra.mxu0 0.0
    %6465 = vmatprep.subr.mxu0 0.0
    %6466 = vmatpush1.msra.mxu0 0.0
    %6467 = vmatprep.subr.mxu0 0.0
    %6468 = vmatpush1.msra.mxu0 0.0
    %6469 = vmatprep.subr.mxu0 0.0
    %6470 = vmatpush1.msra.mxu0 0.0
    %6471 = vmatprep.subr.mxu0 0.0
    %6472 = vmatpush1.msra.mxu0 0.0
    %6473 = vmatprep.subr.mxu0 0.0
    %6474 = vmatpush1.msra.mxu0 0.0
    %6475 = vmatprep.subr.mxu0 0.0
    %6476 = vmatpush1.msra.mxu0 0.0
    %6477 = vmatprep.subr.mxu0 0.0
    %6478 = vmatpush1.msra.mxu0 0.0
    %6479 = vmatprep.subr.mxu0 0.0
    %6480 = vmatpush1.msra.mxu0 0.0
    %6481 = vmatprep.subr.mxu0 0.0
    %6482 = vmatpush1.msra.mxu0 0.0
    %6483 = vmatprep.subr.mxu0 0.0
    %6484 = vmatpush1.msra.mxu0 0.0
    %6485 = vmatprep.subr.mxu0 0.0
    %6486 = vmatpush1.msra.mxu0 0.0
    %6487 = vmatprep.subr.mxu0 0.0
    %6488 = vmatpush1.msra.mxu0 0.0
    %6489 = vmatprep.subr.mxu0 0.0
    %6490 = vmatpush1.msra.mxu0 0.0
    %6491 = vmatprep.subr.mxu0 0.0
    %6492 = vmatpush1.msra.mxu0 0.0
    %6493 = vmatprep.subr.mxu0 0.0
    %6494 = vmatpush1.msra.mxu0 0.0
    %6495 = vmatprep.subr.mxu0 0.0
    %6496 = vmatpush1.msra.mxu0 0.0
    %6497 = vmatprep.subr.mxu0 0.0
    %6498 = vmatpush1.msra.mxu0 0.0
    %6499 = vmatprep.subr.mxu0 0.0
    %6500 = vmatpush1.msra.mxu0 0.0
    %6501 = vmatprep.mubr.f32.mxu0 0.0
    %6502 = vmatmul.mubr.f32.gmra.mrb[0].mxu0 %v4996
    %v6503 = vpop.f32.mrb[0].mxu0
    %v6504 = vadd.f32 %v6435, %v6503
    %v6505 = vpop.f32.mrb[0].mxu0
    %6506 = vmatprep.mubr.f32.mxu0 0.0
    %6507 = vmatmul.mubr.f32.gmra.mrb[0].mxu0 %v4999
    %v6508 = vpop.f32.mrb[0].mxu0
    %v6509 = vadd.f32 %v6435, %v6508
    %v6510 = vpop.f32.mrb[0].mxu0
    %6511 = vdwg.mxu0
    %s6512 = scalar_lea.vmem %s8, 192
    %v6513 = vld [vmem:[%s6512] sm:$0xff]
    %v6514 = vld [vmem:[%s6512 + $0x8] sm:$0xff]
    %v6515 = vld [vmem:[%s6512 + $0x10] sm:$0xff]
    %v6516 = vld [vmem:[%s6512 + $0x18] sm:$0xff]
    %s6517 = scalar_lea.vmem %s9, 6
    %v6518 = vld [vmem:[%s6517] sm:$0x1]
    %v6520 = vlaneseq
    %v6521 = vshrl.u32 %v6520, 7
    %v6522 = vsub.s32 0, %v6521
    %v6523 = vrot.slane %v6518, %v6522
    %6525 = vmatprep.subr.mxu0 0.0
    %6526 = vmatpush1.msra.mxu0 %v6513
    %6527 = vmatprep.subr.mxu0 0.0
    %6528 = vmatpush1.msra.mxu0 %v6514
    %6529 = vmatprep.subr.mxu0 0.0
    %6530 = vmatpush1.msra.mxu0 %v6515
    %6531 = vmatprep.subr.mxu0 0.0
    %6532 = vmatpush1.msra.mxu0 %v6516
    %6533 = vmatprep.subr.mxu0 0.0
    %6534 = vmatpush1.msra.mxu0 0.0
    %6535 = vmatprep.subr.mxu0 0.0
    %6536 = vmatpush1.msra.mxu0 0.0
    %6537 = vmatprep.subr.mxu0 0.0
    %6538 = vmatpush1.msra.mxu0 0.0
    %6539 = vmatprep.subr.mxu0 0.0
    %6540 = vmatpush1.msra.mxu0 0.0
    %6541 = vmatprep.subr.mxu0 0.0
    %6542 = vmatpush1.msra.mxu0 0.0
    %6543 = vmatprep.subr.mxu0 0.0
    %6544 = vmatpush1.msra.mxu0 0.0
    %6545 = vmatprep.subr.mxu0 0.0
    %6546 = vmatpush1.msra.mxu0 0.0
    %6547 = vmatprep.subr.mxu0 0.0
    %6548 = vmatpush1.msra.mxu0 0.0
    %6549 = vmatprep.subr.mxu0 0.0
    %6550 = vmatpush1.msra.mxu0 0.0
    %6551 = vmatprep.subr.mxu0 0.0
    %6552 = vmatpush1.msra.mxu0 0.0
    %6553 = vmatprep.subr.mxu0 0.0
    %6554 = vmatpush1.msra.mxu0 0.0
    %6555 = vmatprep.subr.mxu0 0.0
    %6556 = vmatpush1.msra.mxu0 0.0
    %6557 = vmatprep.subr.mxu0 0.0
    %6558 = vmatpush1.msra.mxu0 0.0
    %6559 = vmatprep.subr.mxu0 0.0
    %6560 = vmatpush1.msra.mxu0 0.0
    %6561 = vmatprep.subr.mxu0 0.0
    %6562 = vmatpush1.msra.mxu0 0.0
    %6563 = vmatprep.subr.mxu0 0.0
    %6564 = vmatpush1.msra.mxu0 0.0
    %6565 = vmatprep.subr.mxu0 0.0
    %6566 = vmatpush1.msra.mxu0 0.0
    %6567 = vmatprep.subr.mxu0 0.0
    %6568 = vmatpush1.msra.mxu0 0.0
    %6569 = vmatprep.subr.mxu0 0.0
    %6570 = vmatpush1.msra.mxu0 0.0
    %6571 = vmatprep.subr.mxu0 0.0
    %6572 = vmatpush1.msra.mxu0 0.0
    %6573 = vmatprep.subr.mxu0 0.0
    %6574 = vmatpush1.msra.mxu0 0.0
    %6575 = vmatprep.subr.mxu0 0.0
    %6576 = vmatpush1.msra.mxu0 0.0
    %6577 = vmatprep.subr.mxu0 0.0
    %6578 = vmatpush1.msra.mxu0 0.0
    %6579 = vmatprep.subr.mxu0 0.0
    %6580 = vmatpush1.msra.mxu0 0.0
    %6581 = vmatprep.subr.mxu0 0.0
    %6582 = vmatpush1.msra.mxu0 0.0
    %6583 = vmatprep.subr.mxu0 0.0
    %6584 = vmatpush1.msra.mxu0 0.0
    %6585 = vmatprep.subr.mxu0 0.0
    %6586 = vmatpush1.msra.mxu0 0.0
    %6587 = vmatprep.subr.mxu0 0.0
    %6588 = vmatpush1.msra.mxu0 0.0
    %6589 = vmatprep.mubr.f32.mxu0 0.0
    %6590 = vmatmul.mubr.f32.gmra.mrb[0].mxu0 %v4996
    %v6591 = vpop.f32.mrb[0].mxu0
    %v6592 = vadd.f32 %v6523, %v6591
    %v6593 = vpop.f32.mrb[0].mxu0
    %6594 = vmatprep.mubr.f32.mxu0 0.0
    %6595 = vmatmul.mubr.f32.gmra.mrb[0].mxu0 %v4999
    %v6596 = vpop.f32.mrb[0].mxu0
    %v6597 = vadd.f32 %v6523, %v6596
    %v6598 = vpop.f32.mrb[0].mxu0
    %6599 = vdwg.mxu0
    %v6601 = vsel %vm430, %v6416, 0
    %v6604 = vsel %vm430, %v6504, 0
    %6606 = vmatprep.subr.mxu0 0.0
    %6607 = vmatpush1.xpose.msra.mxu0 %v6604
    %6608 = vmatprep.subr.mxu0 0.0
    %6609 = vmatpush1.xpose.msra.mxu0 0.0
    %6610 = vmatprep.subr.mxu0 0.0
    %6611 = vmatpush1.xpose.msra.mxu0 0.0
    %6612 = vmatprep.subr.mxu0 0.0
    %6613 = vmatpush1.xpose.msra.mxu0 0.0
    %6614 = vmatprep.subr.mxu0 0.0
    %6615 = vmatpush1.xpose.msra.mxu0 0.0
    %6616 = vmatprep.subr.mxu0 0.0
    %6617 = vmatpush1.xpose.msra.mxu0 0.0
    %6618 = vmatprep.subr.mxu0 0.0
    %6619 = vmatpush1.xpose.msra.mxu0 0.0
    %6620 = vmatprep.subr.mxu0 0.0
    %6621 = vmatpush1.xpose.msra.mxu0 0.0
    %6622 = vmatprep.subr.mxu0 0.0
    %6623 = vmatpush1.xpose.msra.mxu0 0.0
    %6624 = vmatprep.subr.mxu0 0.0
    %6625 = vmatpush1.xpose.msra.mxu0 0.0
    %6626 = vmatprep.subr.mxu0 0.0
    %6627 = vmatpush1.xpose.msra.mxu0 0.0
    %6628 = vmatprep.subr.mxu0 0.0
    %6629 = vmatpush1.xpose.msra.mxu0 0.0
    %6630 = vmatprep.subr.mxu0 0.0
    %6631 = vmatpush1.xpose.msra.mxu0 0.0
    %6632 = vmatprep.subr.mxu0 0.0
    %6633 = vmatpush1.xpose.msra.mxu0 0.0
    %6634 = vmatprep.subr.mxu0 0.0
    %6635 = vmatpush1.xpose.msra.mxu0 0.0
    %6636 = vmatprep.subr.mxu0 0.0
    %6637 = vmatpush1.xpose.msra.mxu0 0.0
    %6638 = vmatprep.subr.mxu0 0.0
    %6639 = vmatpush1.xpose.msra.mxu0 0.0
    %6640 = vmatprep.subr.mxu0 0.0
    %6641 = vmatpush1.xpose.msra.mxu0 0.0
    %6642 = vmatprep.subr.mxu0 0.0
    %6643 = vmatpush1.xpose.msra.mxu0 0.0
    %6644 = vmatprep.subr.mxu0 0.0
    %6645 = vmatpush1.xpose.msra.mxu0 0.0
    %6646 = vmatprep.subr.mxu0 0.0
    %6647 = vmatpush1.xpose.msra.mxu0 0.0
    %6648 = vmatprep.subr.mxu0 0.0
    %6649 = vmatpush1.xpose.msra.mxu0 0.0
    %6650 = vmatprep.subr.mxu0 0.0
    %6651 = vmatpush1.xpose.msra.mxu0 0.0
    %6652 = vmatprep.subr.mxu0 0.0
    %6653 = vmatpush1.xpose.msra.mxu0 0.0
    %6654 = vmatprep.subr.mxu0 0.0
    %6655 = vmatpush1.xpose.msra.mxu0 0.0
    %6656 = vmatprep.subr.mxu0 0.0
    %6657 = vmatpush1.xpose.msra.mxu0 0.0
    %6658 = vmatprep.subr.mxu0 0.0
    %6659 = vmatpush1.xpose.msra.mxu0 0.0
    %6660 = vmatprep.subr.mxu0 0.0
    %6661 = vmatpush1.xpose.msra.mxu0 0.0
    %6662 = vmatprep.subr.mxu0 0.0
    %6663 = vmatpush1.xpose.msra.mxu0 0.0
    %6664 = vmatprep.subr.mxu0 0.0
    %6665 = vmatpush1.xpose.msra.mxu0 0.0
    %6666 = vmatprep.subr.mxu0 0.0
    %6667 = vmatpush1.xpose.msra.mxu0 0.0
    %6668 = vmatprep.subr.mxu0 0.0
    %6669 = vmatpush1.xpose.msra.mxu0 0.0
    %6670 = vmatprep.mubr.f32.mxu0 0.0
    %6671 = vmatmul.mubr.f32.gmra.mrb[0].mxu0 %v6601
    %v6672 = vpop.f32.mrb[0].mxu0
    %v6673 = vadd.f32 0.0, %v6672
    %v6674 = vpop.f32.mrb[0].mxu0
    %6675 = vdwg.mxu0
    %v6676 = vmul.f32 %v6673, 0.35355338
    %v6677 = vsel %vm430, %v6676, -inf
    %6678 = vmax.xlane.f32.xlu0 %v6677
    %v6679 = vpop.xlane.xlu0 %6678
    %v6680 = vsub.f32 %v6676, %v6679
    %v6681 = vmul.f32 %v6680, 1.442695
    %v6682 = vpow.pop %v6681
    %v6683 = vsel %vm430, %v6682, 0.0
    %6684 = vadd.xlane.f32.xlu0 %v6683
    %v6685 = vpop.xlane.xlu0 %6684
    %v6686 = vrcp.pop %v6685
    %v6687 = vmul.f32 %v6682, %v6686
    %v6689 = vsel %vm430, %v6687, 0
    %6691 = vmatprep.subr.mxu0 0.0
    %6692 = vmatpush1.msra.mxu0 %v6592
    %6693 = vmatprep.subr.mxu0 0.0
    %6694 = vmatpush1.msra.mxu0 0.0
    %6695 = vmatprep.subr.mxu0 0.0
    %6696 = vmatpush1.msra.mxu0 0.0
    %6697 = vmatprep.subr.mxu0 0.0
    %6698 = vmatpush1.msra.mxu0 0.0
    %6699 = vmatprep.subr.mxu0 0.0
    %6700 = vmatpush1.msra.mxu0 0.0
    %6701 = vmatprep.subr.mxu0 0.0
    %6702 = vmatpush1.msra.mxu0 0.0
    %6703 = vmatprep.subr.mxu0 0.0
    %6704 = vmatpush1.msra.mxu0 0.0
    %6705 = vmatprep.subr.mxu0 0.0
    %6706 = vmatpush1.msra.mxu0 0.0
    %6707 = vmatprep.subr.mxu0 0.0
    %6708 = vmatpush1.msra.mxu0 0.0
    %6709 = vmatprep.subr.mxu0 0.0
    %6710 = vmatpush1.msra.mxu0 0.0
    %6711 = vmatprep.subr.mxu0 0.0
    %6712 = vmatpush1.msra.mxu0 0.0
    %6713 = vmatprep.subr.mxu0 0.0
    %6714 = vmatpush1.msra.mxu0 0.0
    %6715 = vmatprep.subr.mxu0 0.0
    %6716 = vmatpush1.msra.mxu0 0.0
    %6717 = vmatprep.subr.mxu0 0.0
    %6718 = vmatpush1.msra.mxu0 0.0
    %6719 = vmatprep.subr.mxu0 0.0
    %6720 = vmatpush1.msra.mxu0 0.0
    %6721 = vmatprep.subr.mxu0 0.0
    %6722 = vmatpush1.msra.mxu0 0.0
    %6723 = vmatprep.subr.mxu0 0.0
    %6724 = vmatpush1.msra.mxu0 0.0
    %6725 = vmatprep.subr.mxu0 0.0
    %6726 = vmatpush1.msra.mxu0 0.0
    %6727 = vmatprep.subr.mxu0 0.0
    %6728 = vmatpush1.msra.mxu0 0.0
    %6729 = vmatprep.subr.mxu0 0.0
    %6730 = vmatpush1.msra.mxu0 0.0
    %6731 = vmatprep.subr.mxu0 0.0
    %6732 = vmatpush1.msra.mxu0 0.0
    %6733 = vmatprep.subr.mxu0 0.0
    %6734 = vmatpush1.msra.mxu0 0.0
    %6735 = vmatprep.subr.mxu0 0.0
    %6736 = vmatpush1.msra.mxu0 0.0
    %6737 = vmatprep.subr.mxu0 0.0
    %6738 = vmatpush1.msra.mxu0 0.0
    %6739 = vmatprep.subr.mxu0 0.0
    %6740 = vmatpush1.msra.mxu0 0.0
    %6741 = vmatprep.subr.mxu0 0.0
    %6742 = vmatpush1.msra.mxu0 0.0
    %6743 = vmatprep.subr.mxu0 0.0
    %6744 = vmatpush1.msra.mxu0 0.0
    %6745 = vmatprep.subr.mxu0 0.0
    %6746 = vmatpush1.msra.mxu0 0.0
    %6747 = vmatprep.subr.mxu0 0.0
    %6748 = vmatpush1.msra.mxu0 0.0
    %6749 = vmatprep.subr.mxu0 0.0
    %6750 = vmatpush1.msra.mxu0 0.0
    %6751 = vmatprep.subr.mxu0 0.0
    %6752 = vmatpush1.msra.mxu0 0.0
    %6753 = vmatprep.subr.mxu0 0.0
    %6754 = vmatpush1.msra.mxu0 0.0
    %6755 = vmatprep.mubr.f32.mxu0 0.0
    %6756 = vmatmul.mubr.f32.gmra.mrb[0].mxu0 %v6689
    %v6757 = vpop.f32.mrb[0].mxu0
    %v6758 = vadd.f32 0.0, %v6757
    %v6759 = vpop.f32.mrb[0].mxu0
    %6760 = vdwg.mxu0
    %v6762 = vsel %vm430, %v6421, 0
    %v6765 = vsel %vm430, %v6509, 0
    %6767 = vmatprep.subr.mxu0 0.0
    %6768 = vmatpush1.xpose.msra.mxu0 %v6765
    %6769 = vmatprep.subr.mxu0 0.0
    %6770 = vmatpush1.xpose.msra.mxu0 0.0
    %6771 = vmatprep.subr.mxu0 0.0
    %6772 = vmatpush1.xpose.msra.mxu0 0.0
    %6773 = vmatprep.subr.mxu0 0.0
    %6774 = vmatpush1.xpose.msra.mxu0 0.0
    %6775 = vmatprep.subr.mxu0 0.0
    %6776 = vmatpush1.xpose.msra.mxu0 0.0
    %6777 = vmatprep.subr.mxu0 0.0
    %6778 = vmatpush1.xpose.msra.mxu0 0.0
    %6779 = vmatprep.subr.mxu0 0.0
    %6780 = vmatpush1.xpose.msra.mxu0 0.0
    %6781 = vmatprep.subr.mxu0 0.0
    %6782 = vmatpush1.xpose.msra.mxu0 0.0
    %6783 = vmatprep.subr.mxu0 0.0
    %6784 = vmatpush1.xpose.msra.mxu0 0.0
    %6785 = vmatprep.subr.mxu0 0.0
    %6786 = vmatpush1.xpose.msra.mxu0 0.0
    %6787 = vmatprep.subr.mxu0 0.0
    %6788 = vmatpush1.xpose.msra.mxu0 0.0
    %6789 = vmatprep.subr.mxu0 0.0
    %6790 = vmatpush1.xpose.msra.mxu0 0.0
    %6791 = vmatprep.subr.mxu0 0.0
    %6792 = vmatpush1.xpose.msra.mxu0 0.0
    %6793 = vmatprep.subr.mxu0 0.0
    %6794 = vmatpush1.xpose.msra.mxu0 0.0
    %6795 = vmatprep.subr.mxu0 0.0
    %6796 = vmatpush1.xpose.msra.mxu0 0.0
    %6797 = vmatprep.subr.mxu0 0.0
    %6798 = vmatpush1.xpose.msra.mxu0 0.0
    %6799 = vmatprep.subr.mxu0 0.0
    %6800 = vmatpush1.xpose.msra.mxu0 0.0
    %6801 = vmatprep.subr.mxu0 0.0
    %6802 = vmatpush1.xpose.msra.mxu0 0.0
    %6803 = vmatprep.subr.mxu0 0.0
    %6804 = vmatpush1.xpose.msra.mxu0 0.0
    %6805 = vmatprep.subr.mxu0 0.0
    %6806 = vmatpush1.xpose.msra.mxu0 0.0
    %6807 = vmatprep.subr.mxu0 0.0
    %6808 = vmatpush1.xpose.msra.mxu0 0.0
    %6809 = vmatprep.subr.mxu0 0.0
    %6810 = vmatpush1.xpose.msra.mxu0 0.0
    %6811 = vmatprep.subr.mxu0 0.0
    %6812 = vmatpush1.xpose.msra.mxu0 0.0
    %6813 = vmatprep.subr.mxu0 0.0
    %6814 = vmatpush1.xpose.msra.mxu0 0.0
    %6815 = vmatprep.subr.mxu0 0.0
    %6816 = vmatpush1.xpose.msra.mxu0 0.0
    %6817 = vmatprep.subr.mxu0 0.0
    %6818 = vmatpush1.xpose.msra.mxu0 0.0
    %6819 = vmatprep.subr.mxu0 0.0
    %6820 = vmatpush1.xpose.msra.mxu0 0.0
    %6821 = vmatprep.subr.mxu0 0.0
    %6822 = vmatpush1.xpose.msra.mxu0 0.0
    %6823 = vmatprep.subr.mxu0 0.0
    %6824 = vmatpush1.xpose.msra.mxu0 0.0
    %6825 = vmatprep.subr.mxu0 0.0
    %6826 = vmatpush1.xpose.msra.mxu0 0.0
    %6827 = vmatprep.subr.mxu0 0.0
    %6828 = vmatpush1.xpose.msra.mxu0 0.0
    %6829 = vmatprep.subr.mxu0 0.0
    %6830 = vmatpush1.xpose.msra.mxu0 0.0
    %6831 = vmatprep.mubr.f32.mxu0 0.0
    %6832 = vmatmul.mubr.f32.gmra.mrb[0].mxu0 %v6762
    %v6833 = vpop.f32.mrb[0].mxu0
    %v6834 = vadd.f32 0.0, %v6833
    %v6835 = vpop.f32.mrb[0].mxu0
    %6836 = vdwg.mxu0
    %v6837 = vmul.f32 %v6834, 0.35355338
    %v6838 = vsel %vm430, %v6837, -inf
    %6839 = vmax.xlane.f32.xlu0 %v6838
    %v6840 = vpop.xlane.xlu0 %6839
    %v6841 = vsub.f32 %v6837, %v6840
    %v6842 = vmul.f32 %v6841, 1.442695
    %v6843 = vpow.pop %v6842
    %v6844 = vsel %vm430, %v6843, 0.0
    %6845 = vadd.xlane.f32.xlu0 %v6844
    %v6846 = vpop.xlane.xlu0 %6845
    %v6847 = vrcp.pop %v6846
    %v6848 = vmul.f32 %v6843, %v6847
    %v6850 = vsel %vm430, %v6848, 0
    %6852 = vmatprep.subr.mxu0 0.0
    %6853 = vmatpush1.msra.mxu0 %v6597
    %6854 = vmatprep.subr.mxu0 0.0
    %6855 = vmatpush1.msra.mxu0 0.0
    %6856 = vmatprep.subr.mxu0 0.0
    %6857 = vmatpush1.msra.mxu0 0.0
    %6858 = vmatprep.subr.mxu0 0.0
    %6859 = vmatpush1.msra.mxu0 0.0
    %6860 = vmatprep.subr.mxu0 0.0
    %6861 = vmatpush1.msra.mxu0 0.0
    %6862 = vmatprep.subr.mxu0 0.0
    %6863 = vmatpush1.msra.mxu0 0.0
    %6864 = vmatprep.subr.mxu0 0.0
    %6865 = vmatpush1.msra.mxu0 0.0
    %6866 = vmatprep.subr.mxu0 0.0
    %6867 = vmatpush1.msra.mxu0 0.0
    %6868 = vmatprep.subr.mxu0 0.0
    %6869 = vmatpush1.msra.mxu0 0.0
    %6870 = vmatprep.subr.mxu0 0.0
    %6871 = vmatpush1.msra.mxu0 0.0
    %6872 = vmatprep.subr.mxu0 0.0
    %6873 = vmatpush1.msra.mxu0 0.0
    %6874 = vmatprep.subr.mxu0 0.0
    %6875 = vmatpush1.msra.mxu0 0.0
    %6876 = vmatprep.subr.mxu0 0.0
    %6877 = vmatpush1.msra.mxu0 0.0
    %6878 = vmatprep.subr.mxu0 0.0
    %6879 = vmatpush1.msra.mxu0 0.0
    %6880 = vmatprep.subr.mxu0 0.0
    %6881 = vmatpush1.msra.mxu0 0.0
    %6882 = vmatprep.subr.mxu0 0.0
    %6883 = vmatpush1.msra.mxu0 0.0
    %6884 = vmatprep.subr.mxu0 0.0
    %6885 = vmatpush1.msra.mxu0 0.0
    %6886 = vmatprep.subr.mxu0 0.0
    %6887 = vmatpush1.msra.mxu0 0.0
    %6888 = vmatprep.subr.mxu0 0.0
    %6889 = vmatpush1.msra.mxu0 0.0
    %6890 = vmatprep.subr.mxu0 0.0
    %6891 = vmatpush1.msra.mxu0 0.0
    %6892 = vmatprep.subr.mxu0 0.0
    %6893 = vmatpush1.msra.mxu0 0.0
    %6894 = vmatprep.subr.mxu0 0.0
    %6895 = vmatpush1.msra.mxu0 0.0
    %6896 = vmatprep.subr.mxu0 0.0
    %6897 = vmatpush1.msra.mxu0 0.0
    %6898 = vmatprep.subr.mxu0 0.0
    %6899 = vmatpush1.msra.mxu0 0.0
    %6900 = vmatprep.subr.mxu0 0.0
    %6901 = vmatpush1.msra.mxu0 0.0
    %6902 = vmatprep.subr.mxu0 0.0
    %6903 = vmatpush1.msra.mxu0 0.0
    %6904 = vmatprep.subr.mxu0 0.0
    %6905 = vmatpush1.msra.mxu0 0.0
    %6906 = vmatprep.subr.mxu0 0.0
    %6907 = vmatpush1.msra.mxu0 0.0
    %6908 = vmatprep.subr.mxu0 0.0
    %6909 = vmatpush1.msra.mxu0 0.0
    %6910 = vmatprep.subr.mxu0 0.0
    %6911 = vmatpush1.msra.mxu0 0.0
    %6912 = vmatprep.subr.mxu0 0.0
    %6913 = vmatpush1.msra.mxu0 0.0
    %6914 = vmatprep.subr.mxu0 0.0
    %6915 = vmatpush1.msra.mxu0 0.0
    %6916 = vmatprep.mubr.f32.mxu0 0.0
    %6917 = vmatmul.mubr.f32.gmra.mrb[0].mxu0 %v6850
    %v6918 = vpop.f32.mrb[0].mxu0
    %v6919 = vadd.f32 0.0, %v6918
    %v6920 = vpop.f32.mrb[0].mxu0
    %6921 = vdwg.mxu0
    %s6922 = scalar_lea.vmem %s10, 48
    %v6923 = vld [vmem:[%s6922] sm:$0xff]
    %v6925 = vsel %vm430, %v6758, 0
    %v6928 = vsel %vm430, %v6919, 0
    %6930 = vmatprep.subr.mxu0 0.0
    %6931 = vmatpush1.msra.mxu0 %v6923
    %6932 = vmatprep.subr.mxu0 0.0
    %6933 = vmatpush1.msra.mxu0 0.0
    %6934 = vmatprep.subr.mxu0 0.0
    %6935 = vmatpush1.msra.mxu0 0.0
    %6936 = vmatprep.subr.mxu0 0.0
    %6937 = vmatpush1.msra.mxu0 0.0
    %6938 = vmatprep.subr.mxu0 0.0
    %6939 = vmatpush1.msra.mxu0 0.0
    %6940 = vmatprep.subr.mxu0 0.0
    %6941 = vmatpush1.msra.mxu0 0.0
    %6942 = vmatprep.subr.mxu0 0.0
    %6943 = vmatpush1.msra.mxu0 0.0
    %6944 = vmatprep.subr.mxu0 0.0
    %6945 = vmatpush1.msra.mxu0 0.0
    %6946 = vmatprep.subr.mxu0 0.0
    %6947 = vmatpush1.msra.mxu0 0.0
    %6948 = vmatprep.subr.mxu0 0.0
    %6949 = vmatpush1.msra.mxu0 0.0
    %6950 = vmatprep.subr.mxu0 0.0
    %6951 = vmatpush1.msra.mxu0 0.0
    %6952 = vmatprep.subr.mxu0 0.0
    %6953 = vmatpush1.msra.mxu0 0.0
    %6954 = vmatprep.subr.mxu0 0.0
    %6955 = vmatpush1.msra.mxu0 0.0
    %6956 = vmatprep.subr.mxu0 0.0
    %6957 = vmatpush1.msra.mxu0 0.0
    %6958 = vmatprep.subr.mxu0 0.0
    %6959 = vmatpush1.msra.mxu0 0.0
    %6960 = vmatprep.subr.mxu0 0.0
    %6961 = vmatpush1.msra.mxu0 0.0
    %6962 = vmatprep.subr.mxu0 0.0
    %6963 = vmatpush1.msra.mxu0 0.0
    %6964 = vmatprep.subr.mxu0 0.0
    %6965 = vmatpush1.msra.mxu0 0.0
    %6966 = vmatprep.subr.mxu0 0.0
    %6967 = vmatpush1.msra.mxu0 0.0
    %6968 = vmatprep.subr.mxu0 0.0
    %6969 = vmatpush1.msra.mxu0 0.0
    %6970 = vmatprep.subr.mxu0 0.0
    %6971 = vmatpush1.msra.mxu0 0.0
    %6972 = vmatprep.subr.mxu0 0.0
    %6973 = vmatpush1.msra.mxu0 0.0
    %6974 = vmatprep.subr.mxu0 0.0
    %6975 = vmatpush1.msra.mxu0 0.0
    %6976 = vmatprep.subr.mxu0 0.0
    %6977 = vmatpush1.msra.mxu0 0.0
    %6978 = vmatprep.subr.mxu0 0.0
    %6979 = vmatpush1.msra.mxu0 0.0
    %6980 = vmatprep.subr.mxu0 0.0
    %6981 = vmatpush1.msra.mxu0 0.0
    %6982 = vmatprep.subr.mxu0 0.0
    %6983 = vmatpush1.msra.mxu0 0.0
    %6984 = vmatprep.subr.mxu0 0.0
    %6985 = vmatpush1.msra.mxu0 0.0
    %6986 = vmatprep.subr.mxu0 0.0
    %6987 = vmatpush1.msra.mxu0 0.0
    %6988 = vmatprep.subr.mxu0 0.0
    %6989 = vmatpush1.msra.mxu0 0.0
    %6990 = vmatprep.subr.mxu0 0.0
    %6991 = vmatpush1.msra.mxu0 0.0
    %6992 = vmatprep.subr.mxu0 0.0
    %6993 = vmatpush1.msra.mxu0 0.0
    %6994 = vmatprep.mubr.f32.mxu0 0.0
    %6995 = vmatmul.mubr.f32.gmra.mrb[0].mxu0 %v6925
    %v6996 = vpop.f32.mrb[0].mxu0
    %v6997 = vadd.f32 0.0, %v6996
    %v6998 = vpop.f32.mrb[0].mxu0
    %6999 = vmatprep.mubr.f32.mxu0 0.0
    %7000 = vmatmul.mubr.f32.gmra.mrb[0].mxu0 %v6928
    %v7001 = vpop.f32.mrb[0].mxu0
    %v7002 = vadd.f32 0.0, %v7001
    %v7003 = vpop.f32.mrb[0].mxu0
    %7004 = vdwg.mxu0
    %v7005 = vadd.f32 %v6334, %v6997
    %v7006 = vadd.f32 %v6335, %v7002
    %s7007 = scalar_lea.vmem %s4, 224
    %v7008 = vld [vmem:[%s7007] sm:$0xff]
    %v7009 = vld [vmem:[%s7007 + $0x8] sm:$0xff]
    %v7010 = vld [vmem:[%s7007 + $0x10] sm:$0xff]
    %v7011 = vld [vmem:[%s7007 + $0x18] sm:$0xff]
    %s7012 = scalar_lea.vmem %s5, 7
    %v7013 = vld [vmem:[%s7012] sm:$0x1]
    %v7015 = vlaneseq
    %v7016 = vshrl.u32 %v7015, 7
    %v7017 = vsub.s32 0, %v7016
    %v7018 = vrot.slane %v7013, %v7017
    %7020 = vmatprep.subr.mxu0 0.0
    %7021 = vmatpush1.msra.mxu0 %v7008
    %7022 = vmatprep.subr.mxu0 0.0
    %7023 = vmatpush1.msra.mxu0 %v7009
    %7024 = vmatprep.subr.mxu0 0.0
    %7025 = vmatpush1.msra.mxu0 %v7010
    %7026 = vmatprep.subr.mxu0 0.0
    %7027 = vmatpush1.msra.mxu0 %v7011
    %7028 = vmatprep.subr.mxu0 0.0
    %7029 = vmatpush1.msra.mxu0 0.0
    %7030 = vmatprep.subr.mxu0 0.0
    %7031 = vmatpush1.msra.mxu0 0.0
    %7032 = vmatprep.subr.mxu0 0.0
    %7033 = vmatpush1.msra.mxu0 0.0
    %7034 = vmatprep.subr.mxu0 0.0
    %7035 = vmatpush1.msra.mxu0 0.0
    %7036 = vmatprep.subr.mxu0 0.0
    %7037 = vmatpush1.msra.mxu0 0.0
    %7038 = vmatprep.subr.mxu0 0.0
    %7039 = vmatpush1.msra.mxu0 0.0
    %7040 = vmatprep.subr.mxu0 0.0
    %7041 = vmatpush1.msra.mxu0 0.0
    %7042 = vmatprep.subr.mxu0 0.0
    %7043 = vmatpush1.msra.mxu0 0.0
    %7044 = vmatprep.subr.mxu0 0.0
    %7045 = vmatpush1.msra.mxu0 0.0
    %7046 = vmatprep.subr.mxu0 0.0
    %7047 = vmatpush1.msra.mxu0 0.0
    %7048 = vmatprep.subr.mxu0 0.0
    %7049 = vmatpush1.msra.mxu0 0.0
    %7050 = vmatprep.subr.mxu0 0.0
    %7051 = vmatpush1.msra.mxu0 0.0
    %7052 = vmatprep.subr.mxu0 0.0
    %7053 = vmatpush1.msra.mxu0 0.0
    %7054 = vmatprep.subr.mxu0 0.0
    %7055 = vmatpush1.msra.mxu0 0.0
    %7056 = vmatprep.subr.mxu0 0.0
    %7057 = vmatpush1.msra.mxu0 0.0
    %7058 = vmatprep.subr.mxu0 0.0
    %7059 = vmatpush1.msra.mxu0 0.0
    %7060 = vmatprep.subr.mxu0 0.0
    %7061 = vmatpush1.msra.mxu0 0.0
    %7062 = vmatprep.subr.mxu0 0.0
    %7063 = vmatpush1.msra.mxu0 0.0
    %7064 = vmatprep.subr.mxu0 0.0
    %7065 = vmatpush1.msra.mxu0 0.0
    %7066 = vmatprep.subr.mxu0 0.0
    %7067 = vmatpush1.msra.mxu0 0.0
    %7068 = vmatprep.subr.mxu0 0.0
    %7069 = vmatpush1.msra.mxu0 0.0
    %7070 = vmatprep.subr.mxu0 0.0
    %7071 = vmatpush1.msra.mxu0 0.0
    %7072 = vmatprep.subr.mxu0 0.0
    %7073 = vmatpush1.msra.mxu0 0.0
    %7074 = vmatprep.subr.mxu0 0.0
    %7075 = vmatpush1.msra.mxu0 0.0
    %7076 = vmatprep.subr.mxu0 0.0
    %7077 = vmatpush1.msra.mxu0 0.0
    %7078 = vmatprep.subr.mxu0 0.0
    %7079 = vmatpush1.msra.mxu0 0.0
    %7080 = vmatprep.subr.mxu0 0.0
    %7081 = vmatpush1.msra.mxu0 0.0
    %7082 = vmatprep.subr.mxu0 0.0
    %7083 = vmatpush1.msra.mxu0 0.0
    %7084 = vmatprep.mubr.f32.mxu0 0.0
    %7085 = vmatmul.mubr.f32.gmra.mrb[0].mxu0 %v4996
    %v7086 = vpop.f32.mrb[0].mxu0
    %v7087 = vadd.f32 %v7018, %v7086
    %v7088 = vpop.f32.mrb[0].mxu0
    %7089 = vmatprep.mubr.f32.mxu0 0.0
    %7090 = vmatmul.mubr.f32.gmra.mrb[0].mxu0 %v4999
    %v7091 = vpop.f32.mrb[0].mxu0
    %v7092 = vadd.f32 %v7018, %v7091
    %v7093 = vpop.f32.mrb[0].mxu0
    %7094 = vdwg.mxu0
    %s7095 = scalar_lea.vmem %s6, 224
    %v7096 = vld [vmem:[%s7095] sm:$0xff]
    %v7097 = vld [vmem:[%s7095 + $0x8] sm:$0xff]
    %v7098 = vld [vmem:[%s7095 + $0x10] sm:$0xff]
    %v7099 = vld [vmem:[%s7095 + $0x18] sm:$0xff]
    %s7100 = scalar_lea.vmem %s7, 7
    %v7101 = vld [vmem:[%s7100] sm:$0x1]
    %v7103 = vlaneseq
    %v7104 = vshrl.u32 %v7103, 7
    %v7105 = vsub.s32 0, %v7104
    %v7106 = vrot.slane %v7101, %v7105
    %7108 = vmatprep.subr.mxu0 0.0
    %7109 = vmatpush1.msra.mxu0 %v7096
    %7110 = vmatprep.subr.mxu0 0.0
    %7111 = vmatpush1.msra.mxu0 %v7097
    %7112 = vmatprep.subr.mxu0 0.0
    %7113 = vmatpush1.msra.mxu0 %v7098
    %7114 = vmatprep.subr.mxu0 0.0
    %7115 = vmatpush1.msra.mxu0 %v7099
    %7116 = vmatprep.subr.mxu0 0.0
    %7117 = vmatpush1.msra.mxu0 0.0
    %7118 = vmatprep.subr.mxu0 0.0
    %7119 = vmatpush1.msra.mxu0 0.0
    %7120 = vmatprep.subr.mxu0 0.0
    %7121 = vmatpush1.msra.mxu0 0.0
    %7122 = vmatprep.subr.mxu0 0.0
    %7123 = vmatpush1.msra.mxu0 0.0
    %7124 = vmatprep.subr.mxu0 0.0
    %7125 = vmatpush1.msra.mxu0 0.0
    %7126 = vmatprep.subr.mxu0 0.0
    %7127 = vmatpush1.msra.mxu0 0.0
    %7128 = vmatprep.subr.mxu0 0.0
    %7129 = vmatpush1.msra.mxu0 0.0
    %7130 = vmatprep.subr.mxu0 0.0
    %7131 = vmatpush1.msra.mxu0 0.0
    %7132 = vmatprep.subr.mxu0 0.0
    %7133 = vmatpush1.msra.mxu0 0.0
    %7134 = vmatprep.subr.mxu0 0.0
    %7135 = vmatpush1.msra.mxu0 0.0
    %7136 = vmatprep.subr.mxu0 0.0
    %7137 = vmatpush1.msra.mxu0 0.0
    %7138 = vmatprep.subr.mxu0 0.0
    %7139 = vmatpush1.msra.mxu0 0.0
    %7140 = vmatprep.subr.mxu0 0.0
    %7141 = vmatpush1.msra.mxu0 0.0
    %7142 = vmatprep.subr.mxu0 0.0
    %7143 = vmatpush1.msra.mxu0 0.0
    %7144 = vmatprep.subr.mxu0 0.0
    %7145 = vmatpush1.msra.mxu0 0.0
    %7146 = vmatprep.subr.mxu0 0.0
    %7147 = vmatpush1.msra.mxu0 0.0
    %7148 = vmatprep.subr.mxu0 0.0
    %7149 = vmatpush1.msra.mxu0 0.0
    %7150 = vmatprep.subr.mxu0 0.0
    %7151 = vmatpush1.msra.mxu0 0.0
    %7152 = vmatprep.subr.mxu0 0.0
    %7153 = vmatpush1.msra.mxu0 0.0
    %7154 = vmatprep.subr.mxu0 0.0
    %7155 = vmatpush1.msra.mxu0 0.0
    %7156 = vmatprep.subr.mxu0 0.0
    %7157 = vmatpush1.msra.mxu0 0.0
    %7158 = vmatprep.subr.mxu0 0.0
    %7159 = vmatpush1.msra.mxu0 0.0
    %7160 = vmatprep.subr.mxu0 0.0
    %7161 = vmatpush1.msra.mxu0 0.0
    %7162 = vmatprep.subr.mxu0 0.0
    %7163 = vmatpush1.msra.mxu0 0.0
    %7164 = vmatprep.subr.mxu0 0.0
    %7165 = vmatpush1.msra.mxu0 0.0
    %7166 = vmatprep.subr.mxu0 0.0
    %7167 = vmatpush1.msra.mxu0 0.0
    %7168 = vmatprep.subr.mxu0 0.0
    %7169 = vmatpush1.msra.mxu0 0.0
    %7170 = vmatprep.subr.mxu0 0.0
    %7171 = vmatpush1.msra.mxu0 0.0
    %7172 = vmatprep.mubr.f32.mxu0 0.0
    %7173 = vmatmul.mubr.f32.gmra.mrb[0].mxu0 %v4996
    %v7174 = vpop.f32.mrb[0].mxu0
    %v7175 = vadd.f32 %v7106, %v7174
    %v7176 = vpop.f32.mrb[0].mxu0
    %7177 = vmatprep.mubr.f32.mxu0 0.0
    %7178 = vmatmul.mubr.f32.gmra.mrb[0].mxu0 %v4999
    %v7179 = vpop.f32.mrb[0].mxu0
    %v7180 = vadd.f32 %v7106, %v7179
    %v7181 = vpop.f32.mrb[0].mxu0
    %7182 = vdwg.mxu0
    %s7183 = scalar_lea.vmem %s8, 224
    %v7184 = vld [vmem:[%s7183] sm:$0xff]
    %v7185 = vld [vmem:[%s7183 + $0x8] sm:$0xff]
    %v7186 = vld [vmem:[%s7183 + $0x10] sm:$0xff]
    %v7187 = vld [vmem:[%s7183 + $0x18] sm:$0xff]
    %s7188 = scalar_lea.vmem %s9, 7
    %v7189 = vld [vmem:[%s7188] sm:$0x1]
    %v7191 = vlaneseq
    %v7192 = vshrl.u32 %v7191, 7
    %v7193 = vsub.s32 0, %v7192
    %v7194 = vrot.slane %v7189, %v7193
    %7196 = vmatprep.subr.mxu0 0.0
    %7197 = vmatpush1.msra.mxu0 %v7184
    %7198 = vmatprep.subr.mxu0 0.0
    %7199 = vmatpush1.msra.mxu0 %v7185
    %7200 = vmatprep.subr.mxu0 0.0
    %7201 = vmatpush1.msra.mxu0 %v7186
    %7202 = vmatprep.subr.mxu0 0.0
    %7203 = vmatpush1.msra.mxu0 %v7187
    %7204 = vmatprep.subr.mxu0 0.0
    %7205 = vmatpush1.msra.mxu0 0.0
    %7206 = vmatprep.subr.mxu0 0.0
    %7207 = vmatpush1.msra.mxu0 0.0
    %7208 = vmatprep.subr.mxu0 0.0
    %7209 = vmatpush1.msra.mxu0 0.0
    %7210 = vmatprep.subr.mxu0 0.0
    %7211 = vmatpush1.msra.mxu0 0.0
    %7212 = vmatprep.subr.mxu0 0.0
    %7213 = vmatpush1.msra.mxu0 0.0
    %7214 = vmatprep.subr.mxu0 0.0
    %7215 = vmatpush1.msra.mxu0 0.0
    %7216 = vmatprep.subr.mxu0 0.0
    %7217 = vmatpush1.msra.mxu0 0.0
    %7218 = vmatprep.subr.mxu0 0.0
    %7219 = vmatpush1.msra.mxu0 0.0
    %7220 = vmatprep.subr.mxu0 0.0
    %7221 = vmatpush1.msra.mxu0 0.0
    %7222 = vmatprep.subr.mxu0 0.0
    %7223 = vmatpush1.msra.mxu0 0.0
    %7224 = vmatprep.subr.mxu0 0.0
    %7225 = vmatpush1.msra.mxu0 0.0
    %7226 = vmatprep.subr.mxu0 0.0
    %7227 = vmatpush1.msra.mxu0 0.0
    %7228 = vmatprep.subr.mxu0 0.0
    %7229 = vmatpush1.msra.mxu0 0.0
    %7230 = vmatprep.subr.mxu0 0.0
    %7231 = vmatpush1.msra.mxu0 0.0
    %7232 = vmatprep.subr.mxu0 0.0
    %7233 = vmatpush1.msra.mxu0 0.0
    %7234 = vmatprep.subr.mxu0 0.0
    %7235 = vmatpush1.msra.mxu0 0.0
    %7236 = vmatprep.subr.mxu0 0.0
    %7237 = vmatpush1.msra.mxu0 0.0
    %7238 = vmatprep.subr.mxu0 0.0
    %7239 = vmatpush1.msra.mxu0 0.0
    %7240 = vmatprep.subr.mxu0 0.0
    %7241 = vmatpush1.msra.mxu0 0.0
    %7242 = vmatprep.subr.mxu0 0.0
    %7243 = vmatpush1.msra.mxu0 0.0
    %7244 = vmatprep.subr.mxu0 0.0
    %7245 = vmatpush1.msra.mxu0 0.0
    %7246 = vmatprep.subr.mxu0 0.0
    %7247 = vmatpush1.msra.mxu0 0.0
    %7248 = vmatprep.subr.mxu0 0.0
    %7249 = vmatpush1.msra.mxu0 0.0
    %7250 = vmatprep.subr.mxu0 0.0
    %7251 = vmatpush1.msra.mxu0 0.0
    %7252 = vmatprep.subr.mxu0 0.0
    %7253 = vmatpush1.msra.mxu0 0.0
    %7254 = vmatprep.subr.mxu0 0.0
    %7255 = vmatpush1.msra.mxu0 0.0
    %7256 = vmatprep.subr.mxu0 0.0
    %7257 = vmatpush1.msra.mxu0 0.0
    %7258 = vmatprep.subr.mxu0 0.0
    %7259 = vmatpush1.msra.mxu0 0.0
    %7260 = vmatprep.mubr.f32.mxu0 0.0
    %7261 = vmatmul.mubr.f32.gmra.mrb[0].mxu0 %v4996
    %v7262 = vpop.f32.mrb[0].mxu0
    %v7263 = vadd.f32 %v7194, %v7262
    %v7264 = vpop.f32.mrb[0].mxu0
    %7265 = vmatprep.mubr.f32.mxu0 0.0
    %7266 = vmatmul.mubr.f32.gmra.mrb[0].mxu0 %v4999
    %v7267 = vpop.f32.mrb[0].mxu0
    %v7268 = vadd.f32 %v7194, %v7267
    %v7269 = vpop.f32.mrb[0].mxu0
    %7270 = vdwg.mxu0
    %v7272 = vsel %vm430, %v7087, 0
    %v7275 = vsel %vm430, %v7175, 0
    %7277 = vmatprep.subr.mxu0 0.0
    %7278 = vmatpush1.xpose.msra.mxu0 %v7275
    %7279 = vmatprep.subr.mxu0 0.0
    %7280 = vmatpush1.xpose.msra.mxu0 0.0
    %7281 = vmatprep.subr.mxu0 0.0
    %7282 = vmatpush1.xpose.msra.mxu0 0.0
    %7283 = vmatprep.subr.mxu0 0.0
    %7284 = vmatpush1.xpose.msra.mxu0 0.0
    %7285 = vmatprep.subr.mxu0 0.0
    %7286 = vmatpush1.xpose.msra.mxu0 0.0
    %7287 = vmatprep.subr.mxu0 0.0
    %7288 = vmatpush1.xpose.msra.mxu0 0.0
    %7289 = vmatprep.subr.mxu0 0.0
    %7290 = vmatpush1.xpose.msra.mxu0 0.0
    %7291 = vmatprep.subr.mxu0 0.0
    %7292 = vmatpush1.xpose.msra.mxu0 0.0
    %7293 = vmatprep.subr.mxu0 0.0
    %7294 = vmatpush1.xpose.msra.mxu0 0.0
    %7295 = vmatprep.subr.mxu0 0.0
    %7296 = vmatpush1.xpose.msra.mxu0 0.0
    %7297 = vmatprep.subr.mxu0 0.0
    %7298 = vmatpush1.xpose.msra.mxu0 0.0
    %7299 = vmatprep.subr.mxu0 0.0
    %7300 = vmatpush1.xpose.msra.mxu0 0.0
    %7301 = vmatprep.subr.mxu0 0.0
    %7302 = vmatpush1.xpose.msra.mxu0 0.0
    %7303 = vmatprep.subr.mxu0 0.0
    %7304 = vmatpush1.xpose.msra.mxu0 0.0
    %7305 = vmatprep.subr.mxu0 0.0
    %7306 = vmatpush1.xpose.msra.mxu0 0.0
    %7307 = vmatprep.subr.mxu0 0.0
    %7308 = vmatpush1.xpose.msra.mxu0 0.0
    %7309 = vmatprep.subr.mxu0 0.0
    %7310 = vmatpush1.xpose.msra.mxu0 0.0
    %7311 = vmatprep.subr.mxu0 0.0
    %7312 = vmatpush1.xpose.msra.mxu0 0.0
    %7313 = vmatprep.subr.mxu0 0.0
    %7314 = vmatpush1.xpose.msra.mxu0 0.0
    %7315 = vmatprep.subr.mxu0 0.0
    %7316 = vmatpush1.xpose.msra.mxu0 0.0
    %7317 = vmatprep.subr.mxu0 0.0
    %7318 = vmatpush1.xpose.msra.mxu0 0.0
    %7319 = vmatprep.subr.mxu0 0.0
    %7320 = vmatpush1.xpose.msra.mxu0 0.0
    %7321 = vmatprep.subr.mxu0 0.0
    %7322 = vmatpush1.xpose.msra.mxu0 0.0
    %7323 = vmatprep.subr.mxu0 0.0
    %7324 = vmatpush1.xpose.msra.mxu0 0.0
    %7325 = vmatprep.subr.mxu0 0.0
    %7326 = vmatpush1.xpose.msra.mxu0 0.0
    %7327 = vmatprep.subr.mxu0 0.0
    %7328 = vmatpush1.xpose.msra.mxu0 0.0
    %7329 = vmatprep.subr.mxu0 0.0
    %7330 = vmatpush1.xpose.msra.mxu0 0.0
    %7331 = vmatprep.subr.mxu0 0.0
    %7332 = vmatpush1.xpose.msra.mxu0 0.0
    %7333 = vmatprep.subr.mxu0 0.0
    %7334 = vmatpush1.xpose.msra.mxu0 0.0
    %7335 = vmatprep.subr.mxu0 0.0
    %7336 = vmatpush1.xpose.msra.mxu0 0.0
    %7337 = vmatprep.subr.mxu0 0.0
    %7338 = vmatpush1.xpose.msra.mxu0 0.0
    %7339 = vmatprep.subr.mxu0 0.0
    %7340 = vmatpush1.xpose.msra.mxu0 0.0
    %7341 = vmatprep.mubr.f32.mxu0 0.0
    %7342 = vmatmul.mubr.f32.gmra.mrb[0].mxu0 %v7272
    %v7343 = vpop.f32.mrb[0].mxu0
    %v7344 = vadd.f32 0.0, %v7343
    %v7345 = vpop.f32.mrb[0].mxu0
    %7346 = vdwg.mxu0
    %v7347 = vmul.f32 %v7344, 0.35355338
    %v7348 = vsel %vm430, %v7347, -inf
    %7349 = vmax.xlane.f32.xlu0 %v7348
    %v7350 = vpop.xlane.xlu0 %7349
    %v7351 = vsub.f32 %v7347, %v7350
    %v7352 = vmul.f32 %v7351, 1.442695
    %v7353 = vpow.pop %v7352
    %v7354 = vsel %vm430, %v7353, 0.0
    %7355 = vadd.xlane.f32.xlu0 %v7354
    %v7356 = vpop.xlane.xlu0 %7355
    %v7357 = vrcp.pop %v7356
    %v7358 = vmul.f32 %v7353, %v7357
    %v7360 = vsel %vm430, %v7358, 0
    %7362 = vmatprep.subr.mxu0 0.0
    %7363 = vmatpush1.msra.mxu0 %v7263
    %7364 = vmatprep.subr.mxu0 0.0
    %7365 = vmatpush1.msra.mxu0 0.0
    %7366 = vmatprep.subr.mxu0 0.0
    %7367 = vmatpush1.msra.mxu0 0.0
    %7368 = vmatprep.subr.mxu0 0.0
    %7369 = vmatpush1.msra.mxu0 0.0
    %7370 = vmatprep.subr.mxu0 0.0
    %7371 = vmatpush1.msra.mxu0 0.0
    %7372 = vmatprep.subr.mxu0 0.0
    %7373 = vmatpush1.msra.mxu0 0.0
    %7374 = vmatprep.subr.mxu0 0.0
    %7375 = vmatpush1.msra.mxu0 0.0
    %7376 = vmatprep.subr.mxu0 0.0
    %7377 = vmatpush1.msra.mxu0 0.0
    %7378 = vmatprep.subr.mxu0 0.0
    %7379 = vmatpush1.msra.mxu0 0.0
    %7380 = vmatprep.subr.mxu0 0.0
    %7381 = vmatpush1.msra.mxu0 0.0
    %7382 = vmatprep.subr.mxu0 0.0
    %7383 = vmatpush1.msra.mxu0 0.0
    %7384 = vmatprep.subr.mxu0 0.0
    %7385 = vmatpush1.msra.mxu0 0.0
    %7386 = vmatprep.subr.mxu0 0.0
    %7387 = vmatpush1.msra.mxu0 0.0
    %7388 = vmatprep.subr.mxu0 0.0
    %7389 = vmatpush1.msra.mxu0 0.0
    %7390 = vmatprep.subr.mxu0 0.0
    %7391 = vmatpush1.msra.mxu0 0.0
    %7392 = vmatprep.subr.mxu0 0.0
    %7393 = vmatpush1.msra.mxu0 0.0
    %7394 = vmatprep.subr.mxu0 0.0
    %7395 = vmatpush1.msra.mxu0 0.0
    %7396 = vmatprep.subr.mxu0 0.0
    %7397 = vmatpush1.msra.mxu0 0.0
    %7398 = vmatprep.subr.mxu0 0.0
    %7399 = vmatpush1.msra.mxu0 0.0
    %7400 = vmatprep.subr.mxu0 0.0
    %7401 = vmatpush1.msra.mxu0 0.0
    %7402 = vmatprep.subr.mxu0 0.0
    %7403 = vmatpush1.msra.mxu0 0.0
    %7404 = vmatprep.subr.mxu0 0.0
    %7405 = vmatpush1.msra.mxu0 0.0
    %7406 = vmatprep.subr.mxu0 0.0
    %7407 = vmatpush1.msra.mxu0 0.0
    %7408 = vmatprep.subr.mxu0 0.0
    %7409 = vmatpush1.msra.mxu0 0.0
    %7410 = vmatprep.subr.mxu0 0.0
    %7411 = vmatpush1.msra.mxu0 0.0
    %7412 = vmatprep.subr.mxu0 0.0
    %7413 = vmatpush1.msra.mxu0 0.0
    %7414 = vmatprep.subr.mxu0 0.0
    %7415 = vmatpush1.msra.mxu0 0.0
    %7416 = vmatprep.subr.mxu0 0.0
    %7417 = vmatpush1.msra.mxu0 0.0
    %7418 = vmatprep.subr.mxu0 0.0
    %7419 = vmatpush1.msra.mxu0 0.0
    %7420 = vmatprep.subr.mxu0 0.0
    %7421 = vmatpush1.msra.mxu0 0.0
    %7422 = vmatprep.subr.mxu0 0.0
    %7423 = vmatpush1.msra.mxu0 0.0
    %7424 = vmatprep.subr.mxu0 0.0
    %7425 = vmatpush1.msra.mxu0 0.0
    %7426 = vmatprep.mubr.f32.mxu0 0.0
    %7427 = vmatmul.mubr.f32.gmra.mrb[0].mxu0 %v7360
    %v7428 = vpop.f32.mrb[0].mxu0
    %v7429 = vadd.f32 0.0, %v7428
    %v7430 = vpop.f32.mrb[0].mxu0
    %7431 = vdwg.mxu0
    %v7433 = vsel %vm430, %v7092, 0
    %v7436 = vsel %vm430, %v7180, 0
    %7438 = vmatprep.subr.mxu0 0.0
    %7439 = vmatpush1.xpose.msra.mxu0 %v7436
    %7440 = vmatprep.subr.mxu0 0.0
    %7441 = vmatpush1.xpose.msra.mxu0 0.0
    %7442 = vmatprep.subr.mxu0 0.0
    %7443 = vmatpush1.xpose.msra.mxu0 0.0
    %7444 = vmatprep.subr.mxu0 0.0
    %7445 = vmatpush1.xpose.msra.mxu0 0.0
    %7446 = vmatprep.subr.mxu0 0.0
    %7447 = vmatpush1.xpose.msra.mxu0 0.0
    %7448 = vmatprep.subr.mxu0 0.0
    %7449 = vmatpush1.xpose.msra.mxu0 0.0
    %7450 = vmatprep.subr.mxu0 0.0
    %7451 = vmatpush1.xpose.msra.mxu0 0.0
    %7452 = vmatprep.subr.mxu0 0.0
    %7453 = vmatpush1.xpose.msra.mxu0 0.0
    %7454 = vmatprep.subr.mxu0 0.0
    %7455 = vmatpush1.xpose.msra.mxu0 0.0
    %7456 = vmatprep.subr.mxu0 0.0
    %7457 = vmatpush1.xpose.msra.mxu0 0.0
    %7458 = vmatprep.subr.mxu0 0.0
    %7459 = vmatpush1.xpose.msra.mxu0 0.0
    %7460 = vmatprep.subr.mxu0 0.0
    %7461 = vmatpush1.xpose.msra.mxu0 0.0
    %7462 = vmatprep.subr.mxu0 0.0
    %7463 = vmatpush1.xpose.msra.mxu0 0.0
    %7464 = vmatprep.subr.mxu0 0.0
    %7465 = vmatpush1.xpose.msra.mxu0 0.0
    %7466 = vmatprep.subr.mxu0 0.0
    %7467 = vmatpush1.xpose.msra.mxu0 0.0
    %7468 = vmatprep.subr.mxu0 0.0
    %7469 = vmatpush1.xpose.msra.mxu0 0.0
    %7470 = vmatprep.subr.mxu0 0.0
    %7471 = vmatpush1.xpose.msra.mxu0 0.0
    %7472 = vmatprep.subr.mxu0 0.0
    %7473 = vmatpush1.xpose.msra.mxu0 0.0
    %7474 = vmatprep.subr.mxu0 0.0
    %7475 = vmatpush1.xpose.msra.mxu0 0.0
    %7476 = vmatprep.subr.mxu0 0.0
    %7477 = vmatpush1.xpose.msra.mxu0 0.0
    %7478 = vmatprep.subr.mxu0 0.0
    %7479 = vmatpush1.xpose.msra.mxu0 0.0
    %7480 = vmatprep.subr.mxu0 0.0
    %7481 = vmatpush1.xpose.msra.mxu0 0.0
    %7482 = vmatprep.subr.mxu0 0.0
    %7483 = vmatpush1.xpose.msra.mxu0 0.0
    %7484 = vmatprep.subr.mxu0 0.0
    %7485 = vmatpush1.xpose.msra.mxu0 0.0
    %7486 = vmatprep.subr.mxu0 0.0
    %7487 = vmatpush1.xpose.msra.mxu0 0.0
    %7488 = vmatprep.subr.mxu0 0.0
    %7489 = vmatpush1.xpose.msra.mxu0 0.0
    %7490 = vmatprep.subr.mxu0 0.0
    %7491 = vmatpush1.xpose.msra.mxu0 0.0
    %7492 = vmatprep.subr.mxu0 0.0
    %7493 = vmatpush1.xpose.msra.mxu0 0.0
    %7494 = vmatprep.subr.mxu0 0.0
    %7495 = vmatpush1.xpose.msra.mxu0 0.0
    %7496 = vmatprep.subr.mxu0 0.0
    %7497 = vmatpush1.xpose.msra.mxu0 0.0
    %7498 = vmatprep.subr.mxu0 0.0
    %7499 = vmatpush1.xpose.msra.mxu0 0.0
    %7500 = vmatprep.subr.mxu0 0.0
    %7501 = vmatpush1.xpose.msra.mxu0 0.0
    %7502 = vmatprep.mubr.f32.mxu0 0.0
    %7503 = vmatmul.mubr.f32.gmra.mrb[0].mxu0 %v7433
    %v7504 = vpop.f32.mrb[0].mxu0
    %v7505 = vadd.f32 0.0, %v7504
    %v7506 = vpop.f32.mrb[0].mxu0
    %7507 = vdwg.mxu0
    %v7508 = vmul.f32 %v7505, 0.35355338
    %v7509 = vsel %vm430, %v7508, -inf
    %7510 = vmax.xlane.f32.xlu0 %v7509
    %v7511 = vpop.xlane.xlu0 %7510
    %v7512 = vsub.f32 %v7508, %v7511
    %v7513 = vmul.f32 %v7512, 1.442695
    %v7514 = vpow.pop %v7513
    %v7515 = vsel %vm430, %v7514, 0.0
    %7516 = vadd.xlane.f32.xlu0 %v7515
    %v7517 = vpop.xlane.xlu0 %7516
    %v7518 = vrcp.pop %v7517
    %v7519 = vmul.f32 %v7514, %v7518
    %v7521 = vsel %vm430, %v7519, 0
    %7523 = vmatprep.subr.mxu0 0.0
    %7524 = vmatpush1.msra.mxu0 %v7268
    %7525 = vmatprep.subr.mxu0 0.0
    %7526 = vmatpush1.msra.mxu0 0.0
    %7527 = vmatprep.subr.mxu0 0.0
    %7528 = vmatpush1.msra.mxu0 0.0
    %7529 = vmatprep.subr.mxu0 0.0
    %7530 = vmatpush1.msra.mxu0 0.0
    %7531 = vmatprep.subr.mxu0 0.0
    %7532 = vmatpush1.msra.mxu0 0.0
    %7533 = vmatprep.subr.mxu0 0.0
    %7534 = vmatpush1.msra.mxu0 0.0
    %7535 = vmatprep.subr.mxu0 0.0
    %7536 = vmatpush1.msra.mxu0 0.0
    %7537 = vmatprep.subr.mxu0 0.0
    %7538 = vmatpush1.msra.mxu0 0.0
    %7539 = vmatprep.subr.mxu0 0.0
    %7540 = vmatpush1.msra.mxu0 0.0
    %7541 = vmatprep.subr.mxu0 0.0
    %7542 = vmatpush1.msra.mxu0 0.0
    %7543 = vmatprep.subr.mxu0 0.0
    %7544 = vmatpush1.msra.mxu0 0.0
    %7545 = vmatprep.subr.mxu0 0.0
    %7546 = vmatpush1.msra.mxu0 0.0
    %7547 = vmatprep.subr.mxu0 0.0
    %7548 = vmatpush1.msra.mxu0 0.0
    %7549 = vmatprep.subr.mxu0 0.0
    %7550 = vmatpush1.msra.mxu0 0.0
    %7551 = vmatprep.subr.mxu0 0.0
    %7552 = vmatpush1.msra.mxu0 0.0
    %7553 = vmatprep.subr.mxu0 0.0
    %7554 = vmatpush1.msra.mxu0 0.0
    %7555 = vmatprep.subr.mxu0 0.0
    %7556 = vmatpush1.msra.mxu0 0.0
    %7557 = vmatprep.subr.mxu0 0.0
    %7558 = vmatpush1.msra.mxu0 0.0
    %7559 = vmatprep.subr.mxu0 0.0
    %7560 = vmatpush1.msra.mxu0 0.0
    %7561 = vmatprep.subr.mxu0 0.0
    %7562 = vmatpush1.msra.mxu0 0.0
    %7563 = vmatprep.subr.mxu0 0.0
    %7564 = vmatpush1.msra.mxu0 0.0
    %7565 = vmatprep.subr.mxu0 0.0
    %7566 = vmatpush1.msra.mxu0 0.0
    %7567 = vmatprep.subr.mxu0 0.0
    %7568 = vmatpush1.msra.mxu0 0.0
    %7569 = vmatprep.subr.mxu0 0.0
    %7570 = vmatpush1.msra.mxu0 0.0
    %7571 = vmatprep.subr.mxu0 0.0
    %7572 = vmatpush1.msra.mxu0 0.0
    %7573 = vmatprep.subr.mxu0 0.0
    %7574 = vmatpush1.msra.mxu0 0.0
    %7575 = vmatprep.subr.mxu0 0.0
    %7576 = vmatpush1.msra.mxu0 0.0
    %7577 = vmatprep.subr.mxu0 0.0
    %7578 = vmatpush1.msra.mxu0 0.0
    %7579 = vmatprep.subr.mxu0 0.0
    %7580 = vmatpush1.msra.mxu0 0.0
    %7581 = vmatprep.subr.mxu0 0.0
    %7582 = vmatpush1.msra.mxu0 0.0
    %7583 = vmatprep.subr.mxu0 0.0
    %7584 = vmatpush1.msra.mxu0 0.0
    %7585 = vmatprep.subr.mxu0 0.0
    %7586 = vmatpush1.msra.mxu0 0.0
    %7587 = vmatprep.mubr.f32.mxu0 0.0
    %7588 = vmatmul.mubr.f32.gmra.mrb[0].mxu0 %v7521
    %v7589 = vpop.f32.mrb[0].mxu0
    %v7590 = vadd.f32 0.0, %v7589
    %v7591 = vpop.f32.mrb[0].mxu0
    %7592 = vdwg.mxu0
    %s7593 = scalar_lea.vmem %s10, 56
    %v7594 = vld [vmem:[%s7593] sm:$0xff]
    %v7596 = vsel %vm430, %v7429, 0
    %v7599 = vsel %vm430, %v7590, 0
    %7601 = vmatprep.subr.mxu0 0.0
    %7602 = vmatpush1.msra.mxu0 %v7594
    %7603 = vmatprep.subr.mxu0 0.0
    %7604 = vmatpush1.msra.mxu0 0.0
    %7605 = vmatprep.subr.mxu0 0.0
    %7606 = vmatpush1.msra.mxu0 0.0
    %7607 = vmatprep.subr.mxu0 0.0
    %7608 = vmatpush1.msra.mxu0 0.0
    %7609 = vmatprep.subr.mxu0 0.0
    %7610 = vmatpush1.msra.mxu0 0.0
    %7611 = vmatprep.subr.mxu0 0.0
    %7612 = vmatpush1.msra.mxu0 0.0
    %7613 = vmatprep.subr.mxu0 0.0
    %7614 = vmatpush1.msra.mxu0 0.0
    %7615 = vmatprep.subr.mxu0 0.0
    %7616 = vmatpush1.msra.mxu0 0.0
    %7617 = vmatprep.subr.mxu0 0.0
    %7618 = vmatpush1.msra.mxu0 0.0
    %7619 = vmatprep.subr.mxu0 0.0
    %7620 = vmatpush1.msra.mxu0 0.0
    %7621 = vmatprep.subr.mxu0 0.0
    %7622 = vmatpush1.msra.mxu0 0.0
    %7623 = vmatprep.subr.mxu0 0.0
    %7624 = vmatpush1.msra.mxu0 0.0
    %7625 = vmatprep.subr.mxu0 0.0
    %7626 = vmatpush1.msra.mxu0 0.0
    %7627 = vmatprep.subr.mxu0 0.0
    %7628 = vmatpush1.msra.mxu0 0.0
    %7629 = vmatprep.subr.mxu0 0.0
    %7630 = vmatpush1.msra.mxu0 0.0
    %7631 = vmatprep.subr.mxu0 0.0
    %7632 = vmatpush1.msra.mxu0 0.0
    %7633 = vmatprep.subr.mxu0 0.0
    %7634 = vmatpush1.msra.mxu0 0.0
    %7635 = vmatprep.subr.mxu0 0.0
    %7636 = vmatpush1.msra.mxu0 0.0
    %7637 = vmatprep.subr.mxu0 0.0
    %7638 = vmatpush1.msra.mxu0 0.0
    %7639 = vmatprep.subr.mxu0 0.0
    %7640 = vmatpush1.msra.mxu0 0.0
    %7641 = vmatprep.subr.mxu0 0.0
    %7642 = vmatpush1.msra.mxu0 0.0
    %7643 = vmatprep.subr.mxu0 0.0
    %7644 = vmatpush1.msra.mxu0 0.0
    %7645 = vmatprep.subr.mxu0 0.0
    %7646 = vmatpush1.msra.mxu0 0.0
    %7647 = vmatprep.subr.mxu0 0.0
    %7648 = vmatpush1.msra.mxu0 0.0
    %7649 = vmatprep.subr.mxu0 0.0
    %7650 = vmatpush1.msra.mxu0 0.0
    %7651 = vmatprep.subr.mxu0 0.0
    %7652 = vmatpush1.msra.mxu0 0.0
    %7653 = vmatprep.subr.mxu0 0.0
    %7654 = vmatpush1.msra.mxu0 0.0
    %7655 = vmatprep.subr.mxu0 0.0
    %7656 = vmatpush1.msra.mxu0 0.0
    %7657 = vmatprep.subr.mxu0 0.0
    %7658 = vmatpush1.msra.mxu0 0.0
    %7659 = vmatprep.subr.mxu0 0.0
    %7660 = vmatpush1.msra.mxu0 0.0
    %7661 = vmatprep.subr.mxu0 0.0
    %7662 = vmatpush1.msra.mxu0 0.0
    %7663 = vmatprep.subr.mxu0 0.0
    %7664 = vmatpush1.msra.mxu0 0.0
    %7665 = vmatprep.mubr.f32.mxu0 0.0
    %7666 = vmatmul.mubr.f32.gmra.mrb[0].mxu0 %v7596
    %v7667 = vpop.f32.mrb[0].mxu0
    %v7668 = vadd.f32 0.0, %v7667
    %v7669 = vpop.f32.mrb[0].mxu0
    %7670 = vmatprep.mubr.f32.mxu0 0.0
    %7671 = vmatmul.mubr.f32.gmra.mrb[0].mxu0 %v7599
    %v7672 = vpop.f32.mrb[0].mxu0
    %v7673 = vadd.f32 0.0, %v7672
    %v7674 = vpop.f32.mrb[0].mxu0
    %7675 = vdwg.mxu0
    %v7676 = vadd.f32 %v7005, %v7668
    %v7677 = vadd.f32 %v7006, %v7673
    %v7678 = vadd.f32 %v4978, %v7676
    %v7679 = vadd.f32 %v4979, %v7677
    %s7680 = scalar_lea.vmem %s12, 1
    %v7681 = vld [vmem:[%s7680] sm:$0x1]
    %s7682 = scalar_lea.vmem %s13, 1
    %v7683 = vld [vmem:[%s7682] sm:$0x1]
    %v7684 = vsel %vm176, %v7678, 0.0
    %7685 = vadd.xlane.f32.xlu0 %v7684
    %v7686 = vpop.xlane.xlu0 %7685
    %v7687 = vsel %vm176, %v7679, 0.0
    %7688 = vadd.xlane.f32.xlu0 %v7687
    %v7689 = vpop.xlane.xlu0 %7688
    %v7690 = vmul.f32 %v7686, %v2866
    %v7691 = vmul.f32 %v7689, %v2866
    %v7692 = vsub.f32 %v7678, %v7690
    %v7693 = vsub.f32 %v7679, %v7691
    %v7694 = vmul.f32 %v7692, %v7692
    %v7695 = vmul.f32 %v7693, %v7693
    %v7696 = vsel %vm176, %v7694, 0.0
    %7697 = vadd.xlane.f32.xlu0 %v7696
    %v7698 = vpop.xlane.xlu0 %7697
    %v7699 = vsel %vm176, %v7695, 0.0
    %7700 = vadd.xlane.f32.xlu0 %v7699
    %v7701 = vpop.xlane.xlu0 %7700
    %v7702 = vmul.f32 %v7698, %v2866
    %v7703 = vmul.f32 %v7701, %v2866
    %v7704 = vadd.f32 %v7702, 1e-05
    %v7705 = vadd.f32 %v7703, 1e-05
    %v7706 = vrsqrt.pop %v7704
    %v7707 = vrsqrt.pop %v7705
    %v7708 = vmul.f32 %v7692, %v7706
    %v7709 = vmul.f32 %v7693, %v7707
    %v7711 = vlaneseq
    %v7712 = vshrl.u32 %v7711, 7
    %v7713 = vsub.s32 0, %v7712
    %v7714 = vrot.slane %v7681, %v7713
    %v7716 = vmul.f32 %v7708, %v7714
    %v7717 = vmul.f32 %v7709, %v7714
    %v7719 = vlaneseq
    %v7720 = vshrl.u32 %v7719, 7
    %v7721 = vsub.s32 0, %v7720
    %v7722 = vrot.slane %v7683, %v7721
    %v7724 = vadd.f32 %v7716, %v7722
    %v7725 = vadd.f32 %v7717, %v7722
    %v7726 = vpack.c.bf16 %v7725, %v7724
    %s7727 = scalar_lea.vmem %s14, 256
    %v7728 = vld [vmem:[%s7727] sm:$0xff]
    %v7729 = vld [vmem:[%s7727 + $0x8] sm:$0xff]
    %v7730 = vld [vmem:[%s7727 + $0x10] sm:$0xff]
    %v7731 = vld [vmem:[%s7727 + $0x18] sm:$0xff]
    %v7732 = vld [vmem:[%s7727 + $0x20] sm:$0xff]
    %v7733 = vld [vmem:[%s7727 + $0x28] sm:$0xff]
    %v7734 = vld [vmem:[%s7727 + $0x30] sm:$0xff]
    %v7735 = vld [vmem:[%s7727 + $0x38] sm:$0xff]
    %v7736 = vld [vmem:[%s7727 + $0x40] sm:$0xff]
    %v7737 = vld [vmem:[%s7727 + $0x48] sm:$0xff]
    %v7738 = vld [vmem:[%s7727 + $0x50] sm:$0xff]
    %v7739 = vld [vmem:[%s7727 + $0x58] sm:$0xff]
    %v7740 = vld [vmem:[%s7727 + $0x60] sm:$0xff]
    %v7741 = vld [vmem:[%s7727 + $0x68] sm:$0xff]
    %v7742 = vld [vmem:[%s7727 + $0x70] sm:$0xff]
    %v7743 = vld [vmem:[%s7727 + $0x78] sm:$0xff]
    %v7744 = vld [vmem:[%s7727 + $0x80] sm:$0xff]
    %v7745 = vld [vmem:[%s7727 + $0x88] sm:$0xff]
    %v7746 = vld [vmem:[%s7727 + $0x90] sm:$0xff]
    %v7747 = vld [vmem:[%s7727 + $0x98] sm:$0xff]
    %v7748 = vld [vmem:[%s7727 + $0xa0] sm:$0xff]
    %v7749 = vld [vmem:[%s7727 + $0xa8] sm:$0xff]
    %v7750 = vld [vmem:[%s7727 + $0xb0] sm:$0xff]
    %v7751 = vld [vmem:[%s7727 + $0xb8] sm:$0xff]
    %v7752 = vld [vmem:[%s7727 + $0xc0] sm:$0xff]
    %v7753 = vld [vmem:[%s7727 + $0xc8] sm:$0xff]
    %v7754 = vld [vmem:[%s7727 + $0xd0] sm:$0xff]
    %v7755 = vld [vmem:[%s7727 + $0xd8] sm:$0xff]
    %v7756 = vld [vmem:[%s7727 + $0xe0] sm:$0xff]
    %v7757 = vld [vmem:[%s7727 + $0xe8] sm:$0xff]
    %v7758 = vld [vmem:[%s7727 + $0xf0] sm:$0xff]
    %v7759 = vld [vmem:[%s7727 + $0xf8] sm:$0xff]
    %s7760 = scalar_lea.vmem %s15, 16
    %v7761 = vld [vmem:[%s7760] sm:$0xff]
    %v7762 = vld [vmem:[%s7760 + $0x8] sm:$0xff]
    %v7765 = vlaneseq
    %v7766 = vshrl.u32 %v7765, 7
    %v7767 = vsub.s32 0, %v7766
    %v7768 = vrot.slane %v7761, %v7767
    %v7769 = vlaneseq
    %v7770 = vshrl.u32 %v7769, 7
    %v7771 = vsub.s32 1, %v7770
    %v7772 = vrot.slane %v7761, %v7771
    %v7773 = vlaneseq
    %v7774 = vshrl.u32 %v7773, 7
    %v7775 = vsub.s32 2, %v7774
    %v7776 = vrot.slane %v7761, %v7775
    %v7777 = vlaneseq
    %v7778 = vshrl.u32 %v7777, 7
    %v7779 = vsub.s32 3, %v7778
    %v7780 = vrot.slane %v7761, %v7779
    %v7781 = vlaneseq
    %v7782 = vshrl.u32 %v7781, 7
    %v7783 = vsub.s32 4, %v7782
    %v7784 = vrot.slane %v7761, %v7783
    %v7785 = vlaneseq
    %v7786 = vshrl.u32 %v7785, 7
    %v7787 = vsub.s32 5, %v7786
    %v7788 = vrot.slane %v7761, %v7787
    %v7789 = vlaneseq
    %v7790 = vshrl.u32 %v7789, 7
    %v7791 = vsub.s32 6, %v7790
    %v7792 = vrot.slane %v7761, %v7791
    %v7793 = vlaneseq
    %v7794 = vshrl.u32 %v7793, 7
    %v7795 = vsub.s32 7, %v7794
    %v7796 = vrot.slane %v7761, %v7795
    %v7797 = vlaneseq
    %v7798 = vshrl.u32 %v7797, 7
    %v7799 = vsub.s32 0, %v7798
    %v7800 = vrot.slane %v7762, %v7799
    %v7801 = vlaneseq
    %v7802 = vshrl.u32 %v7801, 7
    %v7803 = vsub.s32 1, %v7802
    %v7804 = vrot.slane %v7762, %v7803
    %v7805 = vlaneseq
    %v7806 = vshrl.u32 %v7805, 7
    %v7807 = vsub.s32 2, %v7806
    %v7808 = vrot.slane %v7762, %v7807
    %v7809 = vlaneseq
    %v7810 = vshrl.u32 %v7809, 7
    %v7811 = vsub.s32 3, %v7810
    %v7812 = vrot.slane %v7762, %v7811
    %v7813 = vlaneseq
    %v7814 = vshrl.u32 %v7813, 7
    %v7815 = vsub.s32 4, %v7814
    %v7816 = vrot.slane %v7762, %v7815
    %v7817 = vlaneseq
    %v7818 = vshrl.u32 %v7817, 7
    %v7819 = vsub.s32 5, %v7818
    %v7820 = vrot.slane %v7762, %v7819
    %v7821 = vlaneseq
    %v7822 = vshrl.u32 %v7821, 7
    %v7823 = vsub.s32 6, %v7822
    %v7824 = vrot.slane %v7762, %v7823
    %v7825 = vlaneseq
    %v7826 = vshrl.u32 %v7825, 7
    %v7827 = vsub.s32 7, %v7826
    %v7828 = vrot.slane %v7762, %v7827
    %v7877 = vunpack.c.l.b16 %v7728
    %v7878 = vunpack.c.h.b16 %v7728
    %v7879 = vunpack.c.l.b16 %v7729
    %v7880 = vunpack.c.h.b16 %v7729
    %v7881 = vunpack.c.l.b16 %v7730
    %v7882 = vunpack.c.h.b16 %v7730
    %v7883 = vunpack.c.l.b16 %v7731
    %v7884 = vunpack.c.h.b16 %v7731
    %v7885 = vunpack.c.l.b16 %v7732
    %v7886 = vunpack.c.h.b16 %v7732
    %v7887 = vunpack.c.l.b16 %v7733
    %v7888 = vunpack.c.h.b16 %v7733
    %v7889 = vunpack.c.l.b16 %v7734
    %v7890 = vunpack.c.h.b16 %v7734
    %v7891 = vunpack.c.l.b16 %v7735
    %v7892 = vunpack.c.h.b16 %v7735
    %v7893 = vunpack.c.l.b16 %v7736
    %v7894 = vunpack.c.h.b16 %v7736
    %v7895 = vunpack.c.l.b16 %v7737
    %v7896 = vunpack.c.h.b16 %v7737
    %v7897 = vunpack.c.l.b16 %v7738
    %v7898 = vunpack.c.h.b16 %v7738
    %v7899 = vunpack.c.l.b16 %v7739
    %v7900 = vunpack.c.h.b16 %v7739
    %v7901 = vunpack.c.l.b16 %v7740
    %v7902 = vunpack.c.h.b16 %v7740
    %v7903 = vunpack.c.l.b16 %v7741
    %v7904 = vunpack.c.h.b16 %v7741
    %v7905 = vunpack.c.l.b16 %v7742
    %v7906 = vunpack.c.h.b16 %v7742
    %v7907 = vunpack.c.l.b16 %v7743
    %v7908 = vunpack.c.h.b16 %v7743
    %v7909 = vunpack.c.l.b16 %v7744
    %v7910 = vunpack.c.h.b16 %v7744
    %v7911 = vunpack.c.l.b16 %v7745
    %v7912 = vunpack.c.h.b16 %v7745
    %v7913 = vunpack.c.l.b16 %v7746
    %v7914 = vunpack.c.h.b16 %v7746
    %v7915 = vunpack.c.l.b16 %v7747
    %v7916 = vunpack.c.h.b16 %v7747
    %v7917 = vunpack.c.l.b16 %v7748
    %v7918 = vunpack.c.h.b16 %v7748
    %v7919 = vunpack.c.l.b16 %v7749
    %v7920 = vunpack.c.h.b16 %v7749
    %v7921 = vunpack.c.l.b16 %v7750
    %v7922 = vunpack.c.h.b16 %v7750
    %v7923 = vunpack.c.l.b16 %v7751
    %v7924 = vunpack.c.h.b16 %v7751
    %v7925 = vunpack.c.l.b16 %v7752
    %v7926 = vunpack.c.h.b16 %v7752
    %v7927 = vunpack.c.l.b16 %v7753
    %v7928 = vunpack.c.h.b16 %v7753
    %v7929 = vunpack.c.l.b16 %v7754
    %v7930 = vunpack.c.h.b16 %v7754
    %v7931 = vunpack.c.l.b16 %v7755
    %v7932 = vunpack.c.h.b16 %v7755
    %v7933 = vunpack.c.l.b16 %v7756
    %v7934 = vunpack.c.h.b16 %v7756
    %v7935 = vunpack.c.l.b16 %v7757
    %v7936 = vunpack.c.h.b16 %v7757
    %v7937 = vunpack.c.l.b16 %v7758
    %v7938 = vunpack.c.h.b16 %v7758
    %v7939 = vunpack.c.l.b16 %v7759
    %v7940 = vunpack.c.h.b16 %v7759
    %v7941 = vpack.c.b16 %v7893, %v7877
    %v7942 = vpack.c.b16 %v7894, %v7878
    %v7943 = vpack.c.b16 %v7895, %v7879
    %v7944 = vpack.c.b16 %v7896, %v7880
    %v7945 = vpack.c.b16 %v7897, %v7881
    %v7946 = vpack.c.b16 %v7898, %v7882
    %v7947 = vpack.c.b16 %v7899, %v7883
    %v7948 = vpack.c.b16 %v7900, %v7884
    %v7949 = vpack.c.b16 %v7901, %v7885
    %v7950 = vpack.c.b16 %v7902, %v7886
    %v7951 = vpack.c.b16 %v7903, %v7887
    %v7952 = vpack.c.b16 %v7904, %v7888
    %v7953 = vpack.c.b16 %v7905, %v7889
    %v7954 = vpack.c.b16 %v7906, %v7890
    %v7955 = vpack.c.b16 %v7907, %v7891
    %v7956 = vpack.c.b16 %v7908, %v7892
    %v7957 = vpack.c.b16 %v7925, %v7909
    %v7958 = vpack.c.b16 %v7926, %v7910
    %v7959 = vpack.c.b16 %v7927, %v7911
    %v7960 = vpack.c.b16 %v7928, %v7912
    %v7961 = vpack.c.b16 %v7929, %v7913
    %v7962 = vpack.c.b16 %v7930, %v7914
    %v7963 = vpack.c.b16 %v7931, %v7915
    %v7964 = vpack.c.b16 %v7932, %v7916
    %v7965 = vpack.c.b16 %v7933, %v7917
    %v7966 = vpack.c.b16 %v7934, %v7918
    %v7967 = vpack.c.b16 %v7935, %v7919
    %v7968 = vpack.c.b16 %v7936, %v7920
    %v7969 = vpack.c.b16 %v7937, %v7921
    %v7970 = vpack.c.b16 %v7938, %v7922
    %v7971 = vpack.c.b16 %v7939, %v7923
    %v7972 = vpack.c.b16 %v7940, %v7924
    %v8006 = vsel %vm176, %v7726, 0
    %8008 = vmatprep.subr.bf16.mxu0 %v7942
    %8009 = vmatpush1.bf16.msra.mxu0 %v7941
    %8010 = vmatprep.subr.bf16.mxu0 %v7958
    %8011 = vmatpush1.bf16.msra.mxu0 %v7957
    %8012 = vmatprep.subr.bf16.mxu0 0
    %8013 = vmatpush1.bf16.msra.mxu0 0
    %8014 = vmatprep.subr.bf16.mxu0 0
    %8015 = vmatpush1.bf16.msra.mxu0 0
    %8016 = vmatprep.subr.bf16.mxu0 0
    %8017 = vmatpush1.bf16.msra.mxu0 0
    %8018 = vmatprep.subr.bf16.mxu0 0
    %8019 = vmatpush1.bf16.msra.mxu0 0
    %8020 = vmatprep.subr.bf16.mxu0 0
    %8021 = vmatpush1.bf16.msra.mxu0 0
    %8022 = vmatprep.subr.bf16.mxu0 0
    %8023 = vmatpush1.bf16.msra.mxu0 0
    %8024 = vmatprep.subr.bf16.mxu0 0
    %8025 = vmatpush1.bf16.msra.mxu0 0
    %8026 = vmatprep.subr.bf16.mxu0 0
    %8027 = vmatpush1.bf16.msra.mxu0 0
    %8028 = vmatprep.subr.bf16.mxu0 0
    %8029 = vmatpush1.bf16.msra.mxu0 0
    %8030 = vmatprep.subr.bf16.mxu0 0
    %8031 = vmatpush1.bf16.msra.mxu0 0
    %8032 = vmatprep.subr.bf16.mxu0 0
    %8033 = vmatpush1.bf16.msra.mxu0 0
    %8034 = vmatprep.subr.bf16.mxu0 0
    %8035 = vmatpush1.bf16.msra.mxu0 0
    %8036 = vmatprep.subr.bf16.mxu0 0
    %8037 = vmatpush1.bf16.msra.mxu0 0
    %8038 = vmatprep.subr.bf16.mxu0 0
    %8039 = vmatpush1.bf16.msra.mxu0 0
    %8040 = vmatprep.mubr.bf16.mxu0 0
    %8041 = vmatmul.mubr.bf16.gmra.mrb[0].mxu0 %v8006
    %v8042 = vpop.f32.mrb[0].mxu0
    %v8043 = vadd.f32 %v7768, %v8042
    %v8044 = vpop.f32.mrb[0].mxu0
    %v8045 = vadd.f32 %v7772, %v8044
    %v8046 = vpop.f32.mrb[0].mxu0
    %v8047 = vadd.f32 %v7768, %v8046
    %v8048 = vpop.f32.mrb[0].mxu0
    %v8049 = vadd.f32 %v7772, %v8048
    %8050 = vdwg.mxu0
    %8051 = vmatprep.subr.bf16.mxu0 %v7944
    %8052 = vmatpush1.bf16.msra.mxu0 %v7943
    %8053 = vmatprep.subr.bf16.mxu0 %v7960
    %8054 = vmatpush1.bf16.msra.mxu0 %v7959
    %8055 = vmatprep.subr.bf16.mxu0 0
    %8056 = vmatpush1.bf16.msra.mxu0 0
    %8057 = vmatprep.subr.bf16.mxu0 0
    %8058 = vmatpush1.bf16.msra.mxu0 0
    %8059 = vmatprep.subr.bf16.mxu0 0
    %8060 = vmatpush1.bf16.msra.mxu0 0
    %8061 = vmatprep.subr.bf16.mxu0 0
    %8062 = vmatpush1.bf16.msra.mxu0 0
    %8063 = vmatprep.subr.bf16.mxu0 0
    %8064 = vmatpush1.bf16.msra.mxu0 0
    %8065 = vmatprep.subr.bf16.mxu0 0
    %8066 = vmatpush1.bf16.msra.mxu0 0
    %8067 = vmatprep.subr.bf16.mxu0 0
    %8068 = vmatpush1.bf16.msra.mxu0 0
    %8069 = vmatprep.subr.bf16.mxu0 0
    %8070 = vmatpush1.bf16.msra.mxu0 0
    %8071 = vmatprep.subr.bf16.mxu0 0
    %8072 = vmatpush1.bf16.msra.mxu0 0
    %8073 = vmatprep.subr.bf16.mxu0 0
    %8074 = vmatpush1.bf16.msra.mxu0 0
    %8075 = vmatprep.subr.bf16.mxu0 0
    %8076 = vmatpush1.bf16.msra.mxu0 0
    %8077 = vmatprep.subr.bf16.mxu0 0
    %8078 = vmatpush1.bf16.msra.mxu0 0
    %8079 = vmatprep.subr.bf16.mxu0 0
    %8080 = vmatpush1.bf16.msra.mxu0 0
    %8081 = vmatprep.subr.bf16.mxu0 0
    %8082 = vmatpush1.bf16.msra.mxu0 0
    %8083 = vmatprep.mubr.bf16.mxu0 0
    %8084 = vmatmul.mubr.bf16.gmra.mrb[0].mxu0 %v8006
    %v8085 = vpop.f32.mrb[0].mxu0
    %v8086 = vadd.f32 %v7776, %v8085
    %v8087 = vpop.f32.mrb[0].mxu0
    %v8088 = vadd.f32 %v7780, %v8087
    %v8089 = vpop.f32.mrb[0].mxu0
    %v8090 = vadd.f32 %v7776, %v8089
    %v8091 = vpop.f32.mrb[0].mxu0
    %v8092 = vadd.f32 %v7780, %v8091
    %8093 = vdwg.mxu0
    %8094 = vmatprep.subr.bf16.mxu0 %v7946
    %8095 = vmatpush1.bf16.msra.mxu0 %v7945
    %8096 = vmatprep.subr.bf16.mxu0 %v7962
    %8097 = vmatpush1.bf16.msra.mxu0 %v7961
    %8098 = vmatprep.subr.bf16.mxu0 0
    %8099 = vmatpush1.bf16.msra.mxu0 0
    %8100 = vmatprep.subr.bf16.mxu0 0
    %8101 = vmatpush1.bf16.msra.mxu0 0
    %8102 = vmatprep.subr.bf16.mxu0 0
    %8103 = vmatpush1.bf16.msra.mxu0 0
    %8104 = vmatprep.subr.bf16.mxu0 0
    %8105 = vmatpush1.bf16.msra.mxu0 0
    %8106 = vmatprep.subr.bf16.mxu0 0
    %8107 = vmatpush1.bf16.msra.mxu0 0
    %8108 = vmatprep.subr.bf16.mxu0 0
    %8109 = vmatpush1.bf16.msra.mxu0 0
    %8110 = vmatprep.subr.bf16.mxu0 0
    %8111 = vmatpush1.bf16.msra.mxu0 0
    %8112 = vmatprep.subr.bf16.mxu0 0
    %8113 = vmatpush1.bf16.msra.mxu0 0
    %8114 = vmatprep.subr.bf16.mxu0 0
    %8115 = vmatpush1.bf16.msra.mxu0 0
    %8116 = vmatprep.subr.bf16.mxu0 0
    %8117 = vmatpush1.bf16.msra.mxu0 0
    %8118 = vmatprep.subr.bf16.mxu0 0
    %8119 = vmatpush1.bf16.msra.mxu0 0
    %8120 = vmatprep.subr.bf16.mxu0 0
    %8121 = vmatpush1.bf16.msra.mxu0 0
    %8122 = vmatprep.subr.bf16.mxu0 0
    %8123 = vmatpush1.bf16.msra.mxu0 0
    %8124 = vmatprep.subr.bf16.mxu0 0
    %8125 = vmatpush1.bf16.msra.mxu0 0
    %8126 = vmatprep.mubr.bf16.mxu0 0
    %8127 = vmatmul.mubr.bf16.gmra.mrb[0].mxu0 %v8006
    %v8128 = vpop.f32.mrb[0].mxu0
    %v8129 = vadd.f32 %v7784, %v8128
    %v8130 = vpop.f32.mrb[0].mxu0
    %v8131 = vadd.f32 %v7788, %v8130
    %v8132 = vpop.f32.mrb[0].mxu0
    %v8133 = vadd.f32 %v7784, %v8132
    %v8134 = vpop.f32.mrb[0].mxu0
    %v8135 = vadd.f32 %v7788, %v8134
    %8136 = vdwg.mxu0
    %8137 = vmatprep.subr.bf16.mxu0 %v7948
    %8138 = vmatpush1.bf16.msra.mxu0 %v7947
    %8139 = vmatprep.subr.bf16.mxu0 %v7964
    %8140 = vmatpush1.bf16.msra.mxu0 %v7963
    %8141 = vmatprep.subr.bf16.mxu0 0
    %8142 = vmatpush1.bf16.msra.mxu0 0
    %8143 = vmatprep.subr.bf16.mxu0 0
    %8144 = vmatpush1.bf16.msra.mxu0 0
    %8145 = vmatprep.subr.bf16.mxu0 0
    %8146 = vmatpush1.bf16.msra.mxu0 0
    %8147 = vmatprep.subr.bf16.mxu0 0
    %8148 = vmatpush1.bf16.msra.mxu0 0
    %8149 = vmatprep.subr.bf16.mxu0 0
    %8150 = vmatpush1.bf16.msra.mxu0 0
    %8151 = vmatprep.subr.bf16.mxu0 0
    %8152 = vmatpush1.bf16.msra.mxu0 0
    %8153 = vmatprep.subr.bf16.mxu0 0
    %8154 = vmatpush1.bf16.msra.mxu0 0
    %8155 = vmatprep.subr.bf16.mxu0 0
    %8156 = vmatpush1.bf16.msra.mxu0 0
    %8157 = vmatprep.subr.bf16.mxu0 0
    %8158 = vmatpush1.bf16.msra.mxu0 0
    %8159 = vmatprep.subr.bf16.mxu0 0
    %8160 = vmatpush1.bf16.msra.mxu0 0
    %8161 = vmatprep.subr.bf16.mxu0 0
    %8162 = vmatpush1.bf16.msra.mxu0 0
    %8163 = vmatprep.subr.bf16.mxu0 0
    %8164 = vmatpush1.bf16.msra.mxu0 0
    %8165 = vmatprep.subr.bf16.mxu0 0
    %8166 = vmatpush1.bf16.msra.mxu0 0
    %8167 = vmatprep.subr.bf16.mxu0 0
    %8168 = vmatpush1.bf16.msra.mxu0 0
    %8169 = vmatprep.mubr.bf16.mxu0 0
    %8170 = vmatmul.mubr.bf16.gmra.mrb[0].mxu0 %v8006
    %v8171 = vpop.f32.mrb[0].mxu0
    %v8172 = vadd.f32 %v7792, %v8171
    %v8173 = vpop.f32.mrb[0].mxu0
    %v8174 = vadd.f32 %v7796, %v8173
    %v8175 = vpop.f32.mrb[0].mxu0
    %v8176 = vadd.f32 %v7792, %v8175
    %v8177 = vpop.f32.mrb[0].mxu0
    %v8178 = vadd.f32 %v7796, %v8177
    %8179 = vdwg.mxu0
    %8180 = vmatprep.subr.bf16.mxu0 %v7950
    %8181 = vmatpush1.bf16.msra.mxu0 %v7949
    %8182 = vmatprep.subr.bf16.mxu0 %v7966
    %8183 = vmatpush1.bf16.msra.mxu0 %v7965
    %8184 = vmatprep.subr.bf16.mxu0 0
    %8185 = vmatpush1.bf16.msra.mxu0 0
    %8186 = vmatprep.subr.bf16.mxu0 0
    %8187 = vmatpush1.bf16.msra.mxu0 0
    %8188 = vmatprep.subr.bf16.mxu0 0
    %8189 = vmatpush1.bf16.msra.mxu0 0
    %8190 = vmatprep.subr.bf16.mxu0 0
    %8191 = vmatpush1.bf16.msra.mxu0 0
    %8192 = vmatprep.subr.bf16.mxu0 0
    %8193 = vmatpush1.bf16.msra.mxu0 0
    %8194 = vmatprep.subr.bf16.mxu0 0
    %8195 = vmatpush1.bf16.msra.mxu0 0
    %8196 = vmatprep.subr.bf16.mxu0 0
    %8197 = vmatpush1.bf16.msra.mxu0 0
    %8198 = vmatprep.subr.bf16.mxu0 0
    %8199 = vmatpush1.bf16.msra.mxu0 0
    %8200 = vmatprep.subr.bf16.mxu0 0
    %8201 = vmatpush1.bf16.msra.mxu0 0
    %8202 = vmatprep.subr.bf16.mxu0 0
    %8203 = vmatpush1.bf16.msra.mxu0 0
    %8204 = vmatprep.subr.bf16.mxu0 0
    %8205 = vmatpush1.bf16.msra.mxu0 0
    %8206 = vmatprep.subr.bf16.mxu0 0
    %8207 = vmatpush1.bf16.msra.mxu0 0
    %8208 = vmatprep.subr.bf16.mxu0 0
    %8209 = vmatpush1.bf16.msra.mxu0 0
    %8210 = vmatprep.subr.bf16.mxu0 0
    %8211 = vmatpush1.bf16.msra.mxu0 0
    %8212 = vmatprep.mubr.bf16.mxu0 0
    %8213 = vmatmul.mubr.bf16.gmra.mrb[0].mxu0 %v8006
    %v8214 = vpop.f32.mrb[0].mxu0
    %v8215 = vadd.f32 %v7800, %v8214
    %v8216 = vpop.f32.mrb[0].mxu0
    %v8217 = vadd.f32 %v7804, %v8216
    %v8218 = vpop.f32.mrb[0].mxu0
    %v8219 = vadd.f32 %v7800, %v8218
    %v8220 = vpop.f32.mrb[0].mxu0
    %v8221 = vadd.f32 %v7804, %v8220
    %8222 = vdwg.mxu0
    %8223 = vmatprep.subr.bf16.mxu0 %v7952
    %8224 = vmatpush1.bf16.msra.mxu0 %v7951
    %8225 = vmatprep.subr.bf16.mxu0 %v7968
    %8226 = vmatpush1.bf16.msra.mxu0 %v7967
    %8227 = vmatprep.subr.bf16.mxu0 0
    %8228 = vmatpush1.bf16.msra.mxu0 0
    %8229 = vmatprep.subr.bf16.mxu0 0
    %8230 = vmatpush1.bf16.msra.mxu0 0
    %8231 = vmatprep.subr.bf16.mxu0 0
    %8232 = vmatpush1.bf16.msra.mxu0 0
    %8233 = vmatprep.subr.bf16.mxu0 0
    %8234 = vmatpush1.bf16.msra.mxu0 0
    %8235 = vmatprep.subr.bf16.mxu0 0
    %8236 = vmatpush1.bf16.msra.mxu0 0
    %8237 = vmatprep.subr.bf16.mxu0 0
    %8238 = vmatpush1.bf16.msra.mxu0 0
    %8239 = vmatprep.subr.bf16.mxu0 0
    %8240 = vmatpush1.bf16.msra.mxu0 0
    %8241 = vmatprep.subr.bf16.mxu0 0
    %8242 = vmatpush1.bf16.msra.mxu0 0
    %8243 = vmatprep.subr.bf16.mxu0 0
    %8244 = vmatpush1.bf16.msra.mxu0 0
    %8245 = vmatprep.subr.bf16.mxu0 0
    %8246 = vmatpush1.bf16.msra.mxu0 0
    %8247 = vmatprep.subr.bf16.mxu0 0
    %8248 = vmatpush1.bf16.msra.mxu0 0
    %8249 = vmatprep.subr.bf16.mxu0 0
    %8250 = vmatpush1.bf16.msra.mxu0 0
    %8251 = vmatprep.subr.bf16.mxu0 0
    %8252 = vmatpush1.bf16.msra.mxu0 0
    %8253 = vmatprep.subr.bf16.mxu0 0
    %8254 = vmatpush1.bf16.msra.mxu0 0
    %8255 = vmatprep.mubr.bf16.mxu0 0
    %8256 = vmatmul.mubr.bf16.gmra.mrb[0].mxu0 %v8006
    %v8257 = vpop.f32.mrb[0].mxu0
    %v8258 = vadd.f32 %v7808, %v8257
    %v8259 = vpop.f32.mrb[0].mxu0
    %v8260 = vadd.f32 %v7812, %v8259
    %v8261 = vpop.f32.mrb[0].mxu0
    %v8262 = vadd.f32 %v7808, %v8261
    %v8263 = vpop.f32.mrb[0].mxu0
    %v8264 = vadd.f32 %v7812, %v8263
    %8265 = vdwg.mxu0
    %8266 = vmatprep.subr.bf16.mxu0 %v7954
    %8267 = vmatpush1.bf16.msra.mxu0 %v7953
    %8268 = vmatprep.subr.bf16.mxu0 %v7970
    %8269 = vmatpush1.bf16.msra.mxu0 %v7969
    %8270 = vmatprep.subr.bf16.mxu0 0
    %8271 = vmatpush1.bf16.msra.mxu0 0
    %8272 = vmatprep.subr.bf16.mxu0 0
    %8273 = vmatpush1.bf16.msra.mxu0 0
    %8274 = vmatprep.subr.bf16.mxu0 0
    %8275 = vmatpush1.bf16.msra.mxu0 0
    %8276 = vmatprep.subr.bf16.mxu0 0
    %8277 = vmatpush1.bf16.msra.mxu0 0
    %8278 = vmatprep.subr.bf16.mxu0 0
    %8279 = vmatpush1.bf16.msra.mxu0 0
    %8280 = vmatprep.subr.bf16.mxu0 0
    %8281 = vmatpush1.bf16.msra.mxu0 0
    %8282 = vmatprep.subr.bf16.mxu0 0
    %8283 = vmatpush1.bf16.msra.mxu0 0
    %8284 = vmatprep.subr.bf16.mxu0 0
    %8285 = vmatpush1.bf16.msra.mxu0 0
    %8286 = vmatprep.subr.bf16.mxu0 0
    %8287 = vmatpush1.bf16.msra.mxu0 0
    %8288 = vmatprep.subr.bf16.mxu0 0
    %8289 = vmatpush1.bf16.msra.mxu0 0
    %8290 = vmatprep.subr.bf16.mxu0 0
    %8291 = vmatpush1.bf16.msra.mxu0 0
    %8292 = vmatprep.subr.bf16.mxu0 0
    %8293 = vmatpush1.bf16.msra.mxu0 0
    %8294 = vmatprep.subr.bf16.mxu0 0
    %8295 = vmatpush1.bf16.msra.mxu0 0
    %8296 = vmatprep.subr.bf16.mxu0 0
    %8297 = vmatpush1.bf16.msra.mxu0 0
    %8298 = vmatprep.mubr.bf16.mxu0 0
    %8299 = vmatmul.mubr.bf16.gmra.mrb[0].mxu0 %v8006
    %v8300 = vpop.f32.mrb[0].mxu0
    %v8301 = vadd.f32 %v7816, %v8300
    %v8302 = vpop.f32.mrb[0].mxu0
    %v8303 = vadd.f32 %v7820, %v8302
    %v8304 = vpop.f32.mrb[0].mxu0
    %v8305 = vadd.f32 %v7816, %v8304
    %v8306 = vpop.f32.mrb[0].mxu0
    %v8307 = vadd.f32 %v7820, %v8306
    %8308 = vdwg.mxu0
    %8309 = vmatprep.subr.bf16.mxu0 %v7956
    %8310 = vmatpush1.bf16.msra.mxu0 %v7955
    %8311 = vmatprep.subr.bf16.mxu0 %v7972
    %8312 = vmatpush1.bf16.msra.mxu0 %v7971
    %8313 = vmatprep.subr.bf16.mxu0 0
    %8314 = vmatpush1.bf16.msra.mxu0 0
    %8315 = vmatprep.subr.bf16.mxu0 0
    %8316 = vmatpush1.bf16.msra.mxu0 0
    %8317 = vmatprep.subr.bf16.mxu0 0
    %8318 = vmatpush1.bf16.msra.mxu0 0
    %8319 = vmatprep.subr.bf16.mxu0 0
    %8320 = vmatpush1.bf16.msra.mxu0 0
    %8321 = vmatprep.subr.bf16.mxu0 0
    %8322 = vmatpush1.bf16.msra.mxu0 0
    %8323 = vmatprep.subr.bf16.mxu0 0
    %8324 = vmatpush1.bf16.msra.mxu0 0
    %8325 = vmatprep.subr.bf16.mxu0 0
    %8326 = vmatpush1.bf16.msra.mxu0 0
    %8327 = vmatprep.subr.bf16.mxu0 0
    %8328 = vmatpush1.bf16.msra.mxu0 0
    %8329 = vmatprep.subr.bf16.mxu0 0
    %8330 = vmatpush1.bf16.msra.mxu0 0
    %8331 = vmatprep.subr.bf16.mxu0 0
    %8332 = vmatpush1.bf16.msra.mxu0 0
    %8333 = vmatprep.subr.bf16.mxu0 0
    %8334 = vmatpush1.bf16.msra.mxu0 0
    %8335 = vmatprep.subr.bf16.mxu0 0
    %8336 = vmatpush1.bf16.msra.mxu0 0
    %8337 = vmatprep.subr.bf16.mxu0 0
    %8338 = vmatpush1.bf16.msra.mxu0 0
    %8339 = vmatprep.subr.bf16.mxu0 0
    %8340 = vmatpush1.bf16.msra.mxu0 0
    %8341 = vmatprep.mubr.bf16.mxu0 0
    %8342 = vmatmul.mubr.bf16.gmra.mrb[0].mxu0 %v8006
    %v8343 = vpop.f32.mrb[0].mxu0
    %v8344 = vadd.f32 %v7824, %v8343
    %v8345 = vpop.f32.mrb[0].mxu0
    %v8346 = vadd.f32 %v7828, %v8345
    %v8347 = vpop.f32.mrb[0].mxu0
    %v8348 = vadd.f32 %v7824, %v8347
    %v8349 = vpop.f32.mrb[0].mxu0
    %v8350 = vadd.f32 %v7828, %v8349
    %8351 = vdwg.mxu0
    %v8352 = vmax.f32 %v8043, 0.0
    %v8353 = vmax.f32 %v8045, 0.0
    %v8354 = vmax.f32 %v8086, 0.0
    %v8355 = vmax.f32 %v8088, 0.0
    %v8356 = vmax.f32 %v8129, 0.0
    %v8357 = vmax.f32 %v8131, 0.0
    %v8358 = vmax.f32 %v8172, 0.0
    %v8359 = vmax.f32 %v8174, 0.0
    %v8360 = vmax.f32 %v8215, 0.0
    %v8361 = vmax.f32 %v8217, 0.0
    %v8362 = vmax.f32 %v8258, 0.0
    %v8363 = vmax.f32 %v8260, 0.0
    %v8364 = vmax.f32 %v8301, 0.0
    %v8365 = vmax.f32 %v8303, 0.0
    %v8366 = vmax.f32 %v8344, 0.0
    %v8367 = vmax.f32 %v8346, 0.0
    %v8368 = vmax.f32 %v8047, 0.0
    %v8369 = vmax.f32 %v8049, 0.0
    %v8370 = vmax.f32 %v8090, 0.0
    %v8371 = vmax.f32 %v8092, 0.0
    %v8372 = vmax.f32 %v8133, 0.0
    %v8373 = vmax.f32 %v8135, 0.0
    %v8374 = vmax.f32 %v8176, 0.0
    %v8375 = vmax.f32 %v8178, 0.0
    %v8376 = vmax.f32 %v8219, 0.0
    %v8377 = vmax.f32 %v8221, 0.0
    %v8378 = vmax.f32 %v8262, 0.0
    %v8379 = vmax.f32 %v8264, 0.0
    %v8380 = vmax.f32 %v8305, 0.0
    %v8381 = vmax.f32 %v8307, 0.0
    %v8382 = vmax.f32 %v8348, 0.0
    %v8383 = vmax.f32 %v8350, 0.0
    %v8384 = vpack.c.bf16 %v8368, %v8352
    %v8385 = vpack.c.bf16 %v8369, %v8353
    %v8386 = vpack.c.bf16 %v8370, %v8354
    %v8387 = vpack.c.bf16 %v8371, %v8355
    %v8388 = vpack.c.bf16 %v8372, %v8356
    %v8389 = vpack.c.bf16 %v8373, %v8357
    %v8390 = vpack.c.bf16 %v8374, %v8358
    %v8391 = vpack.c.bf16 %v8375, %v8359
    %v8392 = vpack.c.bf16 %v8376, %v8360
    %v8393 = vpack.c.bf16 %v8377, %v8361
    %v8394 = vpack.c.bf16 %v8378, %v8362
    %v8395 = vpack.c.bf16 %v8379, %v8363
    %v8396 = vpack.c.bf16 %v8380, %v8364
    %v8397 = vpack.c.bf16 %v8381, %v8365
    %v8398 = vpack.c.bf16 %v8382, %v8366
    %v8399 = vpack.c.bf16 %v8383, %v8367
    %s8400 = scalar_lea.vmem %s16, 1024
    %v8401 = vld [vmem:[%s8400] sm:$0xf]
    %v8402 = vld [vmem:[%s8400 + $0x4] sm:$0xf]
    %v8403 = vld [vmem:[%s8400 + $0x8] sm:$0xf]
    %v8404 = vld [vmem:[%s8400 + $0xc] sm:$0xf]
    %v8405 = vld [vmem:[%s8400 + $0x10] sm:$0xf]
    %v8406 = vld [vmem:[%s8400 + $0x14] sm:$0xf]
    %v8407 = vld [vmem:[%s8400 + $0x18] sm:$0xf]
    %v8408 = vld [vmem:[%s8400 + $0x1c] sm:$0xf]
    %v8409 = vld [vmem:[%s8400 + $0x20] sm:$0xf]
    %v8410 = vld [vmem:[%s8400 + $0x24] sm:$0xf]
    %v8411 = vld [vmem:[%s8400 + $0x28] sm:$0xf]
    %v8412 = vld [vmem:[%s8400 + $0x2c] sm:$0xf]
    %v8413 = vld [vmem:[%s8400 + $0x30] sm:$0xf]
    %v8414 = vld [vmem:[%s8400 + $0x34] sm:$0xf]
    %v8415 = vld [vmem:[%s8400 + $0x38] sm:$0xf]
    %v8416 = vld [vmem:[%s8400 + $0x3c] sm:$0xf]
    %v8417 = vld [vmem:[%s8400 + $0x40] sm:$0xf]
    %v8418 = vld [vmem:[%s8400 + $0x44] sm:$0xf]
    %v8419 = vld [vmem:[%s8400 + $0x48] sm:$0xf]
    %v8420 = vld [vmem:[%s8400 + $0x4c] sm:$0xf]
    %v8421 = vld [vmem:[%s8400 + $0x50] sm:$0xf]
    %v8422 = vld [vmem:[%s8400 + $0x54] sm:$0xf]
    %v8423 = vld [vmem:[%s8400 + $0x58] sm:$0xf]
    %v8424 = vld [vmem:[%s8400 + $0x5c] sm:$0xf]
    %v8425 = vld [vmem:[%s8400 + $0x60] sm:$0xf]
    %v8426 = vld [vmem:[%s8400 + $0x64] sm:$0xf]
    %v8427 = vld [vmem:[%s8400 + $0x68] sm:$0xf]
    %v8428 = vld [vmem:[%s8400 + $0x6c] sm:$0xf]
    %v8429 = vld [vmem:[%s8400 + $0x70] sm:$0xf]
    %v8430 = vld [vmem:[%s8400 + $0x74] sm:$0xf]
    %v8431 = vld [vmem:[%s8400 + $0x78] sm:$0xf]
    %v8432 = vld [vmem:[%s8400 + $0x7c] sm:$0xf]
    %v8433 = vld [vmem:[%s8400 + $0x80] sm:$0xf]
    %v8434 = vld [vmem:[%s8400 + $0x84] sm:$0xf]
    %v8435 = vld [vmem:[%s8400 + $0x88] sm:$0xf]
    %v8436 = vld [vmem:[%s8400 + $0x8c] sm:$0xf]
    %v8437 = vld [vmem:[%s8400 + $0x90] sm:$0xf]
    %v8438 = vld [vmem:[%s8400 + $0x94] sm:$0xf]
    %v8439 = vld [vmem:[%s8400 + $0x98] sm:$0xf]
    %v8440 = vld [vmem:[%s8400 + $0x9c] sm:$0xf]
    %v8441 = vld [vmem:[%s8400 + $0xa0] sm:$0xf]
    %v8442 = vld [vmem:[%s8400 + $0xa4] sm:$0xf]
    %v8443 = vld [vmem:[%s8400 + $0xa8] sm:$0xf]
    %v8444 = vld [vmem:[%s8400 + $0xac] sm:$0xf]
    %v8445 = vld [vmem:[%s8400 + $0xb0] sm:$0xf]
    %v8446 = vld [vmem:[%s8400 + $0xb4] sm:$0xf]
    %v8447 = vld [vmem:[%s8400 + $0xb8] sm:$0xf]
    %v8448 = vld [vmem:[%s8400 + $0xbc] sm:$0xf]
    %v8449 = vld [vmem:[%s8400 + $0xc0] sm:$0xf]
    %v8450 = vld [vmem:[%s8400 + $0xc4] sm:$0xf]
    %v8451 = vld [vmem:[%s8400 + $0xc8] sm:$0xf]
    %v8452 = vld [vmem:[%s8400 + $0xcc] sm:$0xf]
    %v8453 = vld [vmem:[%s8400 + $0xd0] sm:$0xf]
    %v8454 = vld [vmem:[%s8400 + $0xd4] sm:$0xf]
    %v8455 = vld [vmem:[%s8400 + $0xd8] sm:$0xf]
    %v8456 = vld [vmem:[%s8400 + $0xdc] sm:$0xf]
    %v8457 = vld [vmem:[%s8400 + $0xe0] sm:$0xf]
    %v8458 = vld [vmem:[%s8400 + $0xe4] sm:$0xf]
    %v8459 = vld [vmem:[%s8400 + $0xe8] sm:$0xf]
    %v8460 = vld [vmem:[%s8400 + $0xec] sm:$0xf]
    %v8461 = vld [vmem:[%s8400 + $0xf0] sm:$0xf]
    %v8462 = vld [vmem:[%s8400 + $0xf4] sm:$0xf]
    %v8463 = vld [vmem:[%s8400 + $0xf8] sm:$0xf]
    %v8464 = vld [vmem:[%s8400 + $0xfc] sm:$0xf]
    %v8465 = vld [vmem:[%s8400 + $0x100] sm:$0xf]
    %v8466 = vld [vmem:[%s8400 + $0x104] sm:$0xf]
    %v8467 = vld [vmem:[%s8400 + $0x108] sm:$0xf]
    %v8468 = vld [vmem:[%s8400 + $0x10c] sm:$0xf]
    %v8469 = vld [vmem:[%s8400 + $0x110] sm:$0xf]
    %v8470 = vld [vmem:[%s8400 + $0x114] sm:$0xf]
    %v8471 = vld [vmem:[%s8400 + $0x118] sm:$0xf]
    %v8472 = vld [vmem:[%s8400 + $0x11c] sm:$0xf]
    %v8473 = vld [vmem:[%s8400 + $0x120] sm:$0xf]
    %v8474 = vld [vmem:[%s8400 + $0x124] sm:$0xf]
    %v8475 = vld [vmem:[%s8400 + $0x128] sm:$0xf]
    %v8476 = vld [vmem:[%s8400 + $0x12c] sm:$0xf]
    %v8477 = vld [vmem:[%s8400 + $0x130] sm:$0xf]
    %v8478 = vld [vmem:[%s8400 + $0x134] sm:$0xf]
    %v8479 = vld [vmem:[%s8400 + $0x138] sm:$0xf]
    %v8480 = vld [vmem:[%s8400 + $0x13c] sm:$0xf]
    %v8481 = vld [vmem:[%s8400 + $0x140] sm:$0xf]
    %v8482 = vld [vmem:[%s8400 + $0x144] sm:$0xf]
    %v8483 = vld [vmem:[%s8400 + $0x148] sm:$0xf]
    %v8484 = vld [vmem:[%s8400 + $0x14c] sm:$0xf]
    %v8485 = vld [vmem:[%s8400 + $0x150] sm:$0xf]
    %v8486 = vld [vmem:[%s8400 + $0x154] sm:$0xf]
    %v8487 = vld [vmem:[%s8400 + $0x158] sm:$0xf]
    %v8488 = vld [vmem:[%s8400 + $0x15c] sm:$0xf]
    %v8489 = vld [vmem:[%s8400 + $0x160] sm:$0xf]
    %v8490 = vld [vmem:[%s8400 + $0x164] sm:$0xf]
    %v8491 = vld [vmem:[%s8400 + $0x168] sm:$0xf]
    %v8492 = vld [vmem:[%s8400 + $0x16c] sm:$0xf]
    %v8493 = vld [vmem:[%s8400 + $0x170] sm:$0xf]
    %v8494 = vld [vmem:[%s8400 + $0x174] sm:$0xf]
    %v8495 = vld [vmem:[%s8400 + $0x178] sm:$0xf]
    %v8496 = vld [vmem:[%s8400 + $0x17c] sm:$0xf]
    %v8497 = vld [vmem:[%s8400 + $0x180] sm:$0xf]
    %v8498 = vld [vmem:[%s8400 + $0x184] sm:$0xf]
    %v8499 = vld [vmem:[%s8400 + $0x188] sm:$0xf]
    %v8500 = vld [vmem:[%s8400 + $0x18c] sm:$0xf]
    %v8501 = vld [vmem:[%s8400 + $0x190] sm:$0xf]
    %v8502 = vld [vmem:[%s8400 + $0x194] sm:$0xf]
    %v8503 = vld [vmem:[%s8400 + $0x198] sm:$0xf]
    %v8504 = vld [vmem:[%s8400 + $0x19c] sm:$0xf]
    %v8505 = vld [vmem:[%s8400 + $0x1a0] sm:$0xf]
    %v8506 = vld [vmem:[%s8400 + $0x1a4] sm:$0xf]
    %v8507 = vld [vmem:[%s8400 + $0x1a8] sm:$0xf]
    %v8508 = vld [vmem:[%s8400 + $0x1ac] sm:$0xf]
    %v8509 = vld [vmem:[%s8400 + $0x1b0] sm:$0xf]
    %v8510 = vld [vmem:[%s8400 + $0x1b4] sm:$0xf]
    %v8511 = vld [vmem:[%s8400 + $0x1b8] sm:$0xf]
    %v8512 = vld [vmem:[%s8400 + $0x1bc] sm:$0xf]
    %v8513 = vld [vmem:[%s8400 + $0x1c0] sm:$0xf]
    %v8514 = vld [vmem:[%s8400 + $0x1c4] sm:$0xf]
    %v8515 = vld [vmem:[%s8400 + $0x1c8] sm:$0xf]
    %v8516 = vld [vmem:[%s8400 + $0x1cc] sm:$0xf]
    %v8517 = vld [vmem:[%s8400 + $0x1d0] sm:$0xf]
    %v8518 = vld [vmem:[%s8400 + $0x1d4] sm:$0xf]
    %v8519 = vld [vmem:[%s8400 + $0x1d8] sm:$0xf]
    %v8520 = vld [vmem:[%s8400 + $0x1dc] sm:$0xf]
    %v8521 = vld [vmem:[%s8400 + $0x1e0] sm:$0xf]
    %v8522 = vld [vmem:[%s8400 + $0x1e4] sm:$0xf]
    %v8523 = vld [vmem:[%s8400 + $0x1e8] sm:$0xf]
    %v8524 = vld [vmem:[%s8400 + $0x1ec] sm:$0xf]
    %v8525 = vld [vmem:[%s8400 + $0x1f0] sm:$0xf]
    %v8526 = vld [vmem:[%s8400 + $0x1f4] sm:$0xf]
    %v8527 = vld [vmem:[%s8400 + $0x1f8] sm:$0xf]
    %v8528 = vld [vmem:[%s8400 + $0x1fc] sm:$0xf]
    %v8529 = vld [vmem:[%s8400 + $0x200] sm:$0xf]
    %v8530 = vld [vmem:[%s8400 + $0x204] sm:$0xf]
    %v8531 = vld [vmem:[%s8400 + $0x208] sm:$0xf]
    %v8532 = vld [vmem:[%s8400 + $0x20c] sm:$0xf]
    %v8533 = vld [vmem:[%s8400 + $0x210] sm:$0xf]
    %v8534 = vld [vmem:[%s8400 + $0x214] sm:$0xf]
    %v8535 = vld [vmem:[%s8400 + $0x218] sm:$0xf]
    %v8536 = vld [vmem:[%s8400 + $0x21c] sm:$0xf]
    %v8537 = vld [vmem:[%s8400 + $0x220] sm:$0xf]
    %v8538 = vld [vmem:[%s8400 + $0x224] sm:$0xf]
    %v8539 = vld [vmem:[%s8400 + $0x228] sm:$0xf]
    %v8540 = vld [vmem:[%s8400 + $0x22c] sm:$0xf]
    %v8541 = vld [vmem:[%s8400 + $0x230] sm:$0xf]
    %v8542 = vld [vmem:[%s8400 + $0x234] sm:$0xf]
    %v8543 = vld [vmem:[%s8400 + $0x238] sm:$0xf]
    %v8544 = vld [vmem:[%s8400 + $0x23c] sm:$0xf]
    %v8545 = vld [vmem:[%s8400 + $0x240] sm:$0xf]
    %v8546 = vld [vmem:[%s8400 + $0x244] sm:$0xf]
    %v8547 = vld [vmem:[%s8400 + $0x248] sm:$0xf]
    %v8548 = vld [vmem:[%s8400 + $0x24c] sm:$0xf]
    %v8549 = vld [vmem:[%s8400 + $0x250] sm:$0xf]
    %v8550 = vld [vmem:[%s8400 + $0x254] sm:$0xf]
    %v8551 = vld [vmem:[%s8400 + $0x258] sm:$0xf]
    %v8552 = vld [vmem:[%s8400 + $0x25c] sm:$0xf]
    %v8553 = vld [vmem:[%s8400 + $0x260] sm:$0xf]
    %v8554 = vld [vmem:[%s8400 + $0x264] sm:$0xf]
    %v8555 = vld [vmem:[%s8400 + $0x268] sm:$0xf]
    %v8556 = vld [vmem:[%s8400 + $0x26c] sm:$0xf]
    %v8557 = vld [vmem:[%s8400 + $0x270] sm:$0xf]
    %v8558 = vld [vmem:[%s8400 + $0x274] sm:$0xf]
    %v8559 = vld [vmem:[%s8400 + $0x278] sm:$0xf]
    %v8560 = vld [vmem:[%s8400 + $0x27c] sm:$0xf]
    %v8561 = vld [vmem:[%s8400 + $0x280] sm:$0xf]
    %v8562 = vld [vmem:[%s8400 + $0x284] sm:$0xf]
    %v8563 = vld [vmem:[%s8400 + $0x288] sm:$0xf]
    %v8564 = vld [vmem:[%s8400 + $0x28c] sm:$0xf]
    %v8565 = vld [vmem:[%s8400 + $0x290] sm:$0xf]
    %v8566 = vld [vmem:[%s8400 + $0x294] sm:$0xf]
    %v8567 = vld [vmem:[%s8400 + $0x298] sm:$0xf]
    %v8568 = vld [vmem:[%s8400 + $0x29c] sm:$0xf]
    %v8569 = vld [vmem:[%s8400 + $0x2a0] sm:$0xf]
    %v8570 = vld [vmem:[%s8400 + $0x2a4] sm:$0xf]
    %v8571 = vld [vmem:[%s8400 + $0x2a8] sm:$0xf]
    %v8572 = vld [vmem:[%s8400 + $0x2ac] sm:$0xf]
    %v8573 = vld [vmem:[%s8400 + $0x2b0] sm:$0xf]
    %v8574 = vld [vmem:[%s8400 + $0x2b4] sm:$0xf]
    %v8575 = vld [vmem:[%s8400 + $0x2b8] sm:$0xf]
    %v8576 = vld [vmem:[%s8400 + $0x2bc] sm:$0xf]
    %v8577 = vld [vmem:[%s8400 + $0x2c0] sm:$0xf]
    %v8578 = vld [vmem:[%s8400 + $0x2c4] sm:$0xf]
    %v8579 = vld [vmem:[%s8400 + $0x2c8] sm:$0xf]
    %v8580 = vld [vmem:[%s8400 + $0x2cc] sm:$0xf]
    %v8581 = vld [vmem:[%s8400 + $0x2d0] sm:$0xf]
    %v8582 = vld [vmem:[%s8400 + $0x2d4] sm:$0xf]
    %v8583 = vld [vmem:[%s8400 + $0x2d8] sm:$0xf]
    %v8584 = vld [vmem:[%s8400 + $0x2dc] sm:$0xf]
    %v8585 = vld [vmem:[%s8400 + $0x2e0] sm:$0xf]
    %v8586 = vld [vmem:[%s8400 + $0x2e4] sm:$0xf]
    %v8587 = vld [vmem:[%s8400 + $0x2e8] sm:$0xf]
    %v8588 = vld [vmem:[%s8400 + $0x2ec] sm:$0xf]
    %v8589 = vld [vmem:[%s8400 + $0x2f0] sm:$0xf]
    %v8590 = vld [vmem:[%s8400 + $0x2f4] sm:$0xf]
    %v8591 = vld [vmem:[%s8400 + $0x2f8] sm:$0xf]
    %v8592 = vld [vmem:[%s8400 + $0x2fc] sm:$0xf]
    %v8593 = vld [vmem:[%s8400 + $0x300] sm:$0xf]
    %v8594 = vld [vmem:[%s8400 + $0x304] sm:$0xf]
    %v8595 = vld [vmem:[%s8400 + $0x308] sm:$0xf]
    %v8596 = vld [vmem:[%s8400 + $0x30c] sm:$0xf]
    %v8597 = vld [vmem:[%s8400 + $0x310] sm:$0xf]
    %v8598 = vld [vmem:[%s8400 + $0x314] sm:$0xf]
    %v8599 = vld [vmem:[%s8400 + $0x318] sm:$0xf]
    %v8600 = vld [vmem:[%s8400 + $0x31c] sm:$0xf]
    %v8601 = vld [vmem:[%s8400 + $0x320] sm:$0xf]
    %v8602 = vld [vmem:[%s8400 + $0x324] sm:$0xf]
    %v8603 = vld [vmem:[%s8400 + $0x328] sm:$0xf]
    %v8604 = vld [vmem:[%s8400 + $0x32c] sm:$0xf]
    %v8605 = vld [vmem:[%s8400 + $0x330] sm:$0xf]
    %v8606 = vld [vmem:[%s8400 + $0x334] sm:$0xf]
    %v8607 = vld [vmem:[%s8400 + $0x338] sm:$0xf]
    %v8608 = vld [vmem:[%s8400 + $0x33c] sm:$0xf]
    %v8609 = vld [vmem:[%s8400 + $0x340] sm:$0xf]
    %v8610 = vld [vmem:[%s8400 + $0x344] sm:$0xf]
    %v8611 = vld [vmem:[%s8400 + $0x348] sm:$0xf]
    %v8612 = vld [vmem:[%s8400 + $0x34c] sm:$0xf]
    %v8613 = vld [vmem:[%s8400 + $0x350] sm:$0xf]
    %v8614 = vld [vmem:[%s8400 + $0x354] sm:$0xf]
    %v8615 = vld [vmem:[%s8400 + $0x358] sm:$0xf]
    %v8616 = vld [vmem:[%s8400 + $0x35c] sm:$0xf]
    %v8617 = vld [vmem:[%s8400 + $0x360] sm:$0xf]
    %v8618 = vld [vmem:[%s8400 + $0x364] sm:$0xf]
    %v8619 = vld [vmem:[%s8400 + $0x368] sm:$0xf]
    %v8620 = vld [vmem:[%s8400 + $0x36c] sm:$0xf]
    %v8621 = vld [vmem:[%s8400 + $0x370] sm:$0xf]
    %v8622 = vld [vmem:[%s8400 + $0x374] sm:$0xf]
    %v8623 = vld [vmem:[%s8400 + $0x378] sm:$0xf]
    %v8624 = vld [vmem:[%s8400 + $0x37c] sm:$0xf]
    %v8625 = vld [vmem:[%s8400 + $0x380] sm:$0xf]
    %v8626 = vld [vmem:[%s8400 + $0x384] sm:$0xf]
    %v8627 = vld [vmem:[%s8400 + $0x388] sm:$0xf]
    %v8628 = vld [vmem:[%s8400 + $0x38c] sm:$0xf]
    %v8629 = vld [vmem:[%s8400 + $0x390] sm:$0xf]
    %v8630 = vld [vmem:[%s8400 + $0x394] sm:$0xf]
    %v8631 = vld [vmem:[%s8400 + $0x398] sm:$0xf]
    %v8632 = vld [vmem:[%s8400 + $0x39c] sm:$0xf]
    %v8633 = vld [vmem:[%s8400 + $0x3a0] sm:$0xf]
    %v8634 = vld [vmem:[%s8400 + $0x3a4] sm:$0xf]
    %v8635 = vld [vmem:[%s8400 + $0x3a8] sm:$0xf]
    %v8636 = vld [vmem:[%s8400 + $0x3ac] sm:$0xf]
    %v8637 = vld [vmem:[%s8400 + $0x3b0] sm:$0xf]
    %v8638 = vld [vmem:[%s8400 + $0x3b4] sm:$0xf]
    %v8639 = vld [vmem:[%s8400 + $0x3b8] sm:$0xf]
    %v8640 = vld [vmem:[%s8400 + $0x3bc] sm:$0xf]
    %v8641 = vld [vmem:[%s8400 + $0x3c0] sm:$0xf]
    %v8642 = vld [vmem:[%s8400 + $0x3c4] sm:$0xf]
    %v8643 = vld [vmem:[%s8400 + $0x3c8] sm:$0xf]
    %v8644 = vld [vmem:[%s8400 + $0x3cc] sm:$0xf]
    %v8645 = vld [vmem:[%s8400 + $0x3d0] sm:$0xf]
    %v8646 = vld [vmem:[%s8400 + $0x3d4] sm:$0xf]
    %v8647 = vld [vmem:[%s8400 + $0x3d8] sm:$0xf]
    %v8648 = vld [vmem:[%s8400 + $0x3dc] sm:$0xf]
    %v8649 = vld [vmem:[%s8400 + $0x3e0] sm:$0xf]
    %v8650 = vld [vmem:[%s8400 + $0x3e4] sm:$0xf]
    %v8651 = vld [vmem:[%s8400 + $0x3e8] sm:$0xf]
    %v8652 = vld [vmem:[%s8400 + $0x3ec] sm:$0xf]
    %v8653 = vld [vmem:[%s8400 + $0x3f0] sm:$0xf]
    %v8654 = vld [vmem:[%s8400 + $0x3f4] sm:$0xf]
    %v8655 = vld [vmem:[%s8400 + $0x3f8] sm:$0xf]
    %v8656 = vld [vmem:[%s8400 + $0x3fc] sm:$0xf]
    %s8657 = scalar_lea.vmem %s17, 1
    %v8658 = vld [vmem:[%s8657] sm:$0x1]
    %v8660 = vlaneseq
    %v8661 = vshrl.u32 %v8660, 7
    %v8662 = vsub.s32 0, %v8661
    %v8663 = vrot.slane %v8658, %v8662
    %v8921 = vunpack.c.l.b16 %v8401
    %v8922 = vunpack.c.l.b16 %v8402
    %v8923 = vunpack.c.l.b16 %v8403
    %v8924 = vunpack.c.l.b16 %v8404
    %v8925 = vunpack.c.l.b16 %v8405
    %v8926 = vunpack.c.l.b16 %v8406
    %v8927 = vunpack.c.l.b16 %v8407
    %v8928 = vunpack.c.l.b16 %v8408
    %v8929 = vunpack.c.l.b16 %v8409
    %v8930 = vunpack.c.l.b16 %v8410
    %v8931 = vunpack.c.l.b16 %v8411
    %v8932 = vunpack.c.l.b16 %v8412
    %v8933 = vunpack.c.l.b16 %v8413
    %v8934 = vunpack.c.l.b16 %v8414
    %v8935 = vunpack.c.l.b16 %v8415
    %v8936 = vunpack.c.l.b16 %v8416
    %v8937 = vunpack.c.l.b16 %v8417
    %v8938 = vunpack.c.l.b16 %v8418
    %v8939 = vunpack.c.l.b16 %v8419
    %v8940 = vunpack.c.l.b16 %v8420
    %v8941 = vunpack.c.l.b16 %v8421
    %v8942 = vunpack.c.l.b16 %v8422
    %v8943 = vunpack.c.l.b16 %v8423
    %v8944 = vunpack.c.l.b16 %v8424
    %v8945 = vunpack.c.l.b16 %v8425
    %v8946 = vunpack.c.l.b16 %v8426
    %v8947 = vunpack.c.l.b16 %v8427
    %v8948 = vunpack.c.l.b16 %v8428
    %v8949 = vunpack.c.l.b16 %v8429
    %v8950 = vunpack.c.l.b16 %v8430
    %v8951 = vunpack.c.l.b16 %v8431
    %v8952 = vunpack.c.l.b16 %v8432
    %v8953 = vunpack.c.l.b16 %v8433
    %v8954 = vunpack.c.l.b16 %v8434
    %v8955 = vunpack.c.l.b16 %v8435
    %v8956 = vunpack.c.l.b16 %v8436
    %v8957 = vunpack.c.l.b16 %v8437
    %v8958 = vunpack.c.l.b16 %v8438
    %v8959 = vunpack.c.l.b16 %v8439
    %v8960 = vunpack.c.l.b16 %v8440
    %v8961 = vunpack.c.l.b16 %v8441
    %v8962 = vunpack.c.l.b16 %v8442
    %v8963 = vunpack.c.l.b16 %v8443
    %v8964 = vunpack.c.l.b16 %v8444
    %v8965 = vunpack.c.l.b16 %v8445
    %v8966 = vunpack.c.l.b16 %v8446
    %v8967 = vunpack.c.l.b16 %v8447
    %v8968 = vunpack.c.l.b16 %v8448
    %v8969 = vunpack.c.l.b16 %v8449
    %v8970 = vunpack.c.l.b16 %v8450
    %v8971 = vunpack.c.l.b16 %v8451
    %v8972 = vunpack.c.l.b16 %v8452
    %v8973 = vunpack.c.l.b16 %v8453
    %v8974 = vunpack.c.l.b16 %v8454
    %v8975 = vunpack.c.l.b16 %v8455
    %v8976 = vunpack.c.l.b16 %v8456
    %v8977 = vunpack.c.l.b16 %v8457
    %v8978 = vunpack.c.l.b16 %v8458
    %v8979 = vunpack.c.l.b16 %v8459
    %v8980 = vunpack.c.l.b16 %v8460
    %v8981 = vunpack.c.l.b16 %v8461
    %v8982 = vunpack.c.l.b16 %v8462
    %v8983 = vunpack.c.l.b16 %v8463
    %v8984 = vunpack.c.l.b16 %v8464
    %v8985 = vunpack.c.l.b16 %v8465
    %v8986 = vunpack.c.l.b16 %v8466
    %v8987 = vunpack.c.l.b16 %v8467
    %v8988 = vunpack.c.l.b16 %v8468
    %v8989 = vunpack.c.l.b16 %v8469
    %v8990 = vunpack.c.l.b16 %v8470
    %v8991 = vunpack.c.l.b16 %v8471
    %v8992 = vunpack.c.l.b16 %v8472
    %v8993 = vunpack.c.l.b16 %v8473
    %v8994 = vunpack.c.l.b16 %v8474
    %v8995 = vunpack.c.l.b16 %v8475
    %v8996 = vunpack.c.l.b16 %v8476
    %v8997 = vunpack.c.l.b16 %v8477
    %v8998 = vunpack.c.l.b16 %v8478
    %v8999 = vunpack.c.l.b16 %v8479
    %v9000 = vunpack.c.l.b16 %v8480
    %v9001 = vunpack.c.l.b16 %v8481
    %v9002 = vunpack.c.l.b16 %v8482
    %v9003 = vunpack.c.l.b16 %v8483
    %v9004 = vunpack.c.l.b16 %v8484
    %v9005 = vunpack.c.l.b16 %v8485
    %v9006 = vunpack.c.l.b16 %v8486
    %v9007 = vunpack.c.l.b16 %v8487
    %v9008 = vunpack.c.l.b16 %v8488
    %v9009 = vunpack.c.l.b16 %v8489
    %v9010 = vunpack.c.l.b16 %v8490
    %v9011 = vunpack.c.l.b16 %v8491
    %v9012 = vunpack.c.l.b16 %v8492
    %v9013 = vunpack.c.l.b16 %v8493
    %v9014 = vunpack.c.l.b16 %v8494
    %v9015 = vunpack.c.l.b16 %v8495
    %v9016 = vunpack.c.l.b16 %v8496
    %v9017 = vunpack.c.l.b16 %v8497
    %v9018 = vunpack.c.l.b16 %v8498
    %v9019 = vunpack.c.l.b16 %v8499
    %v9020 = vunpack.c.l.b16 %v8500
    %v9021 = vunpack.c.l.b16 %v8501
    %v9022 = vunpack.c.l.b16 %v8502
    %v9023 = vunpack.c.l.b16 %v8503
    %v9024 = vunpack.c.l.b16 %v8504
    %v9025 = vunpack.c.l.b16 %v8505
    %v9026 = vunpack.c.l.b16 %v8506
    %v9027 = vunpack.c.l.b16 %v8507
    %v9028 = vunpack.c.l.b16 %v8508
    %v9029 = vunpack.c.l.b16 %v8509
    %v9030 = vunpack.c.l.b16 %v8510
    %v9031 = vunpack.c.l.b16 %v8511
    %v9032 = vunpack.c.l.b16 %v8512
    %v9033 = vunpack.c.l.b16 %v8513
    %v9034 = vunpack.c.l.b16 %v8514
    %v9035 = vunpack.c.l.b16 %v8515
    %v9036 = vunpack.c.l.b16 %v8516
    %v9037 = vunpack.c.l.b16 %v8517
    %v9038 = vunpack.c.l.b16 %v8518
    %v9039 = vunpack.c.l.b16 %v8519
    %v9040 = vunpack.c.l.b16 %v8520
    %v9041 = vunpack.c.l.b16 %v8521
    %v9042 = vunpack.c.l.b16 %v8522
    %v9043 = vunpack.c.l.b16 %v8523
    %v9044 = vunpack.c.l.b16 %v8524
    %v9045 = vunpack.c.l.b16 %v8525
    %v9046 = vunpack.c.l.b16 %v8526
    %v9047 = vunpack.c.l.b16 %v8527
    %v9048 = vunpack.c.l.b16 %v8528
    %v9049 = vunpack.c.l.b16 %v8529
    %v9050 = vunpack.c.l.b16 %v8530
    %v9051 = vunpack.c.l.b16 %v8531
    %v9052 = vunpack.c.l.b16 %v8532
    %v9053 = vunpack.c.l.b16 %v8533
    %v9054 = vunpack.c.l.b16 %v8534
    %v9055 = vunpack.c.l.b16 %v8535
    %v9056 = vunpack.c.l.b16 %v8536
    %v9057 = vunpack.c.l.b16 %v8537
    %v9058 = vunpack.c.l.b16 %v8538
    %v9059 = vunpack.c.l.b16 %v8539
    %v9060 = vunpack.c.l.b16 %v8540
    %v9061 = vunpack.c.l.b16 %v8541
    %v9062 = vunpack.c.l.b16 %v8542
    %v9063 = vunpack.c.l.b16 %v8543
    %v9064 = vunpack.c.l.b16 %v8544
    %v9065 = vunpack.c.l.b16 %v8545
    %v9066 = vunpack.c.l.b16 %v8546
    %v9067 = vunpack.c.l.b16 %v8547
    %v9068 = vunpack.c.l.b16 %v8548
    %v9069 = vunpack.c.l.b16 %v8549
    %v9070 = vunpack.c.l.b16 %v8550
    %v9071 = vunpack.c.l.b16 %v8551
    %v9072 = vunpack.c.l.b16 %v8552
    %v9073 = vunpack.c.l.b16 %v8553
    %v9074 = vunpack.c.l.b16 %v8554
    %v9075 = vunpack.c.l.b16 %v8555
    %v9076 = vunpack.c.l.b16 %v8556
    %v9077 = vunpack.c.l.b16 %v8557
    %v9078 = vunpack.c.l.b16 %v8558
    %v9079 = vunpack.c.l.b16 %v8559
    %v9080 = vunpack.c.l.b16 %v8560
    %v9081 = vunpack.c.l.b16 %v8561
    %v9082 = vunpack.c.l.b16 %v8562
    %v9083 = vunpack.c.l.b16 %v8563
    %v9084 = vunpack.c.l.b16 %v8564
    %v9085 = vunpack.c.l.b16 %v8565
    %v9086 = vunpack.c.l.b16 %v8566
    %v9087 = vunpack.c.l.b16 %v8567
    %v9088 = vunpack.c.l.b16 %v8568
    %v9089 = vunpack.c.l.b16 %v8569
    %v9090 = vunpack.c.l.b16 %v8570
    %v9091 = vunpack.c.l.b16 %v8571
    %v9092 = vunpack.c.l.b16 %v8572
    %v9093 = vunpack.c.l.b16 %v8573
    %v9094 = vunpack.c.l.b16 %v8574
    %v9095 = vunpack.c.l.b16 %v8575
    %v9096 = vunpack.c.l.b16 %v8576
    %v9097 = vunpack.c.l.b16 %v8577
    %v9098 = vunpack.c.l.b16 %v8578
    %v9099 = vunpack.c.l.b16 %v8579
    %v9100 = vunpack.c.l.b16 %v8580
    %v9101 = vunpack.c.l.b16 %v8581
    %v9102 = vunpack.c.l.b16 %v8582
    %v9103 = vunpack.c.l.b16 %v8583
    %v9104 = vunpack.c.l.b16 %v8584
    %v9105 = vunpack.c.l.b16 %v8585
    %v9106 = vunpack.c.l.b16 %v8586
    %v9107 = vunpack.c.l.b16 %v8587
    %v9108 = vunpack.c.l.b16 %v8588
    %v9109 = vunpack.c.l.b16 %v8589
    %v9110 = vunpack.c.l.b16 %v8590
    %v9111 = vunpack.c.l.b16 %v8591
    %v9112 = vunpack.c.l.b16 %v8592
    %v9113 = vunpack.c.l.b16 %v8593
    %v9114 = vunpack.c.l.b16 %v8594
    %v9115 = vunpack.c.l.b16 %v8595
    %v9116 = vunpack.c.l.b16 %v8596
    %v9117 = vunpack.c.l.b16 %v8597
    %v9118 = vunpack.c.l.b16 %v8598
    %v9119 = vunpack.c.l.b16 %v8599
    %v9120 = vunpack.c.l.b16 %v8600
    %v9121 = vunpack.c.l.b16 %v8601
    %v9122 = vunpack.c.l.b16 %v8602
    %v9123 = vunpack.c.l.b16 %v8603
    %v9124 = vunpack.c.l.b16 %v8604
    %v9125 = vunpack.c.l.b16 %v8605
    %v9126 = vunpack.c.l.b16 %v8606
    %v9127 = vunpack.c.l.b16 %v8607
    %v9128 = vunpack.c.l.b16 %v8608
    %v9129 = vunpack.c.l.b16 %v8609
    %v9130 = vunpack.c.l.b16 %v8610
    %v9131 = vunpack.c.l.b16 %v8611
    %v9132 = vunpack.c.l.b16 %v8612
    %v9133 = vunpack.c.l.b16 %v8613
    %v9134 = vunpack.c.l.b16 %v8614
    %v9135 = vunpack.c.l.b16 %v8615
    %v9136 = vunpack.c.l.b16 %v8616
    %v9137 = vunpack.c.l.b16 %v8617
    %v9138 = vunpack.c.l.b16 %v8618
    %v9139 = vunpack.c.l.b16 %v8619
    %v9140 = vunpack.c.l.b16 %v8620
    %v9141 = vunpack.c.l.b16 %v8621
    %v9142 = vunpack.c.l.b16 %v8622
    %v9143 = vunpack.c.l.b16 %v8623
    %v9144 = vunpack.c.l.b16 %v8624
    %v9145 = vunpack.c.l.b16 %v8625
    %v9146 = vunpack.c.l.b16 %v8626
    %v9147 = vunpack.c.l.b16 %v8627
    %v9148 = vunpack.c.l.b16 %v8628
    %v9149 = vunpack.c.l.b16 %v8629
    %v9150 = vunpack.c.l.b16 %v8630
    %v9151 = vunpack.c.l.b16 %v8631
    %v9152 = vunpack.c.l.b16 %v8632
    %v9153 = vunpack.c.l.b16 %v8633
    %v9154 = vunpack.c.l.b16 %v8634
    %v9155 = vunpack.c.l.b16 %v8635
    %v9156 = vunpack.c.l.b16 %v8636
    %v9157 = vunpack.c.l.b16 %v8637
    %v9158 = vunpack.c.l.b16 %v8638
    %v9159 = vunpack.c.l.b16 %v8639
    %v9160 = vunpack.c.l.b16 %v8640
    %v9161 = vunpack.c.l.b16 %v8641
    %v9162 = vunpack.c.l.b16 %v8642
    %v9163 = vunpack.c.l.b16 %v8643
    %v9164 = vunpack.c.l.b16 %v8644
    %v9165 = vunpack.c.l.b16 %v8645
    %v9166 = vunpack.c.l.b16 %v8646
    %v9167 = vunpack.c.l.b16 %v8647
    %v9168 = vunpack.c.l.b16 %v8648
    %v9169 = vunpack.c.l.b16 %v8649
    %v9170 = vunpack.c.l.b16 %v8650
    %v9171 = vunpack.c.l.b16 %v8651
    %v9172 = vunpack.c.l.b16 %v8652
    %v9173 = vunpack.c.l.b16 %v8653
    %v9174 = vunpack.c.l.b16 %v8654
    %v9175 = vunpack.c.l.b16 %v8655
    %v9176 = vunpack.c.l.b16 %v8656
    %v9177 = vpack.c.b16 %v8922, %v8921
    %v9178 = vpack.c.b16 %v8924, %v8923
    %v9179 = vpack.c.b16 %v8926, %v8925
    %v9180 = vpack.c.b16 %v8928, %v8927
    %v9181 = vpack.c.b16 %v8930, %v8929
    %v9182 = vpack.c.b16 %v8932, %v8931
    %v9183 = vpack.c.b16 %v8934, %v8933
    %v9184 = vpack.c.b16 %v8936, %v8935
    %v9185 = vpack.c.b16 %v8938, %v8937
    %v9186 = vpack.c.b16 %v8940, %v8939
    %v9187 = vpack.c.b16 %v8942, %v8941
    %v9188 = vpack.c.b16 %v8944, %v8943
    %v9189 = vpack.c.b16 %v8946, %v8945
    %v9190 = vpack.c.b16 %v8948, %v8947
    %v9191 = vpack.c.b16 %v8950, %v8949
    %v9192 = vpack.c.b16 %v8952, %v8951
    %v9193 = vpack.c.b16 %v8954, %v8953
    %v9194 = vpack.c.b16 %v8956, %v8955
    %v9195 = vpack.c.b16 %v8958, %v8957
    %v9196 = vpack.c.b16 %v8960, %v8959
    %v9197 = vpack.c.b16 %v8962, %v8961
    %v9198 = vpack.c.b16 %v8964, %v8963
    %v9199 = vpack.c.b16 %v8966, %v8965
    %v9200 = vpack.c.b16 %v8968, %v8967
    %v9201 = vpack.c.b16 %v8970, %v8969
    %v9202 = vpack.c.b16 %v8972, %v8971
    %v9203 = vpack.c.b16 %v8974, %v8973
    %v9204 = vpack.c.b16 %v8976, %v8975
    %v9205 = vpack.c.b16 %v8978, %v8977
    %v9206 = vpack.c.b16 %v8980, %v8979
    %v9207 = vpack.c.b16 %v8982, %v8981
    %v9208 = vpack.c.b16 %v8984, %v8983
    %v9209 = vpack.c.b16 %v8986, %v8985
    %v9210 = vpack.c.b16 %v8988, %v8987
    %v9211 = vpack.c.b16 %v8990, %v8989
    %v9212 = vpack.c.b16 %v8992, %v8991
    %v9213 = vpack.c.b16 %v8994, %v8993
    %v9214 = vpack.c.b16 %v8996, %v8995
    %v9215 = vpack.c.b16 %v8998, %v8997
    %v9216 = vpack.c.b16 %v9000, %v8999
    %v9217 = vpack.c.b16 %v9002, %v9001
    %v9218 = vpack.c.b16 %v9004, %v9003
    %v9219 = vpack.c.b16 %v9006, %v9005
    %v9220 = vpack.c.b16 %v9008, %v9007
    %v9221 = vpack.c.b16 %v9010, %v9009
    %v9222 = vpack.c.b16 %v9012, %v9011
    %v9223 = vpack.c.b16 %v9014, %v9013
    %v9224 = vpack.c.b16 %v9016, %v9015
    %v9225 = vpack.c.b16 %v9018, %v9017
    %v9226 = vpack.c.b16 %v9020, %v9019
    %v9227 = vpack.c.b16 %v9022, %v9021
    %v9228 = vpack.c.b16 %v9024, %v9023
    %v9229 = vpack.c.b16 %v9026, %v9025
    %v9230 = vpack.c.b16 %v9028, %v9027
    %v9231 = vpack.c.b16 %v9030, %v9029
    %v9232 = vpack.c.b16 %v9032, %v9031
    %v9233 = vpack.c.b16 %v9034, %v9033
    %v9234 = vpack.c.b16 %v9036, %v9035
    %v9235 = vpack.c.b16 %v9038, %v9037
    %v9236 = vpack.c.b16 %v9040, %v9039
    %v9237 = vpack.c.b16 %v9042, %v9041
    %v9238 = vpack.c.b16 %v9044, %v9043
    %v9239 = vpack.c.b16 %v9046, %v9045
    %v9240 = vpack.c.b16 %v9048, %v9047
    %v9241 = vpack.c.b16 %v9050, %v9049
    %v9242 = vpack.c.b16 %v9052, %v9051
    %v9243 = vpack.c.b16 %v9054, %v9053
    %v9244 = vpack.c.b16 %v9056, %v9055
    %v9245 = vpack.c.b16 %v9058, %v9057
    %v9246 = vpack.c.b16 %v9060, %v9059
    %v9247 = vpack.c.b16 %v9062, %v9061
    %v9248 = vpack.c.b16 %v9064, %v9063
    %v9249 = vpack.c.b16 %v9066, %v9065
    %v9250 = vpack.c.b16 %v9068, %v9067
    %v9251 = vpack.c.b16 %v9070, %v9069
    %v9252 = vpack.c.b16 %v9072, %v9071
    %v9253 = vpack.c.b16 %v9074, %v9073
    %v9254 = vpack.c.b16 %v9076, %v9075
    %v9255 = vpack.c.b16 %v9078, %v9077
    %v9256 = vpack.c.b16 %v9080, %v9079
    %v9257 = vpack.c.b16 %v9082, %v9081
    %v9258 = vpack.c.b16 %v9084, %v9083
    %v9259 = vpack.c.b16 %v9086, %v9085
    %v9260 = vpack.c.b16 %v9088, %v9087
    %v9261 = vpack.c.b16 %v9090, %v9089
    %v9262 = vpack.c.b16 %v9092, %v9091
    %v9263 = vpack.c.b16 %v9094, %v9093
    %v9264 = vpack.c.b16 %v9096, %v9095
    %v9265 = vpack.c.b16 %v9098, %v9097
    %v9266 = vpack.c.b16 %v9100, %v9099
    %v9267 = vpack.c.b16 %v9102, %v9101
    %v9268 = vpack.c.b16 %v9104, %v9103
    %v9269 = vpack.c.b16 %v9106, %v9105
    %v9270 = vpack.c.b16 %v9108, %v9107
    %v9271 = vpack.c.b16 %v9110, %v9109
    %v9272 = vpack.c.b16 %v9112, %v9111
    %v9273 = vpack.c.b16 %v9114, %v9113
    %v9274 = vpack.c.b16 %v9116, %v9115
    %v9275 = vpack.c.b16 %v9118, %v9117
    %v9276 = vpack.c.b16 %v9120, %v9119
    %v9277 = vpack.c.b16 %v9122, %v9121
    %v9278 = vpack.c.b16 %v9124, %v9123
    %v9279 = vpack.c.b16 %v9126, %v9125
    %v9280 = vpack.c.b16 %v9128, %v9127
    %v9281 = vpack.c.b16 %v9130, %v9129
    %v9282 = vpack.c.b16 %v9132, %v9131
    %v9283 = vpack.c.b16 %v9134, %v9133
    %v9284 = vpack.c.b16 %v9136, %v9135
    %v9285 = vpack.c.b16 %v9138, %v9137
    %v9286 = vpack.c.b16 %v9140, %v9139
    %v9287 = vpack.c.b16 %v9142, %v9141
    %v9288 = vpack.c.b16 %v9144, %v9143
    %v9289 = vpack.c.b16 %v9146, %v9145
    %v9290 = vpack.c.b16 %v9148, %v9147
    %v9291 = vpack.c.b16 %v9150, %v9149
    %v9292 = vpack.c.b16 %v9152, %v9151
    %v9293 = vpack.c.b16 %v9154, %v9153
    %v9294 = vpack.c.b16 %v9156, %v9155
    %v9295 = vpack.c.b16 %v9158, %v9157
    %v9296 = vpack.c.b16 %v9160, %v9159
    %v9297 = vpack.c.b16 %v9162, %v9161
    %v9298 = vpack.c.b16 %v9164, %v9163
    %v9299 = vpack.c.b16 %v9166, %v9165
    %v9300 = vpack.c.b16 %v9168, %v9167
    %v9301 = vpack.c.b16 %v9170, %v9169
    %v9302 = vpack.c.b16 %v9172, %v9171
    %v9303 = vpack.c.b16 %v9174, %v9173
    %v9304 = vpack.c.b16 %v9176, %v9175
    %9433 = vmatprep.subr.bf16.mxu0 0
    %9434 = vmatpush1.bf16.msra.mxu0 %v9177
    %9435 = vmatprep.subr.bf16.mxu0 0
    %9436 = vmatpush1.bf16.msra.mxu0 %v9178
    %9437 = vmatprep.subr.bf16.mxu0 0
    %9438 = vmatpush1.bf16.msra.mxu0 %v9179
    %9439 = vmatprep.subr.bf16.mxu0 0
    %9440 = vmatpush1.bf16.msra.mxu0 %v9180
    %9441 = vmatprep.subr.bf16.mxu0 0
    %9442 = vmatpush1.bf16.msra.mxu0 %v9181
    %9443 = vmatprep.subr.bf16.mxu0 0
    %9444 = vmatpush1.bf16.msra.mxu0 %v9182
    %9445 = vmatprep.subr.bf16.mxu0 0
    %9446 = vmatpush1.bf16.msra.mxu0 %v9183
    %9447 = vmatprep.subr.bf16.mxu0 0
    %9448 = vmatpush1.bf16.msra.mxu0 %v9184
    %9449 = vmatprep.subr.bf16.mxu0 0
    %9450 = vmatpush1.bf16.msra.mxu0 %v9185
    %9451 = vmatprep.subr.bf16.mxu0 0
    %9452 = vmatpush1.bf16.msra.mxu0 %v9186
    %9453 = vmatprep.subr.bf16.mxu0 0
    %9454 = vmatpush1.bf16.msra.mxu0 %v9187
    %9455 = vmatprep.subr.bf16.mxu0 0
    %9456 = vmatpush1.bf16.msra.mxu0 %v9188
    %9457 = vmatprep.subr.bf16.mxu0 0
    %9458 = vmatpush1.bf16.msra.mxu0 %v9189
    %9459 = vmatprep.subr.bf16.mxu0 0
    %9460 = vmatpush1.bf16.msra.mxu0 %v9190
    %9461 = vmatprep.subr.bf16.mxu0 0
    %9462 = vmatpush1.bf16.msra.mxu0 %v9191
    %9463 = vmatprep.subr.bf16.mxu0 0
    %9464 = vmatpush1.bf16.msra.mxu0 %v9192
    %9465 = vmatprep.mubr.bf16.mxu0 %v8385
    %9466 = vmatmul.mubr.bf16.gmra.mrb[0].mxu0 %v8384
    %v9467 = vpop.f32.mrb[0].mxu0
    %v9468 = vadd.f32 %v8663, %v9467
    %v9469 = vpop.f32.mrb[0].mxu0
    %v9470 = vpop.f32.mrb[0].mxu0
    %v9471 = vadd.f32 %v8663, %v9470
    %v9472 = vpop.f32.mrb[0].mxu0
    %9473 = vdwg.mxu0
    %9474 = vmatprep.subr.bf16.mxu0 0
    %9475 = vmatpush1.bf16.msra.mxu0 %v9193
    %9476 = vmatprep.subr.bf16.mxu0 0
    %9477 = vmatpush1.bf16.msra.mxu0 %v9194
    %9478 = vmatprep.subr.bf16.mxu0 0
    %9479 = vmatpush1.bf16.msra.mxu0 %v9195
    %9480 = vmatprep.subr.bf16.mxu0 0
    %9481 = vmatpush1.bf16.msra.mxu0 %v9196
    %9482 = vmatprep.subr.bf16.mxu0 0
    %9483 = vmatpush1.bf16.msra.mxu0 %v9197
    %9484 = vmatprep.subr.bf16.mxu0 0
    %9485 = vmatpush1.bf16.msra.mxu0 %v9198
    %9486 = vmatprep.subr.bf16.mxu0 0
    %9487 = vmatpush1.bf16.msra.mxu0 %v9199
    %9488 = vmatprep.subr.bf16.mxu0 0
    %9489 = vmatpush1.bf16.msra.mxu0 %v9200
    %9490 = vmatprep.subr.bf16.mxu0 0
    %9491 = vmatpush1.bf16.msra.mxu0 %v9201
    %9492 = vmatprep.subr.bf16.mxu0 0
    %9493 = vmatpush1.bf16.msra.mxu0 %v9202
    %9494 = vmatprep.subr.bf16.mxu0 0
    %9495 = vmatpush1.bf16.msra.mxu0 %v9203
    %9496 = vmatprep.subr.bf16.mxu0 0
    %9497 = vmatpush1.bf16.msra.mxu0 %v9204
    %9498 = vmatprep.subr.bf16.mxu0 0
    %9499 = vmatpush1.bf16.msra.mxu0 %v9205
    %9500 = vmatprep.subr.bf16.mxu0 0
    %9501 = vmatpush1.bf16.msra.mxu0 %v9206
    %9502 = vmatprep.subr.bf16.mxu0 0
    %9503 = vmatpush1.bf16.msra.mxu0 %v9207
    %9504 = vmatprep.subr.bf16.mxu0 0
    %9505 = vmatpush1.bf16.msra.mxu0 %v9208
    %9506 = vmatprep.mubr.bf16.mxu0 %v8387
    %9507 = vmatmul.mubr.bf16.gmra.mrb[0].mxu0 %v8386
    %v9508 = vpop.f32.mrb[0].mxu0
    %v9509 = vadd.f32 %v9468, %v9508
    %v9510 = vpop.f32.mrb[0].mxu0
    %v9511 = vpop.f32.mrb[0].mxu0
    %v9512 = vadd.f32 %v9471, %v9511
    %v9513 = vpop.f32.mrb[0].mxu0
    %9514 = vdwg.mxu0
    %9515 = vmatprep.subr.bf16.mxu0 0
    %9516 = vmatpush1.bf16.msra.mxu0 %v9209
    %9517 = vmatprep.subr.bf16.mxu0 0
    %9518 = vmatpush1.bf16.msra.mxu0 %v9210
    %9519 = vmatprep.subr.bf16.mxu0 0
    %9520 = vmatpush1.bf16.msra.mxu0 %v9211
    %9521 = vmatprep.subr.bf16.mxu0 0
    %9522 = vmatpush1.bf16.msra.mxu0 %v9212
    %9523 = vmatprep.subr.bf16.mxu0 0
    %9524 = vmatpush1.bf16.msra.mxu0 %v9213
    %9525 = vmatprep.subr.bf16.mxu0 0
    %9526 = vmatpush1.bf16.msra.mxu0 %v9214
    %9527 = vmatprep.subr.bf16.mxu0 0
    %9528 = vmatpush1.bf16.msra.mxu0 %v9215
    %9529 = vmatprep.subr.bf16.mxu0 0
    %9530 = vmatpush1.bf16.msra.mxu0 %v9216
    %9531 = vmatprep.subr.bf16.mxu0 0
    %9532 = vmatpush1.bf16.msra.mxu0 %v9217
    %9533 = vmatprep.subr.bf16.mxu0 0
    %9534 = vmatpush1.bf16.msra.mxu0 %v9218
    %9535 = vmatprep.subr.bf16.mxu0 0
    %9536 = vmatpush1.bf16.msra.mxu0 %v9219
    %9537 = vmatprep.subr.bf16.mxu0 0
    %9538 = vmatpush1.bf16.msra.mxu0 %v9220
    %9539 = vmatprep.subr.bf16.mxu0 0
    %9540 = vmatpush1.bf16.msra.mxu0 %v9221
    %9541 = vmatprep.subr.bf16.mxu0 0
    %9542 = vmatpush1.bf16.msra.mxu0 %v9222
    %9543 = vmatprep.subr.bf16.mxu0 0
    %9544 = vmatpush1.bf16.msra.mxu0 %v9223
    %9545 = vmatprep.subr.bf16.mxu0 0
    %9546 = vmatpush1.bf16.msra.mxu0 %v9224
    %9547 = vmatprep.mubr.bf16.mxu0 %v8389
    %9548 = vmatmul.mubr.bf16.gmra.mrb[0].mxu0 %v8388
    %v9549 = vpop.f32.mrb[0].mxu0
    %v9550 = vadd.f32 %v9509, %v9549
    %v9551 = vpop.f32.mrb[0].mxu0
    %v9552 = vpop.f32.mrb[0].mxu0
    %v9553 = vadd.f32 %v9512, %v9552
    %v9554 = vpop.f32.mrb[0].mxu0
    %9555 = vdwg.mxu0
    %9556 = vmatprep.subr.bf16.mxu0 0
    %9557 = vmatpush1.bf16.msra.mxu0 %v9225
    %9558 = vmatprep.subr.bf16.mxu0 0
    %9559 = vmatpush1.bf16.msra.mxu0 %v9226
    %9560 = vmatprep.subr.bf16.mxu0 0
    %9561 = vmatpush1.bf16.msra.mxu0 %v9227
    %9562 = vmatprep.subr.bf16.mxu0 0
    %9563 = vmatpush1.bf16.msra.mxu0 %v9228
    %9564 = vmatprep.subr.bf16.mxu0 0
    %9565 = vmatpush1.bf16.msra.mxu0 %v9229
    %9566 = vmatprep.subr.bf16.mxu0 0
    %9567 = vmatpush1.bf16.msra.mxu0 %v9230
    %9568 = vmatprep.subr.bf16.mxu0 0
    %9569 = vmatpush1.bf16.msra.mxu0 %v9231
    %9570 = vmatprep.subr.bf16.mxu0 0
    %9571 = vmatpush1.bf16.msra.mxu0 %v9232
    %9572 = vmatprep.subr.bf16.mxu0 0
    %9573 = vmatpush1.bf16.msra.mxu0 %v9233
    %9574 = vmatprep.subr.bf16.mxu0 0
    %9575 = vmatpush1.bf16.msra.mxu0 %v9234
    %9576 = vmatprep.subr.bf16.mxu0 0
    %9577 = vmatpush1.bf16.msra.mxu0 %v9235
    %9578 = vmatprep.subr.bf16.mxu0 0
    %9579 = vmatpush1.bf16.msra.mxu0 %v9236
    %9580 = vmatprep.subr.bf16.mxu0 0
    %9581 = vmatpush1.bf16.msra.mxu0 %v9237
    %9582 = vmatprep.subr.bf16.mxu0 0
    %9583 = vmatpush1.bf16.msra.mxu0 %v9238
    %9584 = vmatprep.subr.bf16.mxu0 0
    %9585 = vmatpush1.bf16.msra.mxu0 %v9239
    %9586 = vmatprep.subr.bf16.mxu0 0
    %9587 = vmatpush1.bf16.msra.mxu0 %v9240
    %9588 = vmatprep.mubr.bf16.mxu0 %v8391
    %9589 = vmatmul.mubr.bf16.gmra.mrb[0].mxu0 %v8390
    %v9590 = vpop.f32.mrb[0].mxu0
    %v9591 = vadd.f32 %v9550, %v9590
    %v9592 = vpop.f32.mrb[0].mxu0
    %v9593 = vpop.f32.mrb[0].mxu0
    %v9594 = vadd.f32 %v9553, %v9593
    %v9595 = vpop.f32.mrb[0].mxu0
    %9596 = vdwg.mxu0
    %9597 = vmatprep.subr.bf16.mxu0 0
    %9598 = vmatpush1.bf16.msra.mxu0 %v9241
    %9599 = vmatprep.subr.bf16.mxu0 0
    %9600 = vmatpush1.bf16.msra.mxu0 %v9242
    %9601 = vmatprep.subr.bf16.mxu0 0
    %9602 = vmatpush1.bf16.msra.mxu0 %v9243
    %9603 = vmatprep.subr.bf16.mxu0 0
    %9604 = vmatpush1.bf16.msra.mxu0 %v9244
    %9605 = vmatprep.subr.bf16.mxu0 0
    %9606 = vmatpush1.bf16.msra.mxu0 %v9245
    %9607 = vmatprep.subr.bf16.mxu0 0
    %9608 = vmatpush1.bf16.msra.mxu0 %v9246
    %9609 = vmatprep.subr.bf16.mxu0 0
    %9610 = vmatpush1.bf16.msra.mxu0 %v9247
    %9611 = vmatprep.subr.bf16.mxu0 0
    %9612 = vmatpush1.bf16.msra.mxu0 %v9248
    %9613 = vmatprep.subr.bf16.mxu0 0
    %9614 = vmatpush1.bf16.msra.mxu0 %v9249
    %9615 = vmatprep.subr.bf16.mxu0 0
    %9616 = vmatpush1.bf16.msra.mxu0 %v9250
    %9617 = vmatprep.subr.bf16.mxu0 0
    %9618 = vmatpush1.bf16.msra.mxu0 %v9251
    %9619 = vmatprep.subr.bf16.mxu0 0
    %9620 = vmatpush1.bf16.msra.mxu0 %v9252
    %9621 = vmatprep.subr.bf16.mxu0 0
    %9622 = vmatpush1.bf16.msra.mxu0 %v9253
    %9623 = vmatprep.subr.bf16.mxu0 0
    %9624 = vmatpush1.bf16.msra.mxu0 %v9254
    %9625 = vmatprep.subr.bf16.mxu0 0
    %9626 = vmatpush1.bf16.msra.mxu0 %v9255
    %9627 = vmatprep.subr.bf16.mxu0 0
    %9628 = vmatpush1.bf16.msra.mxu0 %v9256
    %9629 = vmatprep.mubr.bf16.mxu0 %v8393
    %9630 = vmatmul.mubr.bf16.gmra.mrb[0].mxu0 %v8392
    %v9631 = vpop.f32.mrb[0].mxu0
    %v9632 = vadd.f32 %v9591, %v9631
    %v9633 = vpop.f32.mrb[0].mxu0
    %v9634 = vpop.f32.mrb[0].mxu0
    %v9635 = vadd.f32 %v9594, %v9634
    %v9636 = vpop.f32.mrb[0].mxu0
    %9637 = vdwg.mxu0
    %9638 = vmatprep.subr.bf16.mxu0 0
    %9639 = vmatpush1.bf16.msra.mxu0 %v9257
    %9640 = vmatprep.subr.bf16.mxu0 0
    %9641 = vmatpush1.bf16.msra.mxu0 %v9258
    %9642 = vmatprep.subr.bf16.mxu0 0
    %9643 = vmatpush1.bf16.msra.mxu0 %v9259
    %9644 = vmatprep.subr.bf16.mxu0 0
    %9645 = vmatpush1.bf16.msra.mxu0 %v9260
    %9646 = vmatprep.subr.bf16.mxu0 0
    %9647 = vmatpush1.bf16.msra.mxu0 %v9261
    %9648 = vmatprep.subr.bf16.mxu0 0
    %9649 = vmatpush1.bf16.msra.mxu0 %v9262
    %9650 = vmatprep.subr.bf16.mxu0 0
    %9651 = vmatpush1.bf16.msra.mxu0 %v9263
    %9652 = vmatprep.subr.bf16.mxu0 0
    %9653 = vmatpush1.bf16.msra.mxu0 %v9264
    %9654 = vmatprep.subr.bf16.mxu0 0
    %9655 = vmatpush1.bf16.msra.mxu0 %v9265
    %9656 = vmatprep.subr.bf16.mxu0 0
    %9657 = vmatpush1.bf16.msra.mxu0 %v9266
    %9658 = vmatprep.subr.bf16.mxu0 0
    %9659 = vmatpush1.bf16.msra.mxu0 %v9267
    %9660 = vmatprep.subr.bf16.mxu0 0
    %9661 = vmatpush1.bf16.msra.mxu0 %v9268
    %9662 = vmatprep.subr.bf16.mxu0 0
    %9663 = vmatpush1.bf16.msra.mxu0 %v9269
    %9664 = vmatprep.subr.bf16.mxu0 0
    %9665 = vmatpush1.bf16.msra.mxu0 %v9270
    %9666 = vmatprep.subr.bf16.mxu0 0
    %9667 = vmatpush1.bf16.msra.mxu0 %v9271
    %9668 = vmatprep.subr.bf16.mxu0 0
    %9669 = vmatpush1.bf16.msra.mxu0 %v9272
    %9670 = vmatprep.mubr.bf16.mxu0 %v8395
    %9671 = vmatmul.mubr.bf16.gmra.mrb[0].mxu0 %v8394
    %v9672 = vpop.f32.mrb[0].mxu0
    %v9673 = vadd.f32 %v9632, %v9672
    %v9674 = vpop.f32.mrb[0].mxu0
    %v9675 = vpop.f32.mrb[0].mxu0
    %v9676 = vadd.f32 %v9635, %v9675
    %v9677 = vpop.f32.mrb[0].mxu0
    %9678 = vdwg.mxu0
    %9679 = vmatprep.subr.bf16.mxu0 0
    %9680 = vmatpush1.bf16.msra.mxu0 %v9273
    %9681 = vmatprep.subr.bf16.mxu0 0
    %9682 = vmatpush1.bf16.msra.mxu0 %v9274
    %9683 = vmatprep.subr.bf16.mxu0 0
    %9684 = vmatpush1.bf16.msra.mxu0 %v9275
    %9685 = vmatprep.subr.bf16.mxu0 0
    %9686 = vmatpush1.bf16.msra.mxu0 %v9276
    %9687 = vmatprep.subr.bf16.mxu0 0
    %9688 = vmatpush1.bf16.msra.mxu0 %v9277
    %9689 = vmatprep.subr.bf16.mxu0 0
    %9690 = vmatpush1.bf16.msra.mxu0 %v9278
    %9691 = vmatprep.subr.bf16.mxu0 0
    %9692 = vmatpush1.bf16.msra.mxu0 %v9279
    %9693 = vmatprep.subr.bf16.mxu0 0
    %9694 = vmatpush1.bf16.msra.mxu0 %v9280
    %9695 = vmatprep.subr.bf16.mxu0 0
    %9696 = vmatpush1.bf16.msra.mxu0 %v9281
    %9697 = vmatprep.subr.bf16.mxu0 0
    %9698 = vmatpush1.bf16.msra.mxu0 %v9282
    %9699 = vmatprep.subr.bf16.mxu0 0
    %9700 = vmatpush1.bf16.msra.mxu0 %v9283
    %9701 = vmatprep.subr.bf16.mxu0 0
    %9702 = vmatpush1.bf16.msra.mxu0 %v9284
    %9703 = vmatprep.subr.bf16.mxu0 0
    %9704 = vmatpush1.bf16.msra.mxu0 %v9285
    %9705 = vmatprep.subr.bf16.mxu0 0
    %9706 = vmatpush1.bf16.msra.mxu0 %v9286
    %9707 = vmatprep.subr.bf16.mxu0 0
    %9708 = vmatpush1.bf16.msra.mxu0 %v9287
    %9709 = vmatprep.subr.bf16.mxu0 0
    %9710 = vmatpush1.bf16.msra.mxu0 %v9288
    %9711 = vmatprep.mubr.bf16.mxu0 %v8397
    %9712 = vmatmul.mubr.bf16.gmra.mrb[0].mxu0 %v8396
    %v9713 = vpop.f32.mrb[0].mxu0
    %v9714 = vadd.f32 %v9673, %v9713
    %v9715 = vpop.f32.mrb[0].mxu0
    %v9716 = vpop.f32.mrb[0].mxu0
    %v9717 = vadd.f32 %v9676, %v9716
    %v9718 = vpop.f32.mrb[0].mxu0
    %9719 = vdwg.mxu0
    %9720 = vmatprep.subr.bf16.mxu0 0
    %9721 = vmatpush1.bf16.msra.mxu0 %v9289
    %9722 = vmatprep.subr.bf16.mxu0 0
    %9723 = vmatpush1.bf16.msra.mxu0 %v9290
    %9724 = vmatprep.subr.bf16.mxu0 0
    %9725 = vmatpush1.bf16.msra.mxu0 %v9291
    %9726 = vmatprep.subr.bf16.mxu0 0
    %9727 = vmatpush1.bf16.msra.mxu0 %v9292
    %9728 = vmatprep.subr.bf16.mxu0 0
    %9729 = vmatpush1.bf16.msra.mxu0 %v9293
    %9730 = vmatprep.subr.bf16.mxu0 0
    %9731 = vmatpush1.bf16.msra.mxu0 %v9294
    %9732 = vmatprep.subr.bf16.mxu0 0
    %9733 = vmatpush1.bf16.msra.mxu0 %v9295
    %9734 = vmatprep.subr.bf16.mxu0 0
    %9735 = vmatpush1.bf16.msra.mxu0 %v9296
    %9736 = vmatprep.subr.bf16.mxu0 0
    %9737 = vmatpush1.bf16.msra.mxu0 %v9297
    %9738 = vmatprep.subr.bf16.mxu0 0
    %9739 = vmatpush1.bf16.msra.mxu0 %v9298
    %9740 = vmatprep.subr.bf16.mxu0 0
    %9741 = vmatpush1.bf16.msra.mxu0 %v9299
    %9742 = vmatprep.subr.bf16.mxu0 0
    %9743 = vmatpush1.bf16.msra.mxu0 %v9300
    %9744 = vmatprep.subr.bf16.mxu0 0
    %9745 = vmatpush1.bf16.msra.mxu0 %v9301
    %9746 = vmatprep.subr.bf16.mxu0 0
    %9747 = vmatpush1.bf16.msra.mxu0 %v9302
    %9748 = vmatprep.subr.bf16.mxu0 0
    %9749 = vmatpush1.bf16.msra.mxu0 %v9303
    %9750 = vmatprep.subr.bf16.mxu0 0
    %9751 = vmatpush1.bf16.msra.mxu0 %v9304
    %9752 = vmatprep.mubr.bf16.mxu0 %v8399
    %9753 = vmatmul.mubr.bf16.gmra.mrb[0].mxu0 %v8398
    %v9754 = vpop.f32.mrb[0].mxu0
    %v9755 = vadd.f32 %v9714, %v9754
    %v9756 = vpop.f32.mrb[0].mxu0
    %v9757 = vpop.f32.mrb[0].mxu0
    %v9758 = vadd.f32 %v9717, %v9757
    %v9759 = vpop.f32.mrb[0].mxu0
    %9760 = vdwg.mxu0
    %v9761 = vadd.f32 %v7724, %v9755
    %v9762 = vadd.f32 %v7725, %v9758
    %s9763 = scalar_lea.vmem %s18, 1
    %v9764 = vld [vmem:[%s9763] sm:$0x1]
    %s9765 = scalar_lea.vmem %s19, 1
    %v9766 = vld [vmem:[%s9765] sm:$0x1]
    %v9767 = vsel %vm176, %v9761, 0.0
    %9768 = vadd.xlane.f32.xlu0 %v9767
    %v9769 = vpop.xlane.xlu0 %9768
    %v9770 = vsel %vm176, %v9762, 0.0
    %9771 = vadd.xlane.f32.xlu0 %v9770
    %v9772 = vpop.xlane.xlu0 %9771
    %v9773 = vmul.f32 %v9769, %v2866
    %v9774 = vmul.f32 %v9772, %v2866
    %v9775 = vsub.f32 %v9761, %v9773
    %v9776 = vsub.f32 %v9762, %v9774
    %v9777 = vmul.f32 %v9775, %v9775
    %v9778 = vmul.f32 %v9776, %v9776
    %v9779 = vsel %vm176, %v9777, 0.0
    %9780 = vadd.xlane.f32.xlu0 %v9779
    %v9781 = vpop.xlane.xlu0 %9780
    %v9782 = vsel %vm176, %v9778, 0.0
    %9783 = vadd.xlane.f32.xlu0 %v9782
    %v9784 = vpop.xlane.xlu0 %9783
    %v9785 = vmul.f32 %v9781, %v2866
    %v9786 = vmul.f32 %v9784, %v2866
    %v9787 = vadd.f32 %v9785, 1e-05
    %v9788 = vadd.f32 %v9786, 1e-05
    %v9789 = vrsqrt.pop %v9787
    %v9790 = vrsqrt.pop %v9788
    %v9791 = vmul.f32 %v9775, %v9789
    %v9792 = vmul.f32 %v9776, %v9790
    %v9794 = vlaneseq
    %v9795 = vshrl.u32 %v9794, 7
    %v9796 = vsub.s32 0, %v9795
    %v9797 = vrot.slane %v9764, %v9796
    %v9799 = vmul.f32 %v9791, %v9797
    %v9800 = vmul.f32 %v9792, %v9797
    %v9802 = vlaneseq
    %v9803 = vshrl.u32 %v9802, 7
    %v9804 = vsub.s32 0, %v9803
    %v9805 = vrot.slane %v9766, %v9804
    %v9807 = vadd.f32 %v9799, %v9805
    %v9808 = vadd.f32 %v9800, %v9805
    %v9809 = vsel %vm176, %v9807, 0.0
    %v9810 = vrot.slane %v9809, 4
    %v9811 = vadd.f32 %v9809, %v9810
    %v9812 = vrot.slane %v9811, 2
    %v9813 = vadd.f32 %v9811, %v9812
    %v9814 = vrot.slane %v9813, 1
    %v9815 = vadd.f32 %v9813, %v9814
    %v9816 = vrcp.pop 8.0
    %v9817 = vmul.f32 %v9815, %v9816
    %v9818 = vsel %vm176, %v9808, 0.0
    %v9819 = vrot.slane %v9818, 4
    %v9820 = vadd.f32 %v9818, %v9819
    %v9821 = vrot.slane %v9820, 2
    %v9822 = vadd.f32 %v9820, %v9821
    %v9823 = vrot.slane %v9822, 1
    %v9824 = vadd.f32 %v9822, %v9823
    %v9825 = vmul.f32 %v9824, %v9816
    %vm9826 = vcmask 1040384
    %v9827 = vsel %vm9826, %v9817, %v9825
    %vm9828 = vcmask 254976
    %9829 = vst.msk [vmem:[#allocation2] sm:$0x3] %vm9828, %v9827
    // Predicated region
    $region82: #{tpu_custom_call.1} parent=1 // pred_check
      _
    $region83: #{tpu_custom_call.1} parent=1 // pred_check_branch
      %9831 = sbr.rel (0) target = $region85
    $region84: #{tpu_custom_call.1} parent=1 // pred_region
      %s9833 = ssub.s32 32, 32
      %9834 = vsyncadd [#allocation3], %s9833
      %s9836 = sshll.u32 [#allocation2], 4
      %s9837 = int_to_ptr.vmem [resolvable:$true] %s9836
      %9839 = dma.vmem_to_hbm [thread:$0]  %s9837, 32, %s20, [#allocation3]
    $region85: #{tpu_custom_call.1} parent=1 // pred_fallthru
      _
    // Predicated region
    $region86: #{tpu_custom_call.1} parent=1 // pred_check
      _
    $region87: #{tpu_custom_call.1} parent=1 // pred_check_branch
      %9841 = sbr.rel (0) target = $region89
    $region88: #{tpu_custom_call.1} parent=1 // pred_region
      %9842 = dma.done [#allocation3], 32
    $region89: #{tpu_custom_call.1} parent=1 // pred_fallthru
      _
    %9843 = vsyncpa [#allocation3], 1

</llo_original>
